<compile_context>
chip_gen: v6e
topology: v6e:2x2x1
jax: 0.10.0
libtpu: 0.0.40
codegen_flags: <defaults>
</compile_context>

<pallas_src>
import jax
import jax.numpy as jnp
from jax.experimental import pallas as pl
from jax.experimental.pallas import tpu as pltpu

EPS = 1e-5
LANE = 128


def _round_up(x, m):
    return (x + m - 1) // m * m


def _row_chunk(h, target=16):
    # largest divisor of h that is <= target: bounds the per-chunk acc temp and
    # (for w >= 16) keeps the matmul M dimension at >= 256 for v6e/v7x MXUs
    t = min(target, h)
    while h % t:
        t -= 1
    return t


def _transposed_to_conv_weights(w_t):
    # PyTorch ConvTranspose2d weight: (Cin, Cout, kH, kW).  For stride=1,
    # padding=1, k=3 it equals a regular 3x3 SAME conv with the kernel
    # spatially flipped:  w[kh, kw, cin, cout] = w_t[cin, cout, 2-kh, 2-kw]
    return jnp.transpose(jnp.flip(w_t, axis=(2, 3)), (2, 3, 0, 1))


# --------------------------------------------------------------------------- #
# shared in-kernel helpers
# --------------------------------------------------------------------------- #
def _write_padded(pad_ref, interior, h, w, c):
    # zero only the 1-px border strips; the interior is written exactly once
    dt = pad_ref.dtype
    pad_ref[0:1, :, :] = jnp.zeros((1, w + 2, c), dt)
    pad_ref[h + 1:h + 2, :, :] = jnp.zeros((1, w + 2, c), dt)
    pad_ref[:, 0:1, :] = jnp.zeros((h + 2, 1, c), dt)
    pad_ref[:, w + 1:w + 2, :] = jnp.zeros((h + 2, 1, c), dt)
    pad_ref[1:h + 1, 1:w + 1, :] = interior


def _conv3x3_and_stats(pad_ref, w_ref, o_ref, st_ref, h, w, ci, co):
    # pad_ref: (h+2, w+2, ci) bf16  zero-padded activation
    # w_ref  : (9, ci, co)    bf16  per-tap weights
    # o_ref  : (1, h, w, co)  bf16  raw conv output (pre-BN)
    # st_ref : (1, 2, co)     f32   per-tile [sum, sum_sq]
    th = _row_chunk(h)
    s1 = jnp.zeros((1, co), jnp.float32)
    s2 = jnp.zeros((1, co), jnp.float32)
    for r0 in range(0, h, th):              # small static trip-count
        acc = jnp.zeros((th * w, co), jnp.float32)
        for t in range(9):                  # per-tap MXU accumulation
            kh, kw = t // 3, t % 3
            tap = pad_ref[r0 + kh:r0 + kh + th, kw:kw + w, :].reshape(th * w, ci)
            acc = acc + jnp.dot(tap, w_ref[t], preferred_element_type=jnp.float32)
        o_ref[0, r0:r0 + th, :, :] = acc.reshape(th, w, co).astype(o_ref.dtype)
        s1 = s1 + jnp.sum(acc, axis=0, keepdims=True)
        s2 = s2 + jnp.sum(acc * acc, axis=0, keepdims=True)
    st_ref[0] = jnp.concatenate([s1, s2], axis=0)


# --------------------------------------------------------------------------- #
# pass 1: in-kernel spatial pad -> conv1 (per-tap) + per-image BN1 partials
# --------------------------------------------------------------------------- #
def _pad_conv_stats_kernel(x_ref, w_ref, o_ref, st_ref, pad_ref):
    _, h, w, ci = x_ref.shape
    co = o_ref.shape[-1]
    _write_padded(pad_ref, x_ref[0], h, w, ci)
    _conv3x3_and_stats(pad_ref, w_ref, o_ref, st_ref, h, w, ci, co)


# --------------------------------------------------------------------------- #
# pass 2: bn1 (folded scale/shift) + relu -> spatial pad -> conv2 + BN2 partials
# --------------------------------------------------------------------------- #
def _bn_relu_pad_conv_stats_kernel(h_ref, scale_ref, shift_ref, w_ref,
                                   o_ref, st_ref, pad_ref):
    _, h, w, c = h_ref.shape
    co = o_ref.shape[-1]
    # bn1 + relu as a single FMA + max (conv bias cancelled by BN mean);
    # cast once into the bf16 padded scratch
    act = jnp.maximum(
        h_ref[0].astype(jnp.float32).reshape(h * w, c) * scale_ref[...]
        + shift_ref[...], 0.0).astype(pad_ref.dtype).reshape(h, w, c)
    _write_padded(pad_ref, act, h, w, c)
    _conv3x3_and_stats(pad_ref, w_ref, o_ref, st_ref, h, w, c, co)


def _finalize_stats(stats, gamma, beta, count):
    # stats: (N, 2, C) per-tile [sum, sum_sq]  ->  fused BN scale / shift
    s = jnp.sum(stats[:, 0, :], axis=0)
    ss = jnp.sum(stats[:, 1, :], axis=0)
    mean = s / count
    var = jnp.maximum(ss / count - mean * mean, 0.0)   # biased var (PyTorch BN)
    scale = gamma * jax.lax.rsqrt(var + EPS)
    shift = beta - mean * scale
    return (scale.reshape(1, -1).astype(jnp.float32),
            shift.reshape(1, -1).astype(jnp.float32))


@jax.jit
def unet_decoding_block(x_nchw, w1t, b1, g1, be1, w2t, b2, g2, be2):
    # ConvTranspose biases accepted for interface parity but exactly cancelled
    # by the training-mode BatchNorm mean subtraction -> unused.
    del b1, b2
    # TODO(synk): BatchNorm running_mean/var buffer updates (training-only side
    # effect, not part of the returned tensor) are not modelled.
    n, cin, h, w = x_nchw.shape
    cm = w1t.shape[1]
    cip = _round_up(cin, LANE)
    cop = _round_up(cm, LANE)
    count = n * h * w

    # layout prep (one XLA pass): NCHW->NHWC, channel pad to lane-dense 128,
    # cast bf16.  Spatial padding happens in-kernel (VMEM), not here.
    x = jnp.transpose(x_nchw, (0, 2, 3, 1)).astype(jnp.float32)
    xc = jnp.pad(x, ((0, 0), (0, 0), (0, 0), (0, cip - cin))).astype(jnp.bfloat16)

    # conv-equivalent weights, per-tap layout: (9, Ci, Co)
    w1 = _transposed_to_conv_weights(w1t)
    w1p = jnp.pad(w1, ((0, 0), (0, 0), (0, cip - cin), (0, cop - cm))
                  ).reshape(9, cip, cop).astype(jnp.bfloat16)
    w2 = _transposed_to_conv_weights(w2t)
    w2p = jnp.pad(w2, ((0, 0), (0, 0), (0, cop - cm), (0, cop - cm))
                  ).reshape(9, cop, cop).astype(jnp.bfloat16)

    g1p = jnp.pad(g1.astype(jnp.float32), (0, cop - cm))
    be1p = jnp.pad(be1.astype(jnp.float32), (0, cop - cm))
    g2p = jnp.pad(g2.astype(jnp.float32), (0, cop - cm))
    be2p = jnp.pad(be2.astype(jnp.float32), (0, cop - cm))

    cparams = pltpu.CompilerParams(
        dimension_semantics=("parallel",),
        vmem_limit_bytes=32 * 1024 * 1024)

    # ---- pass 1: spatial pad + conv1 + partial BN1 stats (grid over batch) --
    h1, st1 = pl.pallas_call(
        _pad_conv_stats_kernel,
        grid=(n,),
        in_specs=[
            pl.BlockSpec((1, h, w, cip), lambda i: (i, 0, 0, 0)),
            pl.BlockSpec((9, cip, cop), lambda i: (0, 0, 0)),
        ],
        out_specs=[
            pl.BlockSpec((1, h, w, cop), lambda i: (i, 0, 0, 0)),
            pl.BlockSpec((1, 2, cop), lambda i: (i, 0, 0)),
        ],
        out_shape=[
            jax.ShapeDtypeStruct((n, h, w, cop), jnp.bfloat16),
            jax.ShapeDtypeStruct((n, 2, cop), jnp.float32),
        ],
        scratch_shapes=[pltpu.VMEM((h + 2, w + 2, cip), jnp.bfloat16)],
        compiler_params=cparams,
    )(xc, w1p)

    sc1, sh1 = _finalize_stats(st1, g1p, be1p, count)

    # ---- pass 2: bn1 + relu -> pad -> conv2 + partial BN2 stats -------------
    h2, st2 = pl.pallas_call(
        _bn_relu_pad_conv_stats_kernel,
        grid=(n,),
        in_specs=[
            pl.BlockSpec((1, h, w, cop), lambda i: (i, 0, 0, 0)),
            pl.BlockSpec((1, cop), lambda i: (0, 0)),
            pl.BlockSpec((1, cop), lambda i: (0, 0)),
            pl.BlockSpec((9, cop, cop), lambda i: (0, 0, 0)),
        ],
        out_specs=[
            pl.BlockSpec((1, h, w, cop), lambda i: (i, 0, 0, 0)),
            pl.BlockSpec((1, 2, cop), lambda i: (i, 0, 0)),
        ],
        out_shape=[
            jax.ShapeDtypeStruct((n, h, w, cop), jnp.bfloat16),
            jax.ShapeDtypeStruct((n, 2, cop), jnp.float32),
        ],
        scratch_shapes=[pltpu.VMEM((h + 2, w + 2, cop), jnp.bfloat16)],
        compiler_params=cparams,
    )(h1, sc1, sh1, w2p)

    sc2, sh2 = _finalize_stats(st2, g2p, be2p, count)

    # ---- epilogue (was pass 3): BN2 + ReLU fused with channel slice + NCHW --
    y = jnp.maximum(
        h2[..., :cm].astype(jnp.float32) * sc2[:, :cm] + sh2[:, :cm], 0.0)
    return jnp.transpose(y, (0, 3, 1, 2)).astype(x_nchw.dtype)


def _reference(x_nchw, w1t, b1, g1, be1, w2t, b2, g2, be2):
    # pure-JAX reference (bf16 conv operands / f32 accumulation, matching the
    # kernel precision), training-mode BN with biased batch variance.
    x = jnp.transpose(x_nchw, (0, 2, 3, 1)).astype(jnp.float32)

    def block(x, wt, b, g, be):
        wc = _transposed_to_conv_weights(wt)
        y = jax.lax.conv_general_dilated(
            x.astype(jnp.bfloat16), wc.astype(jnp.bfloat16),
            window_strides=(1, 1), padding="SAME",
            dimension_numbers=("NHWC", "HWIO", "NHWC"),
            preferred_element_type=jnp.float32) + b
        mean = jnp.mean(y, axis=(0, 1, 2), keepdims=True)
        var = jnp.mean((y - mean) ** 2, axis=(0, 1, 2), keepdims=True)
        y = (y - mean) * g * jax.lax.rsqrt(var + EPS) + be
        return jnp.maximum(y, 0.0)

    y = block(x, w1t, b1, g1, be1)
    y = block(y, w2t, b2, g2, be2)
    return jnp.transpose(y, (0, 3, 1, 2))


if __name__ == "__main__":
    # batch=2, features=8 (-> features//2 = 4), spatial=16
    N, F, H, W = 2, 8, 16, 16
    Cm = F // 2

    key = jax.random.PRNGKey(0)
    kx, kw1, kw2 = jax.random.split(key, 3)

    x = jax.random.normal(kx, (N, F, H, W), dtype=jnp.float32)
    # ConvTranspose2d weights (Cin, Cout, 3, 3); biases zeroed per _init_weights.
    w1t = 0.1 * jax.random.normal(kw1, (F, Cm, 3, 3), dtype=jnp.float32)
    b1 = jnp.zeros((Cm,), jnp.float32)
    w2t = 0.1 * jax.random.normal(kw2, (Cm, Cm, 3, 3), dtype=jnp.float32)
    b2 = jnp.zeros((Cm,), jnp.float32)
    # BatchNorm2d: gamma=1 (default), beta=0 (zeroed by _init_weights).
    g1 = jnp.ones((Cm,), jnp.float32)
    be1 = jnp.zeros((Cm,), jnp.float32)
    g2 = jnp.ones((Cm,), jnp.float32)
    be2 = jnp.zeros((Cm,), jnp.float32)

    out = jax.block_until_ready(
        unet_decoding_block(x, w1t, b1, g1, be1, w2t, b2, g2, be2))
    ref = _reference(x, w1t, b1, g1, be1, w2t, b2, g2, be2)

    assert out.shape == (N, Cm, H, W)
    err = float(jnp.max(jnp.abs(out - ref)))
    # bf16 inter-pass intermediates add a few e-3 of rounding vs the f32 ref
    assert err < 3e-2, err
    print("KERNEL_OK")
</pallas_src>

<mosaic_0001>
module attributes {stable_mosaic.version = 11 : i64} {
  func.func @_pad_conv_stats_kernel(%arg0: i32, %arg1: memref<1x16x16x128xbf16, #tpu.memory_space<vmem>>, %arg2: memref<9x128x128xbf16, #tpu.memory_space<vmem>>, %arg3: memref<1x16x16x128xbf16, #tpu.memory_space<vmem>>, %arg4: memref<1x2x128xf32, #tpu.memory_space<vmem>>, %arg5: memref<18x18x128xbf16, #tpu.memory_space<vmem>>) attributes {dimension_semantics = [#tpu.dimension_semantics<parallel>], iteration_bounds = array<i64: 2>, scalar_prefetch = 0 : i64, scratch_operands = 1 : i64, tpu.core_type = #tpu.core_type<tc>, window_params = [{transform_indices = @transform_0, window_bounds = array<i64: 1, 16, 16, 128>}, {pipeline_mode = #tpu.pipeline_mode<synchronous>, transform_indices = @transform_1, window_bounds = array<i64: 9, 128, 128>}, {transform_indices = @transform_2, window_bounds = array<i64: 1, 16, 16, 128>}, {transform_indices = @transform_3, window_bounds = array<i64: 1, 2, 128>}]} {
    %c0 = arith.constant 0 : index
    %c0_0 = arith.constant 0 : index
    %c0_1 = arith.constant 0 : index
    %c0_2 = arith.constant 0 : index
    %0 = vector.load %arg1[%c0, %c0_0, %c0_1, %c0_2] : memref<1x16x16x128xbf16, #tpu.memory_space<vmem>>, vector<1x16x16x128xbf16>
    %1 = vector.shape_cast %0 : vector<1x16x16x128xbf16> to vector<16x16x128xbf16>
    %cst = arith.constant 0.000000e+00 : bf16
    %2 = vector.broadcast %cst : bf16 to vector<1x18x128xbf16>
    %c0_3 = arith.constant 0 : index
    %c0_4 = arith.constant 0 : index
    %c0_5 = arith.constant 0 : index
    %3 = vector.load %arg5[%c0_3, %c0_4, %c0_5] : memref<18x18x128xbf16, #tpu.memory_space<vmem>>, vector<1x18x128xbf16>
    tpu.vector_store %arg5[%c0_3, %c0_4, %c0_5], %2 {strides = array<i32>} : memref<18x18x128xbf16, #tpu.memory_space<vmem>>, vector<1x18x128xbf16>,
    %cst_6 = arith.constant 0.000000e+00 : bf16
    %4 = vector.broadcast %cst_6 : bf16 to vector<1x18x128xbf16>
    %c17 = arith.constant 17 : index
    %c0_7 = arith.constant 0 : index
    %c0_8 = arith.constant 0 : index
    %5 = vector.load %arg5[%c17, %c0_7, %c0_8] : memref<18x18x128xbf16, #tpu.memory_space<vmem>>, vector<1x18x128xbf16>
    tpu.vector_store %arg5[%c17, %c0_7, %c0_8], %4 {strides = array<i32>} : memref<18x18x128xbf16, #tpu.memory_space<vmem>>, vector<1x18x128xbf16>,
    %cst_9 = arith.constant 0.000000e+00 : bf16
    %6 = vector.broadcast %cst_9 : bf16 to vector<18x1x128xbf16>
    %c0_10 = arith.constant 0 : index
    %c0_11 = arith.constant 0 : index
    %c0_12 = arith.constant 0 : index
    %7 = vector.load %arg5[%c0_10, %c0_11, %c0_12] : memref<18x18x128xbf16, #tpu.memory_space<vmem>>, vector<18x1x128xbf16>
    tpu.vector_store %arg5[%c0_10, %c0_11, %c0_12], %6 {strides = array<i32>} : memref<18x18x128xbf16, #tpu.memory_space<vmem>>, vector<18x1x128xbf16>,
    %cst_13 = arith.constant 0.000000e+00 : bf16
    %8 = vector.broadcast %cst_13 : bf16 to vector<18x1x128xbf16>
    %c0_14 = arith.constant 0 : index
    %c17_15 = arith.constant 17 : index
    %c0_16 = arith.constant 0 : index
    %9 = vector.load %arg5[%c0_14, %c17_15, %c0_16] : memref<18x18x128xbf16, #tpu.memory_space<vmem>>, vector<18x1x128xbf16>
    tpu.vector_store %arg5[%c0_14, %c17_15, %c0_16], %8 {strides = array<i32>} : memref<18x18x128xbf16, #tpu.memory_space<vmem>>, vector<18x1x128xbf16>,
    %c1 = arith.constant 1 : index
    %c1_17 = arith.constant 1 : index
    %c0_18 = arith.constant 0 : index
    %10 = vector.load %arg5[%c1, %c1_17, %c0_18] : memref<18x18x128xbf16, #tpu.memory_space<vmem>>, vector<16x16x128xbf16>
    tpu.vector_store %arg5[%c1, %c1_17, %c0_18], %1 {strides = array<i32>} : memref<18x18x128xbf16, #tpu.memory_space<vmem>>, vector<16x16x128xbf16>,
    %cst_19 = arith.constant 0.000000e+00 : f32
    %11 = vector.broadcast %cst_19 : f32 to vector<1x128xf32>
    %cst_20 = arith.constant 0.000000e+00 : f32
    %12 = vector.broadcast %cst_20 : f32 to vector<1x128xf32>
    %cst_21 = arith.constant 0.000000e+00 : f32
    %13 = vector.broadcast %cst_21 : f32 to vector<256x128xf32>
    %c0_22 = arith.constant 0 : index
    %c0_23 = arith.constant 0 : index
    %c0_24 = arith.constant 0 : index
    %14 = vector.load %arg5[%c0_22, %c0_23, %c0_24] : memref<18x18x128xbf16, #tpu.memory_space<vmem>>, vector<16x16x128xbf16>
    %15 = vector.shape_cast %14 : vector<16x16x128xbf16> to vector<256x128xbf16>
    %c0_25 = arith.constant 0 : index
    %c0_26 = arith.constant 0 : index
    %c0_27 = arith.constant 0 : index
    %16 = vector.load %arg2[%c0_25, %c0_26, %c0_27] : memref<9x128x128xbf16, #tpu.memory_space<vmem>>, vector<1x128x128xbf16>
    %17 = vector.shape_cast %16 : vector<1x128x128xbf16> to vector<128x128xbf16>
    %cst_28 = arith.constant dense<0.000000e+00> : vector<256x128xf32>
    %18 = tpu.matmul %15, %17, %cst_28 {dimension_numbers = #tpu.dot_dimension_numbers<[1], [0], [0], [1], [0, 0, 1, 1], [], []>} : vector<256x128xbf16>, vector<128x128xbf16>, vector<256x128xf32> -> vector<256x128xf32>
    %19 = arith.addf %13, %18 : vector<256x128xf32>
    %c0_29 = arith.constant 0 : index
    %c1_30 = arith.constant 1 : index
    %c0_31 = arith.constant 0 : index
    %20 = vector.load %arg5[%c0_29, %c1_30, %c0_31] : memref<18x18x128xbf16, #tpu.memory_space<vmem>>, vector<16x16x128xbf16>
    %21 = vector.shape_cast %20 : vector<16x16x128xbf16> to vector<256x128xbf16>
    %c1_32 = arith.constant 1 : index
    %c0_33 = arith.constant 0 : index
    %c0_34 = arith.constant 0 : index
    %22 = vector.load %arg2[%c1_32, %c0_33, %c0_34] : memref<9x128x128xbf16, #tpu.memory_space<vmem>>, vector<1x128x128xbf16>
    %23 = vector.shape_cast %22 : vector<1x128x128xbf16> to vector<128x128xbf16>
    %cst_35 = arith.constant dense<0.000000e+00> : vector<256x128xf32>
    %24 = tpu.matmul %21, %23, %cst_35 {dimension_numbers = #tpu.dot_dimension_numbers<[1], [0], [0], [1], [0, 0, 1, 1], [], []>} : vector<256x128xbf16>, vector<128x128xbf16>, vector<256x128xf32> -> vector<256x128xf32>
    %25 = arith.addf %19, %24 : vector<256x128xf32>
    %c0_36 = arith.constant 0 : index
    %c2 = arith.constant 2 : index
    %c0_37 = arith.constant 0 : index
    %26 = vector.load %arg5[%c0_36, %c2, %c0_37] : memref<18x18x128xbf16, #tpu.memory_space<vmem>>, vector<16x16x128xbf16>
    %27 = vector.shape_cast %26 : vector<16x16x128xbf16> to vector<256x128xbf16>
    %c2_38 = arith.constant 2 : index
    %c0_39 = arith.constant 0 : index
    %c0_40 = arith.constant 0 : index
    %28 = vector.load %arg2[%c2_38, %c0_39, %c0_40] : memref<9x128x128xbf16, #tpu.memory_space<vmem>>, vector<1x128x128xbf16>
    %29 = vector.shape_cast %28 : vector<1x128x128xbf16> to vector<128x128xbf16>
    %cst_41 = arith.constant dense<0.000000e+00> : vector<256x128xf32>
    %30 = tpu.matmul %27, %29, %cst_41 {dimension_numbers = #tpu.dot_dimension_numbers<[1], [0], [0], [1], [0, 0, 1, 1], [], []>} : vector<256x128xbf16>, vector<128x128xbf16>, vector<256x128xf32> -> vector<256x128xf32>
    %31 = arith.addf %25, %30 : vector<256x128xf32>
    %c1_42 = arith.constant 1 : index
    %c0_43 = arith.constant 0 : index
    %c0_44 = arith.constant 0 : index
    %32 = vector.load %arg5[%c1_42, %c0_43, %c0_44] : memref<18x18x128xbf16, #tpu.memory_space<vmem>>, vector<16x16x128xbf16>
    %33 = vector.shape_cast %32 : vector<16x16x128xbf16> to vector<256x128xbf16>
    %c3 = arith.constant 3 : index
    %c0_45 = arith.constant 0 : index
    %c0_46 = arith.constant 0 : index
    %34 = vector.load %arg2[%c3, %c0_45, %c0_46] : memref<9x128x128xbf16, #tpu.memory_space<vmem>>, vector<1x128x128xbf16>
    %35 = vector.shape_cast %34 : vector<1x128x128xbf16> to vector<128x128xbf16>
    %cst_47 = arith.constant dense<0.000000e+00> : vector<256x128xf32>
    %36 = tpu.matmul %33, %35, %cst_47 {dimension_numbers = #tpu.dot_dimension_numbers<[1], [0], [0], [1], [0, 0, 1, 1], [], []>} : vector<256x128xbf16>, vector<128x128xbf16>, vector<256x128xf32> -> vector<256x128xf32>
    %37 = arith.addf %31, %36 : vector<256x128xf32>
    %c1_48 = arith.constant 1 : index
    %c1_49 = arith.constant 1 : index
    %c0_50 = arith.constant 0 : index
    %38 = vector.load %arg5[%c1_48, %c1_49, %c0_50] : memref<18x18x128xbf16, #tpu.memory_space<vmem>>, vector<16x16x128xbf16>
    %39 = vector.shape_cast %38 : vector<16x16x128xbf16> to vector<256x128xbf16>
    %c4 = arith.constant 4 : index
    %c0_51 = arith.constant 0 : index
    %c0_52 = arith.constant 0 : index
    %40 = vector.load %arg2[%c4, %c0_51, %c0_52] : memref<9x128x128xbf16, #tpu.memory_space<vmem>>, vector<1x128x128xbf16>
    %41 = vector.shape_cast %40 : vector<1x128x128xbf16> to vector<128x128xbf16>
    %cst_53 = arith.constant dense<0.000000e+00> : vector<256x128xf32>
    %42 = tpu.matmul %39, %41, %cst_53 {dimension_numbers = #tpu.dot_dimension_numbers<[1], [0], [0], [1], [0, 0, 1, 1], [], []>} : vector<256x128xbf16>, vector<128x128xbf16>, vector<256x128xf32> -> vector<256x128xf32>
    %43 = arith.addf %37, %42 : vector<256x128xf32>
    %c1_54 = arith.constant 1 : index
    %c2_55 = arith.constant 2 : index
    %c0_56 = arith.constant 0 : index
    %44 = vector.load %arg5[%c1_54, %c2_55, %c0_56] : memref<18x18x128xbf16, #tpu.memory_space<vmem>>, vector<16x16x128xbf16>
    %45 = vector.shape_cast %44 : vector<16x16x128xbf16> to vector<256x128xbf16>
    %c5 = arith.constant 5 : index
    %c0_57 = arith.constant 0 : index
    %c0_58 = arith.constant 0 : index
    %46 = vector.load %arg2[%c5, %c0_57, %c0_58] : memref<9x128x128xbf16, #tpu.memory_space<vmem>>, vector<1x128x128xbf16>
    %47 = vector.shape_cast %46 : vector<1x128x128xbf16> to vector<128x128xbf16>
    %cst_59 = arith.constant dense<0.000000e+00> : vector<256x128xf32>
    %48 = tpu.matmul %45, %47, %cst_59 {dimension_numbers = #tpu.dot_dimension_numbers<[1], [0], [0], [1], [0, 0, 1, 1], [], []>} : vector<256x128xbf16>, vector<128x128xbf16>, vector<256x128xf32> -> vector<256x128xf32>
    %49 = arith.addf %43, %48 : vector<256x128xf32>
    %c2_60 = arith.constant 2 : index
    %c0_61 = arith.constant 0 : index
    %c0_62 = arith.constant 0 : index
    %50 = vector.load %arg5[%c2_60, %c0_61, %c0_62] : memref<18x18x128xbf16, #tpu.memory_space<vmem>>, vector<16x16x128xbf16>
    %51 = vector.shape_cast %50 : vector<16x16x128xbf16> to vector<256x128xbf16>
    %c6 = arith.constant 6 : index
    %c0_63 = arith.constant 0 : index
    %c0_64 = arith.constant 0 : index
    %52 = vector.load %arg2[%c6, %c0_63, %c0_64] : memref<9x128x128xbf16, #tpu.memory_space<vmem>>, vector<1x128x128xbf16>
    %53 = vector.shape_cast %52 : vector<1x128x128xbf16> to vector<128x128xbf16>
    %cst_65 = arith.constant dense<0.000000e+00> : vector<256x128xf32>
    %54 = tpu.matmul %51, %53, %cst_65 {dimension_numbers = #tpu.dot_dimension_numbers<[1], [0], [0], [1], [0, 0, 1, 1], [], []>} : vector<256x128xbf16>, vector<128x128xbf16>, vector<256x128xf32> -> vector<256x128xf32>
    %55 = arith.addf %49, %54 : vector<256x128xf32>
    %c2_66 = arith.constant 2 : index
    %c1_67 = arith.constant 1 : index
    %c0_68 = arith.constant 0 : index
    %56 = vector.load %arg5[%c2_66, %c1_67, %c0_68] : memref<18x18x128xbf16, #tpu.memory_space<vmem>>, vector<16x16x128xbf16>
    %57 = vector.shape_cast %56 : vector<16x16x128xbf16> to vector<256x128xbf16>
    %c7 = arith.constant 7 : index
    %c0_69 = arith.constant 0 : index
    %c0_70 = arith.constant 0 : index
    %58 = vector.load %arg2[%c7, %c0_69, %c0_70] : memref<9x128x128xbf16, #tpu.memory_space<vmem>>, vector<1x128x128xbf16>
    %59 = vector.shape_cast %58 : vector<1x128x128xbf16> to vector<128x128xbf16>
    %cst_71 = arith.constant dense<0.000000e+00> : vector<256x128xf32>
    %60 = tpu.matmul %57, %59, %cst_71 {dimension_numbers = #tpu.dot_dimension_numbers<[1], [0], [0], [1], [0, 0, 1, 1], [], []>} : vector<256x128xbf16>, vector<128x128xbf16>, vector<256x128xf32> -> vector<256x128xf32>
    %61 = arith.addf %55, %60 : vector<256x128xf32>
    %c2_72 = arith.constant 2 : index
    %c2_73 = arith.constant 2 : index
    %c0_74 = arith.constant 0 : index
    %62 = vector.load %arg5[%c2_72, %c2_73, %c0_74] : memref<18x18x128xbf16, #tpu.memory_space<vmem>>, vector<16x16x128xbf16>
    %63 = vector.shape_cast %62 : vector<16x16x128xbf16> to vector<256x128xbf16>
    %c8 = arith.constant 8 : index
    %c0_75 = arith.constant 0 : index
    %c0_76 = arith.constant 0 : index
    %64 = vector.load %arg2[%c8, %c0_75, %c0_76] : memref<9x128x128xbf16, #tpu.memory_space<vmem>>, vector<1x128x128xbf16>
    %65 = vector.shape_cast %64 : vector<1x128x128xbf16> to vector<128x128xbf16>
    %cst_77 = arith.constant dense<0.000000e+00> : vector<256x128xf32>
    %66 = tpu.matmul %63, %65, %cst_77 {dimension_numbers = #tpu.dot_dimension_numbers<[1], [0], [0], [1], [0, 0, 1, 1], [], []>} : vector<256x128xbf16>, vector<128x128xbf16>, vector<256x128xf32> -> vector<256x128xf32>
    %67 = arith.addf %61, %66 : vector<256x128xf32>
    %68 = vector.shape_cast %67 : vector<256x128xf32> to vector<16x16x128xf32>
    %69 = arith.truncf %68 : vector<16x16x128xf32> to vector<16x16x128xbf16>
    %c0_78 = arith.constant 0 : index
    %c0_79 = arith.constant 0 : index
    %c0_80 = arith.constant 0 : index
    %c0_81 = arith.constant 0 : index
    %70 = vector.load %arg3[%c0_78, %c0_79, %c0_80, %c0_81] : memref<1x16x16x128xbf16, #tpu.memory_space<vmem>>, vector<1x16x16x128xbf16>
    %71 = vector.shape_cast %70 : vector<1x16x16x128xbf16> to vector<16x16x128xbf16>
    %72 = vector.shape_cast %69 : vector<16x16x128xbf16> to vector<1x16x16x128xbf16>
    tpu.vector_store %arg3[%c0_78, %c0_79, %c0_80, %c0_81], %72 {strides = array<i32>} : memref<1x16x16x128xbf16, #tpu.memory_space<vmem>>, vector<1x16x16x128xbf16>,
    %cst_82 = arith.constant dense<0.000000e+00> : vector<128xf32>
    %73 = vector.multi_reduction <add>, %67, %cst_82 [0] : vector<256x128xf32> to vector<128xf32>
    %74 = vector.shape_cast %73 : vector<128xf32> to vector<1x128xf32>
    %75 = arith.addf %11, %74 : vector<1x128xf32>
    %76 = arith.mulf %67, %67 : vector<256x128xf32>
    %cst_83 = arith.constant dense<0.000000e+00> : vector<128xf32>
    %77 = vector.multi_reduction <add>, %76, %cst_83 [0] : vector<256x128xf32> to vector<128xf32>
    %78 = vector.shape_cast %77 : vector<128xf32> to vector<1x128xf32>
    %79 = arith.addf %12, %78 : vector<1x128xf32>
    %80 = tpu.concatenate %75, %79 in 0 : vector<1x128xf32>, vector<1x128xf32> -> vector<2x128xf32>
    %c0_84 = arith.constant 0 : index
    %c0_85 = arith.constant 0 : index
    %c0_86 = arith.constant 0 : index
    %81 = vector.load %arg4[%c0_84, %c0_85, %c0_86] : memref<1x2x128xf32, #tpu.memory_space<vmem>>, vector<1x2x128xf32>
    %82 = vector.shape_cast %81 : vector<1x2x128xf32> to vector<2x128xf32>
    %83 = vector.shape_cast %80 : vector<2x128xf32> to vector<1x2x128xf32>
    tpu.vector_store %arg4[%c0_84, %c0_85, %c0_86], %83 {strides = array<i32>} : memref<1x2x128xf32, #tpu.memory_space<vmem>>, vector<1x2x128xf32>,
    return
  }
  func.func @transform_0(%arg0: i32) -> (i32, i32, i32, i32) {
    %c0_i32 = arith.constant 0 : i32
    %c0_i32_0 = arith.constant 0 : i32
    %c0_i32_1 = arith.constant 0 : i32
    %c0_i32_2 = arith.constant 0 : i32
    return %arg0, %c0_i32, %c0_i32_0, %c0_i32_1 : i32, i32, i32, i32
  }
  func.func @transform_1(%arg0: i32) -> (i32, i32, i32) {
    %c0_i32 = arith.constant 0 : i32
    %c0_i32_0 = arith.constant 0 : i32
    %c0_i32_1 = arith.constant 0 : i32
    %c0_i32_2 = arith.constant 0 : i32
    return %c0_i32, %c0_i32_0, %c0_i32_1 : i32, i32, i32
  }
  func.func @transform_2(%arg0: i32) -> (i32, i32, i32, i32) {
    %c0_i32 = arith.constant 0 : i32
    %c0_i32_0 = arith.constant 0 : i32
    %c0_i32_1 = arith.constant 0 : i32
    %c0_i32_2 = arith.constant 0 : i32
    return %arg0, %c0_i32, %c0_i32_0, %c0_i32_1 : i32, i32, i32, i32
  }
  func.func @transform_3(%arg0: i32) -> (i32, i32, i32) {
    %c0_i32 = arith.constant 0 : i32
    %c0_i32_0 = arith.constant 0 : i32
    %c0_i32_1 = arith.constant 0 : i32
    return %arg0, %c0_i32, %c0_i32_0 : i32, i32, i32
  }
}

module attributes {stable_mosaic.version = 11 : i64} {
  func.func @_bn_relu_pad_conv_stats_kernel(%arg0: i32, %arg1: memref<1x16x16x128xbf16, #tpu.memory_space<vmem>>, %arg2: memref<1x128xf32, #tpu.memory_space<vmem>>, %arg3: memref<1x128xf32, #tpu.memory_space<vmem>>, %arg4: memref<9x128x128xbf16, #tpu.memory_space<vmem>>, %arg5: memref<1x16x16x128xbf16, #tpu.memory_space<vmem>>, %arg6: memref<1x2x128xf32, #tpu.memory_space<vmem>>, %arg7: memref<18x18x128xbf16, #tpu.memory_space<vmem>>) attributes {dimension_semantics = [#tpu.dimension_semantics<parallel>], iteration_bounds = array<i64: 2>, scalar_prefetch = 0 : i64, scratch_operands = 1 : i64, tpu.core_type = #tpu.core_type<tc>, window_params = [{transform_indices = @transform_0, window_bounds = array<i64: 1, 16, 16, 128>}, {pipeline_mode = #tpu.pipeline_mode<synchronous>, transform_indices = @transform_1, window_bounds = array<i64: 1, 128>}, {pipeline_mode = #tpu.pipeline_mode<synchronous>, transform_indices = @transform_2, window_bounds = array<i64: 1, 128>}, {pipeline_mode = #tpu.pipeline_mode<synchronous>, transform_indices = @transform_3, window_bounds = array<i64: 9, 128, 128>}, {transform_indices = @transform_4, window_bounds = array<i64: 1, 16, 16, 128>}, {transform_indices = @transform_5, window_bounds = array<i64: 1, 2, 128>}]} {
    %c0 = arith.constant 0 : index
    %c0_0 = arith.constant 0 : index
    %c0_1 = arith.constant 0 : index
    %c0_2 = arith.constant 0 : index
    %0 = vector.load %arg1[%c0, %c0_0, %c0_1, %c0_2] : memref<1x16x16x128xbf16, #tpu.memory_space<vmem>>, vector<1x16x16x128xbf16>
    %1 = vector.shape_cast %0 : vector<1x16x16x128xbf16> to vector<16x16x128xbf16>
    %2 = arith.extf %1 : vector<16x16x128xbf16> to vector<16x16x128xf32>
    %3 = vector.shape_cast %2 : vector<16x16x128xf32> to vector<256x128xf32>
    %c0_3 = arith.constant 0 : index
    %c0_4 = arith.constant 0 : index
    %4 = vector.load %arg2[%c0_3, %c0_4] : memref<1x128xf32, #tpu.memory_space<vmem>>, vector<1x128xf32>
    %5 = vector.broadcast %4 : vector<1x128xf32> to vector<256x128xf32>
    %6 = arith.mulf %3, %5 : vector<256x128xf32>
    %c0_5 = arith.constant 0 : index
    %c0_6 = arith.constant 0 : index
    %7 = vector.load %arg3[%c0_5, %c0_6] : memref<1x128xf32, #tpu.memory_space<vmem>>, vector<1x128xf32>
    %8 = vector.broadcast %7 : vector<1x128xf32> to vector<256x128xf32>
    %9 = arith.addf %6, %8 : vector<256x128xf32>
    %cst = arith.constant 0.000000e+00 : f32
    %10 = vector.broadcast %cst : f32 to vector<256x128xf32>
    %11 = arith.maximumf %9, %10 : vector<256x128xf32>
    %12 = arith.truncf %11 : vector<256x128xf32> to vector<256x128xbf16>
    %13 = vector.shape_cast %12 : vector<256x128xbf16> to vector<16x16x128xbf16>
    %cst_7 = arith.constant 0.000000e+00 : bf16
    %14 = vector.broadcast %cst_7 : bf16 to vector<1x18x128xbf16>
    %c0_8 = arith.constant 0 : index
    %c0_9 = arith.constant 0 : index
    %c0_10 = arith.constant 0 : index
    %15 = vector.load %arg7[%c0_8, %c0_9, %c0_10] : memref<18x18x128xbf16, #tpu.memory_space<vmem>>, vector<1x18x128xbf16>
    tpu.vector_store %arg7[%c0_8, %c0_9, %c0_10], %14 {strides = array<i32>} : memref<18x18x128xbf16, #tpu.memory_space<vmem>>, vector<1x18x128xbf16>,
    %cst_11 = arith.constant 0.000000e+00 : bf16
    %16 = vector.broadcast %cst_11 : bf16 to vector<1x18x128xbf16>
    %c17 = arith.constant 17 : index
    %c0_12 = arith.constant 0 : index
    %c0_13 = arith.constant 0 : index
    %17 = vector.load %arg7[%c17, %c0_12, %c0_13] : memref<18x18x128xbf16, #tpu.memory_space<vmem>>, vector<1x18x128xbf16>
    tpu.vector_store %arg7[%c17, %c0_12, %c0_13], %16 {strides = array<i32>} : memref<18x18x128xbf16, #tpu.memory_space<vmem>>, vector<1x18x128xbf16>,
    %cst_14 = arith.constant 0.000000e+00 : bf16
    %18 = vector.broadcast %cst_14 : bf16 to vector<18x1x128xbf16>
    %c0_15 = arith.constant 0 : index
    %c0_16 = arith.constant 0 : index
    %c0_17 = arith.constant 0 : index
    %19 = vector.load %arg7[%c0_15, %c0_16, %c0_17] : memref<18x18x128xbf16, #tpu.memory_space<vmem>>, vector<18x1x128xbf16>
    tpu.vector_store %arg7[%c0_15, %c0_16, %c0_17], %18 {strides = array<i32>} : memref<18x18x128xbf16, #tpu.memory_space<vmem>>, vector<18x1x128xbf16>,
    %cst_18 = arith.constant 0.000000e+00 : bf16
    %20 = vector.broadcast %cst_18 : bf16 to vector<18x1x128xbf16>
    %c0_19 = arith.constant 0 : index
    %c17_20 = arith.constant 17 : index
    %c0_21 = arith.constant 0 : index
    %21 = vector.load %arg7[%c0_19, %c17_20, %c0_21] : memref<18x18x128xbf16, #tpu.memory_space<vmem>>, vector<18x1x128xbf16>
    tpu.vector_store %arg7[%c0_19, %c17_20, %c0_21], %20 {strides = array<i32>} : memref<18x18x128xbf16, #tpu.memory_space<vmem>>, vector<18x1x128xbf16>,
    %c1 = arith.constant 1 : index
    %c1_22 = arith.constant 1 : index
    %c0_23 = arith.constant 0 : index
    %22 = vector.load %arg7[%c1, %c1_22, %c0_23] : memref<18x18x128xbf16, #tpu.memory_space<vmem>>, vector<16x16x128xbf16>
    tpu.vector_store %arg7[%c1, %c1_22, %c0_23], %13 {strides = array<i32>} : memref<18x18x128xbf16, #tpu.memory_space<vmem>>, vector<16x16x128xbf16>,
    %cst_24 = arith.constant 0.000000e+00 : f32
    %23 = vector.broadcast %cst_24 : f32 to vector<1x128xf32>
    %cst_25 = arith.constant 0.000000e+00 : f32
    %24 = vector.broadcast %cst_25 : f32 to vector<1x128xf32>
    %cst_26 = arith.constant 0.000000e+00 : f32
    %25 = vector.broadcast %cst_26 : f32 to vector<256x128xf32>
    %c0_27 = arith.constant 0 : index
    %c0_28 = arith.constant 0 : index
    %c0_29 = arith.constant 0 : index
    %26 = vector.load %arg7[%c0_27, %c0_28, %c0_29] : memref<18x18x128xbf16, #tpu.memory_space<vmem>>, vector<16x16x128xbf16>
    %27 = vector.shape_cast %26 : vector<16x16x128xbf16> to vector<256x128xbf16>
    %c0_30 = arith.constant 0 : index
    %c0_31 = arith.constant 0 : index
    %c0_32 = arith.constant 0 : index
    %28 = vector.load %arg4[%c0_30, %c0_31, %c0_32] : memref<9x128x128xbf16, #tpu.memory_space<vmem>>, vector<1x128x128xbf16>
    %29 = vector.shape_cast %28 : vector<1x128x128xbf16> to vector<128x128xbf16>
    %cst_33 = arith.constant dense<0.000000e+00> : vector<256x128xf32>
    %30 = tpu.matmul %27, %29, %cst_33 {dimension_numbers = #tpu.dot_dimension_numbers<[1], [0], [0], [1], [0, 0, 1, 1], [], []>} : vector<256x128xbf16>, vector<128x128xbf16>, vector<256x128xf32> -> vector<256x128xf32>
    %31 = arith.addf %25, %30 : vector<256x128xf32>
    %c0_34 = arith.constant 0 : index
    %c1_35 = arith.constant 1 : index
    %c0_36 = arith.constant 0 : index
    %32 = vector.load %arg7[%c0_34, %c1_35, %c0_36] : memref<18x18x128xbf16, #tpu.memory_space<vmem>>, vector<16x16x128xbf16>
    %33 = vector.shape_cast %32 : vector<16x16x128xbf16> to vector<256x128xbf16>
    %c1_37 = arith.constant 1 : index
    %c0_38 = arith.constant 0 : index
    %c0_39 = arith.constant 0 : index
    %34 = vector.load %arg4[%c1_37, %c0_38, %c0_39] : memref<9x128x128xbf16, #tpu.memory_space<vmem>>, vector<1x128x128xbf16>
    %35 = vector.shape_cast %34 : vector<1x128x128xbf16> to vector<128x128xbf16>
    %cst_40 = arith.constant dense<0.000000e+00> : vector<256x128xf32>
    %36 = tpu.matmul %33, %35, %cst_40 {dimension_numbers = #tpu.dot_dimension_numbers<[1], [0], [0], [1], [0, 0, 1, 1], [], []>} : vector<256x128xbf16>, vector<128x128xbf16>, vector<256x128xf32> -> vector<256x128xf32>
    %37 = arith.addf %31, %36 : vector<256x128xf32>
    %c0_41 = arith.constant 0 : index
    %c2 = arith.constant 2 : index
    %c0_42 = arith.constant 0 : index
    %38 = vector.load %arg7[%c0_41, %c2, %c0_42] : memref<18x18x128xbf16, #tpu.memory_space<vmem>>, vector<16x16x128xbf16>
    %39 = vector.shape_cast %38 : vector<16x16x128xbf16> to vector<256x128xbf16>
    %c2_43 = arith.constant 2 : index
    %c0_44 = arith.constant 0 : index
    %c0_45 = arith.constant 0 : index
    %40 = vector.load %arg4[%c2_43, %c0_44, %c0_45] : memref<9x128x128xbf16, #tpu.memory_space<vmem>>, vector<1x128x128xbf16>
    %41 = vector.shape_cast %40 : vector<1x128x128xbf16> to vector<128x128xbf16>
    %cst_46 = arith.constant dense<0.000000e+00> : vector<256x128xf32>
    %42 = tpu.matmul %39, %41, %cst_46 {dimension_numbers = #tpu.dot_dimension_numbers<[1], [0], [0], [1], [0, 0, 1, 1], [], []>} : vector<256x128xbf16>, vector<128x128xbf16>, vector<256x128xf32> -> vector<256x128xf32>
    %43 = arith.addf %37, %42 : vector<256x128xf32>
    %c1_47 = arith.constant 1 : index
    %c0_48 = arith.constant 0 : index
    %c0_49 = arith.constant 0 : index
    %44 = vector.load %arg7[%c1_47, %c0_48, %c0_49] : memref<18x18x128xbf16, #tpu.memory_space<vmem>>, vector<16x16x128xbf16>
    %45 = vector.shape_cast %44 : vector<16x16x128xbf16> to vector<256x128xbf16>
    %c3 = arith.constant 3 : index
    %c0_50 = arith.constant 0 : index
    %c0_51 = arith.constant 0 : index
    %46 = vector.load %arg4[%c3, %c0_50, %c0_51] : memref<9x128x128xbf16, #tpu.memory_space<vmem>>, vector<1x128x128xbf16>
    %47 = vector.shape_cast %46 : vector<1x128x128xbf16> to vector<128x128xbf16>
    %cst_52 = arith.constant dense<0.000000e+00> : vector<256x128xf32>
    %48 = tpu.matmul %45, %47, %cst_52 {dimension_numbers = #tpu.dot_dimension_numbers<[1], [0], [0], [1], [0, 0, 1, 1], [], []>} : vector<256x128xbf16>, vector<128x128xbf16>, vector<256x128xf32> -> vector<256x128xf32>
    %49 = arith.addf %43, %48 : vector<256x128xf32>
    %c1_53 = arith.constant 1 : index
    %c1_54 = arith.constant 1 : index
    %c0_55 = arith.constant 0 : index
    %50 = vector.load %arg7[%c1_53, %c1_54, %c0_55] : memref<18x18x128xbf16, #tpu.memory_space<vmem>>, vector<16x16x128xbf16>
    %51 = vector.shape_cast %50 : vector<16x16x128xbf16> to vector<256x128xbf16>
    %c4 = arith.constant 4 : index
    %c0_56 = arith.constant 0 : index
    %c0_57 = arith.constant 0 : index
    %52 = vector.load %arg4[%c4, %c0_56, %c0_57] : memref<9x128x128xbf16, #tpu.memory_space<vmem>>, vector<1x128x128xbf16>
    %53 = vector.shape_cast %52 : vector<1x128x128xbf16> to vector<128x128xbf16>
    %cst_58 = arith.constant dense<0.000000e+00> : vector<256x128xf32>
    %54 = tpu.matmul %51, %53, %cst_58 {dimension_numbers = #tpu.dot_dimension_numbers<[1], [0], [0], [1], [0, 0, 1, 1], [], []>} : vector<256x128xbf16>, vector<128x128xbf16>, vector<256x128xf32> -> vector<256x128xf32>
    %55 = arith.addf %49, %54 : vector<256x128xf32>
    %c1_59 = arith.constant 1 : index
    %c2_60 = arith.constant 2 : index
    %c0_61 = arith.constant 0 : index
    %56 = vector.load %arg7[%c1_59, %c2_60, %c0_61] : memref<18x18x128xbf16, #tpu.memory_space<vmem>>, vector<16x16x128xbf16>
    %57 = vector.shape_cast %56 : vector<16x16x128xbf16> to vector<256x128xbf16>
    %c5 = arith.constant 5 : index
    %c0_62 = arith.constant 0 : index
    %c0_63 = arith.constant 0 : index
    %58 = vector.load %arg4[%c5, %c0_62, %c0_63] : memref<9x128x128xbf16, #tpu.memory_space<vmem>>, vector<1x128x128xbf16>
    %59 = vector.shape_cast %58 : vector<1x128x128xbf16> to vector<128x128xbf16>
    %cst_64 = arith.constant dense<0.000000e+00> : vector<256x128xf32>
    %60 = tpu.matmul %57, %59, %cst_64 {dimension_numbers = #tpu.dot_dimension_numbers<[1], [0], [0], [1], [0, 0, 1, 1], [], []>} : vector<256x128xbf16>, vector<128x128xbf16>, vector<256x128xf32> -> vector<256x128xf32>
    %61 = arith.addf %55, %60 : vector<256x128xf32>
    %c2_65 = arith.constant 2 : index
    %c0_66 = arith.constant 0 : index
    %c0_67 = arith.constant 0 : index
    %62 = vector.load %arg7[%c2_65, %c0_66, %c0_67] : memref<18x18x128xbf16, #tpu.memory_space<vmem>>, vector<16x16x128xbf16>
    %63 = vector.shape_cast %62 : vector<16x16x128xbf16> to vector<256x128xbf16>
    %c6 = arith.constant 6 : index
    %c0_68 = arith.constant 0 : index
    %c0_69 = arith.constant 0 : index
    %64 = vector.load %arg4[%c6, %c0_68, %c0_69] : memref<9x128x128xbf16, #tpu.memory_space<vmem>>, vector<1x128x128xbf16>
    %65 = vector.shape_cast %64 : vector<1x128x128xbf16> to vector<128x128xbf16>
    %cst_70 = arith.constant dense<0.000000e+00> : vector<256x128xf32>
    %66 = tpu.matmul %63, %65, %cst_70 {dimension_numbers = #tpu.dot_dimension_numbers<[1], [0], [0], [1], [0, 0, 1, 1], [], []>} : vector<256x128xbf16>, vector<128x128xbf16>, vector<256x128xf32> -> vector<256x128xf32>
    %67 = arith.addf %61, %66 : vector<256x128xf32>
    %c2_71 = arith.constant 2 : index
    %c1_72 = arith.constant 1 : index
    %c0_73 = arith.constant 0 : index
    %68 = vector.load %arg7[%c2_71, %c1_72, %c0_73] : memref<18x18x128xbf16, #tpu.memory_space<vmem>>, vector<16x16x128xbf16>
    %69 = vector.shape_cast %68 : vector<16x16x128xbf16> to vector<256x128xbf16>
    %c7 = arith.constant 7 : index
    %c0_74 = arith.constant 0 : index
    %c0_75 = arith.constant 0 : index
    %70 = vector.load %arg4[%c7, %c0_74, %c0_75] : memref<9x128x128xbf16, #tpu.memory_space<vmem>>, vector<1x128x128xbf16>
    %71 = vector.shape_cast %70 : vector<1x128x128xbf16> to vector<128x128xbf16>
    %cst_76 = arith.constant dense<0.000000e+00> : vector<256x128xf32>
    %72 = tpu.matmul %69, %71, %cst_76 {dimension_numbers = #tpu.dot_dimension_numbers<[1], [0], [0], [1], [0, 0, 1, 1], [], []>} : vector<256x128xbf16>, vector<128x128xbf16>, vector<256x128xf32> -> vector<256x128xf32>
    %73 = arith.addf %67, %72 : vector<256x128xf32>
    %c2_77 = arith.constant 2 : index
    %c2_78 = arith.constant 2 : index
    %c0_79 = arith.constant 0 : index
    %74 = vector.load %arg7[%c2_77, %c2_78, %c0_79] : memref<18x18x128xbf16, #tpu.memory_space<vmem>>, vector<16x16x128xbf16>
    %75 = vector.shape_cast %74 : vector<16x16x128xbf16> to vector<256x128xbf16>
    %c8 = arith.constant 8 : index
    %c0_80 = arith.constant 0 : index
    %c0_81 = arith.constant 0 : index
    %76 = vector.load %arg4[%c8, %c0_80, %c0_81] : memref<9x128x128xbf16, #tpu.memory_space<vmem>>, vector<1x128x128xbf16>
    %77 = vector.shape_cast %76 : vector<1x128x128xbf16> to vector<128x128xbf16>
    %cst_82 = arith.constant dense<0.000000e+00> : vector<256x128xf32>
    %78 = tpu.matmul %75, %77, %cst_82 {dimension_numbers = #tpu.dot_dimension_numbers<[1], [0], [0], [1], [0, 0, 1, 1], [], []>} : vector<256x128xbf16>, vector<128x128xbf16>, vector<256x128xf32> -> vector<256x128xf32>
    %79 = arith.addf %73, %78 : vector<256x128xf32>
    %80 = vector.shape_cast %79 : vector<256x128xf32> to vector<16x16x128xf32>
    %81 = arith.truncf %80 : vector<16x16x128xf32> to vector<16x16x128xbf16>
    %c0_83 = arith.constant 0 : index
    %c0_84 = arith.constant 0 : index
    %c0_85 = arith.constant 0 : index
    %c0_86 = arith.constant 0 : index
    %82 = vector.load %arg5[%c0_83, %c0_84, %c0_85, %c0_86] : memref<1x16x16x128xbf16, #tpu.memory_space<vmem>>, vector<1x16x16x128xbf16>
    %83 = vector.shape_cast %82 : vector<1x16x16x128xbf16> to vector<16x16x128xbf16>
    %84 = vector.shape_cast %81 : vector<16x16x128xbf16> to vector<1x16x16x128xbf16>
    tpu.vector_store %arg5[%c0_83, %c0_84, %c0_85, %c0_86], %84 {strides = array<i32>} : memref<1x16x16x128xbf16, #tpu.memory_space<vmem>>, vector<1x16x16x128xbf16>,
    %cst_87 = arith.constant dense<0.000000e+00> : vector<128xf32>
    %85 = vector.multi_reduction <add>, %79, %cst_87 [0] : vector<256x128xf32> to vector<128xf32>
    %86 = vector.shape_cast %85 : vector<128xf32> to vector<1x128xf32>
    %87 = arith.addf %23, %86 : vector<1x128xf32>
    %88 = arith.mulf %79, %79 : vector<256x128xf32>
    %cst_88 = arith.constant dense<0.000000e+00> : vector<128xf32>
    %89 = vector.multi_reduction <add>, %88, %cst_88 [0] : vector<256x128xf32> to vector<128xf32>
    %90 = vector.shape_cast %89 : vector<128xf32> to vector<1x128xf32>
    %91 = arith.addf %24, %90 : vector<1x128xf32>
    %92 = tpu.concatenate %87, %91 in 0 : vector<1x128xf32>, vector<1x128xf32> -> vector<2x128xf32>
    %c0_89 = arith.constant 0 : index
    %c0_90 = arith.constant 0 : index
    %c0_91 = arith.constant 0 : index
    %93 = vector.load %arg6[%c0_89, %c0_90, %c0_91] : memref<1x2x128xf32, #tpu.memory_space<vmem>>, vector<1x2x128xf32>
    %94 = vector.shape_cast %93 : vector<1x2x128xf32> to vector<2x128xf32>
    %95 = vector.shape_cast %92 : vector<2x128xf32> to vector<1x2x128xf32>
    tpu.vector_store %arg6[%c0_89, %c0_90, %c0_91], %95 {strides = array<i32>} : memref<1x2x128xf32, #tpu.memory_space<vmem>>, vector<1x2x128xf32>,
    return
  }
  func.func @transform_0(%arg0: i32) -> (i32, i32, i32, i32) {
    %c0_i32 = arith.constant 0 : i32
    %c0_i32_0 = arith.constant 0 : i32
    %c0_i32_1 = arith.constant 0 : i32
    %c0_i32_2 = arith.constant 0 : i32
    return %arg0, %c0_i32, %c0_i32_0, %c0_i32_1 : i32, i32, i32, i32
  }
  func.func @transform_1(%arg0: i32) -> (i32, i32) {
    %c0_i32 = arith.constant 0 : i32
    %c0_i32_0 = arith.constant 0 : i32
    %c0_i32_1 = arith.constant 0 : i32
    return %c0_i32, %c0_i32_0 : i32, i32
  }
  func.func @transform_2(%arg0: i32) -> (i32, i32) {
    %c0_i32 = arith.constant 0 : i32
    %c0_i32_0 = arith.constant 0 : i32
    %c0_i32_1 = arith.constant 0 : i32
    return %c0_i32, %c0_i32_0 : i32, i32
  }
  func.func @transform_3(%arg0: i32) -> (i32, i32, i32) {
    %c0_i32 = arith.constant 0 : i32
    %c0_i32_0 = arith.constant 0 : i32
    %c0_i32_1 = arith.constant 0 : i32
    %c0_i32_2 = arith.constant 0 : i32
    return %c0_i32, %c0_i32_0, %c0_i32_1 : i32, i32, i32
  }
  func.func @transform_4(%arg0: i32) -> (i32, i32, i32, i32) {
    %c0_i32 = arith.constant 0 : i32
    %c0_i32_0 = arith.constant 0 : i32
    %c0_i32_1 = arith.constant 0 : i32
    %c0_i32_2 = arith.constant 0 : i32
    return %arg0, %c0_i32, %c0_i32_0, %c0_i32_1 : i32, i32, i32, i32
  }
  func.func @transform_5(%arg0: i32) -> (i32, i32, i32) {
    %c0_i32 = arith.constant 0 : i32
    %c0_i32_0 = arith.constant 0 : i32
    %c0_i32_1 = arith.constant 0 : i32
    return %arg0, %c0_i32, %c0_i32_0 : i32, i32, i32
  }
}

</mosaic_0001>

<llo_original>
// kernel: unet_decoding_block.2
$region0: #{unet_decoding_block.2}
  #allocation0 [shape = 'u32[]', space=smem, size = 0x4, offset = 0x4, fixed_abs, tag = 'smem constant byte address 0x4 - core index']
  #allocation1 [shape = 'u32[144,128]{1,0:T(1,128)}', space=vmem, size = 0x12000, scoped, tag = 'internal scratch']
  #allocation2 [shape = 'bf16[18,18,128]{2,1,0:T(8,128)(2,1)}', space=vmem, size = 0x1b000, scoped, tag = 'scratch operand']
  %s0 = inlined_call_operand.vmem [shape: bf16[2,16,16,128], index: 0, kind: input, shape index: {}]
  %s1 = inlined_call_operand.vmem [shape: bf16[9,128,128], index: 1, kind: input, shape index: {}]
  %s2 = inlined_call_operand.vmem [shape: bf16[2,16,16,128], index: 2, kind: output, shape index: {0}]
  %s3 = inlined_call_operand.vmem [shape: f32[2,2,128], index: 3, kind: output, shape index: {1}]
  %4 = xla_tuple %s2, %s3
  %s5 = sld [smem:[#allocation0]]
  $region49: #{unet_decoding_block.2} parent=0
    _
  %s7 = ssub.s32 1, %s5
  %s8 = scalar_select 0, %s7, %s5
  loop: start=0, step=1, limit=4
  $region2: #{unet_decoding_block.2} parent=0 // loop_pre_header
    _
  $region3: #{unet_decoding_block.2} parent=0 // loop_header
    %s10 = sphi 0, %s14
    %p11 = scmp.ge.s32.totalorder %s10, 4
    %s20 = sphi 0, %s22
    %s23 = sphi 0, %s20
    %s24 = sphi 0, %s23
    %s40 = sphi 0, %s24
    %s44 = sphi 0, %s44
    %s46 = sphi 0, %s44
    %s47 = sphi 0, %s46
    %s61 = sphi 0, %s47
    %s67 = sphi 0, %s69
    %s70 = sphi 0, %s67
    %s71 = sphi 0, %s70
    %s87 = sphi 0, %s71
    %s93 = sphi 0, %s95
    %s96 = sphi 0, %s93
    %s97 = sphi 0, %s96
    %s113 = sphi 0, %s97
  $region4: #{unet_decoding_block.2} parent=0 // loop_header_branch
    %13 = sbr.rel (%p11) target = $region8
  $region5: #{unet_decoding_block.2} parent=0 // loop_body
    %s15 = ssub.s32 %s10, 1
    %s16 = ssub.s32 %s10, 2
    %s17 = sadd.s32 %s10, 1
    %s18 = ssub.s32 %s10, %s17
    %p19 = scmp.eq.s32.totalorder %s18, 0
    %s21 = sadd.s32 %s20, 1
    %s22 = scalar_select %p19, %s20, %s21
    %p25 = pneg %p19
    %p26 = scmp.eq.s32.totalorder %s10, 1
    %p27 = por %p25, %p26
    %p28 = scmp.ne.s32.totalorder %s20, %s23
    %p29 = scmp.eq.s32.totalorder %s10, 0
    %p30 = por %p28, %p29
    %p31 = scmp.ne.s32.totalorder %s20, %s23
    %p32 = scmp.eq.s32.totalorder %s15, 1
    %p33 = por %p31, %p32
    %p34 = scmp.ne.s32.totalorder %s23, %s24
    %p35 = scmp.eq.s32.totalorder %s15, 0
    %p36 = por %p34, %p35
    %p37 = scmp.ne.s32.totalorder %s23, %s24
    %p38 = scmp.eq.s32.totalorder %s16, 1
    %p39 = por %p37, %p38
    %p41 = scmp.ne.s32.totalorder %s24, %s40
    %p42 = scmp.eq.s32.totalorder %s16, 0
    %p43 = por %p41, %p42
    %s45 = sadd.s32 %s44, 1
    %p48 = scmp.eq.s32.totalorder %s10, 1
    %p49 = scmp.ne.s32.totalorder %s44, %s46
    %p50 = scmp.eq.s32.totalorder %s10, 0
    %p51 = por %p49, %p50
    %p52 = scmp.ne.s32.totalorder %s44, %s46
    %p53 = scmp.eq.s32.totalorder %s15, 1
    %p54 = por %p52, %p53
    %p55 = scmp.ne.s32.totalorder %s46, %s47
    %p56 = scmp.eq.s32.totalorder %s15, 0
    %p57 = por %p55, %p56
    %p58 = scmp.ne.s32.totalorder %s46, %s47
    %p59 = scmp.eq.s32.totalorder %s16, 1
    %p60 = por %p58, %p59
    %p62 = scmp.ne.s32.totalorder %s47, %s61
    %p63 = scmp.eq.s32.totalorder %s16, 0
    %p64 = por %p62, %p63
    %s65 = ssub.s32 %s10, %s17
    %p66 = scmp.eq.s32.totalorder %s65, 0
    %s68 = sadd.s32 %s67, 1
    %s69 = scalar_select %p66, %s67, %s68
    %p72 = pneg %p66
    %p73 = scmp.eq.s32.totalorder %s10, 1
    %p74 = por %p72, %p73
    %p75 = scmp.ne.s32.totalorder %s67, %s70
    %p76 = scmp.eq.s32.totalorder %s10, 0
    %p77 = por %p75, %p76
    %p78 = scmp.ne.s32.totalorder %s67, %s70
    %p79 = scmp.eq.s32.totalorder %s15, 1
    %p80 = por %p78, %p79
    %p81 = scmp.ne.s32.totalorder %s70, %s71
    %p82 = scmp.eq.s32.totalorder %s15, 0
    %p83 = por %p81, %p82
    %p84 = scmp.ne.s32.totalorder %s70, %s71
    %p85 = scmp.eq.s32.totalorder %s16, 1
    %p86 = por %p84, %p85
    %p88 = scmp.ne.s32.totalorder %s71, %s87
    %p89 = scmp.eq.s32.totalorder %s16, 0
    %p90 = por %p88, %p89
    %s91 = ssub.s32 %s10, %s17
    %p92 = scmp.eq.s32.totalorder %s91, 0
    %s94 = sadd.s32 %s93, 1
    %s95 = scalar_select %p92, %s93, %s94
    %p98 = pneg %p92
    %p99 = scmp.eq.s32.totalorder %s10, 1
    %p100 = por %p98, %p99
    %p101 = scmp.ne.s32.totalorder %s93, %s96
    %p102 = scmp.eq.s32.totalorder %s10, 0
    %p103 = por %p101, %p102
    %p104 = scmp.ne.s32.totalorder %s93, %s96
    %p105 = scmp.eq.s32.totalorder %s15, 1
    %p106 = por %p104, %p105
    %p107 = scmp.ne.s32.totalorder %s96, %s97
    %p108 = scmp.eq.s32.totalorder %s15, 0
    %p109 = por %p107, %p108
    %p110 = scmp.ne.s32.totalorder %s96, %s97
    %p111 = scmp.eq.s32.totalorder %s16, 1
    %p112 = por %p110, %p111
    %p114 = scmp.ne.s32.totalorder %s97, %s113
    %p115 = scmp.eq.s32.totalorder %s16, 0
    %p116 = por %p114, %p115
    %p117 = scmp.le.s32.totalorder 1, %s10
    %p118 = scmp.lt.s32.totalorder %s10, 3
    %p119 = pnand %p117, %p118
    %p120 = pneg %p119
    // Predicated region
    $region9: #{unet_decoding_block.2} parent=5 // pred_check
      _
    $region10: #{unet_decoding_block.2} parent=5 // pred_check_branch
      %122 = sbr.rel (%p119) target = $region12
    $region11: #{unet_decoding_block.2} parent=5 // pred_region
      %s123 = ssub.s32 %s10, 1
      // Predicated region
      $region13: #{unet_decoding_block.2} parent=11 // pred_check
        %p124 = pneg %p57
      $region14: #{unet_decoding_block.2} parent=11 // pred_check_branch
        %126 = sbr.rel (%p124) target = $region16
      $region15: #{unet_decoding_block.2} parent=11 // pred_region
        _
      $region16: #{unet_decoding_block.2} parent=11 // pred_fallthru
        _
    $region12: #{unet_decoding_block.2} parent=5 // pred_fallthru
      _
    %p127 = scmp.lt.s32.totalorder %s10, 2
    // Predicated region
    $region17: #{unet_decoding_block.2} parent=5 // pred_check
      %p128 = pneg %p127
    $region18: #{unet_decoding_block.2} parent=5 // pred_check_branch
      %130 = sbr.rel (%p128) target = $region20
    $region19: #{unet_decoding_block.2} parent=5 // pred_region
      // Predicated region
      $region21: #{unet_decoding_block.2} parent=19 // pred_check
        %p131 = pneg %p30
      $region22: #{unet_decoding_block.2} parent=19 // pred_check_branch
        %133 = sbr.rel (%p131) target = $region24
      $region23: #{unet_decoding_block.2} parent=19 // pred_region
        %p134 = scmp.lt.s32.totalorder %s10, 1
        %s135 = scalar_select %p134, %s10, 1
        %s136 = smul.addr %s135, 32
        %s137 = smul.addr %s136, 4
        %s138 = scalar_lea.vmem %s0, %s137
      $region24: #{unet_decoding_block.2} parent=19 // pred_fallthru
        _
    $region20: #{unet_decoding_block.2} parent=5 // pred_fallthru
      _
    %p139 = scmp.le.s32.totalorder 1, %s10
    %p140 = scmp.lt.s32.totalorder %s10, 3
    %p141 = pnand %p139, %p140
    %p142 = pneg %p141
    // Predicated region
    $region25: #{unet_decoding_block.2} parent=5 // pred_check
      _
    $region26: #{unet_decoding_block.2} parent=5 // pred_check_branch
      %144 = sbr.rel (%p141) target = $region28
    $region27: #{unet_decoding_block.2} parent=5 // pred_region
      %s145 = ssub.s32 %s10, 1
      %p146 = scmp.lt.s32.totalorder %s15, 1
      %s147 = scalar_select %p146, %s15, 1
      %s148 = smul.addr %s147, 32
      %s149 = smul.addr %s148, 4
      %s150 = scalar_lea.vmem %s0, %s149
      %p151 = pneg %p36
      %p152 = pneg %p33
      %p153 = pneg %p57
      %p154 = pneg %p54
      %p155 = pneg %p83
      %p156 = pneg %p80
      %p157 = scmp.lt.s32.totalorder %s15, 1
      %s158 = scalar_select %p157, %s15, 1
      %s159 = smul.addr %s158, 32
      %s160 = smul.addr %s159, 4
      %s161 = scalar_lea.vmem %s2, %s160
      %p162 = pneg %p109
      %p163 = pneg %p106
      %p164 = scmp.lt.s32.totalorder %s15, 1
      %s165 = scalar_select %p164, %s15, 1
      %s166 = smul.addr %s165, 2
      %s167 = scalar_lea.vmem %s3, %s166
      %p168 = scmp.lt.s32.totalorder %s15, 1
      %s169 = scalar_select %p168, %s15, 1
      %s170 = smul.addr %s169, 32
      %s171 = smul.addr %s170, 4
      %s172 = scalar_lea.vmem %s0, %s171
      %p173 = scmp.lt.s32.totalorder %s15, 1
      %s174 = scalar_select %p173, %s15, 1
      %s175 = smul.addr %s174, 32
      %s176 = smul.addr %s175, 4
      %s177 = scalar_lea.vmem %s2, %s176
      %p178 = scmp.lt.s32.totalorder %s15, 1
      %s179 = scalar_select %p178, %s15, 1
      %s180 = smul.addr %s179, 2
      %s181 = scalar_lea.vmem %s3, %s180
      %v183 = vld [vmem:[%s172] sm:$0xf]
      %v184 = vld [vmem:[%s172 + $0x4] sm:$0xf]
      %v185 = vld [vmem:[%s172 + $0x8] sm:$0xf]
      %v186 = vld [vmem:[%s172 + $0xc] sm:$0xf]
      %v187 = vld [vmem:[%s172 + $0x10] sm:$0xf]
      %v188 = vld [vmem:[%s172 + $0x14] sm:$0xf]
      %v189 = vld [vmem:[%s172 + $0x18] sm:$0xf]
      %v190 = vld [vmem:[%s172 + $0x1c] sm:$0xf]
      %v191 = vld [vmem:[%s172 + $0x20] sm:$0xf]
      %v192 = vld [vmem:[%s172 + $0x24] sm:$0xf]
      %v193 = vld [vmem:[%s172 + $0x28] sm:$0xf]
      %v194 = vld [vmem:[%s172 + $0x2c] sm:$0xf]
      %v195 = vld [vmem:[%s172 + $0x30] sm:$0xf]
      %v196 = vld [vmem:[%s172 + $0x34] sm:$0xf]
      %v197 = vld [vmem:[%s172 + $0x38] sm:$0xf]
      %v198 = vld [vmem:[%s172 + $0x3c] sm:$0xf]
      %v199 = vld [vmem:[%s172 + $0x40] sm:$0xf]
      %v200 = vld [vmem:[%s172 + $0x44] sm:$0xf]
      %v201 = vld [vmem:[%s172 + $0x48] sm:$0xf]
      %v202 = vld [vmem:[%s172 + $0x4c] sm:$0xf]
      %v203 = vld [vmem:[%s172 + $0x50] sm:$0xf]
      %v204 = vld [vmem:[%s172 + $0x54] sm:$0xf]
      %v205 = vld [vmem:[%s172 + $0x58] sm:$0xf]
      %v206 = vld [vmem:[%s172 + $0x5c] sm:$0xf]
      %v207 = vld [vmem:[%s172 + $0x60] sm:$0xf]
      %v208 = vld [vmem:[%s172 + $0x64] sm:$0xf]
      %v209 = vld [vmem:[%s172 + $0x68] sm:$0xf]
      %v210 = vld [vmem:[%s172 + $0x6c] sm:$0xf]
      %v211 = vld [vmem:[%s172 + $0x70] sm:$0xf]
      %v212 = vld [vmem:[%s172 + $0x74] sm:$0xf]
      %v213 = vld [vmem:[%s172 + $0x78] sm:$0xf]
      %v214 = vld [vmem:[%s172 + $0x7c] sm:$0xf]
      %215 = vst [vmem:[#allocation2] sm:$0xf] 0
      %216 = vst [vmem:[#allocation2 + $0x4] sm:$0xf] 0
      %217 = vst [vmem:[#allocation2 + $0x8] sm:$0x1] 0
      %s218 = scalar_lea.vmem [#allocation2], 204
      %219 = vst [vmem:[%s218] sm:$0xf] 0
      %220 = vst [vmem:[%s218 + $0x4] sm:$0xf] 0
      %221 = vst [vmem:[%s218 + $0x8] sm:$0x1] 0
      %vm222 = vcmask 1040384
      %vm223 = vsmask.f32 256
      %vm224 = vmand %vm222, %vm223
      %v225 = vld [vmem:[#allocation2] sm:$0x1]
      %v226 = vsel %vm224, 0, %v225
      %227 = vst [vmem:[#allocation2] sm:$0x1] %v226
      %v228 = vld [vmem:[#allocation2 + $0xc] sm:$0x1]
      %v229 = vsel %vm224, 0, %v228
      %230 = vst [vmem:[#allocation2 + $0xc] sm:$0x1] %v229
      %v231 = vld [vmem:[#allocation2 + $0x18] sm:$0x1]
      %v232 = vsel %vm224, 0, %v231
      %233 = vst [vmem:[#allocation2 + $0x18] sm:$0x1] %v232
      %v234 = vld [vmem:[#allocation2 + $0x24] sm:$0x1]
      %v235 = vsel %vm224, 0, %v234
      %236 = vst [vmem:[#allocation2 + $0x24] sm:$0x1] %v235
      %v237 = vld [vmem:[#allocation2 + $0x30] sm:$0x1]
      %v238 = vsel %vm224, 0, %v237
      %239 = vst [vmem:[#allocation2 + $0x30] sm:$0x1] %v238
      %v240 = vld [vmem:[#allocation2 + $0x3c] sm:$0x1]
      %v241 = vsel %vm224, 0, %v240
      %242 = vst [vmem:[#allocation2 + $0x3c] sm:$0x1] %v241
      %v243 = vld [vmem:[#allocation2 + $0x48] sm:$0x1]
      %v244 = vsel %vm224, 0, %v243
      %245 = vst [vmem:[#allocation2 + $0x48] sm:$0x1] %v244
      %v246 = vld [vmem:[#allocation2 + $0x54] sm:$0x1]
      %v247 = vsel %vm224, 0, %v246
      %248 = vst [vmem:[#allocation2 + $0x54] sm:$0x1] %v247
      %v249 = vld [vmem:[#allocation2 + $0x60] sm:$0x1]
      %v250 = vsel %vm224, 0, %v249
      %251 = vst [vmem:[#allocation2 + $0x60] sm:$0x1] %v250
      %v252 = vld [vmem:[#allocation2 + $0x6c] sm:$0x1]
      %v253 = vsel %vm224, 0, %v252
      %254 = vst [vmem:[#allocation2 + $0x6c] sm:$0x1] %v253
      %v255 = vld [vmem:[#allocation2 + $0x78] sm:$0x1]
      %v256 = vsel %vm224, 0, %v255
      %257 = vst [vmem:[#allocation2 + $0x78] sm:$0x1] %v256
      %v258 = vld [vmem:[#allocation2 + $0x84] sm:$0x1]
      %v259 = vsel %vm224, 0, %v258
      %260 = vst [vmem:[#allocation2 + $0x84] sm:$0x1] %v259
      %v261 = vld [vmem:[#allocation2 + $0x90] sm:$0x1]
      %v262 = vsel %vm224, 0, %v261
      %263 = vst [vmem:[#allocation2 + $0x90] sm:$0x1] %v262
      %v264 = vld [vmem:[#allocation2 + $0x9c] sm:$0x1]
      %v265 = vsel %vm224, 0, %v264
      %266 = vst [vmem:[#allocation2 + $0x9c] sm:$0x1] %v265
      %v267 = vld [vmem:[#allocation2 + $0xa8] sm:$0x1]
      %v268 = vsel %vm224, 0, %v267
      %269 = vst [vmem:[#allocation2 + $0xa8] sm:$0x1] %v268
      %v270 = vld [vmem:[#allocation2 + $0xb4] sm:$0x1]
      %v271 = vsel %vm224, 0, %v270
      %272 = vst [vmem:[#allocation2 + $0xb4] sm:$0x1] %v271
      %v273 = vld [vmem:[#allocation2 + $0xc0] sm:$0x1]
      %v274 = vsel %vm224, 0, %v273
      %275 = vst [vmem:[#allocation2 + $0xc0] sm:$0x1] %v274
      %v276 = vld [vmem:[#allocation2 + $0xcc] sm:$0x1]
      %v277 = vsel %vm224, 0, %v276
      %278 = vst [vmem:[#allocation2 + $0xcc] sm:$0x1] %v277
      %vm279 = vsmask.f32 7938
      %vm280 = vmand %vm222, %vm279
      %v281 = vld [vmem:[#allocation2 + $0x8] sm:$0x1]
      %v282 = vsel %vm280, 0, %v281
      %283 = vst [vmem:[#allocation2 + $0x8] sm:$0x1] %v282
      %v284 = vld [vmem:[#allocation2 + $0x14] sm:$0x1]
      %v285 = vsel %vm280, 0, %v284
      %286 = vst [vmem:[#allocation2 + $0x14] sm:$0x1] %v285
      %v287 = vld [vmem:[#allocation2 + $0x20] sm:$0x1]
      %v288 = vsel %vm280, 0, %v287
      %289 = vst [vmem:[#allocation2 + $0x20] sm:$0x1] %v288
      %v290 = vld [vmem:[#allocation2 + $0x2c] sm:$0x1]
      %v291 = vsel %vm280, 0, %v290
      %292 = vst [vmem:[#allocation2 + $0x2c] sm:$0x1] %v291
      %v293 = vld [vmem:[#allocation2 + $0x38] sm:$0x1]
      %v294 = vsel %vm280, 0, %v293
      %295 = vst [vmem:[#allocation2 + $0x38] sm:$0x1] %v294
      %v296 = vld [vmem:[#allocation2 + $0x44] sm:$0x1]
      %v297 = vsel %vm280, 0, %v296
      %298 = vst [vmem:[#allocation2 + $0x44] sm:$0x1] %v297
      %v299 = vld [vmem:[#allocation2 + $0x50] sm:$0x1]
      %v300 = vsel %vm280, 0, %v299
      %301 = vst [vmem:[#allocation2 + $0x50] sm:$0x1] %v300
      %v302 = vld [vmem:[#allocation2 + $0x5c] sm:$0x1]
      %v303 = vsel %vm280, 0, %v302
      %304 = vst [vmem:[#allocation2 + $0x5c] sm:$0x1] %v303
      %v305 = vld [vmem:[#allocation2 + $0x68] sm:$0x1]
      %v306 = vsel %vm280, 0, %v305
      %307 = vst [vmem:[#allocation2 + $0x68] sm:$0x1] %v306
      %v308 = vld [vmem:[#allocation2 + $0x74] sm:$0x1]
      %v309 = vsel %vm280, 0, %v308
      %310 = vst [vmem:[#allocation2 + $0x74] sm:$0x1] %v309
      %v311 = vld [vmem:[#allocation2 + $0x80] sm:$0x1]
      %v312 = vsel %vm280, 0, %v311
      %313 = vst [vmem:[#allocation2 + $0x80] sm:$0x1] %v312
      %v314 = vld [vmem:[#allocation2 + $0x8c] sm:$0x1]
      %v315 = vsel %vm280, 0, %v314
      %316 = vst [vmem:[#allocation2 + $0x8c] sm:$0x1] %v315
      %v317 = vld [vmem:[#allocation2 + $0x98] sm:$0x1]
      %v318 = vsel %vm280, 0, %v317
      %319 = vst [vmem:[#allocation2 + $0x98] sm:$0x1] %v318
      %v320 = vld [vmem:[#allocation2 + $0xa4] sm:$0x1]
      %v321 = vsel %vm280, 0, %v320
      %322 = vst [vmem:[#allocation2 + $0xa4] sm:$0x1] %v321
      %v323 = vld [vmem:[#allocation2 + $0xb0] sm:$0x1]
      %v324 = vsel %vm280, 0, %v323
      %325 = vst [vmem:[#allocation2 + $0xb0] sm:$0x1] %v324
      %v326 = vld [vmem:[#allocation2 + $0xbc] sm:$0x1]
      %v327 = vsel %vm280, 0, %v326
      %328 = vst [vmem:[#allocation2 + $0xbc] sm:$0x1] %v327
      %v329 = vld [vmem:[#allocation2 + $0xc8] sm:$0x1]
      %v330 = vsel %vm280, 0, %v329
      %331 = vst [vmem:[#allocation2 + $0xc8] sm:$0x1] %v330
      %v332 = vld [vmem:[#allocation2 + $0xd4] sm:$0x1]
      %v333 = vsel %vm280, 0, %v332
      %334 = vst [vmem:[#allocation2 + $0xd4] sm:$0x1] %v333
      %vm335 = vsmask.f32 4368
      %vm336 = vmor %vm223, %vm335
      %v338 = vshrl.u32 %v183, 16
      %v340 = vrot.slane %v338, 7
      %v341 = vshll.u32 %v183, 16
      %v343 = vor.u32 %v340, %v341
      %v344 = vrot.slane %v340, 4
      %v346 = vshrl.u32 %v184, 16
      %v348 = vrot.slane %v346, 7
      %v349 = vshll.u32 %v184, 16
      %v351 = vor.u32 %v348, %v349
      %v352 = vsel %vm336, %v344, %v351
      %v353 = vrot.slane %v348, 4
      %v355 = vshrl.u32 %v185, 16
      %v357 = vrot.slane %v355, 7
      %v358 = vshll.u32 %v185, 16
      %v360 = vor.u32 %v357, %v358
      %v361 = vrot.slane %v357, 4
      %v363 = vshrl.u32 %v186, 16
      %v365 = vrot.slane %v363, 7
      %v366 = vshll.u32 %v186, 16
      %v368 = vor.u32 %v365, %v366
      %v369 = vsel %vm336, %v361, %v368
      %v370 = vrot.slane %v365, 4
      %v372 = vshrl.u32 %v187, 16
      %v374 = vrot.slane %v372, 7
      %v375 = vshll.u32 %v187, 16
      %v377 = vor.u32 %v374, %v375
      %v378 = vrot.slane %v374, 4
      %v380 = vshrl.u32 %v188, 16
      %v382 = vrot.slane %v380, 7
      %v383 = vshll.u32 %v188, 16
      %v385 = vor.u32 %v382, %v383
      %v386 = vsel %vm336, %v378, %v385
      %v387 = vrot.slane %v382, 4
      %v389 = vshrl.u32 %v189, 16
      %v391 = vrot.slane %v389, 7
      %v392 = vshll.u32 %v189, 16
      %v394 = vor.u32 %v391, %v392
      %v395 = vrot.slane %v391, 4
      %v397 = vshrl.u32 %v190, 16
      %v399 = vrot.slane %v397, 7
      %v400 = vshll.u32 %v190, 16
      %v402 = vor.u32 %v399, %v400
      %v403 = vsel %vm336, %v395, %v402
      %v404 = vrot.slane %v399, 4
      %v406 = vshrl.u32 %v191, 16
      %v408 = vrot.slane %v406, 7
      %v409 = vshll.u32 %v191, 16
      %v411 = vor.u32 %v408, %v409
      %v412 = vrot.slane %v408, 4
      %v414 = vshrl.u32 %v192, 16
      %v416 = vrot.slane %v414, 7
      %v417 = vshll.u32 %v192, 16
      %v419 = vor.u32 %v416, %v417
      %v420 = vsel %vm336, %v412, %v419
      %v421 = vrot.slane %v416, 4
      %v423 = vshrl.u32 %v193, 16
      %v425 = vrot.slane %v423, 7
      %v426 = vshll.u32 %v193, 16
      %v428 = vor.u32 %v425, %v426
      %v429 = vrot.slane %v425, 4
      %v431 = vshrl.u32 %v194, 16
      %v433 = vrot.slane %v431, 7
      %v434 = vshll.u32 %v194, 16
      %v436 = vor.u32 %v433, %v434
      %v437 = vsel %vm336, %v429, %v436
      %v438 = vrot.slane %v433, 4
      %v440 = vshrl.u32 %v195, 16
      %v442 = vrot.slane %v440, 7
      %v443 = vshll.u32 %v195, 16
      %v445 = vor.u32 %v442, %v443
      %v446 = vrot.slane %v442, 4
      %v448 = vshrl.u32 %v196, 16
      %v450 = vrot.slane %v448, 7
      %v451 = vshll.u32 %v196, 16
      %v453 = vor.u32 %v450, %v451
      %v454 = vsel %vm336, %v446, %v453
      %v455 = vrot.slane %v450, 4
      %v457 = vshrl.u32 %v197, 16
      %v459 = vrot.slane %v457, 7
      %v460 = vshll.u32 %v197, 16
      %v462 = vor.u32 %v459, %v460
      %v463 = vrot.slane %v459, 4
      %v465 = vshrl.u32 %v198, 16
      %v467 = vrot.slane %v465, 7
      %v468 = vshll.u32 %v198, 16
      %v470 = vor.u32 %v467, %v468
      %v471 = vsel %vm336, %v463, %v470
      %v472 = vrot.slane %v467, 4
      %v474 = vshrl.u32 %v199, 16
      %v476 = vrot.slane %v474, 7
      %v477 = vshll.u32 %v199, 16
      %v479 = vor.u32 %v476, %v477
      %v480 = vrot.slane %v476, 4
      %v482 = vshrl.u32 %v200, 16
      %v484 = vrot.slane %v482, 7
      %v485 = vshll.u32 %v200, 16
      %v487 = vor.u32 %v484, %v485
      %v488 = vsel %vm336, %v480, %v487
      %v489 = vrot.slane %v484, 4
      %v491 = vshrl.u32 %v201, 16
      %v493 = vrot.slane %v491, 7
      %v494 = vshll.u32 %v201, 16
      %v496 = vor.u32 %v493, %v494
      %v497 = vrot.slane %v493, 4
      %v499 = vshrl.u32 %v202, 16
      %v501 = vrot.slane %v499, 7
      %v502 = vshll.u32 %v202, 16
      %v504 = vor.u32 %v501, %v502
      %v505 = vsel %vm336, %v497, %v504
      %v506 = vrot.slane %v501, 4
      %v508 = vshrl.u32 %v203, 16
      %v510 = vrot.slane %v508, 7
      %v511 = vshll.u32 %v203, 16
      %v513 = vor.u32 %v510, %v511
      %v514 = vrot.slane %v510, 4
      %v516 = vshrl.u32 %v204, 16
      %v518 = vrot.slane %v516, 7
      %v519 = vshll.u32 %v204, 16
      %v521 = vor.u32 %v518, %v519
      %v522 = vsel %vm336, %v514, %v521
      %v523 = vrot.slane %v518, 4
      %v525 = vshrl.u32 %v205, 16
      %v527 = vrot.slane %v525, 7
      %v528 = vshll.u32 %v205, 16
      %v530 = vor.u32 %v527, %v528
      %v531 = vrot.slane %v527, 4
      %v533 = vshrl.u32 %v206, 16
      %v535 = vrot.slane %v533, 7
      %v536 = vshll.u32 %v206, 16
      %v538 = vor.u32 %v535, %v536
      %v539 = vsel %vm336, %v531, %v538
      %v540 = vrot.slane %v535, 4
      %v542 = vshrl.u32 %v207, 16
      %v544 = vrot.slane %v542, 7
      %v545 = vshll.u32 %v207, 16
      %v547 = vor.u32 %v544, %v545
      %v548 = vrot.slane %v544, 4
      %v550 = vshrl.u32 %v208, 16
      %v552 = vrot.slane %v550, 7
      %v553 = vshll.u32 %v208, 16
      %v555 = vor.u32 %v552, %v553
      %v556 = vsel %vm336, %v548, %v555
      %v557 = vrot.slane %v552, 4
      %v559 = vshrl.u32 %v209, 16
      %v561 = vrot.slane %v559, 7
      %v562 = vshll.u32 %v209, 16
      %v564 = vor.u32 %v561, %v562
      %v565 = vrot.slane %v561, 4
      %v567 = vshrl.u32 %v210, 16
      %v569 = vrot.slane %v567, 7
      %v570 = vshll.u32 %v210, 16
      %v572 = vor.u32 %v569, %v570
      %v573 = vsel %vm336, %v565, %v572
      %v574 = vrot.slane %v569, 4
      %v576 = vshrl.u32 %v211, 16
      %v578 = vrot.slane %v576, 7
      %v579 = vshll.u32 %v211, 16
      %v581 = vor.u32 %v578, %v579
      %v582 = vrot.slane %v578, 4
      %v584 = vshrl.u32 %v212, 16
      %v586 = vrot.slane %v584, 7
      %v587 = vshll.u32 %v212, 16
      %v589 = vor.u32 %v586, %v587
      %v590 = vsel %vm336, %v582, %v589
      %v591 = vrot.slane %v586, 4
      %v593 = vshrl.u32 %v213, 16
      %v595 = vrot.slane %v593, 7
      %v596 = vshll.u32 %v213, 16
      %v598 = vor.u32 %v595, %v596
      %v599 = vrot.slane %v595, 4
      %v601 = vshrl.u32 %v214, 16
      %v603 = vrot.slane %v601, 7
      %v604 = vshll.u32 %v214, 16
      %v606 = vor.u32 %v603, %v604
      %v607 = vsel %vm336, %v599, %v606
      %v608 = vrot.slane %v603, 4
      %s657 = scalar_lea.vmem [#allocation2], 12
      %vm658 = vcmask 1043456
      %vm659 = vmand %vm658, %vm279
      %v660 = vld [vmem:[%s657] sm:$0xf]
      %v661 = vsel %vm659, %v343, %v660
      %662 = vst [vmem:[%s657] sm:$0xf] %v661
      %663 = vst [vmem:[%s657 + $0x4] sm:$0xf] %v352
      %v664 = vld [vmem:[%s657 + $0x8] sm:$0x1]
      %v665 = vsel %vm224, %v353, %v664
      %666 = vst [vmem:[%s657 + $0x8] sm:$0x1] %v665
      %v667 = vld [vmem:[%s657 + $0xc] sm:$0xf]
      %v668 = vsel %vm659, %v360, %v667
      %669 = vst [vmem:[%s657 + $0xc] sm:$0xf] %v668
      %670 = vst [vmem:[%s657 + $0x10] sm:$0xf] %v369
      %v671 = vld [vmem:[%s657 + $0x14] sm:$0x1]
      %v672 = vsel %vm224, %v370, %v671
      %673 = vst [vmem:[%s657 + $0x14] sm:$0x1] %v672
      %v674 = vld [vmem:[%s657 + $0x18] sm:$0xf]
      %v675 = vsel %vm659, %v377, %v674
      %676 = vst [vmem:[%s657 + $0x18] sm:$0xf] %v675
      %677 = vst [vmem:[%s657 + $0x1c] sm:$0xf] %v386
      %v678 = vld [vmem:[%s657 + $0x20] sm:$0x1]
      %v679 = vsel %vm224, %v387, %v678
      %680 = vst [vmem:[%s657 + $0x20] sm:$0x1] %v679
      %v681 = vld [vmem:[%s657 + $0x24] sm:$0xf]
      %v682 = vsel %vm659, %v394, %v681
      %683 = vst [vmem:[%s657 + $0x24] sm:$0xf] %v682
      %684 = vst [vmem:[%s657 + $0x28] sm:$0xf] %v403
      %v685 = vld [vmem:[%s657 + $0x2c] sm:$0x1]
      %v686 = vsel %vm224, %v404, %v685
      %687 = vst [vmem:[%s657 + $0x2c] sm:$0x1] %v686
      %v688 = vld [vmem:[%s657 + $0x30] sm:$0xf]
      %v689 = vsel %vm659, %v411, %v688
      %690 = vst [vmem:[%s657 + $0x30] sm:$0xf] %v689
      %691 = vst [vmem:[%s657 + $0x34] sm:$0xf] %v420
      %v692 = vld [vmem:[%s657 + $0x38] sm:$0x1]
      %v693 = vsel %vm224, %v421, %v692
      %694 = vst [vmem:[%s657 + $0x38] sm:$0x1] %v693
      %v695 = vld [vmem:[%s657 + $0x3c] sm:$0xf]
      %v696 = vsel %vm659, %v428, %v695
      %697 = vst [vmem:[%s657 + $0x3c] sm:$0xf] %v696
      %698 = vst [vmem:[%s657 + $0x40] sm:$0xf] %v437
      %v699 = vld [vmem:[%s657 + $0x44] sm:$0x1]
      %v700 = vsel %vm224, %v438, %v699
      %701 = vst [vmem:[%s657 + $0x44] sm:$0x1] %v700
      %v702 = vld [vmem:[%s657 + $0x48] sm:$0xf]
      %v703 = vsel %vm659, %v445, %v702
      %704 = vst [vmem:[%s657 + $0x48] sm:$0xf] %v703
      %705 = vst [vmem:[%s657 + $0x4c] sm:$0xf] %v454
      %v706 = vld [vmem:[%s657 + $0x50] sm:$0x1]
      %v707 = vsel %vm224, %v455, %v706
      %708 = vst [vmem:[%s657 + $0x50] sm:$0x1] %v707
      %v709 = vld [vmem:[%s657 + $0x54] sm:$0xf]
      %v710 = vsel %vm659, %v462, %v709
      %711 = vst [vmem:[%s657 + $0x54] sm:$0xf] %v710
      %712 = vst [vmem:[%s657 + $0x58] sm:$0xf] %v471
      %v713 = vld [vmem:[%s657 + $0x5c] sm:$0x1]
      %v714 = vsel %vm224, %v472, %v713
      %715 = vst [vmem:[%s657 + $0x5c] sm:$0x1] %v714
      %v716 = vld [vmem:[%s657 + $0x60] sm:$0xf]
      %v717 = vsel %vm659, %v479, %v716
      %718 = vst [vmem:[%s657 + $0x60] sm:$0xf] %v717
      %719 = vst [vmem:[%s657 + $0x64] sm:$0xf] %v488
      %v720 = vld [vmem:[%s657 + $0x68] sm:$0x1]
      %v721 = vsel %vm224, %v489, %v720
      %722 = vst [vmem:[%s657 + $0x68] sm:$0x1] %v721
      %v723 = vld [vmem:[%s657 + $0x6c] sm:$0xf]
      %v724 = vsel %vm659, %v496, %v723
      %725 = vst [vmem:[%s657 + $0x6c] sm:$0xf] %v724
      %726 = vst [vmem:[%s657 + $0x70] sm:$0xf] %v505
      %v727 = vld [vmem:[%s657 + $0x74] sm:$0x1]
      %v728 = vsel %vm224, %v506, %v727
      %729 = vst [vmem:[%s657 + $0x74] sm:$0x1] %v728
      %v730 = vld [vmem:[%s657 + $0x78] sm:$0xf]
      %v731 = vsel %vm659, %v513, %v730
      %732 = vst [vmem:[%s657 + $0x78] sm:$0xf] %v731
      %733 = vst [vmem:[%s657 + $0x7c] sm:$0xf] %v522
      %v734 = vld [vmem:[%s657 + $0x80] sm:$0x1]
      %v735 = vsel %vm224, %v523, %v734
      %736 = vst [vmem:[%s657 + $0x80] sm:$0x1] %v735
      %v737 = vld [vmem:[%s657 + $0x84] sm:$0xf]
      %v738 = vsel %vm659, %v530, %v737
      %739 = vst [vmem:[%s657 + $0x84] sm:$0xf] %v738
      %740 = vst [vmem:[%s657 + $0x88] sm:$0xf] %v539
      %v741 = vld [vmem:[%s657 + $0x8c] sm:$0x1]
      %v742 = vsel %vm224, %v540, %v741
      %743 = vst [vmem:[%s657 + $0x8c] sm:$0x1] %v742
      %v744 = vld [vmem:[%s657 + $0x90] sm:$0xf]
      %v745 = vsel %vm659, %v547, %v744
      %746 = vst [vmem:[%s657 + $0x90] sm:$0xf] %v745
      %747 = vst [vmem:[%s657 + $0x94] sm:$0xf] %v556
      %v748 = vld [vmem:[%s657 + $0x98] sm:$0x1]
      %v749 = vsel %vm224, %v557, %v748
      %750 = vst [vmem:[%s657 + $0x98] sm:$0x1] %v749
      %v751 = vld [vmem:[%s657 + $0x9c] sm:$0xf]
      %v752 = vsel %vm659, %v564, %v751
      %753 = vst [vmem:[%s657 + $0x9c] sm:$0xf] %v752
      %754 = vst [vmem:[%s657 + $0xa0] sm:$0xf] %v573
      %v755 = vld [vmem:[%s657 + $0xa4] sm:$0x1]
      %v756 = vsel %vm224, %v574, %v755
      %757 = vst [vmem:[%s657 + $0xa4] sm:$0x1] %v756
      %v758 = vld [vmem:[%s657 + $0xa8] sm:$0xf]
      %v759 = vsel %vm659, %v581, %v758
      %760 = vst [vmem:[%s657 + $0xa8] sm:$0xf] %v759
      %761 = vst [vmem:[%s657 + $0xac] sm:$0xf] %v590
      %v762 = vld [vmem:[%s657 + $0xb0] sm:$0x1]
      %v763 = vsel %vm224, %v591, %v762
      %764 = vst [vmem:[%s657 + $0xb0] sm:$0x1] %v763
      %v765 = vld [vmem:[%s657 + $0xb4] sm:$0xf]
      %v766 = vsel %vm659, %v598, %v765
      %767 = vst [vmem:[%s657 + $0xb4] sm:$0xf] %v766
      %768 = vst [vmem:[%s657 + $0xb8] sm:$0xf] %v607
      %v769 = vld [vmem:[%s657 + $0xbc] sm:$0x1]
      %v770 = vsel %vm224, %v608, %v769
      %771 = vst [vmem:[%s657 + $0xbc] sm:$0x1] %v770
      %v772 = vld [vmem:[#allocation2] sm:$0xf]
      %v773 = vld [vmem:[#allocation2 + $0x4] sm:$0xf]
      %v774 = vld [vmem:[#allocation2 + $0xc] sm:$0xf]
      %v775 = vld [vmem:[#allocation2 + $0x10] sm:$0xf]
      %v776 = vld [vmem:[#allocation2 + $0x18] sm:$0xf]
      %v777 = vld [vmem:[#allocation2 + $0x1c] sm:$0xf]
      %v778 = vld [vmem:[#allocation2 + $0x24] sm:$0xf]
      %v779 = vld [vmem:[#allocation2 + $0x28] sm:$0xf]
      %v780 = vld [vmem:[#allocation2 + $0x30] sm:$0xf]
      %v781 = vld [vmem:[#allocation2 + $0x34] sm:$0xf]
      %v782 = vld [vmem:[#allocation2 + $0x3c] sm:$0xf]
      %v783 = vld [vmem:[#allocation2 + $0x40] sm:$0xf]
      %v784 = vld [vmem:[#allocation2 + $0x48] sm:$0xf]
      %v785 = vld [vmem:[#allocation2 + $0x4c] sm:$0xf]
      %v786 = vld [vmem:[#allocation2 + $0x54] sm:$0xf]
      %v787 = vld [vmem:[#allocation2 + $0x58] sm:$0xf]
      %v788 = vld [vmem:[#allocation2 + $0x60] sm:$0xf]
      %v789 = vld [vmem:[#allocation2 + $0x64] sm:$0xf]
      %v790 = vld [vmem:[#allocation2 + $0x6c] sm:$0xf]
      %v791 = vld [vmem:[#allocation2 + $0x70] sm:$0xf]
      %v792 = vld [vmem:[#allocation2 + $0x78] sm:$0xf]
      %v793 = vld [vmem:[#allocation2 + $0x7c] sm:$0xf]
      %v794 = vld [vmem:[#allocation2 + $0x84] sm:$0xf]
      %v795 = vld [vmem:[#allocation2 + $0x88] sm:$0xf]
      %v796 = vld [vmem:[#allocation2 + $0x90] sm:$0xf]
      %v797 = vld [vmem:[#allocation2 + $0x94] sm:$0xf]
      %v798 = vld [vmem:[#allocation2 + $0x9c] sm:$0xf]
      %v799 = vld [vmem:[#allocation2 + $0xa0] sm:$0xf]
      %v800 = vld [vmem:[#allocation2 + $0xa8] sm:$0xf]
      %v801 = vld [vmem:[#allocation2 + $0xac] sm:$0xf]
      %v802 = vld [vmem:[#allocation2 + $0xb4] sm:$0xf]
      %v803 = vld [vmem:[#allocation2 + $0xb8] sm:$0xf]
      %v804 = vld [vmem:[%s1] sm:$0xf]
      %v805 = vld [vmem:[%s1 + $0x4] sm:$0xf]
      %v806 = vld [vmem:[%s1 + $0x8] sm:$0xf]
      %v807 = vld [vmem:[%s1 + $0xc] sm:$0xf]
      %v808 = vld [vmem:[%s1 + $0x10] sm:$0xf]
      %v809 = vld [vmem:[%s1 + $0x14] sm:$0xf]
      %v810 = vld [vmem:[%s1 + $0x18] sm:$0xf]
      %v811 = vld [vmem:[%s1 + $0x1c] sm:$0xf]
      %v812 = vld [vmem:[%s1 + $0x20] sm:$0xf]
      %v813 = vld [vmem:[%s1 + $0x24] sm:$0xf]
      %v814 = vld [vmem:[%s1 + $0x28] sm:$0xf]
      %v815 = vld [vmem:[%s1 + $0x2c] sm:$0xf]
      %v816 = vld [vmem:[%s1 + $0x30] sm:$0xf]
      %v817 = vld [vmem:[%s1 + $0x34] sm:$0xf]
      %v818 = vld [vmem:[%s1 + $0x38] sm:$0xf]
      %v819 = vld [vmem:[%s1 + $0x3c] sm:$0xf]
      %v820 = vld [vmem:[#allocation2 + $0x8] sm:$0x1]
      %v821 = vld [vmem:[#allocation2 + $0x14] sm:$0x1]
      %v822 = vld [vmem:[#allocation2 + $0x20] sm:$0x1]
      %v823 = vld [vmem:[#allocation2 + $0x2c] sm:$0x1]
      %v824 = vld [vmem:[#allocation2 + $0x38] sm:$0x1]
      %v825 = vld [vmem:[#allocation2 + $0x44] sm:$0x1]
      %v826 = vld [vmem:[#allocation2 + $0x50] sm:$0x1]
      %v827 = vld [vmem:[#allocation2 + $0x5c] sm:$0x1]
      %v828 = vld [vmem:[#allocation2 + $0x68] sm:$0x1]
      %v829 = vld [vmem:[#allocation2 + $0x74] sm:$0x1]
      %v830 = vld [vmem:[#allocation2 + $0x80] sm:$0x1]
      %v831 = vld [vmem:[#allocation2 + $0x8c] sm:$0x1]
      %v832 = vld [vmem:[#allocation2 + $0x98] sm:$0x1]
      %v833 = vld [vmem:[#allocation2 + $0xa4] sm:$0x1]
      %v834 = vld [vmem:[#allocation2 + $0xb0] sm:$0x1]
      %v835 = vld [vmem:[#allocation2 + $0xbc] sm:$0x1]
      %vm836 = vsmask.f32 3328
      %vm837 = vsmask.f32 7440
      %vm838 = vmor %vm836, %vm837
      %v840 = vshrl.u32 %v772, 16
      %v842 = vrot.slane %v840, 4
      %v843 = vshll.u32 %v772, 16
      %v845 = vrot.slane %v843, 5
      %v846 = vor.u32 %v842, %v845
      %v847 = vrot.slane %v846, 4
      %v849 = vshll.u32 %v773, 16
      %v851 = vrot.slane %v849, 5
      %v852 = vsel %vm838, %v847, %v851
      %v853 = vshrl.u32 %v773, 16
      %v855 = vrot.slane %v853, 4
      %v856 = vor.u32 %v855, %v851
      %v857 = vrot.slane %v856, 4
      %v859 = vshll.u32 %v820, 16
      %v861 = vrot.slane %v859, 5
      %v862 = vsel %vm838, %v857, %v861
      %v864 = vshrl.u32 %v774, 16
      %v866 = vrot.slane %v864, 4
      %v867 = vshll.u32 %v774, 16
      %v869 = vrot.slane %v867, 5
      %v870 = vor.u32 %v866, %v869
      %v871 = vrot.slane %v870, 4
      %v873 = vshll.u32 %v775, 16
      %v875 = vrot.slane %v873, 5
      %v876 = vsel %vm838, %v871, %v875
      %v877 = vshrl.u32 %v775, 16
      %v879 = vrot.slane %v877, 4
      %v880 = vor.u32 %v879, %v875
      %v881 = vrot.slane %v880, 4
      %v883 = vshll.u32 %v821, 16
      %v885 = vrot.slane %v883, 5
      %v886 = vsel %vm838, %v881, %v885
      %v888 = vshrl.u32 %v776, 16
      %v890 = vrot.slane %v888, 4
      %v891 = vshll.u32 %v776, 16
      %v893 = vrot.slane %v891, 5
      %v894 = vor.u32 %v890, %v893
      %v895 = vrot.slane %v894, 4
      %v897 = vshll.u32 %v777, 16
      %v899 = vrot.slane %v897, 5
      %v900 = vsel %vm838, %v895, %v899
      %v901 = vshrl.u32 %v777, 16
      %v903 = vrot.slane %v901, 4
      %v904 = vor.u32 %v903, %v899
      %v905 = vrot.slane %v904, 4
      %v907 = vshll.u32 %v822, 16
      %v909 = vrot.slane %v907, 5
      %v910 = vsel %vm838, %v905, %v909
      %v912 = vshrl.u32 %v778, 16
      %v914 = vrot.slane %v912, 4
      %v915 = vshll.u32 %v778, 16
      %v917 = vrot.slane %v915, 5
      %v918 = vor.u32 %v914, %v917
      %v919 = vrot.slane %v918, 4
      %v921 = vshll.u32 %v779, 16
      %v923 = vrot.slane %v921, 5
      %v924 = vsel %vm838, %v919, %v923
      %v925 = vshrl.u32 %v779, 16
      %v927 = vrot.slane %v925, 4
      %v928 = vor.u32 %v927, %v923
      %v929 = vrot.slane %v928, 4
      %v931 = vshll.u32 %v823, 16
      %v933 = vrot.slane %v931, 5
      %v934 = vsel %vm838, %v929, %v933
      %v936 = vshrl.u32 %v780, 16
      %v938 = vrot.slane %v936, 4
      %v939 = vshll.u32 %v780, 16
      %v941 = vrot.slane %v939, 5
      %v942 = vor.u32 %v938, %v941
      %v943 = vrot.slane %v942, 4
      %v945 = vshll.u32 %v781, 16
      %v947 = vrot.slane %v945, 5
      %v948 = vsel %vm838, %v943, %v947
      %v949 = vshrl.u32 %v781, 16
      %v951 = vrot.slane %v949, 4
      %v952 = vor.u32 %v951, %v947
      %v953 = vrot.slane %v952, 4
      %v955 = vshll.u32 %v824, 16
      %v957 = vrot.slane %v955, 5
      %v958 = vsel %vm838, %v953, %v957
      %v960 = vshrl.u32 %v782, 16
      %v962 = vrot.slane %v960, 4
      %v963 = vshll.u32 %v782, 16
      %v965 = vrot.slane %v963, 5
      %v966 = vor.u32 %v962, %v965
      %v967 = vrot.slane %v966, 4
      %v969 = vshll.u32 %v783, 16
      %v971 = vrot.slane %v969, 5
      %v972 = vsel %vm838, %v967, %v971
      %v973 = vshrl.u32 %v783, 16
      %v975 = vrot.slane %v973, 4
      %v976 = vor.u32 %v975, %v971
      %v977 = vrot.slane %v976, 4
      %v979 = vshll.u32 %v825, 16
      %v981 = vrot.slane %v979, 5
      %v982 = vsel %vm838, %v977, %v981
      %v984 = vshrl.u32 %v784, 16
      %v986 = vrot.slane %v984, 4
      %v987 = vshll.u32 %v784, 16
      %v989 = vrot.slane %v987, 5
      %v990 = vor.u32 %v986, %v989
      %v991 = vrot.slane %v990, 4
      %v993 = vshll.u32 %v785, 16
      %v995 = vrot.slane %v993, 5
      %v996 = vsel %vm838, %v991, %v995
      %v997 = vshrl.u32 %v785, 16
      %v999 = vrot.slane %v997, 4
      %v1000 = vor.u32 %v999, %v995
      %v1001 = vrot.slane %v1000, 4
      %v1003 = vshll.u32 %v826, 16
      %v1005 = vrot.slane %v1003, 5
      %v1006 = vsel %vm838, %v1001, %v1005
      %v1008 = vshrl.u32 %v786, 16
      %v1010 = vrot.slane %v1008, 4
      %v1011 = vshll.u32 %v786, 16
      %v1013 = vrot.slane %v1011, 5
      %v1014 = vor.u32 %v1010, %v1013
      %v1015 = vrot.slane %v1014, 4
      %v1017 = vshll.u32 %v787, 16
      %v1019 = vrot.slane %v1017, 5
      %v1020 = vsel %vm838, %v1015, %v1019
      %v1021 = vshrl.u32 %v787, 16
      %v1023 = vrot.slane %v1021, 4
      %v1024 = vor.u32 %v1023, %v1019
      %v1025 = vrot.slane %v1024, 4
      %v1027 = vshll.u32 %v827, 16
      %v1029 = vrot.slane %v1027, 5
      %v1030 = vsel %vm838, %v1025, %v1029
      %v1032 = vshrl.u32 %v788, 16
      %v1034 = vrot.slane %v1032, 4
      %v1035 = vshll.u32 %v788, 16
      %v1037 = vrot.slane %v1035, 5
      %v1038 = vor.u32 %v1034, %v1037
      %v1039 = vrot.slane %v1038, 4
      %v1041 = vshll.u32 %v789, 16
      %v1043 = vrot.slane %v1041, 5
      %v1044 = vsel %vm838, %v1039, %v1043
      %v1045 = vshrl.u32 %v789, 16
      %v1047 = vrot.slane %v1045, 4
      %v1048 = vor.u32 %v1047, %v1043
      %v1049 = vrot.slane %v1048, 4
      %v1051 = vshll.u32 %v828, 16
      %v1053 = vrot.slane %v1051, 5
      %v1054 = vsel %vm838, %v1049, %v1053
      %v1056 = vshrl.u32 %v790, 16
      %v1058 = vrot.slane %v1056, 4
      %v1059 = vshll.u32 %v790, 16
      %v1061 = vrot.slane %v1059, 5
      %v1062 = vor.u32 %v1058, %v1061
      %v1063 = vrot.slane %v1062, 4
      %v1065 = vshll.u32 %v791, 16
      %v1067 = vrot.slane %v1065, 5
      %v1068 = vsel %vm838, %v1063, %v1067
      %v1069 = vshrl.u32 %v791, 16
      %v1071 = vrot.slane %v1069, 4
      %v1072 = vor.u32 %v1071, %v1067
      %v1073 = vrot.slane %v1072, 4
      %v1075 = vshll.u32 %v829, 16
      %v1077 = vrot.slane %v1075, 5
      %v1078 = vsel %vm838, %v1073, %v1077
      %v1080 = vshrl.u32 %v792, 16
      %v1082 = vrot.slane %v1080, 4
      %v1083 = vshll.u32 %v792, 16
      %v1085 = vrot.slane %v1083, 5
      %v1086 = vor.u32 %v1082, %v1085
      %v1087 = vrot.slane %v1086, 4
      %v1089 = vshll.u32 %v793, 16
      %v1091 = vrot.slane %v1089, 5
      %v1092 = vsel %vm838, %v1087, %v1091
      %v1093 = vshrl.u32 %v793, 16
      %v1095 = vrot.slane %v1093, 4
      %v1096 = vor.u32 %v1095, %v1091
      %v1097 = vrot.slane %v1096, 4
      %v1099 = vshll.u32 %v830, 16
      %v1101 = vrot.slane %v1099, 5
      %v1102 = vsel %vm838, %v1097, %v1101
      %v1104 = vshrl.u32 %v794, 16
      %v1106 = vrot.slane %v1104, 4
      %v1107 = vshll.u32 %v794, 16
      %v1109 = vrot.slane %v1107, 5
      %v1110 = vor.u32 %v1106, %v1109
      %v1111 = vrot.slane %v1110, 4
      %v1113 = vshll.u32 %v795, 16
      %v1115 = vrot.slane %v1113, 5
      %v1116 = vsel %vm838, %v1111, %v1115
      %v1117 = vshrl.u32 %v795, 16
      %v1119 = vrot.slane %v1117, 4
      %v1120 = vor.u32 %v1119, %v1115
      %v1121 = vrot.slane %v1120, 4
      %v1123 = vshll.u32 %v831, 16
      %v1125 = vrot.slane %v1123, 5
      %v1126 = vsel %vm838, %v1121, %v1125
      %v1128 = vshrl.u32 %v796, 16
      %v1130 = vrot.slane %v1128, 4
      %v1131 = vshll.u32 %v796, 16
      %v1133 = vrot.slane %v1131, 5
      %v1134 = vor.u32 %v1130, %v1133
      %v1135 = vrot.slane %v1134, 4
      %v1137 = vshll.u32 %v797, 16
      %v1139 = vrot.slane %v1137, 5
      %v1140 = vsel %vm838, %v1135, %v1139
      %v1141 = vshrl.u32 %v797, 16
      %v1143 = vrot.slane %v1141, 4
      %v1144 = vor.u32 %v1143, %v1139
      %v1145 = vrot.slane %v1144, 4
      %v1147 = vshll.u32 %v832, 16
      %v1149 = vrot.slane %v1147, 5
      %v1150 = vsel %vm838, %v1145, %v1149
      %v1152 = vshrl.u32 %v798, 16
      %v1154 = vrot.slane %v1152, 4
      %v1155 = vshll.u32 %v798, 16
      %v1157 = vrot.slane %v1155, 5
      %v1158 = vor.u32 %v1154, %v1157
      %v1159 = vrot.slane %v1158, 4
      %v1161 = vshll.u32 %v799, 16
      %v1163 = vrot.slane %v1161, 5
      %v1164 = vsel %vm838, %v1159, %v1163
      %v1165 = vshrl.u32 %v799, 16
      %v1167 = vrot.slane %v1165, 4
      %v1168 = vor.u32 %v1167, %v1163
      %v1169 = vrot.slane %v1168, 4
      %v1171 = vshll.u32 %v833, 16
      %v1173 = vrot.slane %v1171, 5
      %v1174 = vsel %vm838, %v1169, %v1173
      %v1176 = vshrl.u32 %v800, 16
      %v1178 = vrot.slane %v1176, 4
      %v1179 = vshll.u32 %v800, 16
      %v1181 = vrot.slane %v1179, 5
      %v1182 = vor.u32 %v1178, %v1181
      %v1183 = vrot.slane %v1182, 4
      %v1185 = vshll.u32 %v801, 16
      %v1187 = vrot.slane %v1185, 5
      %v1188 = vsel %vm838, %v1183, %v1187
      %v1189 = vshrl.u32 %v801, 16
      %v1191 = vrot.slane %v1189, 4
      %v1192 = vor.u32 %v1191, %v1187
      %v1193 = vrot.slane %v1192, 4
      %v1195 = vshll.u32 %v834, 16
      %v1197 = vrot.slane %v1195, 5
      %v1198 = vsel %vm838, %v1193, %v1197
      %v1200 = vshrl.u32 %v802, 16
      %v1202 = vrot.slane %v1200, 4
      %v1203 = vshll.u32 %v802, 16
      %v1205 = vrot.slane %v1203, 5
      %v1206 = vor.u32 %v1202, %v1205
      %v1207 = vrot.slane %v1206, 4
      %v1209 = vshll.u32 %v803, 16
      %v1211 = vrot.slane %v1209, 5
      %v1212 = vsel %vm838, %v1207, %v1211
      %v1213 = vshrl.u32 %v803, 16
      %v1215 = vrot.slane %v1213, 4
      %v1216 = vor.u32 %v1215, %v1211
      %v1217 = vrot.slane %v1216, 4
      %v1219 = vshll.u32 %v835, 16
      %v1221 = vrot.slane %v1219, 5
      %v1222 = vsel %vm838, %v1217, %v1221
      %s1223 = scalar_lea.vmem %s1, 64
      %v1224 = vld [vmem:[%s1223] sm:$0xf]
      %v1225 = vld [vmem:[%s1223 + $0x4] sm:$0xf]
      %v1226 = vld [vmem:[%s1223 + $0x8] sm:$0xf]
      %v1227 = vld [vmem:[%s1223 + $0xc] sm:$0xf]
      %v1228 = vld [vmem:[%s1223 + $0x10] sm:$0xf]
      %v1229 = vld [vmem:[%s1223 + $0x14] sm:$0xf]
      %v1230 = vld [vmem:[%s1223 + $0x18] sm:$0xf]
      %v1231 = vld [vmem:[%s1223 + $0x1c] sm:$0xf]
      %v1232 = vld [vmem:[%s1223 + $0x20] sm:$0xf]
      %v1233 = vld [vmem:[%s1223 + $0x24] sm:$0xf]
      %v1234 = vld [vmem:[%s1223 + $0x28] sm:$0xf]
      %v1235 = vld [vmem:[%s1223 + $0x2c] sm:$0xf]
      %v1236 = vld [vmem:[%s1223 + $0x30] sm:$0xf]
      %v1237 = vld [vmem:[%s1223 + $0x34] sm:$0xf]
      %v1238 = vld [vmem:[%s1223 + $0x38] sm:$0xf]
      %v1239 = vld [vmem:[%s1223 + $0x3c] sm:$0xf]
      %v1240 = vunpack.c.l.b16 %v852
      %v1241 = vunpack.c.l.b16 %v862
      %v1242 = vunpack.c.l.b16 %v876
      %v1243 = vunpack.c.l.b16 %v886
      %v1244 = vunpack.c.l.b16 %v900
      %v1245 = vunpack.c.l.b16 %v910
      %v1246 = vunpack.c.l.b16 %v924
      %v1247 = vunpack.c.l.b16 %v934
      %v1248 = vunpack.c.l.b16 %v948
      %v1249 = vunpack.c.l.b16 %v958
      %v1250 = vunpack.c.l.b16 %v972
      %v1251 = vunpack.c.l.b16 %v982
      %v1252 = vunpack.c.l.b16 %v996
      %v1253 = vunpack.c.l.b16 %v1006
      %v1254 = vunpack.c.l.b16 %v1020
      %v1255 = vunpack.c.l.b16 %v1030
      %v1256 = vunpack.c.l.b16 %v1044
      %v1257 = vunpack.c.l.b16 %v1054
      %v1258 = vunpack.c.l.b16 %v1068
      %v1259 = vunpack.c.l.b16 %v1078
      %v1260 = vunpack.c.l.b16 %v1092
      %v1261 = vunpack.c.l.b16 %v1102
      %v1262 = vunpack.c.l.b16 %v1116
      %v1263 = vunpack.c.l.b16 %v1126
      %v1264 = vunpack.c.l.b16 %v1140
      %v1265 = vunpack.c.l.b16 %v1150
      %v1266 = vunpack.c.l.b16 %v1164
      %v1267 = vunpack.c.l.b16 %v1174
      %v1268 = vunpack.c.l.b16 %v1188
      %v1269 = vunpack.c.l.b16 %v1198
      %v1270 = vunpack.c.l.b16 %v1212
      %v1271 = vunpack.c.l.b16 %v1222
      %v1272 = vpack.c.b16 %v1241, %v1240
      %v1273 = vpack.c.b16 %v1243, %v1242
      %v1274 = vpack.c.b16 %v1245, %v1244
      %v1275 = vpack.c.b16 %v1247, %v1246
      %v1276 = vpack.c.b16 %v1249, %v1248
      %v1277 = vpack.c.b16 %v1251, %v1250
      %v1278 = vpack.c.b16 %v1253, %v1252
      %v1279 = vpack.c.b16 %v1255, %v1254
      %v1280 = vpack.c.b16 %v1257, %v1256
      %v1281 = vpack.c.b16 %v1259, %v1258
      %v1282 = vpack.c.b16 %v1261, %v1260
      %v1283 = vpack.c.b16 %v1263, %v1262
      %v1284 = vpack.c.b16 %v1265, %v1264
      %v1285 = vpack.c.b16 %v1267, %v1266
      %v1286 = vpack.c.b16 %v1269, %v1268
      %v1287 = vpack.c.b16 %v1271, %v1270
      %v1320 = vunpack.c.l.b16 %v1224
      %v1321 = vunpack.c.l.b16 %v1225
      %v1322 = vunpack.c.l.b16 %v1226
      %v1323 = vunpack.c.l.b16 %v1227
      %v1324 = vunpack.c.l.b16 %v1228
      %v1325 = vunpack.c.l.b16 %v1229
      %v1326 = vunpack.c.l.b16 %v1230
      %v1327 = vunpack.c.l.b16 %v1231
      %v1328 = vunpack.c.l.b16 %v1232
      %v1329 = vunpack.c.l.b16 %v1233
      %v1330 = vunpack.c.l.b16 %v1234
      %v1331 = vunpack.c.l.b16 %v1235
      %v1332 = vunpack.c.l.b16 %v1236
      %v1333 = vunpack.c.l.b16 %v1237
      %v1334 = vunpack.c.l.b16 %v1238
      %v1335 = vunpack.c.l.b16 %v1239
      %v1336 = vpack.c.b16 %v1321, %v1320
      %v1337 = vpack.c.b16 %v1323, %v1322
      %v1338 = vpack.c.b16 %v1325, %v1324
      %v1339 = vpack.c.b16 %v1327, %v1326
      %v1340 = vpack.c.b16 %v1329, %v1328
      %v1341 = vpack.c.b16 %v1331, %v1330
      %v1342 = vpack.c.b16 %v1333, %v1332
      %v1343 = vpack.c.b16 %v1335, %v1334
      %1352 = vmatprep.subr.bf16.mxu0 0
      %1353 = vmatpush1.bf16.msra.mxu0 %v1343
      %1354 = vmatprep.subr.bf16.mxu0 0
      %1355 = vmatpush1.bf16.msra.mxu0 %v1342
      %1356 = vmatprep.subr.bf16.mxu0 0
      %1357 = vmatpush1.bf16.msra.mxu0 %v1341
      %1358 = vmatprep.subr.bf16.mxu0 0
      %1359 = vmatpush1.bf16.msra.mxu0 %v1340
      %1360 = vmatprep.subr.bf16.mxu0 0
      %1361 = vmatpush1.bf16.msra.mxu0 %v1339
      %1362 = vmatprep.subr.bf16.mxu0 0
      %1363 = vmatpush1.bf16.msra.mxu0 %v1338
      %1364 = vmatprep.subr.bf16.mxu0 0
      %1365 = vmatpush1.bf16.msra.mxu0 %v1337
      %1366 = vmatprep.subr.bf16.mxu0 0
      %1367 = vmatpush1.bf16.msra.mxu0 %v1336
      %1368 = vmatprep.subr.bf16.mxu0 0
      %1369 = vmatpush2.bf16.msra.mxu0 0
      %1370 = vmatprep.subr.bf16.mxu0 0
      %1371 = vmatpush2.bf16.msra.mxu0 0
      %1372 = vmatprep.subr.bf16.mxu0 0
      %1373 = vmatpush2.bf16.msra.mxu0 0
      %1374 = vmatprep.subr.bf16.mxu0 0
      %1375 = vmatpush2.bf16.msra.mxu0 0
      %1376 = vmatprep.subr.bf16.mxu0 0
      %1377 = vmatpush2.bf16.msra.mxu0 0
      %1378 = vmatprep.subr.bf16.mxu0 0
      %1379 = vmatpush2.bf16.msra.mxu0 0
      %1380 = vmatprep.subr.bf16.mxu0 0
      %1381 = vmatpush2.bf16.msra.mxu0 0
      %1382 = vmatprep.subr.bf16.mxu0 0
      %1383 = vmatpush2.bf16.msra.mxu0 0
      %1384 = vmatprep.mubr.bf16.mxu0 0
      %1385 = vmatmul.mubr.bf16.gmra.mxu0 %v1272
      %v1386 = vpop.f32.mrf.mxu0
      %v1387 = vadd.f32 0.0, %v1386
      %v1388 = vpop.f32.mrf.mxu0
      %v1389 = vpop.f32.mrf.mxu0
      %v1390 = vadd.f32 0.0, %v1389
      %v1391 = vpop.f32.mrf.mxu0
      %1392 = vmatprep.mubr.bf16.mxu0 0
      %1393 = vmatmul.mubr.bf16.gmra.mxu0 %v1273
      %v1394 = vpop.f32.mrf.mxu0
      %v1395 = vadd.f32 0.0, %v1394
      %v1396 = vpop.f32.mrf.mxu0
      %v1397 = vpop.f32.mrf.mxu0
      %v1398 = vadd.f32 0.0, %v1397
      %v1399 = vpop.f32.mrf.mxu0
      %1400 = vmatprep.mubr.bf16.mxu0 0
      %1401 = vmatmul.mubr.bf16.gmra.mxu0 %v1274
      %v1402 = vpop.f32.mrf.mxu0
      %v1403 = vadd.f32 0.0, %v1402
      %v1404 = vpop.f32.mrf.mxu0
      %v1405 = vpop.f32.mrf.mxu0
      %v1406 = vadd.f32 0.0, %v1405
      %v1407 = vpop.f32.mrf.mxu0
      %1408 = vmatprep.mubr.bf16.mxu0 0
      %1409 = vmatmul.mubr.bf16.gmra.mxu0 %v1275
      %v1410 = vpop.f32.mrf.mxu0
      %v1411 = vadd.f32 0.0, %v1410
      %v1412 = vpop.f32.mrf.mxu0
      %v1413 = vpop.f32.mrf.mxu0
      %v1414 = vadd.f32 0.0, %v1413
      %v1415 = vpop.f32.mrf.mxu0
      %1416 = vmatprep.mubr.bf16.mxu0 0
      %1417 = vmatmul.mubr.bf16.gmra.mxu0 %v1276
      %v1418 = vpop.f32.mrf.mxu0
      %v1419 = vadd.f32 0.0, %v1418
      %v1420 = vpop.f32.mrf.mxu0
      %v1421 = vpop.f32.mrf.mxu0
      %v1422 = vadd.f32 0.0, %v1421
      %v1423 = vpop.f32.mrf.mxu0
      %1424 = vmatprep.mubr.bf16.mxu0 0
      %1425 = vmatmul.mubr.bf16.gmra.mxu0 %v1277
      %v1426 = vpop.f32.mrf.mxu0
      %v1427 = vadd.f32 0.0, %v1426
      %v1428 = vpop.f32.mrf.mxu0
      %v1429 = vpop.f32.mrf.mxu0
      %v1430 = vadd.f32 0.0, %v1429
      %v1431 = vpop.f32.mrf.mxu0
      %1432 = vmatprep.mubr.bf16.mxu0 0
      %1433 = vmatmul.mubr.bf16.gmra.mxu0 %v1278
      %v1434 = vpop.f32.mrf.mxu0
      %v1435 = vadd.f32 0.0, %v1434
      %v1436 = vpop.f32.mrf.mxu0
      %v1437 = vpop.f32.mrf.mxu0
      %v1438 = vadd.f32 0.0, %v1437
      %v1439 = vpop.f32.mrf.mxu0
      %1440 = vmatprep.mubr.bf16.mxu0 0
      %1441 = vmatmul.mubr.bf16.gmra.mxu0 %v1279
      %v1442 = vpop.f32.mrf.mxu0
      %v1443 = vadd.f32 0.0, %v1442
      %v1444 = vpop.f32.mrf.mxu0
      %v1445 = vpop.f32.mrf.mxu0
      %v1446 = vadd.f32 0.0, %v1445
      %v1447 = vpop.f32.mrf.mxu0
      %1448 = vmatprep.mubr.bf16.mxu0 0
      %1449 = vmatmul.mubr.bf16.gmra.mxu0 %v1280
      %v1450 = vpop.f32.mrf.mxu0
      %v1451 = vadd.f32 0.0, %v1450
      %v1452 = vpop.f32.mrf.mxu0
      %v1453 = vpop.f32.mrf.mxu0
      %v1454 = vadd.f32 0.0, %v1453
      %v1455 = vpop.f32.mrf.mxu0
      %1456 = vmatprep.mubr.bf16.mxu0 0
      %1457 = vmatmul.mubr.bf16.gmra.mxu0 %v1281
      %v1458 = vpop.f32.mrf.mxu0
      %v1459 = vadd.f32 0.0, %v1458
      %v1460 = vpop.f32.mrf.mxu0
      %v1461 = vpop.f32.mrf.mxu0
      %v1462 = vadd.f32 0.0, %v1461
      %v1463 = vpop.f32.mrf.mxu0
      %1464 = vmatprep.mubr.bf16.mxu0 0
      %1465 = vmatmul.mubr.bf16.gmra.mxu0 %v1282
      %v1466 = vpop.f32.mrf.mxu0
      %v1467 = vadd.f32 0.0, %v1466
      %v1468 = vpop.f32.mrf.mxu0
      %v1469 = vpop.f32.mrf.mxu0
      %v1470 = vadd.f32 0.0, %v1469
      %v1471 = vpop.f32.mrf.mxu0
      %1472 = vmatprep.mubr.bf16.mxu0 0
      %1473 = vmatmul.mubr.bf16.gmra.mxu0 %v1283
      %v1474 = vpop.f32.mrf.mxu0
      %v1475 = vadd.f32 0.0, %v1474
      %v1476 = vpop.f32.mrf.mxu0
      %v1477 = vpop.f32.mrf.mxu0
      %v1478 = vadd.f32 0.0, %v1477
      %v1479 = vpop.f32.mrf.mxu0
      %1480 = vmatprep.mubr.bf16.mxu0 0
      %1481 = vmatmul.mubr.bf16.gmra.mxu0 %v1284
      %v1482 = vpop.f32.mrf.mxu0
      %v1483 = vadd.f32 0.0, %v1482
      %v1484 = vpop.f32.mrf.mxu0
      %v1485 = vpop.f32.mrf.mxu0
      %v1486 = vadd.f32 0.0, %v1485
      %v1487 = vpop.f32.mrf.mxu0
      %1488 = vmatprep.mubr.bf16.mxu0 0
      %1489 = vmatmul.mubr.bf16.gmra.mxu0 %v1285
      %v1490 = vpop.f32.mrf.mxu0
      %v1491 = vadd.f32 0.0, %v1490
      %v1492 = vpop.f32.mrf.mxu0
      %v1493 = vpop.f32.mrf.mxu0
      %v1494 = vadd.f32 0.0, %v1493
      %v1495 = vpop.f32.mrf.mxu0
      %1496 = vmatprep.mubr.bf16.mxu0 0
      %1497 = vmatmul.mubr.bf16.gmra.mxu0 %v1286
      %v1498 = vpop.f32.mrf.mxu0
      %v1499 = vadd.f32 0.0, %v1498
      %v1500 = vpop.f32.mrf.mxu0
      %v1501 = vpop.f32.mrf.mxu0
      %v1502 = vadd.f32 0.0, %v1501
      %v1503 = vpop.f32.mrf.mxu0
      %1504 = vmatprep.mubr.bf16.mxu0 0
      %1505 = vmatmul.mubr.bf16.gmra.mxu0 %v1287
      %v1506 = vpop.f32.mrf.mxu0
      %v1507 = vadd.f32 0.0, %v1506
      %v1508 = vpop.f32.mrf.mxu0
      %v1509 = vpop.f32.mrf.mxu0
      %v1510 = vadd.f32 0.0, %v1509
      %v1511 = vpop.f32.mrf.mxu0
      %1512 = vdwg.mxu0
      %v1545 = vunpack.c.l.b16 %v772
      %v1546 = vunpack.c.l.b16 %v773
      %v1547 = vunpack.c.l.b16 %v774
      %v1548 = vunpack.c.l.b16 %v775
      %v1549 = vunpack.c.l.b16 %v776
      %v1550 = vunpack.c.l.b16 %v777
      %v1551 = vunpack.c.l.b16 %v778
      %v1552 = vunpack.c.l.b16 %v779
      %v1553 = vunpack.c.l.b16 %v780
      %v1554 = vunpack.c.l.b16 %v781
      %v1555 = vunpack.c.l.b16 %v782
      %v1556 = vunpack.c.l.b16 %v783
      %v1557 = vunpack.c.l.b16 %v784
      %v1558 = vunpack.c.l.b16 %v785
      %v1559 = vunpack.c.l.b16 %v786
      %v1560 = vunpack.c.l.b16 %v787
      %v1561 = vunpack.c.l.b16 %v788
      %v1562 = vunpack.c.l.b16 %v789
      %v1563 = vunpack.c.l.b16 %v790
      %v1564 = vunpack.c.l.b16 %v791
      %v1565 = vunpack.c.l.b16 %v792
      %v1566 = vunpack.c.l.b16 %v793
      %v1567 = vunpack.c.l.b16 %v794
      %v1568 = vunpack.c.l.b16 %v795
      %v1569 = vunpack.c.l.b16 %v796
      %v1570 = vunpack.c.l.b16 %v797
      %v1571 = vunpack.c.l.b16 %v798
      %v1572 = vunpack.c.l.b16 %v799
      %v1573 = vunpack.c.l.b16 %v800
      %v1574 = vunpack.c.l.b16 %v801
      %v1575 = vunpack.c.l.b16 %v802
      %v1576 = vunpack.c.l.b16 %v803
      %v1577 = vpack.c.b16 %v1546, %v1545
      %v1578 = vpack.c.b16 %v1548, %v1547
      %v1579 = vpack.c.b16 %v1550, %v1549
      %v1580 = vpack.c.b16 %v1552, %v1551
      %v1581 = vpack.c.b16 %v1554, %v1553
      %v1582 = vpack.c.b16 %v1556, %v1555
      %v1583 = vpack.c.b16 %v1558, %v1557
      %v1584 = vpack.c.b16 %v1560, %v1559
      %v1585 = vpack.c.b16 %v1562, %v1561
      %v1586 = vpack.c.b16 %v1564, %v1563
      %v1587 = vpack.c.b16 %v1566, %v1565
      %v1588 = vpack.c.b16 %v1568, %v1567
      %v1589 = vpack.c.b16 %v1570, %v1569
      %v1590 = vpack.c.b16 %v1572, %v1571
      %v1591 = vpack.c.b16 %v1574, %v1573
      %v1592 = vpack.c.b16 %v1576, %v1575
      %v1625 = vunpack.c.l.b16 %v804
      %v1626 = vunpack.c.l.b16 %v805
      %v1627 = vunpack.c.l.b16 %v806
      %v1628 = vunpack.c.l.b16 %v807
      %v1629 = vunpack.c.l.b16 %v808
      %v1630 = vunpack.c.l.b16 %v809
      %v1631 = vunpack.c.l.b16 %v810
      %v1632 = vunpack.c.l.b16 %v811
      %v1633 = vunpack.c.l.b16 %v812
      %v1634 = vunpack.c.l.b16 %v813
      %v1635 = vunpack.c.l.b16 %v814
      %v1636 = vunpack.c.l.b16 %v815
      %v1637 = vunpack.c.l.b16 %v816
      %v1638 = vunpack.c.l.b16 %v817
      %v1639 = vunpack.c.l.b16 %v818
      %v1640 = vunpack.c.l.b16 %v819
      %v1641 = vpack.c.b16 %v1626, %v1625
      %v1642 = vpack.c.b16 %v1628, %v1627
      %v1643 = vpack.c.b16 %v1630, %v1629
      %v1644 = vpack.c.b16 %v1632, %v1631
      %v1645 = vpack.c.b16 %v1634, %v1633
      %v1646 = vpack.c.b16 %v1636, %v1635
      %v1647 = vpack.c.b16 %v1638, %v1637
      %v1648 = vpack.c.b16 %v1640, %v1639
      %1657 = vmatprep.subr.bf16.mxu0 0
      %1658 = vmatpush1.bf16.msra.mxu0 %v1648
      %1659 = vmatprep.subr.bf16.mxu0 0
      %1660 = vmatpush1.bf16.msra.mxu0 %v1647
      %1661 = vmatprep.subr.bf16.mxu0 0
      %1662 = vmatpush1.bf16.msra.mxu0 %v1646
      %1663 = vmatprep.subr.bf16.mxu0 0
      %1664 = vmatpush1.bf16.msra.mxu0 %v1645
      %1665 = vmatprep.subr.bf16.mxu0 0
      %1666 = vmatpush1.bf16.msra.mxu0 %v1644
      %1667 = vmatprep.subr.bf16.mxu0 0
      %1668 = vmatpush1.bf16.msra.mxu0 %v1643
      %1669 = vmatprep.subr.bf16.mxu0 0
      %1670 = vmatpush1.bf16.msra.mxu0 %v1642
      %1671 = vmatprep.subr.bf16.mxu0 0
      %1672 = vmatpush1.bf16.msra.mxu0 %v1641
      %1673 = vmatprep.subr.bf16.mxu0 0
      %1674 = vmatpush2.bf16.msra.mxu0 0
      %1675 = vmatprep.subr.bf16.mxu0 0
      %1676 = vmatpush2.bf16.msra.mxu0 0
      %1677 = vmatprep.subr.bf16.mxu0 0
      %1678 = vmatpush2.bf16.msra.mxu0 0
      %1679 = vmatprep.subr.bf16.mxu0 0
      %1680 = vmatpush2.bf16.msra.mxu0 0
      %1681 = vmatprep.subr.bf16.mxu0 0
      %1682 = vmatpush2.bf16.msra.mxu0 0
      %1683 = vmatprep.subr.bf16.mxu0 0
      %1684 = vmatpush2.bf16.msra.mxu0 0
      %1685 = vmatprep.subr.bf16.mxu0 0
      %1686 = vmatpush2.bf16.msra.mxu0 0
      %1687 = vmatprep.subr.bf16.mxu0 0
      %1688 = vmatpush2.bf16.msra.mxu0 0
      %1689 = vmatprep.mubr.bf16.mxu0 0
      %1690 = vmatmul.mubr.bf16.gmra.mxu0 %v1577
      %v1691 = vpop.f32.mrf.mxu0
      %v1692 = vadd.f32 %v1387, %v1691
      %v1693 = vpop.f32.mrf.mxu0
      %v1694 = vpop.f32.mrf.mxu0
      %v1695 = vadd.f32 %v1390, %v1694
      %v1696 = vpop.f32.mrf.mxu0
      %1697 = vmatprep.mubr.bf16.mxu0 0
      %1698 = vmatmul.mubr.bf16.gmra.mxu0 %v1578
      %v1699 = vpop.f32.mrf.mxu0
      %v1700 = vadd.f32 %v1395, %v1699
      %v1701 = vpop.f32.mrf.mxu0
      %v1702 = vpop.f32.mrf.mxu0
      %v1703 = vadd.f32 %v1398, %v1702
      %v1704 = vpop.f32.mrf.mxu0
      %1705 = vmatprep.mubr.bf16.mxu0 0
      %1706 = vmatmul.mubr.bf16.gmra.mxu0 %v1579
      %v1707 = vpop.f32.mrf.mxu0
      %v1708 = vadd.f32 %v1403, %v1707
      %v1709 = vpop.f32.mrf.mxu0
      %v1710 = vpop.f32.mrf.mxu0
      %v1711 = vadd.f32 %v1406, %v1710
      %v1712 = vpop.f32.mrf.mxu0
      %1713 = vmatprep.mubr.bf16.mxu0 0
      %1714 = vmatmul.mubr.bf16.gmra.mxu0 %v1580
      %v1715 = vpop.f32.mrf.mxu0
      %v1716 = vadd.f32 %v1411, %v1715
      %v1717 = vpop.f32.mrf.mxu0
      %v1718 = vpop.f32.mrf.mxu0
      %v1719 = vadd.f32 %v1414, %v1718
      %v1720 = vpop.f32.mrf.mxu0
      %1721 = vmatprep.mubr.bf16.mxu0 0
      %1722 = vmatmul.mubr.bf16.gmra.mxu0 %v1581
      %v1723 = vpop.f32.mrf.mxu0
      %v1724 = vadd.f32 %v1419, %v1723
      %v1725 = vpop.f32.mrf.mxu0
      %v1726 = vpop.f32.mrf.mxu0
      %v1727 = vadd.f32 %v1422, %v1726
      %v1728 = vpop.f32.mrf.mxu0
      %1729 = vmatprep.mubr.bf16.mxu0 0
      %1730 = vmatmul.mubr.bf16.gmra.mxu0 %v1582
      %v1731 = vpop.f32.mrf.mxu0
      %v1732 = vadd.f32 %v1427, %v1731
      %v1733 = vpop.f32.mrf.mxu0
      %v1734 = vpop.f32.mrf.mxu0
      %v1735 = vadd.f32 %v1430, %v1734
      %v1736 = vpop.f32.mrf.mxu0
      %1737 = vmatprep.mubr.bf16.mxu0 0
      %1738 = vmatmul.mubr.bf16.gmra.mxu0 %v1583
      %v1739 = vpop.f32.mrf.mxu0
      %v1740 = vadd.f32 %v1435, %v1739
      %v1741 = vpop.f32.mrf.mxu0
      %v1742 = vpop.f32.mrf.mxu0
      %v1743 = vadd.f32 %v1438, %v1742
      %v1744 = vpop.f32.mrf.mxu0
      %1745 = vmatprep.mubr.bf16.mxu0 0
      %1746 = vmatmul.mubr.bf16.gmra.mxu0 %v1584
      %v1747 = vpop.f32.mrf.mxu0
      %v1748 = vadd.f32 %v1443, %v1747
      %v1749 = vpop.f32.mrf.mxu0
      %v1750 = vpop.f32.mrf.mxu0
      %v1751 = vadd.f32 %v1446, %v1750
      %v1752 = vpop.f32.mrf.mxu0
      %1753 = vmatprep.mubr.bf16.mxu0 0
      %1754 = vmatmul.mubr.bf16.gmra.mxu0 %v1585
      %v1755 = vpop.f32.mrf.mxu0
      %v1756 = vadd.f32 %v1451, %v1755
      %v1757 = vpop.f32.mrf.mxu0
      %v1758 = vpop.f32.mrf.mxu0
      %v1759 = vadd.f32 %v1454, %v1758
      %v1760 = vpop.f32.mrf.mxu0
      %1761 = vmatprep.mubr.bf16.mxu0 0
      %1762 = vmatmul.mubr.bf16.gmra.mxu0 %v1586
      %v1763 = vpop.f32.mrf.mxu0
      %v1764 = vadd.f32 %v1459, %v1763
      %v1765 = vpop.f32.mrf.mxu0
      %v1766 = vpop.f32.mrf.mxu0
      %v1767 = vadd.f32 %v1462, %v1766
      %v1768 = vpop.f32.mrf.mxu0
      %1769 = vmatprep.mubr.bf16.mxu0 0
      %1770 = vmatmul.mubr.bf16.gmra.mxu0 %v1587
      %v1771 = vpop.f32.mrf.mxu0
      %v1772 = vadd.f32 %v1467, %v1771
      %v1773 = vpop.f32.mrf.mxu0
      %v1774 = vpop.f32.mrf.mxu0
      %v1775 = vadd.f32 %v1470, %v1774
      %v1776 = vpop.f32.mrf.mxu0
      %1777 = vmatprep.mubr.bf16.mxu0 0
      %1778 = vmatmul.mubr.bf16.gmra.mxu0 %v1588
      %v1779 = vpop.f32.mrf.mxu0
      %v1780 = vadd.f32 %v1475, %v1779
      %v1781 = vpop.f32.mrf.mxu0
      %v1782 = vpop.f32.mrf.mxu0
      %v1783 = vadd.f32 %v1478, %v1782
      %v1784 = vpop.f32.mrf.mxu0
      %1785 = vmatprep.mubr.bf16.mxu0 0
      %1786 = vmatmul.mubr.bf16.gmra.mxu0 %v1589
      %v1787 = vpop.f32.mrf.mxu0
      %v1788 = vadd.f32 %v1483, %v1787
      %v1789 = vpop.f32.mrf.mxu0
      %v1790 = vpop.f32.mrf.mxu0
      %v1791 = vadd.f32 %v1486, %v1790
      %v1792 = vpop.f32.mrf.mxu0
      %1793 = vmatprep.mubr.bf16.mxu0 0
      %1794 = vmatmul.mubr.bf16.gmra.mxu0 %v1590
      %v1795 = vpop.f32.mrf.mxu0
      %v1796 = vadd.f32 %v1491, %v1795
      %v1797 = vpop.f32.mrf.mxu0
      %v1798 = vpop.f32.mrf.mxu0
      %v1799 = vadd.f32 %v1494, %v1798
      %v1800 = vpop.f32.mrf.mxu0
      %1801 = vmatprep.mubr.bf16.mxu0 0
      %1802 = vmatmul.mubr.bf16.gmra.mxu0 %v1591
      %v1803 = vpop.f32.mrf.mxu0
      %v1804 = vadd.f32 %v1499, %v1803
      %v1805 = vpop.f32.mrf.mxu0
      %v1806 = vpop.f32.mrf.mxu0
      %v1807 = vadd.f32 %v1502, %v1806
      %v1808 = vpop.f32.mrf.mxu0
      %1809 = vmatprep.mubr.bf16.mxu0 0
      %1810 = vmatmul.mubr.bf16.gmra.mxu0 %v1592
      %v1811 = vpop.f32.mrf.mxu0
      %v1812 = vadd.f32 %v1507, %v1811
      %v1813 = vpop.f32.mrf.mxu0
      %v1814 = vpop.f32.mrf.mxu0
      %v1815 = vadd.f32 %v1510, %v1814
      %v1816 = vpop.f32.mrf.mxu0
      %1817 = vdwg.mxu0
      %v1818 = vld [vmem:[#allocation2] sm:$0xe]
      %v1819 = vld [vmem:[#allocation2 + $0xc] sm:$0xe]
      %v1820 = vld [vmem:[#allocation2 + $0x18] sm:$0xe]
      %v1821 = vld [vmem:[#allocation2 + $0x24] sm:$0xe]
      %v1822 = vld [vmem:[#allocation2 + $0x30] sm:$0xe]
      %v1823 = vld [vmem:[#allocation2 + $0x3c] sm:$0xe]
      %v1824 = vld [vmem:[#allocation2 + $0x48] sm:$0xe]
      %v1825 = vld [vmem:[#allocation2 + $0x54] sm:$0xe]
      %v1826 = vld [vmem:[#allocation2 + $0x60] sm:$0xe]
      %v1827 = vld [vmem:[#allocation2 + $0x6c] sm:$0xe]
      %v1828 = vld [vmem:[#allocation2 + $0x78] sm:$0xe]
      %v1829 = vld [vmem:[#allocation2 + $0x84] sm:$0xe]
      %v1830 = vld [vmem:[#allocation2 + $0x90] sm:$0xe]
      %v1831 = vld [vmem:[#allocation2 + $0x9c] sm:$0xe]
      %v1832 = vld [vmem:[#allocation2 + $0xa8] sm:$0xe]
      %v1833 = vld [vmem:[#allocation2 + $0xb4] sm:$0xe]
      %vm1866 = vcmask 1042432
      %vm1867 = vcmask 1046532
      %vm1868 = vmor %vm1866, %vm1867
      %v1869 = vrot.slane %v1818, 5
      %v1870 = vrot.slane %v1869, 4
      %v1871 = vrot.slane %v773, 5
      %v1872 = vsel %vm1868, %v1870, %v1871
      %v1873 = vrot.slane %v1871, 4
      %v1874 = vrot.slane %v820, 5
      %v1875 = vsel %vm1868, %v1873, %v1874
      %v1876 = vrot.slane %v1819, 5
      %v1877 = vrot.slane %v1876, 4
      %v1878 = vrot.slane %v775, 5
      %v1879 = vsel %vm1868, %v1877, %v1878
      %v1880 = vrot.slane %v1878, 4
      %v1881 = vrot.slane %v821, 5
      %v1882 = vsel %vm1868, %v1880, %v1881
      %v1883 = vrot.slane %v1820, 5
      %v1884 = vrot.slane %v1883, 4
      %v1885 = vrot.slane %v777, 5
      %v1886 = vsel %vm1868, %v1884, %v1885
      %v1887 = vrot.slane %v1885, 4
      %v1888 = vrot.slane %v822, 5
      %v1889 = vsel %vm1868, %v1887, %v1888
      %v1890 = vrot.slane %v1821, 5
      %v1891 = vrot.slane %v1890, 4
      %v1892 = vrot.slane %v779, 5
      %v1893 = vsel %vm1868, %v1891, %v1892
      %v1894 = vrot.slane %v1892, 4
      %v1895 = vrot.slane %v823, 5
      %v1896 = vsel %vm1868, %v1894, %v1895
      %v1897 = vrot.slane %v1822, 5
      %v1898 = vrot.slane %v1897, 4
      %v1899 = vrot.slane %v781, 5
      %v1900 = vsel %vm1868, %v1898, %v1899
      %v1901 = vrot.slane %v1899, 4
      %v1902 = vrot.slane %v824, 5
      %v1903 = vsel %vm1868, %v1901, %v1902
      %v1904 = vrot.slane %v1823, 5
      %v1905 = vrot.slane %v1904, 4
      %v1906 = vrot.slane %v783, 5
      %v1907 = vsel %vm1868, %v1905, %v1906
      %v1908 = vrot.slane %v1906, 4
      %v1909 = vrot.slane %v825, 5
      %v1910 = vsel %vm1868, %v1908, %v1909
      %v1911 = vrot.slane %v1824, 5
      %v1912 = vrot.slane %v1911, 4
      %v1913 = vrot.slane %v785, 5
      %v1914 = vsel %vm1868, %v1912, %v1913
      %v1915 = vrot.slane %v1913, 4
      %v1916 = vrot.slane %v826, 5
      %v1917 = vsel %vm1868, %v1915, %v1916
      %v1918 = vrot.slane %v1825, 5
      %v1919 = vrot.slane %v1918, 4
      %v1920 = vrot.slane %v787, 5
      %v1921 = vsel %vm1868, %v1919, %v1920
      %v1922 = vrot.slane %v1920, 4
      %v1923 = vrot.slane %v827, 5
      %v1924 = vsel %vm1868, %v1922, %v1923
      %v1925 = vrot.slane %v1826, 5
      %v1926 = vrot.slane %v1925, 4
      %v1927 = vrot.slane %v789, 5
      %v1928 = vsel %vm1868, %v1926, %v1927
      %v1929 = vrot.slane %v1927, 4
      %v1930 = vrot.slane %v828, 5
      %v1931 = vsel %vm1868, %v1929, %v1930
      %v1932 = vrot.slane %v1827, 5
      %v1933 = vrot.slane %v1932, 4
      %v1934 = vrot.slane %v791, 5
      %v1935 = vsel %vm1868, %v1933, %v1934
      %v1936 = vrot.slane %v1934, 4
      %v1937 = vrot.slane %v829, 5
      %v1938 = vsel %vm1868, %v1936, %v1937
      %v1939 = vrot.slane %v1828, 5
      %v1940 = vrot.slane %v1939, 4
      %v1941 = vrot.slane %v793, 5
      %v1942 = vsel %vm1868, %v1940, %v1941
      %v1943 = vrot.slane %v1941, 4
      %v1944 = vrot.slane %v830, 5
      %v1945 = vsel %vm1868, %v1943, %v1944
      %v1946 = vrot.slane %v1829, 5
      %v1947 = vrot.slane %v1946, 4
      %v1948 = vrot.slane %v795, 5
      %v1949 = vsel %vm1868, %v1947, %v1948
      %v1950 = vrot.slane %v1948, 4
      %v1951 = vrot.slane %v831, 5
      %v1952 = vsel %vm1868, %v1950, %v1951
      %v1953 = vrot.slane %v1830, 5
      %v1954 = vrot.slane %v1953, 4
      %v1955 = vrot.slane %v797, 5
      %v1956 = vsel %vm1868, %v1954, %v1955
      %v1957 = vrot.slane %v1955, 4
      %v1958 = vrot.slane %v832, 5
      %v1959 = vsel %vm1868, %v1957, %v1958
      %v1960 = vrot.slane %v1831, 5
      %v1961 = vrot.slane %v1960, 4
      %v1962 = vrot.slane %v799, 5
      %v1963 = vsel %vm1868, %v1961, %v1962
      %v1964 = vrot.slane %v1962, 4
      %v1965 = vrot.slane %v833, 5
      %v1966 = vsel %vm1868, %v1964, %v1965
      %v1967 = vrot.slane %v1832, 5
      %v1968 = vrot.slane %v1967, 4
      %v1969 = vrot.slane %v801, 5
      %v1970 = vsel %vm1868, %v1968, %v1969
      %v1971 = vrot.slane %v1969, 4
      %v1972 = vrot.slane %v834, 5
      %v1973 = vsel %vm1868, %v1971, %v1972
      %v1974 = vrot.slane %v1833, 5
      %v1975 = vrot.slane %v1974, 4
      %v1976 = vrot.slane %v803, 5
      %v1977 = vsel %vm1868, %v1975, %v1976
      %v1978 = vrot.slane %v1976, 4
      %v1979 = vrot.slane %v835, 5
      %v1980 = vsel %vm1868, %v1978, %v1979
      %s1981 = scalar_lea.vmem %s1, 128
      %v1982 = vld [vmem:[%s1981] sm:$0xf]
      %v1983 = vld [vmem:[%s1981 + $0x4] sm:$0xf]
      %v1984 = vld [vmem:[%s1981 + $0x8] sm:$0xf]
      %v1985 = vld [vmem:[%s1981 + $0xc] sm:$0xf]
      %v1986 = vld [vmem:[%s1981 + $0x10] sm:$0xf]
      %v1987 = vld [vmem:[%s1981 + $0x14] sm:$0xf]
      %v1988 = vld [vmem:[%s1981 + $0x18] sm:$0xf]
      %v1989 = vld [vmem:[%s1981 + $0x1c] sm:$0xf]
      %v1990 = vld [vmem:[%s1981 + $0x20] sm:$0xf]
      %v1991 = vld [vmem:[%s1981 + $0x24] sm:$0xf]
      %v1992 = vld [vmem:[%s1981 + $0x28] sm:$0xf]
      %v1993 = vld [vmem:[%s1981 + $0x2c] sm:$0xf]
      %v1994 = vld [vmem:[%s1981 + $0x30] sm:$0xf]
      %v1995 = vld [vmem:[%s1981 + $0x34] sm:$0xf]
      %v1996 = vld [vmem:[%s1981 + $0x38] sm:$0xf]
      %v1997 = vld [vmem:[%s1981 + $0x3c] sm:$0xf]
      %v1998 = vunpack.c.l.b16 %v1872
      %v1999 = vunpack.c.l.b16 %v1875
      %v2000 = vunpack.c.l.b16 %v1879
      %v2001 = vunpack.c.l.b16 %v1882
      %v2002 = vunpack.c.l.b16 %v1886
      %v2003 = vunpack.c.l.b16 %v1889
      %v2004 = vunpack.c.l.b16 %v1893
      %v2005 = vunpack.c.l.b16 %v1896
      %v2006 = vunpack.c.l.b16 %v1900
      %v2007 = vunpack.c.l.b16 %v1903
      %v2008 = vunpack.c.l.b16 %v1907
      %v2009 = vunpack.c.l.b16 %v1910
      %v2010 = vunpack.c.l.b16 %v1914
      %v2011 = vunpack.c.l.b16 %v1917
      %v2012 = vunpack.c.l.b16 %v1921
      %v2013 = vunpack.c.l.b16 %v1924
      %v2014 = vunpack.c.l.b16 %v1928
      %v2015 = vunpack.c.l.b16 %v1931
      %v2016 = vunpack.c.l.b16 %v1935
      %v2017 = vunpack.c.l.b16 %v1938
      %v2018 = vunpack.c.l.b16 %v1942
      %v2019 = vunpack.c.l.b16 %v1945
      %v2020 = vunpack.c.l.b16 %v1949
      %v2021 = vunpack.c.l.b16 %v1952
      %v2022 = vunpack.c.l.b16 %v1956
      %v2023 = vunpack.c.l.b16 %v1959
      %v2024 = vunpack.c.l.b16 %v1963
      %v2025 = vunpack.c.l.b16 %v1966
      %v2026 = vunpack.c.l.b16 %v1970
      %v2027 = vunpack.c.l.b16 %v1973
      %v2028 = vunpack.c.l.b16 %v1977
      %v2029 = vunpack.c.l.b16 %v1980
      %v2030 = vpack.c.b16 %v1999, %v1998
      %v2031 = vpack.c.b16 %v2001, %v2000
      %v2032 = vpack.c.b16 %v2003, %v2002
      %v2033 = vpack.c.b16 %v2005, %v2004
      %v2034 = vpack.c.b16 %v2007, %v2006
      %v2035 = vpack.c.b16 %v2009, %v2008
      %v2036 = vpack.c.b16 %v2011, %v2010
      %v2037 = vpack.c.b16 %v2013, %v2012
      %v2038 = vpack.c.b16 %v2015, %v2014
      %v2039 = vpack.c.b16 %v2017, %v2016
      %v2040 = vpack.c.b16 %v2019, %v2018
      %v2041 = vpack.c.b16 %v2021, %v2020
      %v2042 = vpack.c.b16 %v2023, %v2022
      %v2043 = vpack.c.b16 %v2025, %v2024
      %v2044 = vpack.c.b16 %v2027, %v2026
      %v2045 = vpack.c.b16 %v2029, %v2028
      %v2078 = vunpack.c.l.b16 %v1982
      %v2079 = vunpack.c.l.b16 %v1983
      %v2080 = vunpack.c.l.b16 %v1984
      %v2081 = vunpack.c.l.b16 %v1985
      %v2082 = vunpack.c.l.b16 %v1986
      %v2083 = vunpack.c.l.b16 %v1987
      %v2084 = vunpack.c.l.b16 %v1988
      %v2085 = vunpack.c.l.b16 %v1989
      %v2086 = vunpack.c.l.b16 %v1990
      %v2087 = vunpack.c.l.b16 %v1991
      %v2088 = vunpack.c.l.b16 %v1992
      %v2089 = vunpack.c.l.b16 %v1993
      %v2090 = vunpack.c.l.b16 %v1994
      %v2091 = vunpack.c.l.b16 %v1995
      %v2092 = vunpack.c.l.b16 %v1996
      %v2093 = vunpack.c.l.b16 %v1997
      %v2094 = vpack.c.b16 %v2079, %v2078
      %v2095 = vpack.c.b16 %v2081, %v2080
      %v2096 = vpack.c.b16 %v2083, %v2082
      %v2097 = vpack.c.b16 %v2085, %v2084
      %v2098 = vpack.c.b16 %v2087, %v2086
      %v2099 = vpack.c.b16 %v2089, %v2088
      %v2100 = vpack.c.b16 %v2091, %v2090
      %v2101 = vpack.c.b16 %v2093, %v2092
      %2110 = vmatprep.subr.bf16.mxu0 0
      %2111 = vmatpush1.bf16.msra.mxu0 %v2101
      %2112 = vmatprep.subr.bf16.mxu0 0
      %2113 = vmatpush1.bf16.msra.mxu0 %v2100
      %2114 = vmatprep.subr.bf16.mxu0 0
      %2115 = vmatpush1.bf16.msra.mxu0 %v2099
      %2116 = vmatprep.subr.bf16.mxu0 0
      %2117 = vmatpush1.bf16.msra.mxu0 %v2098
      %2118 = vmatprep.subr.bf16.mxu0 0
      %2119 = vmatpush1.bf16.msra.mxu0 %v2097
      %2120 = vmatprep.subr.bf16.mxu0 0
      %2121 = vmatpush1.bf16.msra.mxu0 %v2096
      %2122 = vmatprep.subr.bf16.mxu0 0
      %2123 = vmatpush1.bf16.msra.mxu0 %v2095
      %2124 = vmatprep.subr.bf16.mxu0 0
      %2125 = vmatpush1.bf16.msra.mxu0 %v2094
      %2126 = vmatprep.subr.bf16.mxu0 0
      %2127 = vmatpush2.bf16.msra.mxu0 0
      %2128 = vmatprep.subr.bf16.mxu0 0
      %2129 = vmatpush2.bf16.msra.mxu0 0
      %2130 = vmatprep.subr.bf16.mxu0 0
      %2131 = vmatpush2.bf16.msra.mxu0 0
      %2132 = vmatprep.subr.bf16.mxu0 0
      %2133 = vmatpush2.bf16.msra.mxu0 0
      %2134 = vmatprep.subr.bf16.mxu0 0
      %2135 = vmatpush2.bf16.msra.mxu0 0
      %2136 = vmatprep.subr.bf16.mxu0 0
      %2137 = vmatpush2.bf16.msra.mxu0 0
      %2138 = vmatprep.subr.bf16.mxu0 0
      %2139 = vmatpush2.bf16.msra.mxu0 0
      %2140 = vmatprep.subr.bf16.mxu0 0
      %2141 = vmatpush2.bf16.msra.mxu0 0
      %2142 = vmatprep.mubr.bf16.mxu0 0
      %2143 = vmatmul.mubr.bf16.gmra.mxu0 %v2030
      %v2144 = vpop.f32.mrf.mxu0
      %v2145 = vadd.f32 0.0, %v2144
      %v2146 = vpop.f32.mrf.mxu0
      %v2147 = vpop.f32.mrf.mxu0
      %v2148 = vadd.f32 0.0, %v2147
      %v2149 = vpop.f32.mrf.mxu0
      %2150 = vmatprep.mubr.bf16.mxu0 0
      %2151 = vmatmul.mubr.bf16.gmra.mxu0 %v2031
      %v2152 = vpop.f32.mrf.mxu0
      %v2153 = vadd.f32 0.0, %v2152
      %v2154 = vpop.f32.mrf.mxu0
      %v2155 = vpop.f32.mrf.mxu0
      %v2156 = vadd.f32 0.0, %v2155
      %v2157 = vpop.f32.mrf.mxu0
      %2158 = vmatprep.mubr.bf16.mxu0 0
      %2159 = vmatmul.mubr.bf16.gmra.mxu0 %v2032
      %v2160 = vpop.f32.mrf.mxu0
      %v2161 = vadd.f32 0.0, %v2160
      %v2162 = vpop.f32.mrf.mxu0
      %v2163 = vpop.f32.mrf.mxu0
      %v2164 = vadd.f32 0.0, %v2163
      %v2165 = vpop.f32.mrf.mxu0
      %2166 = vmatprep.mubr.bf16.mxu0 0
      %2167 = vmatmul.mubr.bf16.gmra.mxu0 %v2033
      %v2168 = vpop.f32.mrf.mxu0
      %v2169 = vadd.f32 0.0, %v2168
      %v2170 = vpop.f32.mrf.mxu0
      %v2171 = vpop.f32.mrf.mxu0
      %v2172 = vadd.f32 0.0, %v2171
      %v2173 = vpop.f32.mrf.mxu0
      %2174 = vmatprep.mubr.bf16.mxu0 0
      %2175 = vmatmul.mubr.bf16.gmra.mxu0 %v2034
      %v2176 = vpop.f32.mrf.mxu0
      %v2177 = vadd.f32 0.0, %v2176
      %v2178 = vpop.f32.mrf.mxu0
      %v2179 = vpop.f32.mrf.mxu0
      %v2180 = vadd.f32 0.0, %v2179
      %v2181 = vpop.f32.mrf.mxu0
      %2182 = vmatprep.mubr.bf16.mxu0 0
      %2183 = vmatmul.mubr.bf16.gmra.mxu0 %v2035
      %v2184 = vpop.f32.mrf.mxu0
      %v2185 = vadd.f32 0.0, %v2184
      %v2186 = vpop.f32.mrf.mxu0
      %v2187 = vpop.f32.mrf.mxu0
      %v2188 = vadd.f32 0.0, %v2187
      %v2189 = vpop.f32.mrf.mxu0
      %2190 = vmatprep.mubr.bf16.mxu0 0
      %2191 = vmatmul.mubr.bf16.gmra.mxu0 %v2036
      %v2192 = vpop.f32.mrf.mxu0
      %v2193 = vadd.f32 0.0, %v2192
      %v2194 = vpop.f32.mrf.mxu0
      %v2195 = vpop.f32.mrf.mxu0
      %v2196 = vadd.f32 0.0, %v2195
      %v2197 = vpop.f32.mrf.mxu0
      %2198 = vmatprep.mubr.bf16.mxu0 0
      %2199 = vmatmul.mubr.bf16.gmra.mxu0 %v2037
      %v2200 = vpop.f32.mrf.mxu0
      %v2201 = vadd.f32 0.0, %v2200
      %v2202 = vpop.f32.mrf.mxu0
      %v2203 = vpop.f32.mrf.mxu0
      %v2204 = vadd.f32 0.0, %v2203
      %v2205 = vpop.f32.mrf.mxu0
      %2206 = vmatprep.mubr.bf16.mxu0 0
      %2207 = vmatmul.mubr.bf16.gmra.mxu0 %v2038
      %v2208 = vpop.f32.mrf.mxu0
      %v2209 = vadd.f32 0.0, %v2208
      %v2210 = vpop.f32.mrf.mxu0
      %v2211 = vpop.f32.mrf.mxu0
      %v2212 = vadd.f32 0.0, %v2211
      %v2213 = vpop.f32.mrf.mxu0
      %2214 = vmatprep.mubr.bf16.mxu0 0
      %2215 = vmatmul.mubr.bf16.gmra.mxu0 %v2039
      %v2216 = vpop.f32.mrf.mxu0
      %v2217 = vadd.f32 0.0, %v2216
      %v2218 = vpop.f32.mrf.mxu0
      %v2219 = vpop.f32.mrf.mxu0
      %v2220 = vadd.f32 0.0, %v2219
      %v2221 = vpop.f32.mrf.mxu0
      %2222 = vmatprep.mubr.bf16.mxu0 0
      %2223 = vmatmul.mubr.bf16.gmra.mxu0 %v2040
      %v2224 = vpop.f32.mrf.mxu0
      %v2225 = vadd.f32 0.0, %v2224
      %v2226 = vpop.f32.mrf.mxu0
      %v2227 = vpop.f32.mrf.mxu0
      %v2228 = vadd.f32 0.0, %v2227
      %v2229 = vpop.f32.mrf.mxu0
      %2230 = vmatprep.mubr.bf16.mxu0 0
      %2231 = vmatmul.mubr.bf16.gmra.mxu0 %v2041
      %v2232 = vpop.f32.mrf.mxu0
      %v2233 = vadd.f32 0.0, %v2232
      %v2234 = vpop.f32.mrf.mxu0
      %v2235 = vpop.f32.mrf.mxu0
      %v2236 = vadd.f32 0.0, %v2235
      %v2237 = vpop.f32.mrf.mxu0
      %2238 = vmatprep.mubr.bf16.mxu0 0
      %2239 = vmatmul.mubr.bf16.gmra.mxu0 %v2042
      %v2240 = vpop.f32.mrf.mxu0
      %v2241 = vadd.f32 0.0, %v2240
      %v2242 = vpop.f32.mrf.mxu0
      %v2243 = vpop.f32.mrf.mxu0
      %v2244 = vadd.f32 0.0, %v2243
      %v2245 = vpop.f32.mrf.mxu0
      %2246 = vmatprep.mubr.bf16.mxu0 0
      %2247 = vmatmul.mubr.bf16.gmra.mxu0 %v2043
      %v2248 = vpop.f32.mrf.mxu0
      %v2249 = vadd.f32 0.0, %v2248
      %v2250 = vpop.f32.mrf.mxu0
      %v2251 = vpop.f32.mrf.mxu0
      %v2252 = vadd.f32 0.0, %v2251
      %v2253 = vpop.f32.mrf.mxu0
      %2254 = vmatprep.mubr.bf16.mxu0 0
      %2255 = vmatmul.mubr.bf16.gmra.mxu0 %v2044
      %v2256 = vpop.f32.mrf.mxu0
      %v2257 = vadd.f32 0.0, %v2256
      %v2258 = vpop.f32.mrf.mxu0
      %v2259 = vpop.f32.mrf.mxu0
      %v2260 = vadd.f32 0.0, %v2259
      %v2261 = vpop.f32.mrf.mxu0
      %2262 = vmatprep.mubr.bf16.mxu0 0
      %2263 = vmatmul.mubr.bf16.gmra.mxu0 %v2045
      %v2264 = vpop.f32.mrf.mxu0
      %v2265 = vadd.f32 0.0, %v2264
      %v2266 = vpop.f32.mrf.mxu0
      %v2267 = vpop.f32.mrf.mxu0
      %v2268 = vadd.f32 0.0, %v2267
      %v2269 = vpop.f32.mrf.mxu0
      %2270 = vdwg.mxu0
      %v2271 = vadd.f32 %v1692, %v2145
      %v2272 = vadd.f32 %v1695, %v2148
      %v2273 = vadd.f32 %v1700, %v2153
      %v2274 = vadd.f32 %v1703, %v2156
      %v2275 = vadd.f32 %v1708, %v2161
      %v2276 = vadd.f32 %v1711, %v2164
      %v2277 = vadd.f32 %v1716, %v2169
      %v2278 = vadd.f32 %v1719, %v2172
      %v2279 = vadd.f32 %v1724, %v2177
      %v2280 = vadd.f32 %v1727, %v2180
      %v2281 = vadd.f32 %v1732, %v2185
      %v2282 = vadd.f32 %v1735, %v2188
      %v2283 = vadd.f32 %v1740, %v2193
      %v2284 = vadd.f32 %v1743, %v2196
      %v2285 = vadd.f32 %v1748, %v2201
      %v2286 = vadd.f32 %v1751, %v2204
      %v2287 = vadd.f32 %v1756, %v2209
      %v2288 = vadd.f32 %v1759, %v2212
      %v2289 = vadd.f32 %v1764, %v2217
      %v2290 = vadd.f32 %v1767, %v2220
      %v2291 = vadd.f32 %v1772, %v2225
      %v2292 = vadd.f32 %v1775, %v2228
      %v2293 = vadd.f32 %v1780, %v2233
      %v2294 = vadd.f32 %v1783, %v2236
      %v2295 = vadd.f32 %v1788, %v2241
      %v2296 = vadd.f32 %v1791, %v2244
      %v2297 = vadd.f32 %v1796, %v2249
      %v2298 = vadd.f32 %v1799, %v2252
      %v2299 = vadd.f32 %v1804, %v2257
      %v2300 = vadd.f32 %v1807, %v2260
      %v2301 = vadd.f32 %v1812, %v2265
      %v2302 = vadd.f32 %v1815, %v2268
      %v2303 = vld [vmem:[%s657] sm:$0xf]
      %v2304 = vld [vmem:[%s657 + $0x4] sm:$0xf]
      %v2305 = vld [vmem:[%s657 + $0xc] sm:$0xf]
      %v2306 = vld [vmem:[%s657 + $0x10] sm:$0xf]
      %v2307 = vld [vmem:[%s657 + $0x18] sm:$0xf]
      %v2308 = vld [vmem:[%s657 + $0x1c] sm:$0xf]
      %v2309 = vld [vmem:[%s657 + $0x24] sm:$0xf]
      %v2310 = vld [vmem:[%s657 + $0x28] sm:$0xf]
      %v2311 = vld [vmem:[%s657 + $0x30] sm:$0xf]
      %v2312 = vld [vmem:[%s657 + $0x34] sm:$0xf]
      %v2313 = vld [vmem:[%s657 + $0x3c] sm:$0xf]
      %v2314 = vld [vmem:[%s657 + $0x40] sm:$0xf]
      %v2315 = vld [vmem:[%s657 + $0x48] sm:$0xf]
      %v2316 = vld [vmem:[%s657 + $0x4c] sm:$0xf]
      %v2317 = vld [vmem:[%s657 + $0x54] sm:$0xf]
      %v2318 = vld [vmem:[%s657 + $0x58] sm:$0xf]
      %v2319 = vld [vmem:[%s657 + $0x60] sm:$0xf]
      %v2320 = vld [vmem:[%s657 + $0x64] sm:$0xf]
      %v2321 = vld [vmem:[%s657 + $0x6c] sm:$0xf]
      %v2322 = vld [vmem:[%s657 + $0x70] sm:$0xf]
      %v2323 = vld [vmem:[%s657 + $0x78] sm:$0xf]
      %v2324 = vld [vmem:[%s657 + $0x7c] sm:$0xf]
      %v2325 = vld [vmem:[%s657 + $0x84] sm:$0xf]
      %v2326 = vld [vmem:[%s657 + $0x88] sm:$0xf]
      %v2327 = vld [vmem:[%s657 + $0x90] sm:$0xf]
      %v2328 = vld [vmem:[%s657 + $0x94] sm:$0xf]
      %v2329 = vld [vmem:[%s657 + $0x9c] sm:$0xf]
      %v2330 = vld [vmem:[%s657 + $0xa0] sm:$0xf]
      %v2331 = vld [vmem:[%s657 + $0xa8] sm:$0xf]
      %v2332 = vld [vmem:[%s657 + $0xac] sm:$0xf]
      %v2333 = vld [vmem:[%s657 + $0xb4] sm:$0xf]
      %v2334 = vld [vmem:[%s657 + $0xb8] sm:$0xf]
      %s2335 = scalar_lea.vmem %s1, 192
      %v2336 = vld [vmem:[%s2335] sm:$0xf]
      %v2337 = vld [vmem:[%s2335 + $0x4] sm:$0xf]
      %v2338 = vld [vmem:[%s2335 + $0x8] sm:$0xf]
      %v2339 = vld [vmem:[%s2335 + $0xc] sm:$0xf]
      %v2340 = vld [vmem:[%s2335 + $0x10] sm:$0xf]
      %v2341 = vld [vmem:[%s2335 + $0x14] sm:$0xf]
      %v2342 = vld [vmem:[%s2335 + $0x18] sm:$0xf]
      %v2343 = vld [vmem:[%s2335 + $0x1c] sm:$0xf]
      %v2344 = vld [vmem:[%s2335 + $0x20] sm:$0xf]
      %v2345 = vld [vmem:[%s2335 + $0x24] sm:$0xf]
      %v2346 = vld [vmem:[%s2335 + $0x28] sm:$0xf]
      %v2347 = vld [vmem:[%s2335 + $0x2c] sm:$0xf]
      %v2348 = vld [vmem:[%s2335 + $0x30] sm:$0xf]
      %v2349 = vld [vmem:[%s2335 + $0x34] sm:$0xf]
      %v2350 = vld [vmem:[%s2335 + $0x38] sm:$0xf]
      %v2351 = vld [vmem:[%s2335 + $0x3c] sm:$0xf]
      %v2384 = vunpack.c.l.b16 %v2303
      %v2385 = vunpack.c.l.b16 %v2304
      %v2386 = vunpack.c.l.b16 %v2305
      %v2387 = vunpack.c.l.b16 %v2306
      %v2388 = vunpack.c.l.b16 %v2307
      %v2389 = vunpack.c.l.b16 %v2308
      %v2390 = vunpack.c.l.b16 %v2309
      %v2391 = vunpack.c.l.b16 %v2310
      %v2392 = vunpack.c.l.b16 %v2311
      %v2393 = vunpack.c.l.b16 %v2312
      %v2394 = vunpack.c.l.b16 %v2313
      %v2395 = vunpack.c.l.b16 %v2314
      %v2396 = vunpack.c.l.b16 %v2315
      %v2397 = vunpack.c.l.b16 %v2316
      %v2398 = vunpack.c.l.b16 %v2317
      %v2399 = vunpack.c.l.b16 %v2318
      %v2400 = vunpack.c.l.b16 %v2319
      %v2401 = vunpack.c.l.b16 %v2320
      %v2402 = vunpack.c.l.b16 %v2321
      %v2403 = vunpack.c.l.b16 %v2322
      %v2404 = vunpack.c.l.b16 %v2323
      %v2405 = vunpack.c.l.b16 %v2324
      %v2406 = vunpack.c.l.b16 %v2325
      %v2407 = vunpack.c.l.b16 %v2326
      %v2408 = vunpack.c.l.b16 %v2327
      %v2409 = vunpack.c.l.b16 %v2328
      %v2410 = vunpack.c.l.b16 %v2329
      %v2411 = vunpack.c.l.b16 %v2330
      %v2412 = vunpack.c.l.b16 %v2331
      %v2413 = vunpack.c.l.b16 %v2332
      %v2414 = vunpack.c.l.b16 %v2333
      %v2415 = vunpack.c.l.b16 %v2334
      %v2416 = vpack.c.b16 %v2385, %v2384
      %v2417 = vpack.c.b16 %v2387, %v2386
      %v2418 = vpack.c.b16 %v2389, %v2388
      %v2419 = vpack.c.b16 %v2391, %v2390
      %v2420 = vpack.c.b16 %v2393, %v2392
      %v2421 = vpack.c.b16 %v2395, %v2394
      %v2422 = vpack.c.b16 %v2397, %v2396
      %v2423 = vpack.c.b16 %v2399, %v2398
      %v2424 = vpack.c.b16 %v2401, %v2400
      %v2425 = vpack.c.b16 %v2403, %v2402
      %v2426 = vpack.c.b16 %v2405, %v2404
      %v2427 = vpack.c.b16 %v2407, %v2406
      %v2428 = vpack.c.b16 %v2409, %v2408
      %v2429 = vpack.c.b16 %v2411, %v2410
      %v2430 = vpack.c.b16 %v2413, %v2412
      %v2431 = vpack.c.b16 %v2415, %v2414
      %v2464 = vunpack.c.l.b16 %v2336
      %v2465 = vunpack.c.l.b16 %v2337
      %v2466 = vunpack.c.l.b16 %v2338
      %v2467 = vunpack.c.l.b16 %v2339
      %v2468 = vunpack.c.l.b16 %v2340
      %v2469 = vunpack.c.l.b16 %v2341
      %v2470 = vunpack.c.l.b16 %v2342
      %v2471 = vunpack.c.l.b16 %v2343
      %v2472 = vunpack.c.l.b16 %v2344
      %v2473 = vunpack.c.l.b16 %v2345
      %v2474 = vunpack.c.l.b16 %v2346
      %v2475 = vunpack.c.l.b16 %v2347
      %v2476 = vunpack.c.l.b16 %v2348
      %v2477 = vunpack.c.l.b16 %v2349
      %v2478 = vunpack.c.l.b16 %v2350
      %v2479 = vunpack.c.l.b16 %v2351
      %v2480 = vpack.c.b16 %v2465, %v2464
      %v2481 = vpack.c.b16 %v2467, %v2466
      %v2482 = vpack.c.b16 %v2469, %v2468
      %v2483 = vpack.c.b16 %v2471, %v2470
      %v2484 = vpack.c.b16 %v2473, %v2472
      %v2485 = vpack.c.b16 %v2475, %v2474
      %v2486 = vpack.c.b16 %v2477, %v2476
      %v2487 = vpack.c.b16 %v2479, %v2478
      %2496 = vmatprep.subr.bf16.mxu0 0
      %2497 = vmatpush1.bf16.msra.mxu0 %v2487
      %2498 = vmatprep.subr.bf16.mxu0 0
      %2499 = vmatpush1.bf16.msra.mxu0 %v2486
      %2500 = vmatprep.subr.bf16.mxu0 0
      %2501 = vmatpush1.bf16.msra.mxu0 %v2485
      %2502 = vmatprep.subr.bf16.mxu0 0
      %2503 = vmatpush1.bf16.msra.mxu0 %v2484
      %2504 = vmatprep.subr.bf16.mxu0 0
      %2505 = vmatpush1.bf16.msra.mxu0 %v2483
      %2506 = vmatprep.subr.bf16.mxu0 0
      %2507 = vmatpush1.bf16.msra.mxu0 %v2482
      %2508 = vmatprep.subr.bf16.mxu0 0
      %2509 = vmatpush1.bf16.msra.mxu0 %v2481
      %2510 = vmatprep.subr.bf16.mxu0 0
      %2511 = vmatpush1.bf16.msra.mxu0 %v2480
      %2512 = vmatprep.subr.bf16.mxu0 0
      %2513 = vmatpush2.bf16.msra.mxu0 0
      %2514 = vmatprep.subr.bf16.mxu0 0
      %2515 = vmatpush2.bf16.msra.mxu0 0
      %2516 = vmatprep.subr.bf16.mxu0 0
      %2517 = vmatpush2.bf16.msra.mxu0 0
      %2518 = vmatprep.subr.bf16.mxu0 0
      %2519 = vmatpush2.bf16.msra.mxu0 0
      %2520 = vmatprep.subr.bf16.mxu0 0
      %2521 = vmatpush2.bf16.msra.mxu0 0
      %2522 = vmatprep.subr.bf16.mxu0 0
      %2523 = vmatpush2.bf16.msra.mxu0 0
      %2524 = vmatprep.subr.bf16.mxu0 0
      %2525 = vmatpush2.bf16.msra.mxu0 0
      %2526 = vmatprep.subr.bf16.mxu0 0
      %2527 = vmatpush2.bf16.msra.mxu0 0
      %2528 = vmatprep.mubr.bf16.mxu0 0
      %2529 = vmatmul.mubr.bf16.gmra.mxu0 %v2416
      %v2530 = vpop.f32.mrf.mxu0
      %v2531 = vadd.f32 0.0, %v2530
      %v2532 = vpop.f32.mrf.mxu0
      %v2533 = vpop.f32.mrf.mxu0
      %v2534 = vadd.f32 0.0, %v2533
      %v2535 = vpop.f32.mrf.mxu0
      %2536 = vmatprep.mubr.bf16.mxu0 0
      %2537 = vmatmul.mubr.bf16.gmra.mxu0 %v2417
      %v2538 = vpop.f32.mrf.mxu0
      %v2539 = vadd.f32 0.0, %v2538
      %v2540 = vpop.f32.mrf.mxu0
      %v2541 = vpop.f32.mrf.mxu0
      %v2542 = vadd.f32 0.0, %v2541
      %v2543 = vpop.f32.mrf.mxu0
      %2544 = vmatprep.mubr.bf16.mxu0 0
      %2545 = vmatmul.mubr.bf16.gmra.mxu0 %v2418
      %v2546 = vpop.f32.mrf.mxu0
      %v2547 = vadd.f32 0.0, %v2546
      %v2548 = vpop.f32.mrf.mxu0
      %v2549 = vpop.f32.mrf.mxu0
      %v2550 = vadd.f32 0.0, %v2549
      %v2551 = vpop.f32.mrf.mxu0
      %2552 = vmatprep.mubr.bf16.mxu0 0
      %2553 = vmatmul.mubr.bf16.gmra.mxu0 %v2419
      %v2554 = vpop.f32.mrf.mxu0
      %v2555 = vadd.f32 0.0, %v2554
      %v2556 = vpop.f32.mrf.mxu0
      %v2557 = vpop.f32.mrf.mxu0
      %v2558 = vadd.f32 0.0, %v2557
      %v2559 = vpop.f32.mrf.mxu0
      %2560 = vmatprep.mubr.bf16.mxu0 0
      %2561 = vmatmul.mubr.bf16.gmra.mxu0 %v2420
      %v2562 = vpop.f32.mrf.mxu0
      %v2563 = vadd.f32 0.0, %v2562
      %v2564 = vpop.f32.mrf.mxu0
      %v2565 = vpop.f32.mrf.mxu0
      %v2566 = vadd.f32 0.0, %v2565
      %v2567 = vpop.f32.mrf.mxu0
      %2568 = vmatprep.mubr.bf16.mxu0 0
      %2569 = vmatmul.mubr.bf16.gmra.mxu0 %v2421
      %v2570 = vpop.f32.mrf.mxu0
      %v2571 = vadd.f32 0.0, %v2570
      %v2572 = vpop.f32.mrf.mxu0
      %v2573 = vpop.f32.mrf.mxu0
      %v2574 = vadd.f32 0.0, %v2573
      %v2575 = vpop.f32.mrf.mxu0
      %2576 = vmatprep.mubr.bf16.mxu0 0
      %2577 = vmatmul.mubr.bf16.gmra.mxu0 %v2422
      %v2578 = vpop.f32.mrf.mxu0
      %v2579 = vadd.f32 0.0, %v2578
      %v2580 = vpop.f32.mrf.mxu0
      %v2581 = vpop.f32.mrf.mxu0
      %v2582 = vadd.f32 0.0, %v2581
      %v2583 = vpop.f32.mrf.mxu0
      %2584 = vmatprep.mubr.bf16.mxu0 0
      %2585 = vmatmul.mubr.bf16.gmra.mxu0 %v2423
      %v2586 = vpop.f32.mrf.mxu0
      %v2587 = vadd.f32 0.0, %v2586
      %v2588 = vpop.f32.mrf.mxu0
      %v2589 = vpop.f32.mrf.mxu0
      %v2590 = vadd.f32 0.0, %v2589
      %v2591 = vpop.f32.mrf.mxu0
      %2592 = vmatprep.mubr.bf16.mxu0 0
      %2593 = vmatmul.mubr.bf16.gmra.mxu0 %v2424
      %v2594 = vpop.f32.mrf.mxu0
      %v2595 = vadd.f32 0.0, %v2594
      %v2596 = vpop.f32.mrf.mxu0
      %v2597 = vpop.f32.mrf.mxu0
      %v2598 = vadd.f32 0.0, %v2597
      %v2599 = vpop.f32.mrf.mxu0
      %2600 = vmatprep.mubr.bf16.mxu0 0
      %2601 = vmatmul.mubr.bf16.gmra.mxu0 %v2425
      %v2602 = vpop.f32.mrf.mxu0
      %v2603 = vadd.f32 0.0, %v2602
      %v2604 = vpop.f32.mrf.mxu0
      %v2605 = vpop.f32.mrf.mxu0
      %v2606 = vadd.f32 0.0, %v2605
      %v2607 = vpop.f32.mrf.mxu0
      %2608 = vmatprep.mubr.bf16.mxu0 0
      %2609 = vmatmul.mubr.bf16.gmra.mxu0 %v2426
      %v2610 = vpop.f32.mrf.mxu0
      %v2611 = vadd.f32 0.0, %v2610
      %v2612 = vpop.f32.mrf.mxu0
      %v2613 = vpop.f32.mrf.mxu0
      %v2614 = vadd.f32 0.0, %v2613
      %v2615 = vpop.f32.mrf.mxu0
      %2616 = vmatprep.mubr.bf16.mxu0 0
      %2617 = vmatmul.mubr.bf16.gmra.mxu0 %v2427
      %v2618 = vpop.f32.mrf.mxu0
      %v2619 = vadd.f32 0.0, %v2618
      %v2620 = vpop.f32.mrf.mxu0
      %v2621 = vpop.f32.mrf.mxu0
      %v2622 = vadd.f32 0.0, %v2621
      %v2623 = vpop.f32.mrf.mxu0
      %2624 = vmatprep.mubr.bf16.mxu0 0
      %2625 = vmatmul.mubr.bf16.gmra.mxu0 %v2428
      %v2626 = vpop.f32.mrf.mxu0
      %v2627 = vadd.f32 0.0, %v2626
      %v2628 = vpop.f32.mrf.mxu0
      %v2629 = vpop.f32.mrf.mxu0
      %v2630 = vadd.f32 0.0, %v2629
      %v2631 = vpop.f32.mrf.mxu0
      %2632 = vmatprep.mubr.bf16.mxu0 0
      %2633 = vmatmul.mubr.bf16.gmra.mxu0 %v2429
      %v2634 = vpop.f32.mrf.mxu0
      %v2635 = vadd.f32 0.0, %v2634
      %v2636 = vpop.f32.mrf.mxu0
      %v2637 = vpop.f32.mrf.mxu0
      %v2638 = vadd.f32 0.0, %v2637
      %v2639 = vpop.f32.mrf.mxu0
      %2640 = vmatprep.mubr.bf16.mxu0 0
      %2641 = vmatmul.mubr.bf16.gmra.mxu0 %v2430
      %v2642 = vpop.f32.mrf.mxu0
      %v2643 = vadd.f32 0.0, %v2642
      %v2644 = vpop.f32.mrf.mxu0
      %v2645 = vpop.f32.mrf.mxu0
      %v2646 = vadd.f32 0.0, %v2645
      %v2647 = vpop.f32.mrf.mxu0
      %2648 = vmatprep.mubr.bf16.mxu0 0
      %2649 = vmatmul.mubr.bf16.gmra.mxu0 %v2431
      %v2650 = vpop.f32.mrf.mxu0
      %v2651 = vadd.f32 0.0, %v2650
      %v2652 = vpop.f32.mrf.mxu0
      %v2653 = vpop.f32.mrf.mxu0
      %v2654 = vadd.f32 0.0, %v2653
      %v2655 = vpop.f32.mrf.mxu0
      %2656 = vdwg.mxu0
      %v2657 = vadd.f32 %v2271, %v2531
      %v2658 = vadd.f32 %v2272, %v2534
      %v2659 = vadd.f32 %v2273, %v2539
      %v2660 = vadd.f32 %v2274, %v2542
      %v2661 = vadd.f32 %v2275, %v2547
      %v2662 = vadd.f32 %v2276, %v2550
      %v2663 = vadd.f32 %v2277, %v2555
      %v2664 = vadd.f32 %v2278, %v2558
      %v2665 = vadd.f32 %v2279, %v2563
      %v2666 = vadd.f32 %v2280, %v2566
      %v2667 = vadd.f32 %v2281, %v2571
      %v2668 = vadd.f32 %v2282, %v2574
      %v2669 = vadd.f32 %v2283, %v2579
      %v2670 = vadd.f32 %v2284, %v2582
      %v2671 = vadd.f32 %v2285, %v2587
      %v2672 = vadd.f32 %v2286, %v2590
      %v2673 = vadd.f32 %v2287, %v2595
      %v2674 = vadd.f32 %v2288, %v2598
      %v2675 = vadd.f32 %v2289, %v2603
      %v2676 = vadd.f32 %v2290, %v2606
      %v2677 = vadd.f32 %v2291, %v2611
      %v2678 = vadd.f32 %v2292, %v2614
      %v2679 = vadd.f32 %v2293, %v2619
      %v2680 = vadd.f32 %v2294, %v2622
      %v2681 = vadd.f32 %v2295, %v2627
      %v2682 = vadd.f32 %v2296, %v2630
      %v2683 = vadd.f32 %v2297, %v2635
      %v2684 = vadd.f32 %v2298, %v2638
      %v2685 = vadd.f32 %v2299, %v2643
      %v2686 = vadd.f32 %v2300, %v2646
      %v2687 = vadd.f32 %v2301, %v2651
      %v2688 = vadd.f32 %v2302, %v2654
      %v2689 = vld [vmem:[%s657] sm:$0xf]
      %v2690 = vld [vmem:[%s657 + $0x4] sm:$0xf]
      %v2691 = vld [vmem:[%s657 + $0x8] sm:$0x1]
      %v2692 = vld [vmem:[%s657 + $0xc] sm:$0xf]
      %v2693 = vld [vmem:[%s657 + $0x10] sm:$0xf]
      %v2694 = vld [vmem:[%s657 + $0x14] sm:$0x1]
      %v2695 = vld [vmem:[%s657 + $0x18] sm:$0xf]
      %v2696 = vld [vmem:[%s657 + $0x1c] sm:$0xf]
      %v2697 = vld [vmem:[%s657 + $0x20] sm:$0x1]
      %v2698 = vld [vmem:[%s657 + $0x24] sm:$0xf]
      %v2699 = vld [vmem:[%s657 + $0x28] sm:$0xf]
      %v2700 = vld [vmem:[%s657 + $0x2c] sm:$0x1]
      %v2701 = vld [vmem:[%s657 + $0x30] sm:$0xf]
      %v2702 = vld [vmem:[%s657 + $0x34] sm:$0xf]
      %v2703 = vld [vmem:[%s657 + $0x38] sm:$0x1]
      %v2704 = vld [vmem:[%s657 + $0x3c] sm:$0xf]
      %v2705 = vld [vmem:[%s657 + $0x40] sm:$0xf]
      %v2706 = vld [vmem:[%s657 + $0x44] sm:$0x1]
      %v2707 = vld [vmem:[%s657 + $0x48] sm:$0xf]
      %v2708 = vld [vmem:[%s657 + $0x4c] sm:$0xf]
      %v2709 = vld [vmem:[%s657 + $0x50] sm:$0x1]
      %v2710 = vld [vmem:[%s657 + $0x54] sm:$0xf]
      %v2711 = vld [vmem:[%s657 + $0x58] sm:$0xf]
      %v2712 = vld [vmem:[%s657 + $0x5c] sm:$0x1]
      %v2713 = vld [vmem:[%s657 + $0x60] sm:$0xf]
      %v2714 = vld [vmem:[%s657 + $0x64] sm:$0xf]
      %v2715 = vld [vmem:[%s657 + $0x68] sm:$0x1]
      %v2716 = vld [vmem:[%s657 + $0x6c] sm:$0xf]
      %v2717 = vld [vmem:[%s657 + $0x70] sm:$0xf]
      %v2718 = vld [vmem:[%s657 + $0x74] sm:$0x1]
      %v2719 = vld [vmem:[%s657 + $0x78] sm:$0xf]
      %v2720 = vld [vmem:[%s657 + $0x7c] sm:$0xf]
      %v2721 = vld [vmem:[%s657 + $0x80] sm:$0x1]
      %v2722 = vld [vmem:[%s657 + $0x84] sm:$0xf]
      %v2723 = vld [vmem:[%s657 + $0x88] sm:$0xf]
      %v2724 = vld [vmem:[%s657 + $0x8c] sm:$0x1]
      %v2725 = vld [vmem:[%s657 + $0x90] sm:$0xf]
      %v2726 = vld [vmem:[%s657 + $0x94] sm:$0xf]
      %v2727 = vld [vmem:[%s657 + $0x98] sm:$0x1]
      %v2728 = vld [vmem:[%s657 + $0x9c] sm:$0xf]
      %v2729 = vld [vmem:[%s657 + $0xa0] sm:$0xf]
      %v2730 = vld [vmem:[%s657 + $0xa4] sm:$0x1]
      %v2731 = vld [vmem:[%s657 + $0xa8] sm:$0xf]
      %v2732 = vld [vmem:[%s657 + $0xac] sm:$0xf]
      %v2733 = vld [vmem:[%s657 + $0xb0] sm:$0x1]
      %v2734 = vld [vmem:[%s657 + $0xb4] sm:$0xf]
      %v2735 = vld [vmem:[%s657 + $0xb8] sm:$0xf]
      %v2736 = vld [vmem:[%s657 + $0xbc] sm:$0x1]
      %v2738 = vshrl.u32 %v2689, 16
      %v2740 = vrot.slane %v2738, 4
      %v2741 = vshll.u32 %v2689, 16
      %v2743 = vrot.slane %v2741, 5
      %v2744 = vor.u32 %v2740, %v2743
      %v2745 = vrot.slane %v2744, 4
      %v2747 = vshll.u32 %v2690, 16
      %v2749 = vrot.slane %v2747, 5
      %v2750 = vsel %vm838, %v2745, %v2749
      %v2751 = vshrl.u32 %v2690, 16
      %v2753 = vrot.slane %v2751, 4
      %v2754 = vor.u32 %v2753, %v2749
      %v2755 = vrot.slane %v2754, 4
      %v2757 = vshll.u32 %v2691, 16
      %v2759 = vrot.slane %v2757, 5
      %v2760 = vsel %vm838, %v2755, %v2759
      %v2762 = vshrl.u32 %v2692, 16
      %v2764 = vrot.slane %v2762, 4
      %v2765 = vshll.u32 %v2692, 16
      %v2767 = vrot.slane %v2765, 5
      %v2768 = vor.u32 %v2764, %v2767
      %v2769 = vrot.slane %v2768, 4
      %v2771 = vshll.u32 %v2693, 16
      %v2773 = vrot.slane %v2771, 5
      %v2774 = vsel %vm838, %v2769, %v2773
      %v2775 = vshrl.u32 %v2693, 16
      %v2777 = vrot.slane %v2775, 4
      %v2778 = vor.u32 %v2777, %v2773
      %v2779 = vrot.slane %v2778, 4
      %v2781 = vshll.u32 %v2694, 16
      %v2783 = vrot.slane %v2781, 5
      %v2784 = vsel %vm838, %v2779, %v2783
      %v2786 = vshrl.u32 %v2695, 16
      %v2788 = vrot.slane %v2786, 4
      %v2789 = vshll.u32 %v2695, 16
      %v2791 = vrot.slane %v2789, 5
      %v2792 = vor.u32 %v2788, %v2791
      %v2793 = vrot.slane %v2792, 4
      %v2795 = vshll.u32 %v2696, 16
      %v2797 = vrot.slane %v2795, 5
      %v2798 = vsel %vm838, %v2793, %v2797
      %v2799 = vshrl.u32 %v2696, 16
      %v2801 = vrot.slane %v2799, 4
      %v2802 = vor.u32 %v2801, %v2797
      %v2803 = vrot.slane %v2802, 4
      %v2805 = vshll.u32 %v2697, 16
      %v2807 = vrot.slane %v2805, 5
      %v2808 = vsel %vm838, %v2803, %v2807
      %v2810 = vshrl.u32 %v2698, 16
      %v2812 = vrot.slane %v2810, 4
      %v2813 = vshll.u32 %v2698, 16
      %v2815 = vrot.slane %v2813, 5
      %v2816 = vor.u32 %v2812, %v2815
      %v2817 = vrot.slane %v2816, 4
      %v2819 = vshll.u32 %v2699, 16
      %v2821 = vrot.slane %v2819, 5
      %v2822 = vsel %vm838, %v2817, %v2821
      %v2823 = vshrl.u32 %v2699, 16
      %v2825 = vrot.slane %v2823, 4
      %v2826 = vor.u32 %v2825, %v2821
      %v2827 = vrot.slane %v2826, 4
      %v2829 = vshll.u32 %v2700, 16
      %v2831 = vrot.slane %v2829, 5
      %v2832 = vsel %vm838, %v2827, %v2831
      %v2834 = vshrl.u32 %v2701, 16
      %v2836 = vrot.slane %v2834, 4
      %v2837 = vshll.u32 %v2701, 16
      %v2839 = vrot.slane %v2837, 5
      %v2840 = vor.u32 %v2836, %v2839
      %v2841 = vrot.slane %v2840, 4
      %v2843 = vshll.u32 %v2702, 16
      %v2845 = vrot.slane %v2843, 5
      %v2846 = vsel %vm838, %v2841, %v2845
      %v2847 = vshrl.u32 %v2702, 16
      %v2849 = vrot.slane %v2847, 4
      %v2850 = vor.u32 %v2849, %v2845
      %v2851 = vrot.slane %v2850, 4
      %v2853 = vshll.u32 %v2703, 16
      %v2855 = vrot.slane %v2853, 5
      %v2856 = vsel %vm838, %v2851, %v2855
      %v2858 = vshrl.u32 %v2704, 16
      %v2860 = vrot.slane %v2858, 4
      %v2861 = vshll.u32 %v2704, 16
      %v2863 = vrot.slane %v2861, 5
      %v2864 = vor.u32 %v2860, %v2863
      %v2865 = vrot.slane %v2864, 4
      %v2867 = vshll.u32 %v2705, 16
      %v2869 = vrot.slane %v2867, 5
      %v2870 = vsel %vm838, %v2865, %v2869
      %v2871 = vshrl.u32 %v2705, 16
      %v2873 = vrot.slane %v2871, 4
      %v2874 = vor.u32 %v2873, %v2869
      %v2875 = vrot.slane %v2874, 4
      %v2877 = vshll.u32 %v2706, 16
      %v2879 = vrot.slane %v2877, 5
      %v2880 = vsel %vm838, %v2875, %v2879
      %v2882 = vshrl.u32 %v2707, 16
      %v2884 = vrot.slane %v2882, 4
      %v2885 = vshll.u32 %v2707, 16
      %v2887 = vrot.slane %v2885, 5
      %v2888 = vor.u32 %v2884, %v2887
      %v2889 = vrot.slane %v2888, 4
      %v2891 = vshll.u32 %v2708, 16
      %v2893 = vrot.slane %v2891, 5
      %v2894 = vsel %vm838, %v2889, %v2893
      %v2895 = vshrl.u32 %v2708, 16
      %v2897 = vrot.slane %v2895, 4
      %v2898 = vor.u32 %v2897, %v2893
      %v2899 = vrot.slane %v2898, 4
      %v2901 = vshll.u32 %v2709, 16
      %v2903 = vrot.slane %v2901, 5
      %v2904 = vsel %vm838, %v2899, %v2903
      %v2906 = vshrl.u32 %v2710, 16
      %v2908 = vrot.slane %v2906, 4
      %v2909 = vshll.u32 %v2710, 16
      %v2911 = vrot.slane %v2909, 5
      %v2912 = vor.u32 %v2908, %v2911
      %v2913 = vrot.slane %v2912, 4
      %v2915 = vshll.u32 %v2711, 16
      %v2917 = vrot.slane %v2915, 5
      %v2918 = vsel %vm838, %v2913, %v2917
      %v2919 = vshrl.u32 %v2711, 16
      %v2921 = vrot.slane %v2919, 4
      %v2922 = vor.u32 %v2921, %v2917
      %v2923 = vrot.slane %v2922, 4
      %v2925 = vshll.u32 %v2712, 16
      %v2927 = vrot.slane %v2925, 5
      %v2928 = vsel %vm838, %v2923, %v2927
      %v2930 = vshrl.u32 %v2713, 16
      %v2932 = vrot.slane %v2930, 4
      %v2933 = vshll.u32 %v2713, 16
      %v2935 = vrot.slane %v2933, 5
      %v2936 = vor.u32 %v2932, %v2935
      %v2937 = vrot.slane %v2936, 4
      %v2939 = vshll.u32 %v2714, 16
      %v2941 = vrot.slane %v2939, 5
      %v2942 = vsel %vm838, %v2937, %v2941
      %v2943 = vshrl.u32 %v2714, 16
      %v2945 = vrot.slane %v2943, 4
      %v2946 = vor.u32 %v2945, %v2941
      %v2947 = vrot.slane %v2946, 4
      %v2949 = vshll.u32 %v2715, 16
      %v2951 = vrot.slane %v2949, 5
      %v2952 = vsel %vm838, %v2947, %v2951
      %v2954 = vshrl.u32 %v2716, 16
      %v2956 = vrot.slane %v2954, 4
      %v2957 = vshll.u32 %v2716, 16
      %v2959 = vrot.slane %v2957, 5
      %v2960 = vor.u32 %v2956, %v2959
      %v2961 = vrot.slane %v2960, 4
      %v2963 = vshll.u32 %v2717, 16
      %v2965 = vrot.slane %v2963, 5
      %v2966 = vsel %vm838, %v2961, %v2965
      %v2967 = vshrl.u32 %v2717, 16
      %v2969 = vrot.slane %v2967, 4
      %v2970 = vor.u32 %v2969, %v2965
      %v2971 = vrot.slane %v2970, 4
      %v2973 = vshll.u32 %v2718, 16
      %v2975 = vrot.slane %v2973, 5
      %v2976 = vsel %vm838, %v2971, %v2975
      %v2978 = vshrl.u32 %v2719, 16
      %v2980 = vrot.slane %v2978, 4
      %v2981 = vshll.u32 %v2719, 16
      %v2983 = vrot.slane %v2981, 5
      %v2984 = vor.u32 %v2980, %v2983
      %v2985 = vrot.slane %v2984, 4
      %v2987 = vshll.u32 %v2720, 16
      %v2989 = vrot.slane %v2987, 5
      %v2990 = vsel %vm838, %v2985, %v2989
      %v2991 = vshrl.u32 %v2720, 16
      %v2993 = vrot.slane %v2991, 4
      %v2994 = vor.u32 %v2993, %v2989
      %v2995 = vrot.slane %v2994, 4
      %v2997 = vshll.u32 %v2721, 16
      %v2999 = vrot.slane %v2997, 5
      %v3000 = vsel %vm838, %v2995, %v2999
      %v3002 = vshrl.u32 %v2722, 16
      %v3004 = vrot.slane %v3002, 4
      %v3005 = vshll.u32 %v2722, 16
      %v3007 = vrot.slane %v3005, 5
      %v3008 = vor.u32 %v3004, %v3007
      %v3009 = vrot.slane %v3008, 4
      %v3011 = vshll.u32 %v2723, 16
      %v3013 = vrot.slane %v3011, 5
      %v3014 = vsel %vm838, %v3009, %v3013
      %v3015 = vshrl.u32 %v2723, 16
      %v3017 = vrot.slane %v3015, 4
      %v3018 = vor.u32 %v3017, %v3013
      %v3019 = vrot.slane %v3018, 4
      %v3021 = vshll.u32 %v2724, 16
      %v3023 = vrot.slane %v3021, 5
      %v3024 = vsel %vm838, %v3019, %v3023
      %v3026 = vshrl.u32 %v2725, 16
      %v3028 = vrot.slane %v3026, 4
      %v3029 = vshll.u32 %v2725, 16
      %v3031 = vrot.slane %v3029, 5
      %v3032 = vor.u32 %v3028, %v3031
      %v3033 = vrot.slane %v3032, 4
      %v3035 = vshll.u32 %v2726, 16
      %v3037 = vrot.slane %v3035, 5
      %v3038 = vsel %vm838, %v3033, %v3037
      %v3039 = vshrl.u32 %v2726, 16
      %v3041 = vrot.slane %v3039, 4
      %v3042 = vor.u32 %v3041, %v3037
      %v3043 = vrot.slane %v3042, 4
      %v3045 = vshll.u32 %v2727, 16
      %v3047 = vrot.slane %v3045, 5
      %v3048 = vsel %vm838, %v3043, %v3047
      %v3050 = vshrl.u32 %v2728, 16
      %v3052 = vrot.slane %v3050, 4
      %v3053 = vshll.u32 %v2728, 16
      %v3055 = vrot.slane %v3053, 5
      %v3056 = vor.u32 %v3052, %v3055
      %v3057 = vrot.slane %v3056, 4
      %v3059 = vshll.u32 %v2729, 16
      %v3061 = vrot.slane %v3059, 5
      %v3062 = vsel %vm838, %v3057, %v3061
      %v3063 = vshrl.u32 %v2729, 16
      %v3065 = vrot.slane %v3063, 4
      %v3066 = vor.u32 %v3065, %v3061
      %v3067 = vrot.slane %v3066, 4
      %v3069 = vshll.u32 %v2730, 16
      %v3071 = vrot.slane %v3069, 5
      %v3072 = vsel %vm838, %v3067, %v3071
      %v3074 = vshrl.u32 %v2731, 16
      %v3076 = vrot.slane %v3074, 4
      %v3077 = vshll.u32 %v2731, 16
      %v3079 = vrot.slane %v3077, 5
      %v3080 = vor.u32 %v3076, %v3079
      %v3081 = vrot.slane %v3080, 4
      %v3083 = vshll.u32 %v2732, 16
      %v3085 = vrot.slane %v3083, 5
      %v3086 = vsel %vm838, %v3081, %v3085
      %v3087 = vshrl.u32 %v2732, 16
      %v3089 = vrot.slane %v3087, 4
      %v3090 = vor.u32 %v3089, %v3085
      %v3091 = vrot.slane %v3090, 4
      %v3093 = vshll.u32 %v2733, 16
      %v3095 = vrot.slane %v3093, 5
      %v3096 = vsel %vm838, %v3091, %v3095
      %v3098 = vshrl.u32 %v2734, 16
      %v3100 = vrot.slane %v3098, 4
      %v3101 = vshll.u32 %v2734, 16
      %v3103 = vrot.slane %v3101, 5
      %v3104 = vor.u32 %v3100, %v3103
      %v3105 = vrot.slane %v3104, 4
      %v3107 = vshll.u32 %v2735, 16
      %v3109 = vrot.slane %v3107, 5
      %v3110 = vsel %vm838, %v3105, %v3109
      %v3111 = vshrl.u32 %v2735, 16
      %v3113 = vrot.slane %v3111, 4
      %v3114 = vor.u32 %v3113, %v3109
      %v3115 = vrot.slane %v3114, 4
      %v3117 = vshll.u32 %v2736, 16
      %v3119 = vrot.slane %v3117, 5
      %v3120 = vsel %vm838, %v3115, %v3119
      %s3121 = scalar_lea.vmem %s1, 256
      %v3122 = vld [vmem:[%s3121] sm:$0xf]
      %v3123 = vld [vmem:[%s3121 + $0x4] sm:$0xf]
      %v3124 = vld [vmem:[%s3121 + $0x8] sm:$0xf]
      %v3125 = vld [vmem:[%s3121 + $0xc] sm:$0xf]
      %v3126 = vld [vmem:[%s3121 + $0x10] sm:$0xf]
      %v3127 = vld [vmem:[%s3121 + $0x14] sm:$0xf]
      %v3128 = vld [vmem:[%s3121 + $0x18] sm:$0xf]
      %v3129 = vld [vmem:[%s3121 + $0x1c] sm:$0xf]
      %v3130 = vld [vmem:[%s3121 + $0x20] sm:$0xf]
      %v3131 = vld [vmem:[%s3121 + $0x24] sm:$0xf]
      %v3132 = vld [vmem:[%s3121 + $0x28] sm:$0xf]
      %v3133 = vld [vmem:[%s3121 + $0x2c] sm:$0xf]
      %v3134 = vld [vmem:[%s3121 + $0x30] sm:$0xf]
      %v3135 = vld [vmem:[%s3121 + $0x34] sm:$0xf]
      %v3136 = vld [vmem:[%s3121 + $0x38] sm:$0xf]
      %v3137 = vld [vmem:[%s3121 + $0x3c] sm:$0xf]
      %v3138 = vunpack.c.l.b16 %v2750
      %v3139 = vunpack.c.l.b16 %v2760
      %v3140 = vunpack.c.l.b16 %v2774
      %v3141 = vunpack.c.l.b16 %v2784
      %v3142 = vunpack.c.l.b16 %v2798
      %v3143 = vunpack.c.l.b16 %v2808
      %v3144 = vunpack.c.l.b16 %v2822
      %v3145 = vunpack.c.l.b16 %v2832
      %v3146 = vunpack.c.l.b16 %v2846
      %v3147 = vunpack.c.l.b16 %v2856
      %v3148 = vunpack.c.l.b16 %v2870
      %v3149 = vunpack.c.l.b16 %v2880
      %v3150 = vunpack.c.l.b16 %v2894
      %v3151 = vunpack.c.l.b16 %v2904
      %v3152 = vunpack.c.l.b16 %v2918
      %v3153 = vunpack.c.l.b16 %v2928
      %v3154 = vunpack.c.l.b16 %v2942
      %v3155 = vunpack.c.l.b16 %v2952
      %v3156 = vunpack.c.l.b16 %v2966
      %v3157 = vunpack.c.l.b16 %v2976
      %v3158 = vunpack.c.l.b16 %v2990
      %v3159 = vunpack.c.l.b16 %v3000
      %v3160 = vunpack.c.l.b16 %v3014
      %v3161 = vunpack.c.l.b16 %v3024
      %v3162 = vunpack.c.l.b16 %v3038
      %v3163 = vunpack.c.l.b16 %v3048
      %v3164 = vunpack.c.l.b16 %v3062
      %v3165 = vunpack.c.l.b16 %v3072
      %v3166 = vunpack.c.l.b16 %v3086
      %v3167 = vunpack.c.l.b16 %v3096
      %v3168 = vunpack.c.l.b16 %v3110
      %v3169 = vunpack.c.l.b16 %v3120
      %v3170 = vpack.c.b16 %v3139, %v3138
      %v3171 = vpack.c.b16 %v3141, %v3140
      %v3172 = vpack.c.b16 %v3143, %v3142
      %v3173 = vpack.c.b16 %v3145, %v3144
      %v3174 = vpack.c.b16 %v3147, %v3146
      %v3175 = vpack.c.b16 %v3149, %v3148
      %v3176 = vpack.c.b16 %v3151, %v3150
      %v3177 = vpack.c.b16 %v3153, %v3152
      %v3178 = vpack.c.b16 %v3155, %v3154
      %v3179 = vpack.c.b16 %v3157, %v3156
      %v3180 = vpack.c.b16 %v3159, %v3158
      %v3181 = vpack.c.b16 %v3161, %v3160
      %v3182 = vpack.c.b16 %v3163, %v3162
      %v3183 = vpack.c.b16 %v3165, %v3164
      %v3184 = vpack.c.b16 %v3167, %v3166
      %v3185 = vpack.c.b16 %v3169, %v3168
      %v3218 = vunpack.c.l.b16 %v3122
      %v3219 = vunpack.c.l.b16 %v3123
      %v3220 = vunpack.c.l.b16 %v3124
      %v3221 = vunpack.c.l.b16 %v3125
      %v3222 = vunpack.c.l.b16 %v3126
      %v3223 = vunpack.c.l.b16 %v3127
      %v3224 = vunpack.c.l.b16 %v3128
      %v3225 = vunpack.c.l.b16 %v3129
      %v3226 = vunpack.c.l.b16 %v3130
      %v3227 = vunpack.c.l.b16 %v3131
      %v3228 = vunpack.c.l.b16 %v3132
      %v3229 = vunpack.c.l.b16 %v3133
      %v3230 = vunpack.c.l.b16 %v3134
      %v3231 = vunpack.c.l.b16 %v3135
      %v3232 = vunpack.c.l.b16 %v3136
      %v3233 = vunpack.c.l.b16 %v3137
      %v3234 = vpack.c.b16 %v3219, %v3218
      %v3235 = vpack.c.b16 %v3221, %v3220
      %v3236 = vpack.c.b16 %v3223, %v3222
      %v3237 = vpack.c.b16 %v3225, %v3224
      %v3238 = vpack.c.b16 %v3227, %v3226
      %v3239 = vpack.c.b16 %v3229, %v3228
      %v3240 = vpack.c.b16 %v3231, %v3230
      %v3241 = vpack.c.b16 %v3233, %v3232
      %3250 = vmatprep.subr.bf16.mxu0 0
      %3251 = vmatpush1.bf16.msra.mxu0 %v3241
      %3252 = vmatprep.subr.bf16.mxu0 0
      %3253 = vmatpush1.bf16.msra.mxu0 %v3240
      %3254 = vmatprep.subr.bf16.mxu0 0
      %3255 = vmatpush1.bf16.msra.mxu0 %v3239
      %3256 = vmatprep.subr.bf16.mxu0 0
      %3257 = vmatpush1.bf16.msra.mxu0 %v3238
      %3258 = vmatprep.subr.bf16.mxu0 0
      %3259 = vmatpush1.bf16.msra.mxu0 %v3237
      %3260 = vmatprep.subr.bf16.mxu0 0
      %3261 = vmatpush1.bf16.msra.mxu0 %v3236
      %3262 = vmatprep.subr.bf16.mxu0 0
      %3263 = vmatpush1.bf16.msra.mxu0 %v3235
      %3264 = vmatprep.subr.bf16.mxu0 0
      %3265 = vmatpush1.bf16.msra.mxu0 %v3234
      %3266 = vmatprep.subr.bf16.mxu0 0
      %3267 = vmatpush2.bf16.msra.mxu0 0
      %3268 = vmatprep.subr.bf16.mxu0 0
      %3269 = vmatpush2.bf16.msra.mxu0 0
      %3270 = vmatprep.subr.bf16.mxu0 0
      %3271 = vmatpush2.bf16.msra.mxu0 0
      %3272 = vmatprep.subr.bf16.mxu0 0
      %3273 = vmatpush2.bf16.msra.mxu0 0
      %3274 = vmatprep.subr.bf16.mxu0 0
      %3275 = vmatpush2.bf16.msra.mxu0 0
      %3276 = vmatprep.subr.bf16.mxu0 0
      %3277 = vmatpush2.bf16.msra.mxu0 0
      %3278 = vmatprep.subr.bf16.mxu0 0
      %3279 = vmatpush2.bf16.msra.mxu0 0
      %3280 = vmatprep.subr.bf16.mxu0 0
      %3281 = vmatpush2.bf16.msra.mxu0 0
      %3282 = vmatprep.mubr.bf16.mxu0 0
      %3283 = vmatmul.mubr.bf16.gmra.mxu0 %v3170
      %v3284 = vpop.f32.mrf.mxu0
      %v3285 = vadd.f32 0.0, %v3284
      %v3286 = vpop.f32.mrf.mxu0
      %v3287 = vpop.f32.mrf.mxu0
      %v3288 = vadd.f32 0.0, %v3287
      %v3289 = vpop.f32.mrf.mxu0
      %3290 = vmatprep.mubr.bf16.mxu0 0
      %3291 = vmatmul.mubr.bf16.gmra.mxu0 %v3171
      %v3292 = vpop.f32.mrf.mxu0
      %v3293 = vadd.f32 0.0, %v3292
      %v3294 = vpop.f32.mrf.mxu0
      %v3295 = vpop.f32.mrf.mxu0
      %v3296 = vadd.f32 0.0, %v3295
      %v3297 = vpop.f32.mrf.mxu0
      %3298 = vmatprep.mubr.bf16.mxu0 0
      %3299 = vmatmul.mubr.bf16.gmra.mxu0 %v3172
      %v3300 = vpop.f32.mrf.mxu0
      %v3301 = vadd.f32 0.0, %v3300
      %v3302 = vpop.f32.mrf.mxu0
      %v3303 = vpop.f32.mrf.mxu0
      %v3304 = vadd.f32 0.0, %v3303
      %v3305 = vpop.f32.mrf.mxu0
      %3306 = vmatprep.mubr.bf16.mxu0 0
      %3307 = vmatmul.mubr.bf16.gmra.mxu0 %v3173
      %v3308 = vpop.f32.mrf.mxu0
      %v3309 = vadd.f32 0.0, %v3308
      %v3310 = vpop.f32.mrf.mxu0
      %v3311 = vpop.f32.mrf.mxu0
      %v3312 = vadd.f32 0.0, %v3311
      %v3313 = vpop.f32.mrf.mxu0
      %3314 = vmatprep.mubr.bf16.mxu0 0
      %3315 = vmatmul.mubr.bf16.gmra.mxu0 %v3174
      %v3316 = vpop.f32.mrf.mxu0
      %v3317 = vadd.f32 0.0, %v3316
      %v3318 = vpop.f32.mrf.mxu0
      %v3319 = vpop.f32.mrf.mxu0
      %v3320 = vadd.f32 0.0, %v3319
      %v3321 = vpop.f32.mrf.mxu0
      %3322 = vmatprep.mubr.bf16.mxu0 0
      %3323 = vmatmul.mubr.bf16.gmra.mxu0 %v3175
      %v3324 = vpop.f32.mrf.mxu0
      %v3325 = vadd.f32 0.0, %v3324
      %v3326 = vpop.f32.mrf.mxu0
      %v3327 = vpop.f32.mrf.mxu0
      %v3328 = vadd.f32 0.0, %v3327
      %v3329 = vpop.f32.mrf.mxu0
      %3330 = vmatprep.mubr.bf16.mxu0 0
      %3331 = vmatmul.mubr.bf16.gmra.mxu0 %v3176
      %v3332 = vpop.f32.mrf.mxu0
      %v3333 = vadd.f32 0.0, %v3332
      %v3334 = vpop.f32.mrf.mxu0
      %v3335 = vpop.f32.mrf.mxu0
      %v3336 = vadd.f32 0.0, %v3335
      %v3337 = vpop.f32.mrf.mxu0
      %3338 = vmatprep.mubr.bf16.mxu0 0
      %3339 = vmatmul.mubr.bf16.gmra.mxu0 %v3177
      %v3340 = vpop.f32.mrf.mxu0
      %v3341 = vadd.f32 0.0, %v3340
      %v3342 = vpop.f32.mrf.mxu0
      %v3343 = vpop.f32.mrf.mxu0
      %v3344 = vadd.f32 0.0, %v3343
      %v3345 = vpop.f32.mrf.mxu0
      %3346 = vmatprep.mubr.bf16.mxu0 0
      %3347 = vmatmul.mubr.bf16.gmra.mxu0 %v3178
      %v3348 = vpop.f32.mrf.mxu0
      %v3349 = vadd.f32 0.0, %v3348
      %v3350 = vpop.f32.mrf.mxu0
      %v3351 = vpop.f32.mrf.mxu0
      %v3352 = vadd.f32 0.0, %v3351
      %v3353 = vpop.f32.mrf.mxu0
      %3354 = vmatprep.mubr.bf16.mxu0 0
      %3355 = vmatmul.mubr.bf16.gmra.mxu0 %v3179
      %v3356 = vpop.f32.mrf.mxu0
      %v3357 = vadd.f32 0.0, %v3356
      %v3358 = vpop.f32.mrf.mxu0
      %v3359 = vpop.f32.mrf.mxu0
      %v3360 = vadd.f32 0.0, %v3359
      %v3361 = vpop.f32.mrf.mxu0
      %3362 = vmatprep.mubr.bf16.mxu0 0
      %3363 = vmatmul.mubr.bf16.gmra.mxu0 %v3180
      %v3364 = vpop.f32.mrf.mxu0
      %v3365 = vadd.f32 0.0, %v3364
      %v3366 = vpop.f32.mrf.mxu0
      %v3367 = vpop.f32.mrf.mxu0
      %v3368 = vadd.f32 0.0, %v3367
      %v3369 = vpop.f32.mrf.mxu0
      %3370 = vmatprep.mubr.bf16.mxu0 0
      %3371 = vmatmul.mubr.bf16.gmra.mxu0 %v3181
      %v3372 = vpop.f32.mrf.mxu0
      %v3373 = vadd.f32 0.0, %v3372
      %v3374 = vpop.f32.mrf.mxu0
      %v3375 = vpop.f32.mrf.mxu0
      %v3376 = vadd.f32 0.0, %v3375
      %v3377 = vpop.f32.mrf.mxu0
      %3378 = vmatprep.mubr.bf16.mxu0 0
      %3379 = vmatmul.mubr.bf16.gmra.mxu0 %v3182
      %v3380 = vpop.f32.mrf.mxu0
      %v3381 = vadd.f32 0.0, %v3380
      %v3382 = vpop.f32.mrf.mxu0
      %v3383 = vpop.f32.mrf.mxu0
      %v3384 = vadd.f32 0.0, %v3383
      %v3385 = vpop.f32.mrf.mxu0
      %3386 = vmatprep.mubr.bf16.mxu0 0
      %3387 = vmatmul.mubr.bf16.gmra.mxu0 %v3183
      %v3388 = vpop.f32.mrf.mxu0
      %v3389 = vadd.f32 0.0, %v3388
      %v3390 = vpop.f32.mrf.mxu0
      %v3391 = vpop.f32.mrf.mxu0
      %v3392 = vadd.f32 0.0, %v3391
      %v3393 = vpop.f32.mrf.mxu0
      %3394 = vmatprep.mubr.bf16.mxu0 0
      %3395 = vmatmul.mubr.bf16.gmra.mxu0 %v3184
      %v3396 = vpop.f32.mrf.mxu0
      %v3397 = vadd.f32 0.0, %v3396
      %v3398 = vpop.f32.mrf.mxu0
      %v3399 = vpop.f32.mrf.mxu0
      %v3400 = vadd.f32 0.0, %v3399
      %v3401 = vpop.f32.mrf.mxu0
      %3402 = vmatprep.mubr.bf16.mxu0 0
      %3403 = vmatmul.mubr.bf16.gmra.mxu0 %v3185
      %v3404 = vpop.f32.mrf.mxu0
      %v3405 = vadd.f32 0.0, %v3404
      %v3406 = vpop.f32.mrf.mxu0
      %v3407 = vpop.f32.mrf.mxu0
      %v3408 = vadd.f32 0.0, %v3407
      %v3409 = vpop.f32.mrf.mxu0
      %3410 = vdwg.mxu0
      %v3411 = vadd.f32 %v2657, %v3285
      %v3412 = vadd.f32 %v2658, %v3288
      %v3413 = vadd.f32 %v2659, %v3293
      %v3414 = vadd.f32 %v2660, %v3296
      %v3415 = vadd.f32 %v2661, %v3301
      %v3416 = vadd.f32 %v2662, %v3304
      %v3417 = vadd.f32 %v2663, %v3309
      %v3418 = vadd.f32 %v2664, %v3312
      %v3419 = vadd.f32 %v2665, %v3317
      %v3420 = vadd.f32 %v2666, %v3320
      %v3421 = vadd.f32 %v2667, %v3325
      %v3422 = vadd.f32 %v2668, %v3328
      %v3423 = vadd.f32 %v2669, %v3333
      %v3424 = vadd.f32 %v2670, %v3336
      %v3425 = vadd.f32 %v2671, %v3341
      %v3426 = vadd.f32 %v2672, %v3344
      %v3427 = vadd.f32 %v2673, %v3349
      %v3428 = vadd.f32 %v2674, %v3352
      %v3429 = vadd.f32 %v2675, %v3357
      %v3430 = vadd.f32 %v2676, %v3360
      %v3431 = vadd.f32 %v2677, %v3365
      %v3432 = vadd.f32 %v2678, %v3368
      %v3433 = vadd.f32 %v2679, %v3373
      %v3434 = vadd.f32 %v2680, %v3376
      %v3435 = vadd.f32 %v2681, %v3381
      %v3436 = vadd.f32 %v2682, %v3384
      %v3437 = vadd.f32 %v2683, %v3389
      %v3438 = vadd.f32 %v2684, %v3392
      %v3439 = vadd.f32 %v2685, %v3397
      %v3440 = vadd.f32 %v2686, %v3400
      %v3441 = vadd.f32 %v2687, %v3405
      %v3442 = vadd.f32 %v2688, %v3408
      %v3443 = vld [vmem:[%s657] sm:$0xe]
      %v3444 = vld [vmem:[%s657 + $0xc] sm:$0xe]
      %v3445 = vld [vmem:[%s657 + $0x18] sm:$0xe]
      %v3446 = vld [vmem:[%s657 + $0x24] sm:$0xe]
      %v3447 = vld [vmem:[%s657 + $0x30] sm:$0xe]
      %v3448 = vld [vmem:[%s657 + $0x3c] sm:$0xe]
      %v3449 = vld [vmem:[%s657 + $0x48] sm:$0xe]
      %v3450 = vld [vmem:[%s657 + $0x54] sm:$0xe]
      %v3451 = vld [vmem:[%s657 + $0x60] sm:$0xe]
      %v3452 = vld [vmem:[%s657 + $0x6c] sm:$0xe]
      %v3453 = vld [vmem:[%s657 + $0x78] sm:$0xe]
      %v3454 = vld [vmem:[%s657 + $0x84] sm:$0xe]
      %v3455 = vld [vmem:[%s657 + $0x90] sm:$0xe]
      %v3456 = vld [vmem:[%s657 + $0x9c] sm:$0xe]
      %v3457 = vld [vmem:[%s657 + $0xa8] sm:$0xe]
      %v3458 = vld [vmem:[%s657 + $0xb4] sm:$0xe]
      %v3507 = vrot.slane %v3443, 5
      %v3508 = vrot.slane %v3507, 4
      %v3509 = vrot.slane %v2690, 5
      %v3510 = vsel %vm1868, %v3508, %v3509
      %v3511 = vrot.slane %v3509, 4
      %v3512 = vrot.slane %v2691, 5
      %v3513 = vsel %vm1868, %v3511, %v3512
      %v3514 = vrot.slane %v3444, 5
      %v3515 = vrot.slane %v3514, 4
      %v3516 = vrot.slane %v2693, 5
      %v3517 = vsel %vm1868, %v3515, %v3516
      %v3518 = vrot.slane %v3516, 4
      %v3519 = vrot.slane %v2694, 5
      %v3520 = vsel %vm1868, %v3518, %v3519
      %v3521 = vrot.slane %v3445, 5
      %v3522 = vrot.slane %v3521, 4
      %v3523 = vrot.slane %v2696, 5
      %v3524 = vsel %vm1868, %v3522, %v3523
      %v3525 = vrot.slane %v3523, 4
      %v3526 = vrot.slane %v2697, 5
      %v3527 = vsel %vm1868, %v3525, %v3526
      %v3528 = vrot.slane %v3446, 5
      %v3529 = vrot.slane %v3528, 4
      %v3530 = vrot.slane %v2699, 5
      %v3531 = vsel %vm1868, %v3529, %v3530
      %v3532 = vrot.slane %v3530, 4
      %v3533 = vrot.slane %v2700, 5
      %v3534 = vsel %vm1868, %v3532, %v3533
      %v3535 = vrot.slane %v3447, 5
      %v3536 = vrot.slane %v3535, 4
      %v3537 = vrot.slane %v2702, 5
      %v3538 = vsel %vm1868, %v3536, %v3537
      %v3539 = vrot.slane %v3537, 4
      %v3540 = vrot.slane %v2703, 5
      %v3541 = vsel %vm1868, %v3539, %v3540
      %v3542 = vrot.slane %v3448, 5
      %v3543 = vrot.slane %v3542, 4
      %v3544 = vrot.slane %v2705, 5
      %v3545 = vsel %vm1868, %v3543, %v3544
      %v3546 = vrot.slane %v3544, 4
      %v3547 = vrot.slane %v2706, 5
      %v3548 = vsel %vm1868, %v3546, %v3547
      %v3549 = vrot.slane %v3449, 5
      %v3550 = vrot.slane %v3549, 4
      %v3551 = vrot.slane %v2708, 5
      %v3552 = vsel %vm1868, %v3550, %v3551
      %v3553 = vrot.slane %v3551, 4
      %v3554 = vrot.slane %v2709, 5
      %v3555 = vsel %vm1868, %v3553, %v3554
      %v3556 = vrot.slane %v3450, 5
      %v3557 = vrot.slane %v3556, 4
      %v3558 = vrot.slane %v2711, 5
      %v3559 = vsel %vm1868, %v3557, %v3558
      %v3560 = vrot.slane %v3558, 4
      %v3561 = vrot.slane %v2712, 5
      %v3562 = vsel %vm1868, %v3560, %v3561
      %v3563 = vrot.slane %v3451, 5
      %v3564 = vrot.slane %v3563, 4
      %v3565 = vrot.slane %v2714, 5
      %v3566 = vsel %vm1868, %v3564, %v3565
      %v3567 = vrot.slane %v3565, 4
      %v3568 = vrot.slane %v2715, 5
      %v3569 = vsel %vm1868, %v3567, %v3568
      %v3570 = vrot.slane %v3452, 5
      %v3571 = vrot.slane %v3570, 4
      %v3572 = vrot.slane %v2717, 5
      %v3573 = vsel %vm1868, %v3571, %v3572
      %v3574 = vrot.slane %v3572, 4
      %v3575 = vrot.slane %v2718, 5
      %v3576 = vsel %vm1868, %v3574, %v3575
      %v3577 = vrot.slane %v3453, 5
      %v3578 = vrot.slane %v3577, 4
      %v3579 = vrot.slane %v2720, 5
      %v3580 = vsel %vm1868, %v3578, %v3579
      %v3581 = vrot.slane %v3579, 4
      %v3582 = vrot.slane %v2721, 5
      %v3583 = vsel %vm1868, %v3581, %v3582
      %v3584 = vrot.slane %v3454, 5
      %v3585 = vrot.slane %v3584, 4
      %v3586 = vrot.slane %v2723, 5
      %v3587 = vsel %vm1868, %v3585, %v3586
      %v3588 = vrot.slane %v3586, 4
      %v3589 = vrot.slane %v2724, 5
      %v3590 = vsel %vm1868, %v3588, %v3589
      %v3591 = vrot.slane %v3455, 5
      %v3592 = vrot.slane %v3591, 4
      %v3593 = vrot.slane %v2726, 5
      %v3594 = vsel %vm1868, %v3592, %v3593
      %v3595 = vrot.slane %v3593, 4
      %v3596 = vrot.slane %v2727, 5
      %v3597 = vsel %vm1868, %v3595, %v3596
      %v3598 = vrot.slane %v3456, 5
      %v3599 = vrot.slane %v3598, 4
      %v3600 = vrot.slane %v2729, 5
      %v3601 = vsel %vm1868, %v3599, %v3600
      %v3602 = vrot.slane %v3600, 4
      %v3603 = vrot.slane %v2730, 5
      %v3604 = vsel %vm1868, %v3602, %v3603
      %v3605 = vrot.slane %v3457, 5
      %v3606 = vrot.slane %v3605, 4
      %v3607 = vrot.slane %v2732, 5
      %v3608 = vsel %vm1868, %v3606, %v3607
      %v3609 = vrot.slane %v3607, 4
      %v3610 = vrot.slane %v2733, 5
      %v3611 = vsel %vm1868, %v3609, %v3610
      %v3612 = vrot.slane %v3458, 5
      %v3613 = vrot.slane %v3612, 4
      %v3614 = vrot.slane %v2735, 5
      %v3615 = vsel %vm1868, %v3613, %v3614
      %v3616 = vrot.slane %v3614, 4
      %v3617 = vrot.slane %v2736, 5
      %v3618 = vsel %vm1868, %v3616, %v3617
      %s3619 = scalar_lea.vmem %s1, 320
      %v3620 = vld [vmem:[%s3619] sm:$0xf]
      %v3621 = vld [vmem:[%s3619 + $0x4] sm:$0xf]
      %v3622 = vld [vmem:[%s3619 + $0x8] sm:$0xf]
      %v3623 = vld [vmem:[%s3619 + $0xc] sm:$0xf]
      %v3624 = vld [vmem:[%s3619 + $0x10] sm:$0xf]
      %v3625 = vld [vmem:[%s3619 + $0x14] sm:$0xf]
      %v3626 = vld [vmem:[%s3619 + $0x18] sm:$0xf]
      %v3627 = vld [vmem:[%s3619 + $0x1c] sm:$0xf]
      %v3628 = vld [vmem:[%s3619 + $0x20] sm:$0xf]
      %v3629 = vld [vmem:[%s3619 + $0x24] sm:$0xf]
      %v3630 = vld [vmem:[%s3619 + $0x28] sm:$0xf]
      %v3631 = vld [vmem:[%s3619 + $0x2c] sm:$0xf]
      %v3632 = vld [vmem:[%s3619 + $0x30] sm:$0xf]
      %v3633 = vld [vmem:[%s3619 + $0x34] sm:$0xf]
      %v3634 = vld [vmem:[%s3619 + $0x38] sm:$0xf]
      %v3635 = vld [vmem:[%s3619 + $0x3c] sm:$0xf]
      %v3636 = vunpack.c.l.b16 %v3510
      %v3637 = vunpack.c.l.b16 %v3513
      %v3638 = vunpack.c.l.b16 %v3517
      %v3639 = vunpack.c.l.b16 %v3520
      %v3640 = vunpack.c.l.b16 %v3524
      %v3641 = vunpack.c.l.b16 %v3527
      %v3642 = vunpack.c.l.b16 %v3531
      %v3643 = vunpack.c.l.b16 %v3534
      %v3644 = vunpack.c.l.b16 %v3538
      %v3645 = vunpack.c.l.b16 %v3541
      %v3646 = vunpack.c.l.b16 %v3545
      %v3647 = vunpack.c.l.b16 %v3548
      %v3648 = vunpack.c.l.b16 %v3552
      %v3649 = vunpack.c.l.b16 %v3555
      %v3650 = vunpack.c.l.b16 %v3559
      %v3651 = vunpack.c.l.b16 %v3562
      %v3652 = vunpack.c.l.b16 %v3566
      %v3653 = vunpack.c.l.b16 %v3569
      %v3654 = vunpack.c.l.b16 %v3573
      %v3655 = vunpack.c.l.b16 %v3576
      %v3656 = vunpack.c.l.b16 %v3580
      %v3657 = vunpack.c.l.b16 %v3583
      %v3658 = vunpack.c.l.b16 %v3587
      %v3659 = vunpack.c.l.b16 %v3590
      %v3660 = vunpack.c.l.b16 %v3594
      %v3661 = vunpack.c.l.b16 %v3597
      %v3662 = vunpack.c.l.b16 %v3601
      %v3663 = vunpack.c.l.b16 %v3604
      %v3664 = vunpack.c.l.b16 %v3608
      %v3665 = vunpack.c.l.b16 %v3611
      %v3666 = vunpack.c.l.b16 %v3615
      %v3667 = vunpack.c.l.b16 %v3618
      %v3668 = vpack.c.b16 %v3637, %v3636
      %v3669 = vpack.c.b16 %v3639, %v3638
      %v3670 = vpack.c.b16 %v3641, %v3640
      %v3671 = vpack.c.b16 %v3643, %v3642
      %v3672 = vpack.c.b16 %v3645, %v3644
      %v3673 = vpack.c.b16 %v3647, %v3646
      %v3674 = vpack.c.b16 %v3649, %v3648
      %v3675 = vpack.c.b16 %v3651, %v3650
      %v3676 = vpack.c.b16 %v3653, %v3652
      %v3677 = vpack.c.b16 %v3655, %v3654
      %v3678 = vpack.c.b16 %v3657, %v3656
      %v3679 = vpack.c.b16 %v3659, %v3658
      %v3680 = vpack.c.b16 %v3661, %v3660
      %v3681 = vpack.c.b16 %v3663, %v3662
      %v3682 = vpack.c.b16 %v3665, %v3664
      %v3683 = vpack.c.b16 %v3667, %v3666
      %v3716 = vunpack.c.l.b16 %v3620
      %v3717 = vunpack.c.l.b16 %v3621
      %v3718 = vunpack.c.l.b16 %v3622
      %v3719 = vunpack.c.l.b16 %v3623
      %v3720 = vunpack.c.l.b16 %v3624
      %v3721 = vunpack.c.l.b16 %v3625
      %v3722 = vunpack.c.l.b16 %v3626
      %v3723 = vunpack.c.l.b16 %v3627
      %v3724 = vunpack.c.l.b16 %v3628
      %v3725 = vunpack.c.l.b16 %v3629
      %v3726 = vunpack.c.l.b16 %v3630
      %v3727 = vunpack.c.l.b16 %v3631
      %v3728 = vunpack.c.l.b16 %v3632
      %v3729 = vunpack.c.l.b16 %v3633
      %v3730 = vunpack.c.l.b16 %v3634
      %v3731 = vunpack.c.l.b16 %v3635
      %v3732 = vpack.c.b16 %v3717, %v3716
      %v3733 = vpack.c.b16 %v3719, %v3718
      %v3734 = vpack.c.b16 %v3721, %v3720
      %v3735 = vpack.c.b16 %v3723, %v3722
      %v3736 = vpack.c.b16 %v3725, %v3724
      %v3737 = vpack.c.b16 %v3727, %v3726
      %v3738 = vpack.c.b16 %v3729, %v3728
      %v3739 = vpack.c.b16 %v3731, %v3730
      %3748 = vmatprep.subr.bf16.mxu0 0
      %3749 = vmatpush1.bf16.msra.mxu0 %v3739
      %3750 = vmatprep.subr.bf16.mxu0 0
      %3751 = vmatpush1.bf16.msra.mxu0 %v3738
      %3752 = vmatprep.subr.bf16.mxu0 0
      %3753 = vmatpush1.bf16.msra.mxu0 %v3737
      %3754 = vmatprep.subr.bf16.mxu0 0
      %3755 = vmatpush1.bf16.msra.mxu0 %v3736
      %3756 = vmatprep.subr.bf16.mxu0 0
      %3757 = vmatpush1.bf16.msra.mxu0 %v3735
      %3758 = vmatprep.subr.bf16.mxu0 0
      %3759 = vmatpush1.bf16.msra.mxu0 %v3734
      %3760 = vmatprep.subr.bf16.mxu0 0
      %3761 = vmatpush1.bf16.msra.mxu0 %v3733
      %3762 = vmatprep.subr.bf16.mxu0 0
      %3763 = vmatpush1.bf16.msra.mxu0 %v3732
      %3764 = vmatprep.subr.bf16.mxu0 0
      %3765 = vmatpush2.bf16.msra.mxu0 0
      %3766 = vmatprep.subr.bf16.mxu0 0
      %3767 = vmatpush2.bf16.msra.mxu0 0
      %3768 = vmatprep.subr.bf16.mxu0 0
      %3769 = vmatpush2.bf16.msra.mxu0 0
      %3770 = vmatprep.subr.bf16.mxu0 0
      %3771 = vmatpush2.bf16.msra.mxu0 0
      %3772 = vmatprep.subr.bf16.mxu0 0
      %3773 = vmatpush2.bf16.msra.mxu0 0
      %3774 = vmatprep.subr.bf16.mxu0 0
      %3775 = vmatpush2.bf16.msra.mxu0 0
      %3776 = vmatprep.subr.bf16.mxu0 0
      %3777 = vmatpush2.bf16.msra.mxu0 0
      %3778 = vmatprep.subr.bf16.mxu0 0
      %3779 = vmatpush2.bf16.msra.mxu0 0
      %3780 = vmatprep.mubr.bf16.mxu0 0
      %3781 = vmatmul.mubr.bf16.gmra.mxu0 %v3668
      %v3782 = vpop.f32.mrf.mxu0
      %v3783 = vadd.f32 0.0, %v3782
      %v3784 = vpop.f32.mrf.mxu0
      %v3785 = vpop.f32.mrf.mxu0
      %v3786 = vadd.f32 0.0, %v3785
      %v3787 = vpop.f32.mrf.mxu0
      %3788 = vmatprep.mubr.bf16.mxu0 0
      %3789 = vmatmul.mubr.bf16.gmra.mxu0 %v3669
      %v3790 = vpop.f32.mrf.mxu0
      %v3791 = vadd.f32 0.0, %v3790
      %v3792 = vpop.f32.mrf.mxu0
      %v3793 = vpop.f32.mrf.mxu0
      %v3794 = vadd.f32 0.0, %v3793
      %v3795 = vpop.f32.mrf.mxu0
      %3796 = vmatprep.mubr.bf16.mxu0 0
      %3797 = vmatmul.mubr.bf16.gmra.mxu0 %v3670
      %v3798 = vpop.f32.mrf.mxu0
      %v3799 = vadd.f32 0.0, %v3798
      %v3800 = vpop.f32.mrf.mxu0
      %v3801 = vpop.f32.mrf.mxu0
      %v3802 = vadd.f32 0.0, %v3801
      %v3803 = vpop.f32.mrf.mxu0
      %3804 = vmatprep.mubr.bf16.mxu0 0
      %3805 = vmatmul.mubr.bf16.gmra.mxu0 %v3671
      %v3806 = vpop.f32.mrf.mxu0
      %v3807 = vadd.f32 0.0, %v3806
      %v3808 = vpop.f32.mrf.mxu0
      %v3809 = vpop.f32.mrf.mxu0
      %v3810 = vadd.f32 0.0, %v3809
      %v3811 = vpop.f32.mrf.mxu0
      %3812 = vmatprep.mubr.bf16.mxu0 0
      %3813 = vmatmul.mubr.bf16.gmra.mxu0 %v3672
      %v3814 = vpop.f32.mrf.mxu0
      %v3815 = vadd.f32 0.0, %v3814
      %v3816 = vpop.f32.mrf.mxu0
      %v3817 = vpop.f32.mrf.mxu0
      %v3818 = vadd.f32 0.0, %v3817
      %v3819 = vpop.f32.mrf.mxu0
      %3820 = vmatprep.mubr.bf16.mxu0 0
      %3821 = vmatmul.mubr.bf16.gmra.mxu0 %v3673
      %v3822 = vpop.f32.mrf.mxu0
      %v3823 = vadd.f32 0.0, %v3822
      %v3824 = vpop.f32.mrf.mxu0
      %v3825 = vpop.f32.mrf.mxu0
      %v3826 = vadd.f32 0.0, %v3825
      %v3827 = vpop.f32.mrf.mxu0
      %3828 = vmatprep.mubr.bf16.mxu0 0
      %3829 = vmatmul.mubr.bf16.gmra.mxu0 %v3674
      %v3830 = vpop.f32.mrf.mxu0
      %v3831 = vadd.f32 0.0, %v3830
      %v3832 = vpop.f32.mrf.mxu0
      %v3833 = vpop.f32.mrf.mxu0
      %v3834 = vadd.f32 0.0, %v3833
      %v3835 = vpop.f32.mrf.mxu0
      %3836 = vmatprep.mubr.bf16.mxu0 0
      %3837 = vmatmul.mubr.bf16.gmra.mxu0 %v3675
      %v3838 = vpop.f32.mrf.mxu0
      %v3839 = vadd.f32 0.0, %v3838
      %v3840 = vpop.f32.mrf.mxu0
      %v3841 = vpop.f32.mrf.mxu0
      %v3842 = vadd.f32 0.0, %v3841
      %v3843 = vpop.f32.mrf.mxu0
      %3844 = vmatprep.mubr.bf16.mxu0 0
      %3845 = vmatmul.mubr.bf16.gmra.mxu0 %v3676
      %v3846 = vpop.f32.mrf.mxu0
      %v3847 = vadd.f32 0.0, %v3846
      %v3848 = vpop.f32.mrf.mxu0
      %v3849 = vpop.f32.mrf.mxu0
      %v3850 = vadd.f32 0.0, %v3849
      %v3851 = vpop.f32.mrf.mxu0
      %3852 = vmatprep.mubr.bf16.mxu0 0
      %3853 = vmatmul.mubr.bf16.gmra.mxu0 %v3677
      %v3854 = vpop.f32.mrf.mxu0
      %v3855 = vadd.f32 0.0, %v3854
      %v3856 = vpop.f32.mrf.mxu0
      %v3857 = vpop.f32.mrf.mxu0
      %v3858 = vadd.f32 0.0, %v3857
      %v3859 = vpop.f32.mrf.mxu0
      %3860 = vmatprep.mubr.bf16.mxu0 0
      %3861 = vmatmul.mubr.bf16.gmra.mxu0 %v3678
      %v3862 = vpop.f32.mrf.mxu0
      %v3863 = vadd.f32 0.0, %v3862
      %v3864 = vpop.f32.mrf.mxu0
      %v3865 = vpop.f32.mrf.mxu0
      %v3866 = vadd.f32 0.0, %v3865
      %v3867 = vpop.f32.mrf.mxu0
      %3868 = vmatprep.mubr.bf16.mxu0 0
      %3869 = vmatmul.mubr.bf16.gmra.mxu0 %v3679
      %v3870 = vpop.f32.mrf.mxu0
      %v3871 = vadd.f32 0.0, %v3870
      %v3872 = vpop.f32.mrf.mxu0
      %v3873 = vpop.f32.mrf.mxu0
      %v3874 = vadd.f32 0.0, %v3873
      %v3875 = vpop.f32.mrf.mxu0
      %3876 = vmatprep.mubr.bf16.mxu0 0
      %3877 = vmatmul.mubr.bf16.gmra.mxu0 %v3680
      %v3878 = vpop.f32.mrf.mxu0
      %v3879 = vadd.f32 0.0, %v3878
      %v3880 = vpop.f32.mrf.mxu0
      %v3881 = vpop.f32.mrf.mxu0
      %v3882 = vadd.f32 0.0, %v3881
      %v3883 = vpop.f32.mrf.mxu0
      %3884 = vmatprep.mubr.bf16.mxu0 0
      %3885 = vmatmul.mubr.bf16.gmra.mxu0 %v3681
      %v3886 = vpop.f32.mrf.mxu0
      %v3887 = vadd.f32 0.0, %v3886
      %v3888 = vpop.f32.mrf.mxu0
      %v3889 = vpop.f32.mrf.mxu0
      %v3890 = vadd.f32 0.0, %v3889
      %v3891 = vpop.f32.mrf.mxu0
      %3892 = vmatprep.mubr.bf16.mxu0 0
      %3893 = vmatmul.mubr.bf16.gmra.mxu0 %v3682
      %v3894 = vpop.f32.mrf.mxu0
      %v3895 = vadd.f32 0.0, %v3894
      %v3896 = vpop.f32.mrf.mxu0
      %v3897 = vpop.f32.mrf.mxu0
      %v3898 = vadd.f32 0.0, %v3897
      %v3899 = vpop.f32.mrf.mxu0
      %3900 = vmatprep.mubr.bf16.mxu0 0
      %3901 = vmatmul.mubr.bf16.gmra.mxu0 %v3683
      %v3902 = vpop.f32.mrf.mxu0
      %v3903 = vadd.f32 0.0, %v3902
      %v3904 = vpop.f32.mrf.mxu0
      %v3905 = vpop.f32.mrf.mxu0
      %v3906 = vadd.f32 0.0, %v3905
      %v3907 = vpop.f32.mrf.mxu0
      %3908 = vdwg.mxu0
      %v3909 = vadd.f32 %v3411, %v3783
      %v3910 = vadd.f32 %v3412, %v3786
      %v3911 = vadd.f32 %v3413, %v3791
      %v3912 = vadd.f32 %v3414, %v3794
      %v3913 = vadd.f32 %v3415, %v3799
      %v3914 = vadd.f32 %v3416, %v3802
      %v3915 = vadd.f32 %v3417, %v3807
      %v3916 = vadd.f32 %v3418, %v3810
      %v3917 = vadd.f32 %v3419, %v3815
      %v3918 = vadd.f32 %v3420, %v3818
      %v3919 = vadd.f32 %v3421, %v3823
      %v3920 = vadd.f32 %v3422, %v3826
      %v3921 = vadd.f32 %v3423, %v3831
      %v3922 = vadd.f32 %v3424, %v3834
      %v3923 = vadd.f32 %v3425, %v3839
      %v3924 = vadd.f32 %v3426, %v3842
      %v3925 = vadd.f32 %v3427, %v3847
      %v3926 = vadd.f32 %v3428, %v3850
      %v3927 = vadd.f32 %v3429, %v3855
      %v3928 = vadd.f32 %v3430, %v3858
      %v3929 = vadd.f32 %v3431, %v3863
      %v3930 = vadd.f32 %v3432, %v3866
      %v3931 = vadd.f32 %v3433, %v3871
      %v3932 = vadd.f32 %v3434, %v3874
      %v3933 = vadd.f32 %v3435, %v3879
      %v3934 = vadd.f32 %v3436, %v3882
      %v3935 = vadd.f32 %v3437, %v3887
      %v3936 = vadd.f32 %v3438, %v3890
      %v3937 = vadd.f32 %v3439, %v3895
      %v3938 = vadd.f32 %v3440, %v3898
      %v3939 = vadd.f32 %v3441, %v3903
      %v3940 = vadd.f32 %v3442, %v3906
      %s3941 = scalar_lea.vmem [#allocation2], 24
      %v3942 = vld [vmem:[%s3941] sm:$0xf]
      %v3943 = vld [vmem:[%s3941 + $0x4] sm:$0xf]
      %v3944 = vld [vmem:[%s3941 + $0xc] sm:$0xf]
      %v3945 = vld [vmem:[%s3941 + $0x10] sm:$0xf]
      %v3946 = vld [vmem:[%s3941 + $0x18] sm:$0xf]
      %v3947 = vld [vmem:[%s3941 + $0x1c] sm:$0xf]
      %v3948 = vld [vmem:[%s3941 + $0x24] sm:$0xf]
      %v3949 = vld [vmem:[%s3941 + $0x28] sm:$0xf]
      %v3950 = vld [vmem:[%s3941 + $0x30] sm:$0xf]
      %v3951 = vld [vmem:[%s3941 + $0x34] sm:$0xf]
      %v3952 = vld [vmem:[%s3941 + $0x3c] sm:$0xf]
      %v3953 = vld [vmem:[%s3941 + $0x40] sm:$0xf]
      %v3954 = vld [vmem:[%s3941 + $0x48] sm:$0xf]
      %v3955 = vld [vmem:[%s3941 + $0x4c] sm:$0xf]
      %v3956 = vld [vmem:[%s3941 + $0x54] sm:$0xf]
      %v3957 = vld [vmem:[%s3941 + $0x58] sm:$0xf]
      %v3958 = vld [vmem:[%s3941 + $0x60] sm:$0xf]
      %v3959 = vld [vmem:[%s3941 + $0x64] sm:$0xf]
      %v3960 = vld [vmem:[%s3941 + $0x6c] sm:$0xf]
      %v3961 = vld [vmem:[%s3941 + $0x70] sm:$0xf]
      %v3962 = vld [vmem:[%s3941 + $0x78] sm:$0xf]
      %v3963 = vld [vmem:[%s3941 + $0x7c] sm:$0xf]
      %v3964 = vld [vmem:[%s3941 + $0x84] sm:$0xf]
      %v3965 = vld [vmem:[%s3941 + $0x88] sm:$0xf]
      %v3966 = vld [vmem:[%s3941 + $0x90] sm:$0xf]
      %v3967 = vld [vmem:[%s3941 + $0x94] sm:$0xf]
      %v3968 = vld [vmem:[%s3941 + $0x9c] sm:$0xf]
      %v3969 = vld [vmem:[%s3941 + $0xa0] sm:$0xf]
      %v3970 = vld [vmem:[%s3941 + $0xa8] sm:$0xf]
      %v3971 = vld [vmem:[%s3941 + $0xac] sm:$0xf]
      %v3972 = vld [vmem:[%s3941 + $0xb4] sm:$0xf]
      %v3973 = vld [vmem:[%s3941 + $0xb8] sm:$0xf]
      %s3974 = scalar_lea.vmem %s1, 384
      %v3975 = vld [vmem:[%s3974] sm:$0xf]
      %v3976 = vld [vmem:[%s3974 + $0x4] sm:$0xf]
      %v3977 = vld [vmem:[%s3974 + $0x8] sm:$0xf]
      %v3978 = vld [vmem:[%s3974 + $0xc] sm:$0xf]
      %v3979 = vld [vmem:[%s3974 + $0x10] sm:$0xf]
      %v3980 = vld [vmem:[%s3974 + $0x14] sm:$0xf]
      %v3981 = vld [vmem:[%s3974 + $0x18] sm:$0xf]
      %v3982 = vld [vmem:[%s3974 + $0x1c] sm:$0xf]
      %v3983 = vld [vmem:[%s3974 + $0x20] sm:$0xf]
      %v3984 = vld [vmem:[%s3974 + $0x24] sm:$0xf]
      %v3985 = vld [vmem:[%s3974 + $0x28] sm:$0xf]
      %v3986 = vld [vmem:[%s3974 + $0x2c] sm:$0xf]
      %v3987 = vld [vmem:[%s3974 + $0x30] sm:$0xf]
      %v3988 = vld [vmem:[%s3974 + $0x34] sm:$0xf]
      %v3989 = vld [vmem:[%s3974 + $0x38] sm:$0xf]
      %v3990 = vld [vmem:[%s3974 + $0x3c] sm:$0xf]
      %v4023 = vunpack.c.l.b16 %v3942
      %v4024 = vunpack.c.l.b16 %v3943
      %v4025 = vunpack.c.l.b16 %v3944
      %v4026 = vunpack.c.l.b16 %v3945
      %v4027 = vunpack.c.l.b16 %v3946
      %v4028 = vunpack.c.l.b16 %v3947
      %v4029 = vunpack.c.l.b16 %v3948
      %v4030 = vunpack.c.l.b16 %v3949
      %v4031 = vunpack.c.l.b16 %v3950
      %v4032 = vunpack.c.l.b16 %v3951
      %v4033 = vunpack.c.l.b16 %v3952
      %v4034 = vunpack.c.l.b16 %v3953
      %v4035 = vunpack.c.l.b16 %v3954
      %v4036 = vunpack.c.l.b16 %v3955
      %v4037 = vunpack.c.l.b16 %v3956
      %v4038 = vunpack.c.l.b16 %v3957
      %v4039 = vunpack.c.l.b16 %v3958
      %v4040 = vunpack.c.l.b16 %v3959
      %v4041 = vunpack.c.l.b16 %v3960
      %v4042 = vunpack.c.l.b16 %v3961
      %v4043 = vunpack.c.l.b16 %v3962
      %v4044 = vunpack.c.l.b16 %v3963
      %v4045 = vunpack.c.l.b16 %v3964
      %v4046 = vunpack.c.l.b16 %v3965
      %v4047 = vunpack.c.l.b16 %v3966
      %v4048 = vunpack.c.l.b16 %v3967
      %v4049 = vunpack.c.l.b16 %v3968
      %v4050 = vunpack.c.l.b16 %v3969
      %v4051 = vunpack.c.l.b16 %v3970
      %v4052 = vunpack.c.l.b16 %v3971
      %v4053 = vunpack.c.l.b16 %v3972
      %v4054 = vunpack.c.l.b16 %v3973
      %v4055 = vpack.c.b16 %v4024, %v4023
      %v4056 = vpack.c.b16 %v4026, %v4025
      %v4057 = vpack.c.b16 %v4028, %v4027
      %v4058 = vpack.c.b16 %v4030, %v4029
      %v4059 = vpack.c.b16 %v4032, %v4031
      %v4060 = vpack.c.b16 %v4034, %v4033
      %v4061 = vpack.c.b16 %v4036, %v4035
      %v4062 = vpack.c.b16 %v4038, %v4037
      %v4063 = vpack.c.b16 %v4040, %v4039
      %v4064 = vpack.c.b16 %v4042, %v4041
      %v4065 = vpack.c.b16 %v4044, %v4043
      %v4066 = vpack.c.b16 %v4046, %v4045
      %v4067 = vpack.c.b16 %v4048, %v4047
      %v4068 = vpack.c.b16 %v4050, %v4049
      %v4069 = vpack.c.b16 %v4052, %v4051
      %v4070 = vpack.c.b16 %v4054, %v4053
      %v4103 = vunpack.c.l.b16 %v3975
      %v4104 = vunpack.c.l.b16 %v3976
      %v4105 = vunpack.c.l.b16 %v3977
      %v4106 = vunpack.c.l.b16 %v3978
      %v4107 = vunpack.c.l.b16 %v3979
      %v4108 = vunpack.c.l.b16 %v3980
      %v4109 = vunpack.c.l.b16 %v3981
      %v4110 = vunpack.c.l.b16 %v3982
      %v4111 = vunpack.c.l.b16 %v3983
      %v4112 = vunpack.c.l.b16 %v3984
      %v4113 = vunpack.c.l.b16 %v3985
      %v4114 = vunpack.c.l.b16 %v3986
      %v4115 = vunpack.c.l.b16 %v3987
      %v4116 = vunpack.c.l.b16 %v3988
      %v4117 = vunpack.c.l.b16 %v3989
      %v4118 = vunpack.c.l.b16 %v3990
      %v4119 = vpack.c.b16 %v4104, %v4103
      %v4120 = vpack.c.b16 %v4106, %v4105
      %v4121 = vpack.c.b16 %v4108, %v4107
      %v4122 = vpack.c.b16 %v4110, %v4109
      %v4123 = vpack.c.b16 %v4112, %v4111
      %v4124 = vpack.c.b16 %v4114, %v4113
      %v4125 = vpack.c.b16 %v4116, %v4115
      %v4126 = vpack.c.b16 %v4118, %v4117
      %4135 = vmatprep.subr.bf16.mxu0 0
      %4136 = vmatpush1.bf16.msra.mxu0 %v4126
      %4137 = vmatprep.subr.bf16.mxu0 0
      %4138 = vmatpush1.bf16.msra.mxu0 %v4125
      %4139 = vmatprep.subr.bf16.mxu0 0
      %4140 = vmatpush1.bf16.msra.mxu0 %v4124
      %4141 = vmatprep.subr.bf16.mxu0 0
      %4142 = vmatpush1.bf16.msra.mxu0 %v4123
      %4143 = vmatprep.subr.bf16.mxu0 0
      %4144 = vmatpush1.bf16.msra.mxu0 %v4122
      %4145 = vmatprep.subr.bf16.mxu0 0
      %4146 = vmatpush1.bf16.msra.mxu0 %v4121
      %4147 = vmatprep.subr.bf16.mxu0 0
      %4148 = vmatpush1.bf16.msra.mxu0 %v4120
      %4149 = vmatprep.subr.bf16.mxu0 0
      %4150 = vmatpush1.bf16.msra.mxu0 %v4119
      %4151 = vmatprep.subr.bf16.mxu0 0
      %4152 = vmatpush2.bf16.msra.mxu0 0
      %4153 = vmatprep.subr.bf16.mxu0 0
      %4154 = vmatpush2.bf16.msra.mxu0 0
      %4155 = vmatprep.subr.bf16.mxu0 0
      %4156 = vmatpush2.bf16.msra.mxu0 0
      %4157 = vmatprep.subr.bf16.mxu0 0
      %4158 = vmatpush2.bf16.msra.mxu0 0
      %4159 = vmatprep.subr.bf16.mxu0 0
      %4160 = vmatpush2.bf16.msra.mxu0 0
      %4161 = vmatprep.subr.bf16.mxu0 0
      %4162 = vmatpush2.bf16.msra.mxu0 0
      %4163 = vmatprep.subr.bf16.mxu0 0
      %4164 = vmatpush2.bf16.msra.mxu0 0
      %4165 = vmatprep.subr.bf16.mxu0 0
      %4166 = vmatpush2.bf16.msra.mxu0 0
      %4167 = vmatprep.mubr.bf16.mxu0 0
      %4168 = vmatmul.mubr.bf16.gmra.mxu0 %v4055
      %v4169 = vpop.f32.mrf.mxu0
      %v4170 = vadd.f32 0.0, %v4169
      %v4171 = vpop.f32.mrf.mxu0
      %v4172 = vpop.f32.mrf.mxu0
      %v4173 = vadd.f32 0.0, %v4172
      %v4174 = vpop.f32.mrf.mxu0
      %4175 = vmatprep.mubr.bf16.mxu0 0
      %4176 = vmatmul.mubr.bf16.gmra.mxu0 %v4056
      %v4177 = vpop.f32.mrf.mxu0
      %v4178 = vadd.f32 0.0, %v4177
      %v4179 = vpop.f32.mrf.mxu0
      %v4180 = vpop.f32.mrf.mxu0
      %v4181 = vadd.f32 0.0, %v4180
      %v4182 = vpop.f32.mrf.mxu0
      %4183 = vmatprep.mubr.bf16.mxu0 0
      %4184 = vmatmul.mubr.bf16.gmra.mxu0 %v4057
      %v4185 = vpop.f32.mrf.mxu0
      %v4186 = vadd.f32 0.0, %v4185
      %v4187 = vpop.f32.mrf.mxu0
      %v4188 = vpop.f32.mrf.mxu0
      %v4189 = vadd.f32 0.0, %v4188
      %v4190 = vpop.f32.mrf.mxu0
      %4191 = vmatprep.mubr.bf16.mxu0 0
      %4192 = vmatmul.mubr.bf16.gmra.mxu0 %v4058
      %v4193 = vpop.f32.mrf.mxu0
      %v4194 = vadd.f32 0.0, %v4193
      %v4195 = vpop.f32.mrf.mxu0
      %v4196 = vpop.f32.mrf.mxu0
      %v4197 = vadd.f32 0.0, %v4196
      %v4198 = vpop.f32.mrf.mxu0
      %4199 = vmatprep.mubr.bf16.mxu0 0
      %4200 = vmatmul.mubr.bf16.gmra.mxu0 %v4059
      %v4201 = vpop.f32.mrf.mxu0
      %v4202 = vadd.f32 0.0, %v4201
      %v4203 = vpop.f32.mrf.mxu0
      %v4204 = vpop.f32.mrf.mxu0
      %v4205 = vadd.f32 0.0, %v4204
      %v4206 = vpop.f32.mrf.mxu0
      %4207 = vmatprep.mubr.bf16.mxu0 0
      %4208 = vmatmul.mubr.bf16.gmra.mxu0 %v4060
      %v4209 = vpop.f32.mrf.mxu0
      %v4210 = vadd.f32 0.0, %v4209
      %v4211 = vpop.f32.mrf.mxu0
      %v4212 = vpop.f32.mrf.mxu0
      %v4213 = vadd.f32 0.0, %v4212
      %v4214 = vpop.f32.mrf.mxu0
      %4215 = vmatprep.mubr.bf16.mxu0 0
      %4216 = vmatmul.mubr.bf16.gmra.mxu0 %v4061
      %v4217 = vpop.f32.mrf.mxu0
      %v4218 = vadd.f32 0.0, %v4217
      %v4219 = vpop.f32.mrf.mxu0
      %v4220 = vpop.f32.mrf.mxu0
      %v4221 = vadd.f32 0.0, %v4220
      %v4222 = vpop.f32.mrf.mxu0
      %4223 = vmatprep.mubr.bf16.mxu0 0
      %4224 = vmatmul.mubr.bf16.gmra.mxu0 %v4062
      %v4225 = vpop.f32.mrf.mxu0
      %v4226 = vadd.f32 0.0, %v4225
      %v4227 = vpop.f32.mrf.mxu0
      %v4228 = vpop.f32.mrf.mxu0
      %v4229 = vadd.f32 0.0, %v4228
      %v4230 = vpop.f32.mrf.mxu0
      %4231 = vmatprep.mubr.bf16.mxu0 0
      %4232 = vmatmul.mubr.bf16.gmra.mxu0 %v4063
      %v4233 = vpop.f32.mrf.mxu0
      %v4234 = vadd.f32 0.0, %v4233
      %v4235 = vpop.f32.mrf.mxu0
      %v4236 = vpop.f32.mrf.mxu0
      %v4237 = vadd.f32 0.0, %v4236
      %v4238 = vpop.f32.mrf.mxu0
      %4239 = vmatprep.mubr.bf16.mxu0 0
      %4240 = vmatmul.mubr.bf16.gmra.mxu0 %v4064
      %v4241 = vpop.f32.mrf.mxu0
      %v4242 = vadd.f32 0.0, %v4241
      %v4243 = vpop.f32.mrf.mxu0
      %v4244 = vpop.f32.mrf.mxu0
      %v4245 = vadd.f32 0.0, %v4244
      %v4246 = vpop.f32.mrf.mxu0
      %4247 = vmatprep.mubr.bf16.mxu0 0
      %4248 = vmatmul.mubr.bf16.gmra.mxu0 %v4065
      %v4249 = vpop.f32.mrf.mxu0
      %v4250 = vadd.f32 0.0, %v4249
      %v4251 = vpop.f32.mrf.mxu0
      %v4252 = vpop.f32.mrf.mxu0
      %v4253 = vadd.f32 0.0, %v4252
      %v4254 = vpop.f32.mrf.mxu0
      %4255 = vmatprep.mubr.bf16.mxu0 0
      %4256 = vmatmul.mubr.bf16.gmra.mxu0 %v4066
      %v4257 = vpop.f32.mrf.mxu0
      %v4258 = vadd.f32 0.0, %v4257
      %v4259 = vpop.f32.mrf.mxu0
      %v4260 = vpop.f32.mrf.mxu0
      %v4261 = vadd.f32 0.0, %v4260
      %v4262 = vpop.f32.mrf.mxu0
      %4263 = vmatprep.mubr.bf16.mxu0 0
      %4264 = vmatmul.mubr.bf16.gmra.mxu0 %v4067
      %v4265 = vpop.f32.mrf.mxu0
      %v4266 = vadd.f32 0.0, %v4265
      %v4267 = vpop.f32.mrf.mxu0
      %v4268 = vpop.f32.mrf.mxu0
      %v4269 = vadd.f32 0.0, %v4268
      %v4270 = vpop.f32.mrf.mxu0
      %4271 = vmatprep.mubr.bf16.mxu0 0
      %4272 = vmatmul.mubr.bf16.gmra.mxu0 %v4068
      %v4273 = vpop.f32.mrf.mxu0
      %v4274 = vadd.f32 0.0, %v4273
      %v4275 = vpop.f32.mrf.mxu0
      %v4276 = vpop.f32.mrf.mxu0
      %v4277 = vadd.f32 0.0, %v4276
      %v4278 = vpop.f32.mrf.mxu0
      %4279 = vmatprep.mubr.bf16.mxu0 0
      %4280 = vmatmul.mubr.bf16.gmra.mxu0 %v4069
      %v4281 = vpop.f32.mrf.mxu0
      %v4282 = vadd.f32 0.0, %v4281
      %v4283 = vpop.f32.mrf.mxu0
      %v4284 = vpop.f32.mrf.mxu0
      %v4285 = vadd.f32 0.0, %v4284
      %v4286 = vpop.f32.mrf.mxu0
      %4287 = vmatprep.mubr.bf16.mxu0 0
      %4288 = vmatmul.mubr.bf16.gmra.mxu0 %v4070
      %v4289 = vpop.f32.mrf.mxu0
      %v4290 = vadd.f32 0.0, %v4289
      %v4291 = vpop.f32.mrf.mxu0
      %v4292 = vpop.f32.mrf.mxu0
      %v4293 = vadd.f32 0.0, %v4292
      %v4294 = vpop.f32.mrf.mxu0
      %4295 = vdwg.mxu0
      %v4296 = vadd.f32 %v3909, %v4170
      %v4297 = vadd.f32 %v3910, %v4173
      %v4298 = vadd.f32 %v3911, %v4178
      %v4299 = vadd.f32 %v3912, %v4181
      %v4300 = vadd.f32 %v3913, %v4186
      %v4301 = vadd.f32 %v3914, %v4189
      %v4302 = vadd.f32 %v3915, %v4194
      %v4303 = vadd.f32 %v3916, %v4197
      %v4304 = vadd.f32 %v3917, %v4202
      %v4305 = vadd.f32 %v3918, %v4205
      %v4306 = vadd.f32 %v3919, %v4210
      %v4307 = vadd.f32 %v3920, %v4213
      %v4308 = vadd.f32 %v3921, %v4218
      %v4309 = vadd.f32 %v3922, %v4221
      %v4310 = vadd.f32 %v3923, %v4226
      %v4311 = vadd.f32 %v3924, %v4229
      %v4312 = vadd.f32 %v3925, %v4234
      %v4313 = vadd.f32 %v3926, %v4237
      %v4314 = vadd.f32 %v3927, %v4242
      %v4315 = vadd.f32 %v3928, %v4245
      %v4316 = vadd.f32 %v3929, %v4250
      %v4317 = vadd.f32 %v3930, %v4253
      %v4318 = vadd.f32 %v3931, %v4258
      %v4319 = vadd.f32 %v3932, %v4261
      %v4320 = vadd.f32 %v3933, %v4266
      %v4321 = vadd.f32 %v3934, %v4269
      %v4322 = vadd.f32 %v3935, %v4274
      %v4323 = vadd.f32 %v3936, %v4277
      %v4324 = vadd.f32 %v3937, %v4282
      %v4325 = vadd.f32 %v3938, %v4285
      %v4326 = vadd.f32 %v3939, %v4290
      %v4327 = vadd.f32 %v3940, %v4293
      %v4328 = vld [vmem:[%s3941] sm:$0xf]
      %v4329 = vld [vmem:[%s3941 + $0x4] sm:$0xf]
      %v4330 = vld [vmem:[%s3941 + $0x8] sm:$0x1]
      %v4331 = vld [vmem:[%s3941 + $0xc] sm:$0xf]
      %v4332 = vld [vmem:[%s3941 + $0x10] sm:$0xf]
      %v4333 = vld [vmem:[%s3941 + $0x14] sm:$0x1]
      %v4334 = vld [vmem:[%s3941 + $0x18] sm:$0xf]
      %v4335 = vld [vmem:[%s3941 + $0x1c] sm:$0xf]
      %v4336 = vld [vmem:[%s3941 + $0x20] sm:$0x1]
      %v4337 = vld [vmem:[%s3941 + $0x24] sm:$0xf]
      %v4338 = vld [vmem:[%s3941 + $0x28] sm:$0xf]
      %v4339 = vld [vmem:[%s3941 + $0x2c] sm:$0x1]
      %v4340 = vld [vmem:[%s3941 + $0x30] sm:$0xf]
      %v4341 = vld [vmem:[%s3941 + $0x34] sm:$0xf]
      %v4342 = vld [vmem:[%s3941 + $0x38] sm:$0x1]
      %v4343 = vld [vmem:[%s3941 + $0x3c] sm:$0xf]
      %v4344 = vld [vmem:[%s3941 + $0x40] sm:$0xf]
      %v4345 = vld [vmem:[%s3941 + $0x44] sm:$0x1]
      %v4346 = vld [vmem:[%s3941 + $0x48] sm:$0xf]
      %v4347 = vld [vmem:[%s3941 + $0x4c] sm:$0xf]
      %v4348 = vld [vmem:[%s3941 + $0x50] sm:$0x1]
      %v4349 = vld [vmem:[%s3941 + $0x54] sm:$0xf]
      %v4350 = vld [vmem:[%s3941 + $0x58] sm:$0xf]
      %v4351 = vld [vmem:[%s3941 + $0x5c] sm:$0x1]
      %v4352 = vld [vmem:[%s3941 + $0x60] sm:$0xf]
      %v4353 = vld [vmem:[%s3941 + $0x64] sm:$0xf]
      %v4354 = vld [vmem:[%s3941 + $0x68] sm:$0x1]
      %v4355 = vld [vmem:[%s3941 + $0x6c] sm:$0xf]
      %v4356 = vld [vmem:[%s3941 + $0x70] sm:$0xf]
      %v4357 = vld [vmem:[%s3941 + $0x74] sm:$0x1]
      %v4358 = vld [vmem:[%s3941 + $0x78] sm:$0xf]
      %v4359 = vld [vmem:[%s3941 + $0x7c] sm:$0xf]
      %v4360 = vld [vmem:[%s3941 + $0x80] sm:$0x1]
      %v4361 = vld [vmem:[%s3941 + $0x84] sm:$0xf]
      %v4362 = vld [vmem:[%s3941 + $0x88] sm:$0xf]
      %v4363 = vld [vmem:[%s3941 + $0x8c] sm:$0x1]
      %v4364 = vld [vmem:[%s3941 + $0x90] sm:$0xf]
      %v4365 = vld [vmem:[%s3941 + $0x94] sm:$0xf]
      %v4366 = vld [vmem:[%s3941 + $0x98] sm:$0x1]
      %v4367 = vld [vmem:[%s3941 + $0x9c] sm:$0xf]
      %v4368 = vld [vmem:[%s3941 + $0xa0] sm:$0xf]
      %v4369 = vld [vmem:[%s3941 + $0xa4] sm:$0x1]
      %v4370 = vld [vmem:[%s3941 + $0xa8] sm:$0xf]
      %v4371 = vld [vmem:[%s3941 + $0xac] sm:$0xf]
      %v4372 = vld [vmem:[%s3941 + $0xb0] sm:$0x1]
      %v4373 = vld [vmem:[%s3941 + $0xb4] sm:$0xf]
      %v4374 = vld [vmem:[%s3941 + $0xb8] sm:$0xf]
      %v4375 = vld [vmem:[%s3941 + $0xbc] sm:$0x1]
      %v4377 = vshrl.u32 %v4328, 16
      %v4379 = vrot.slane %v4377, 4
      %v4380 = vshll.u32 %v4328, 16
      %v4382 = vrot.slane %v4380, 5
      %v4383 = vor.u32 %v4379, %v4382
      %v4384 = vrot.slane %v4383, 4
      %v4386 = vshll.u32 %v4329, 16
      %v4388 = vrot.slane %v4386, 5
      %v4389 = vsel %vm838, %v4384, %v4388
      %v4390 = vshrl.u32 %v4329, 16
      %v4392 = vrot.slane %v4390, 4
      %v4393 = vor.u32 %v4392, %v4388
      %v4394 = vrot.slane %v4393, 4
      %v4396 = vshll.u32 %v4330, 16
      %v4398 = vrot.slane %v4396, 5
      %v4399 = vsel %vm838, %v4394, %v4398
      %v4401 = vshrl.u32 %v4331, 16
      %v4403 = vrot.slane %v4401, 4
      %v4404 = vshll.u32 %v4331, 16
      %v4406 = vrot.slane %v4404, 5
      %v4407 = vor.u32 %v4403, %v4406
      %v4408 = vrot.slane %v4407, 4
      %v4410 = vshll.u32 %v4332, 16
      %v4412 = vrot.slane %v4410, 5
      %v4413 = vsel %vm838, %v4408, %v4412
      %v4414 = vshrl.u32 %v4332, 16
      %v4416 = vrot.slane %v4414, 4
      %v4417 = vor.u32 %v4416, %v4412
      %v4418 = vrot.slane %v4417, 4
      %v4420 = vshll.u32 %v4333, 16
      %v4422 = vrot.slane %v4420, 5
      %v4423 = vsel %vm838, %v4418, %v4422
      %v4425 = vshrl.u32 %v4334, 16
      %v4427 = vrot.slane %v4425, 4
      %v4428 = vshll.u32 %v4334, 16
      %v4430 = vrot.slane %v4428, 5
      %v4431 = vor.u32 %v4427, %v4430
      %v4432 = vrot.slane %v4431, 4
      %v4434 = vshll.u32 %v4335, 16
      %v4436 = vrot.slane %v4434, 5
      %v4437 = vsel %vm838, %v4432, %v4436
      %v4438 = vshrl.u32 %v4335, 16
      %v4440 = vrot.slane %v4438, 4
      %v4441 = vor.u32 %v4440, %v4436
      %v4442 = vrot.slane %v4441, 4
      %v4444 = vshll.u32 %v4336, 16
      %v4446 = vrot.slane %v4444, 5
      %v4447 = vsel %vm838, %v4442, %v4446
      %v4449 = vshrl.u32 %v4337, 16
      %v4451 = vrot.slane %v4449, 4
      %v4452 = vshll.u32 %v4337, 16
      %v4454 = vrot.slane %v4452, 5
      %v4455 = vor.u32 %v4451, %v4454
      %v4456 = vrot.slane %v4455, 4
      %v4458 = vshll.u32 %v4338, 16
      %v4460 = vrot.slane %v4458, 5
      %v4461 = vsel %vm838, %v4456, %v4460
      %v4462 = vshrl.u32 %v4338, 16
      %v4464 = vrot.slane %v4462, 4
      %v4465 = vor.u32 %v4464, %v4460
      %v4466 = vrot.slane %v4465, 4
      %v4468 = vshll.u32 %v4339, 16
      %v4470 = vrot.slane %v4468, 5
      %v4471 = vsel %vm838, %v4466, %v4470
      %v4473 = vshrl.u32 %v4340, 16
      %v4475 = vrot.slane %v4473, 4
      %v4476 = vshll.u32 %v4340, 16
      %v4478 = vrot.slane %v4476, 5
      %v4479 = vor.u32 %v4475, %v4478
      %v4480 = vrot.slane %v4479, 4
      %v4482 = vshll.u32 %v4341, 16
      %v4484 = vrot.slane %v4482, 5
      %v4485 = vsel %vm838, %v4480, %v4484
      %v4486 = vshrl.u32 %v4341, 16
      %v4488 = vrot.slane %v4486, 4
      %v4489 = vor.u32 %v4488, %v4484
      %v4490 = vrot.slane %v4489, 4
      %v4492 = vshll.u32 %v4342, 16
      %v4494 = vrot.slane %v4492, 5
      %v4495 = vsel %vm838, %v4490, %v4494
      %v4497 = vshrl.u32 %v4343, 16
      %v4499 = vrot.slane %v4497, 4
      %v4500 = vshll.u32 %v4343, 16
      %v4502 = vrot.slane %v4500, 5
      %v4503 = vor.u32 %v4499, %v4502
      %v4504 = vrot.slane %v4503, 4
      %v4506 = vshll.u32 %v4344, 16
      %v4508 = vrot.slane %v4506, 5
      %v4509 = vsel %vm838, %v4504, %v4508
      %v4510 = vshrl.u32 %v4344, 16
      %v4512 = vrot.slane %v4510, 4
      %v4513 = vor.u32 %v4512, %v4508
      %v4514 = vrot.slane %v4513, 4
      %v4516 = vshll.u32 %v4345, 16
      %v4518 = vrot.slane %v4516, 5
      %v4519 = vsel %vm838, %v4514, %v4518
      %v4521 = vshrl.u32 %v4346, 16
      %v4523 = vrot.slane %v4521, 4
      %v4524 = vshll.u32 %v4346, 16
      %v4526 = vrot.slane %v4524, 5
      %v4527 = vor.u32 %v4523, %v4526
      %v4528 = vrot.slane %v4527, 4
      %v4530 = vshll.u32 %v4347, 16
      %v4532 = vrot.slane %v4530, 5
      %v4533 = vsel %vm838, %v4528, %v4532
      %v4534 = vshrl.u32 %v4347, 16
      %v4536 = vrot.slane %v4534, 4
      %v4537 = vor.u32 %v4536, %v4532
      %v4538 = vrot.slane %v4537, 4
      %v4540 = vshll.u32 %v4348, 16
      %v4542 = vrot.slane %v4540, 5
      %v4543 = vsel %vm838, %v4538, %v4542
      %v4545 = vshrl.u32 %v4349, 16
      %v4547 = vrot.slane %v4545, 4
      %v4548 = vshll.u32 %v4349, 16
      %v4550 = vrot.slane %v4548, 5
      %v4551 = vor.u32 %v4547, %v4550
      %v4552 = vrot.slane %v4551, 4
      %v4554 = vshll.u32 %v4350, 16
      %v4556 = vrot.slane %v4554, 5
      %v4557 = vsel %vm838, %v4552, %v4556
      %v4558 = vshrl.u32 %v4350, 16
      %v4560 = vrot.slane %v4558, 4
      %v4561 = vor.u32 %v4560, %v4556
      %v4562 = vrot.slane %v4561, 4
      %v4564 = vshll.u32 %v4351, 16
      %v4566 = vrot.slane %v4564, 5
      %v4567 = vsel %vm838, %v4562, %v4566
      %v4569 = vshrl.u32 %v4352, 16
      %v4571 = vrot.slane %v4569, 4
      %v4572 = vshll.u32 %v4352, 16
      %v4574 = vrot.slane %v4572, 5
      %v4575 = vor.u32 %v4571, %v4574
      %v4576 = vrot.slane %v4575, 4
      %v4578 = vshll.u32 %v4353, 16
      %v4580 = vrot.slane %v4578, 5
      %v4581 = vsel %vm838, %v4576, %v4580
      %v4582 = vshrl.u32 %v4353, 16
      %v4584 = vrot.slane %v4582, 4
      %v4585 = vor.u32 %v4584, %v4580
      %v4586 = vrot.slane %v4585, 4
      %v4588 = vshll.u32 %v4354, 16
      %v4590 = vrot.slane %v4588, 5
      %v4591 = vsel %vm838, %v4586, %v4590
      %v4593 = vshrl.u32 %v4355, 16
      %v4595 = vrot.slane %v4593, 4
      %v4596 = vshll.u32 %v4355, 16
      %v4598 = vrot.slane %v4596, 5
      %v4599 = vor.u32 %v4595, %v4598
      %v4600 = vrot.slane %v4599, 4
      %v4602 = vshll.u32 %v4356, 16
      %v4604 = vrot.slane %v4602, 5
      %v4605 = vsel %vm838, %v4600, %v4604
      %v4606 = vshrl.u32 %v4356, 16
      %v4608 = vrot.slane %v4606, 4
      %v4609 = vor.u32 %v4608, %v4604
      %v4610 = vrot.slane %v4609, 4
      %v4612 = vshll.u32 %v4357, 16
      %v4614 = vrot.slane %v4612, 5
      %v4615 = vsel %vm838, %v4610, %v4614
      %v4617 = vshrl.u32 %v4358, 16
      %v4619 = vrot.slane %v4617, 4
      %v4620 = vshll.u32 %v4358, 16
      %v4622 = vrot.slane %v4620, 5
      %v4623 = vor.u32 %v4619, %v4622
      %v4624 = vrot.slane %v4623, 4
      %v4626 = vshll.u32 %v4359, 16
      %v4628 = vrot.slane %v4626, 5
      %v4629 = vsel %vm838, %v4624, %v4628
      %v4630 = vshrl.u32 %v4359, 16
      %v4632 = vrot.slane %v4630, 4
      %v4633 = vor.u32 %v4632, %v4628
      %v4634 = vrot.slane %v4633, 4
      %v4636 = vshll.u32 %v4360, 16
      %v4638 = vrot.slane %v4636, 5
      %v4639 = vsel %vm838, %v4634, %v4638
      %v4641 = vshrl.u32 %v4361, 16
      %v4643 = vrot.slane %v4641, 4
      %v4644 = vshll.u32 %v4361, 16
      %v4646 = vrot.slane %v4644, 5
      %v4647 = vor.u32 %v4643, %v4646
      %v4648 = vrot.slane %v4647, 4
      %v4650 = vshll.u32 %v4362, 16
      %v4652 = vrot.slane %v4650, 5
      %v4653 = vsel %vm838, %v4648, %v4652
      %v4654 = vshrl.u32 %v4362, 16
      %v4656 = vrot.slane %v4654, 4
      %v4657 = vor.u32 %v4656, %v4652
      %v4658 = vrot.slane %v4657, 4
      %v4660 = vshll.u32 %v4363, 16
      %v4662 = vrot.slane %v4660, 5
      %v4663 = vsel %vm838, %v4658, %v4662
      %v4665 = vshrl.u32 %v4364, 16
      %v4667 = vrot.slane %v4665, 4
      %v4668 = vshll.u32 %v4364, 16
      %v4670 = vrot.slane %v4668, 5
      %v4671 = vor.u32 %v4667, %v4670
      %v4672 = vrot.slane %v4671, 4
      %v4674 = vshll.u32 %v4365, 16
      %v4676 = vrot.slane %v4674, 5
      %v4677 = vsel %vm838, %v4672, %v4676
      %v4678 = vshrl.u32 %v4365, 16
      %v4680 = vrot.slane %v4678, 4
      %v4681 = vor.u32 %v4680, %v4676
      %v4682 = vrot.slane %v4681, 4
      %v4684 = vshll.u32 %v4366, 16
      %v4686 = vrot.slane %v4684, 5
      %v4687 = vsel %vm838, %v4682, %v4686
      %v4689 = vshrl.u32 %v4367, 16
      %v4691 = vrot.slane %v4689, 4
      %v4692 = vshll.u32 %v4367, 16
      %v4694 = vrot.slane %v4692, 5
      %v4695 = vor.u32 %v4691, %v4694
      %v4696 = vrot.slane %v4695, 4
      %v4698 = vshll.u32 %v4368, 16
      %v4700 = vrot.slane %v4698, 5
      %v4701 = vsel %vm838, %v4696, %v4700
      %v4702 = vshrl.u32 %v4368, 16
      %v4704 = vrot.slane %v4702, 4
      %v4705 = vor.u32 %v4704, %v4700
      %v4706 = vrot.slane %v4705, 4
      %v4708 = vshll.u32 %v4369, 16
      %v4710 = vrot.slane %v4708, 5
      %v4711 = vsel %vm838, %v4706, %v4710
      %v4713 = vshrl.u32 %v4370, 16
      %v4715 = vrot.slane %v4713, 4
      %v4716 = vshll.u32 %v4370, 16
      %v4718 = vrot.slane %v4716, 5
      %v4719 = vor.u32 %v4715, %v4718
      %v4720 = vrot.slane %v4719, 4
      %v4722 = vshll.u32 %v4371, 16
      %v4724 = vrot.slane %v4722, 5
      %v4725 = vsel %vm838, %v4720, %v4724
      %v4726 = vshrl.u32 %v4371, 16
      %v4728 = vrot.slane %v4726, 4
      %v4729 = vor.u32 %v4728, %v4724
      %v4730 = vrot.slane %v4729, 4
      %v4732 = vshll.u32 %v4372, 16
      %v4734 = vrot.slane %v4732, 5
      %v4735 = vsel %vm838, %v4730, %v4734
      %v4737 = vshrl.u32 %v4373, 16
      %v4739 = vrot.slane %v4737, 4
      %v4740 = vshll.u32 %v4373, 16
      %v4742 = vrot.slane %v4740, 5
      %v4743 = vor.u32 %v4739, %v4742
      %v4744 = vrot.slane %v4743, 4
      %v4746 = vshll.u32 %v4374, 16
      %v4748 = vrot.slane %v4746, 5
      %v4749 = vsel %vm838, %v4744, %v4748
      %v4750 = vshrl.u32 %v4374, 16
      %v4752 = vrot.slane %v4750, 4
      %v4753 = vor.u32 %v4752, %v4748
      %v4754 = vrot.slane %v4753, 4
      %v4756 = vshll.u32 %v4375, 16
      %v4758 = vrot.slane %v4756, 5
      %v4759 = vsel %vm838, %v4754, %v4758
      %s4760 = scalar_lea.vmem %s1, 448
      %v4761 = vld [vmem:[%s4760] sm:$0xf]
      %v4762 = vld [vmem:[%s4760 + $0x4] sm:$0xf]
      %v4763 = vld [vmem:[%s4760 + $0x8] sm:$0xf]
      %v4764 = vld [vmem:[%s4760 + $0xc] sm:$0xf]
      %v4765 = vld [vmem:[%s4760 + $0x10] sm:$0xf]
      %v4766 = vld [vmem:[%s4760 + $0x14] sm:$0xf]
      %v4767 = vld [vmem:[%s4760 + $0x18] sm:$0xf]
      %v4768 = vld [vmem:[%s4760 + $0x1c] sm:$0xf]
      %v4769 = vld [vmem:[%s4760 + $0x20] sm:$0xf]
      %v4770 = vld [vmem:[%s4760 + $0x24] sm:$0xf]
      %v4771 = vld [vmem:[%s4760 + $0x28] sm:$0xf]
      %v4772 = vld [vmem:[%s4760 + $0x2c] sm:$0xf]
      %v4773 = vld [vmem:[%s4760 + $0x30] sm:$0xf]
      %v4774 = vld [vmem:[%s4760 + $0x34] sm:$0xf]
      %v4775 = vld [vmem:[%s4760 + $0x38] sm:$0xf]
      %v4776 = vld [vmem:[%s4760 + $0x3c] sm:$0xf]
      %v4777 = vunpack.c.l.b16 %v4389
      %v4778 = vunpack.c.l.b16 %v4399
      %v4779 = vunpack.c.l.b16 %v4413
      %v4780 = vunpack.c.l.b16 %v4423
      %v4781 = vunpack.c.l.b16 %v4437
      %v4782 = vunpack.c.l.b16 %v4447
      %v4783 = vunpack.c.l.b16 %v4461
      %v4784 = vunpack.c.l.b16 %v4471
      %v4785 = vunpack.c.l.b16 %v4485
      %v4786 = vunpack.c.l.b16 %v4495
      %v4787 = vunpack.c.l.b16 %v4509
      %v4788 = vunpack.c.l.b16 %v4519
      %v4789 = vunpack.c.l.b16 %v4533
      %v4790 = vunpack.c.l.b16 %v4543
      %v4791 = vunpack.c.l.b16 %v4557
      %v4792 = vunpack.c.l.b16 %v4567
      %v4793 = vunpack.c.l.b16 %v4581
      %v4794 = vunpack.c.l.b16 %v4591
      %v4795 = vunpack.c.l.b16 %v4605
      %v4796 = vunpack.c.l.b16 %v4615
      %v4797 = vunpack.c.l.b16 %v4629
      %v4798 = vunpack.c.l.b16 %v4639
      %v4799 = vunpack.c.l.b16 %v4653
      %v4800 = vunpack.c.l.b16 %v4663
      %v4801 = vunpack.c.l.b16 %v4677
      %v4802 = vunpack.c.l.b16 %v4687
      %v4803 = vunpack.c.l.b16 %v4701
      %v4804 = vunpack.c.l.b16 %v4711
      %v4805 = vunpack.c.l.b16 %v4725
      %v4806 = vunpack.c.l.b16 %v4735
      %v4807 = vunpack.c.l.b16 %v4749
      %v4808 = vunpack.c.l.b16 %v4759
      %v4809 = vpack.c.b16 %v4778, %v4777
      %v4810 = vpack.c.b16 %v4780, %v4779
      %v4811 = vpack.c.b16 %v4782, %v4781
      %v4812 = vpack.c.b16 %v4784, %v4783
      %v4813 = vpack.c.b16 %v4786, %v4785
      %v4814 = vpack.c.b16 %v4788, %v4787
      %v4815 = vpack.c.b16 %v4790, %v4789
      %v4816 = vpack.c.b16 %v4792, %v4791
      %v4817 = vpack.c.b16 %v4794, %v4793
      %v4818 = vpack.c.b16 %v4796, %v4795
      %v4819 = vpack.c.b16 %v4798, %v4797
      %v4820 = vpack.c.b16 %v4800, %v4799
      %v4821 = vpack.c.b16 %v4802, %v4801
      %v4822 = vpack.c.b16 %v4804, %v4803
      %v4823 = vpack.c.b16 %v4806, %v4805
      %v4824 = vpack.c.b16 %v4808, %v4807
      %v4857 = vunpack.c.l.b16 %v4761
      %v4858 = vunpack.c.l.b16 %v4762
      %v4859 = vunpack.c.l.b16 %v4763
      %v4860 = vunpack.c.l.b16 %v4764
      %v4861 = vunpack.c.l.b16 %v4765
      %v4862 = vunpack.c.l.b16 %v4766
      %v4863 = vunpack.c.l.b16 %v4767
      %v4864 = vunpack.c.l.b16 %v4768
      %v4865 = vunpack.c.l.b16 %v4769
      %v4866 = vunpack.c.l.b16 %v4770
      %v4867 = vunpack.c.l.b16 %v4771
      %v4868 = vunpack.c.l.b16 %v4772
      %v4869 = vunpack.c.l.b16 %v4773
      %v4870 = vunpack.c.l.b16 %v4774
      %v4871 = vunpack.c.l.b16 %v4775
      %v4872 = vunpack.c.l.b16 %v4776
      %v4873 = vpack.c.b16 %v4858, %v4857
      %v4874 = vpack.c.b16 %v4860, %v4859
      %v4875 = vpack.c.b16 %v4862, %v4861
      %v4876 = vpack.c.b16 %v4864, %v4863
      %v4877 = vpack.c.b16 %v4866, %v4865
      %v4878 = vpack.c.b16 %v4868, %v4867
      %v4879 = vpack.c.b16 %v4870, %v4869
      %v4880 = vpack.c.b16 %v4872, %v4871
      %4889 = vmatprep.subr.bf16.mxu0 0
      %4890 = vmatpush1.bf16.msra.mxu0 %v4880
      %4891 = vmatprep.subr.bf16.mxu0 0
      %4892 = vmatpush1.bf16.msra.mxu0 %v4879
      %4893 = vmatprep.subr.bf16.mxu0 0
      %4894 = vmatpush1.bf16.msra.mxu0 %v4878
      %4895 = vmatprep.subr.bf16.mxu0 0
      %4896 = vmatpush1.bf16.msra.mxu0 %v4877
      %4897 = vmatprep.subr.bf16.mxu0 0
      %4898 = vmatpush1.bf16.msra.mxu0 %v4876
      %4899 = vmatprep.subr.bf16.mxu0 0
      %4900 = vmatpush1.bf16.msra.mxu0 %v4875
      %4901 = vmatprep.subr.bf16.mxu0 0
      %4902 = vmatpush1.bf16.msra.mxu0 %v4874
      %4903 = vmatprep.subr.bf16.mxu0 0
      %4904 = vmatpush1.bf16.msra.mxu0 %v4873
      %4905 = vmatprep.subr.bf16.mxu0 0
      %4906 = vmatpush2.bf16.msra.mxu0 0
      %4907 = vmatprep.subr.bf16.mxu0 0
      %4908 = vmatpush2.bf16.msra.mxu0 0
      %4909 = vmatprep.subr.bf16.mxu0 0
      %4910 = vmatpush2.bf16.msra.mxu0 0
      %4911 = vmatprep.subr.bf16.mxu0 0
      %4912 = vmatpush2.bf16.msra.mxu0 0
      %4913 = vmatprep.subr.bf16.mxu0 0
      %4914 = vmatpush2.bf16.msra.mxu0 0
      %4915 = vmatprep.subr.bf16.mxu0 0
      %4916 = vmatpush2.bf16.msra.mxu0 0
      %4917 = vmatprep.subr.bf16.mxu0 0
      %4918 = vmatpush2.bf16.msra.mxu0 0
      %4919 = vmatprep.subr.bf16.mxu0 0
      %4920 = vmatpush2.bf16.msra.mxu0 0
      %4921 = vmatprep.mubr.bf16.mxu0 0
      %4922 = vmatmul.mubr.bf16.gmra.mxu0 %v4809
      %v4923 = vpop.f32.mrf.mxu0
      %v4924 = vadd.f32 0.0, %v4923
      %v4925 = vpop.f32.mrf.mxu0
      %v4926 = vpop.f32.mrf.mxu0
      %v4927 = vadd.f32 0.0, %v4926
      %v4928 = vpop.f32.mrf.mxu0
      %4929 = vmatprep.mubr.bf16.mxu0 0
      %4930 = vmatmul.mubr.bf16.gmra.mxu0 %v4810
      %v4931 = vpop.f32.mrf.mxu0
      %v4932 = vadd.f32 0.0, %v4931
      %v4933 = vpop.f32.mrf.mxu0
      %v4934 = vpop.f32.mrf.mxu0
      %v4935 = vadd.f32 0.0, %v4934
      %v4936 = vpop.f32.mrf.mxu0
      %4937 = vmatprep.mubr.bf16.mxu0 0
      %4938 = vmatmul.mubr.bf16.gmra.mxu0 %v4811
      %v4939 = vpop.f32.mrf.mxu0
      %v4940 = vadd.f32 0.0, %v4939
      %v4941 = vpop.f32.mrf.mxu0
      %v4942 = vpop.f32.mrf.mxu0
      %v4943 = vadd.f32 0.0, %v4942
      %v4944 = vpop.f32.mrf.mxu0
      %4945 = vmatprep.mubr.bf16.mxu0 0
      %4946 = vmatmul.mubr.bf16.gmra.mxu0 %v4812
      %v4947 = vpop.f32.mrf.mxu0
      %v4948 = vadd.f32 0.0, %v4947
      %v4949 = vpop.f32.mrf.mxu0
      %v4950 = vpop.f32.mrf.mxu0
      %v4951 = vadd.f32 0.0, %v4950
      %v4952 = vpop.f32.mrf.mxu0
      %4953 = vmatprep.mubr.bf16.mxu0 0
      %4954 = vmatmul.mubr.bf16.gmra.mxu0 %v4813
      %v4955 = vpop.f32.mrf.mxu0
      %v4956 = vadd.f32 0.0, %v4955
      %v4957 = vpop.f32.mrf.mxu0
      %v4958 = vpop.f32.mrf.mxu0
      %v4959 = vadd.f32 0.0, %v4958
      %v4960 = vpop.f32.mrf.mxu0
      %4961 = vmatprep.mubr.bf16.mxu0 0
      %4962 = vmatmul.mubr.bf16.gmra.mxu0 %v4814
      %v4963 = vpop.f32.mrf.mxu0
      %v4964 = vadd.f32 0.0, %v4963
      %v4965 = vpop.f32.mrf.mxu0
      %v4966 = vpop.f32.mrf.mxu0
      %v4967 = vadd.f32 0.0, %v4966
      %v4968 = vpop.f32.mrf.mxu0
      %4969 = vmatprep.mubr.bf16.mxu0 0
      %4970 = vmatmul.mubr.bf16.gmra.mxu0 %v4815
      %v4971 = vpop.f32.mrf.mxu0
      %v4972 = vadd.f32 0.0, %v4971
      %v4973 = vpop.f32.mrf.mxu0
      %v4974 = vpop.f32.mrf.mxu0
      %v4975 = vadd.f32 0.0, %v4974
      %v4976 = vpop.f32.mrf.mxu0
      %4977 = vmatprep.mubr.bf16.mxu0 0
      %4978 = vmatmul.mubr.bf16.gmra.mxu0 %v4816
      %v4979 = vpop.f32.mrf.mxu0
      %v4980 = vadd.f32 0.0, %v4979
      %v4981 = vpop.f32.mrf.mxu0
      %v4982 = vpop.f32.mrf.mxu0
      %v4983 = vadd.f32 0.0, %v4982
      %v4984 = vpop.f32.mrf.mxu0
      %4985 = vmatprep.mubr.bf16.mxu0 0
      %4986 = vmatmul.mubr.bf16.gmra.mxu0 %v4817
      %v4987 = vpop.f32.mrf.mxu0
      %v4988 = vadd.f32 0.0, %v4987
      %v4989 = vpop.f32.mrf.mxu0
      %v4990 = vpop.f32.mrf.mxu0
      %v4991 = vadd.f32 0.0, %v4990
      %v4992 = vpop.f32.mrf.mxu0
      %4993 = vmatprep.mubr.bf16.mxu0 0
      %4994 = vmatmul.mubr.bf16.gmra.mxu0 %v4818
      %v4995 = vpop.f32.mrf.mxu0
      %v4996 = vadd.f32 0.0, %v4995
      %v4997 = vpop.f32.mrf.mxu0
      %v4998 = vpop.f32.mrf.mxu0
      %v4999 = vadd.f32 0.0, %v4998
      %v5000 = vpop.f32.mrf.mxu0
      %5001 = vmatprep.mubr.bf16.mxu0 0
      %5002 = vmatmul.mubr.bf16.gmra.mxu0 %v4819
      %v5003 = vpop.f32.mrf.mxu0
      %v5004 = vadd.f32 0.0, %v5003
      %v5005 = vpop.f32.mrf.mxu0
      %v5006 = vpop.f32.mrf.mxu0
      %v5007 = vadd.f32 0.0, %v5006
      %v5008 = vpop.f32.mrf.mxu0
      %5009 = vmatprep.mubr.bf16.mxu0 0
      %5010 = vmatmul.mubr.bf16.gmra.mxu0 %v4820
      %v5011 = vpop.f32.mrf.mxu0
      %v5012 = vadd.f32 0.0, %v5011
      %v5013 = vpop.f32.mrf.mxu0
      %v5014 = vpop.f32.mrf.mxu0
      %v5015 = vadd.f32 0.0, %v5014
      %v5016 = vpop.f32.mrf.mxu0
      %5017 = vmatprep.mubr.bf16.mxu0 0
      %5018 = vmatmul.mubr.bf16.gmra.mxu0 %v4821
      %v5019 = vpop.f32.mrf.mxu0
      %v5020 = vadd.f32 0.0, %v5019
      %v5021 = vpop.f32.mrf.mxu0
      %v5022 = vpop.f32.mrf.mxu0
      %v5023 = vadd.f32 0.0, %v5022
      %v5024 = vpop.f32.mrf.mxu0
      %5025 = vmatprep.mubr.bf16.mxu0 0
      %5026 = vmatmul.mubr.bf16.gmra.mxu0 %v4822
      %v5027 = vpop.f32.mrf.mxu0
      %v5028 = vadd.f32 0.0, %v5027
      %v5029 = vpop.f32.mrf.mxu0
      %v5030 = vpop.f32.mrf.mxu0
      %v5031 = vadd.f32 0.0, %v5030
      %v5032 = vpop.f32.mrf.mxu0
      %5033 = vmatprep.mubr.bf16.mxu0 0
      %5034 = vmatmul.mubr.bf16.gmra.mxu0 %v4823
      %v5035 = vpop.f32.mrf.mxu0
      %v5036 = vadd.f32 0.0, %v5035
      %v5037 = vpop.f32.mrf.mxu0
      %v5038 = vpop.f32.mrf.mxu0
      %v5039 = vadd.f32 0.0, %v5038
      %v5040 = vpop.f32.mrf.mxu0
      %5041 = vmatprep.mubr.bf16.mxu0 0
      %5042 = vmatmul.mubr.bf16.gmra.mxu0 %v4824
      %v5043 = vpop.f32.mrf.mxu0
      %v5044 = vadd.f32 0.0, %v5043
      %v5045 = vpop.f32.mrf.mxu0
      %v5046 = vpop.f32.mrf.mxu0
      %v5047 = vadd.f32 0.0, %v5046
      %v5048 = vpop.f32.mrf.mxu0
      %5049 = vdwg.mxu0
      %v5050 = vadd.f32 %v4296, %v4924
      %v5051 = vadd.f32 %v4297, %v4927
      %v5052 = vadd.f32 %v4298, %v4932
      %v5053 = vadd.f32 %v4299, %v4935
      %v5054 = vadd.f32 %v4300, %v4940
      %v5055 = vadd.f32 %v4301, %v4943
      %v5056 = vadd.f32 %v4302, %v4948
      %v5057 = vadd.f32 %v4303, %v4951
      %v5058 = vadd.f32 %v4304, %v4956
      %v5059 = vadd.f32 %v4305, %v4959
      %v5060 = vadd.f32 %v4306, %v4964
      %v5061 = vadd.f32 %v4307, %v4967
      %v5062 = vadd.f32 %v4308, %v4972
      %v5063 = vadd.f32 %v4309, %v4975
      %v5064 = vadd.f32 %v4310, %v4980
      %v5065 = vadd.f32 %v4311, %v4983
      %v5066 = vadd.f32 %v4312, %v4988
      %v5067 = vadd.f32 %v4313, %v4991
      %v5068 = vadd.f32 %v4314, %v4996
      %v5069 = vadd.f32 %v4315, %v4999
      %v5070 = vadd.f32 %v4316, %v5004
      %v5071 = vadd.f32 %v4317, %v5007
      %v5072 = vadd.f32 %v4318, %v5012
      %v5073 = vadd.f32 %v4319, %v5015
      %v5074 = vadd.f32 %v4320, %v5020
      %v5075 = vadd.f32 %v4321, %v5023
      %v5076 = vadd.f32 %v4322, %v5028
      %v5077 = vadd.f32 %v4323, %v5031
      %v5078 = vadd.f32 %v4324, %v5036
      %v5079 = vadd.f32 %v4325, %v5039
      %v5080 = vadd.f32 %v4326, %v5044
      %v5081 = vadd.f32 %v4327, %v5047
      %v5082 = vld [vmem:[%s3941] sm:$0xe]
      %v5083 = vld [vmem:[%s3941 + $0xc] sm:$0xe]
      %v5084 = vld [vmem:[%s3941 + $0x18] sm:$0xe]
      %v5085 = vld [vmem:[%s3941 + $0x24] sm:$0xe]
      %v5086 = vld [vmem:[%s3941 + $0x30] sm:$0xe]
      %v5087 = vld [vmem:[%s3941 + $0x3c] sm:$0xe]
      %v5088 = vld [vmem:[%s3941 + $0x48] sm:$0xe]
      %v5089 = vld [vmem:[%s3941 + $0x54] sm:$0xe]
      %v5090 = vld [vmem:[%s3941 + $0x60] sm:$0xe]
      %v5091 = vld [vmem:[%s3941 + $0x6c] sm:$0xe]
      %v5092 = vld [vmem:[%s3941 + $0x78] sm:$0xe]
      %v5093 = vld [vmem:[%s3941 + $0x84] sm:$0xe]
      %v5094 = vld [vmem:[%s3941 + $0x90] sm:$0xe]
      %v5095 = vld [vmem:[%s3941 + $0x9c] sm:$0xe]
      %v5096 = vld [vmem:[%s3941 + $0xa8] sm:$0xe]
      %v5097 = vld [vmem:[%s3941 + $0xb4] sm:$0xe]
      %v5146 = vrot.slane %v5082, 5
      %v5147 = vrot.slane %v5146, 4
      %v5148 = vrot.slane %v4329, 5
      %v5149 = vsel %vm1868, %v5147, %v5148
      %v5150 = vrot.slane %v5148, 4
      %v5151 = vrot.slane %v4330, 5
      %v5152 = vsel %vm1868, %v5150, %v5151
      %v5153 = vrot.slane %v5083, 5
      %v5154 = vrot.slane %v5153, 4
      %v5155 = vrot.slane %v4332, 5
      %v5156 = vsel %vm1868, %v5154, %v5155
      %v5157 = vrot.slane %v5155, 4
      %v5158 = vrot.slane %v4333, 5
      %v5159 = vsel %vm1868, %v5157, %v5158
      %v5160 = vrot.slane %v5084, 5
      %v5161 = vrot.slane %v5160, 4
      %v5162 = vrot.slane %v4335, 5
      %v5163 = vsel %vm1868, %v5161, %v5162
      %v5164 = vrot.slane %v5162, 4
      %v5165 = vrot.slane %v4336, 5
      %v5166 = vsel %vm1868, %v5164, %v5165
      %v5167 = vrot.slane %v5085, 5
      %v5168 = vrot.slane %v5167, 4
      %v5169 = vrot.slane %v4338, 5
      %v5170 = vsel %vm1868, %v5168, %v5169
      %v5171 = vrot.slane %v5169, 4
      %v5172 = vrot.slane %v4339, 5
      %v5173 = vsel %vm1868, %v5171, %v5172
      %v5174 = vrot.slane %v5086, 5
      %v5175 = vrot.slane %v5174, 4
      %v5176 = vrot.slane %v4341, 5
      %v5177 = vsel %vm1868, %v5175, %v5176
      %v5178 = vrot.slane %v5176, 4
      %v5179 = vrot.slane %v4342, 5
      %v5180 = vsel %vm1868, %v5178, %v5179
      %v5181 = vrot.slane %v5087, 5
      %v5182 = vrot.slane %v5181, 4
      %v5183 = vrot.slane %v4344, 5
      %v5184 = vsel %vm1868, %v5182, %v5183
      %v5185 = vrot.slane %v5183, 4
      %v5186 = vrot.slane %v4345, 5
      %v5187 = vsel %vm1868, %v5185, %v5186
      %v5188 = vrot.slane %v5088, 5
      %v5189 = vrot.slane %v5188, 4
      %v5190 = vrot.slane %v4347, 5
      %v5191 = vsel %vm1868, %v5189, %v5190
      %v5192 = vrot.slane %v5190, 4
      %v5193 = vrot.slane %v4348, 5
      %v5194 = vsel %vm1868, %v5192, %v5193
      %v5195 = vrot.slane %v5089, 5
      %v5196 = vrot.slane %v5195, 4
      %v5197 = vrot.slane %v4350, 5
      %v5198 = vsel %vm1868, %v5196, %v5197
      %v5199 = vrot.slane %v5197, 4
      %v5200 = vrot.slane %v4351, 5
      %v5201 = vsel %vm1868, %v5199, %v5200
      %v5202 = vrot.slane %v5090, 5
      %v5203 = vrot.slane %v5202, 4
      %v5204 = vrot.slane %v4353, 5
      %v5205 = vsel %vm1868, %v5203, %v5204
      %v5206 = vrot.slane %v5204, 4
      %v5207 = vrot.slane %v4354, 5
      %v5208 = vsel %vm1868, %v5206, %v5207
      %v5209 = vrot.slane %v5091, 5
      %v5210 = vrot.slane %v5209, 4
      %v5211 = vrot.slane %v4356, 5
      %v5212 = vsel %vm1868, %v5210, %v5211
      %v5213 = vrot.slane %v5211, 4
      %v5214 = vrot.slane %v4357, 5
      %v5215 = vsel %vm1868, %v5213, %v5214
      %v5216 = vrot.slane %v5092, 5
      %v5217 = vrot.slane %v5216, 4
      %v5218 = vrot.slane %v4359, 5
      %v5219 = vsel %vm1868, %v5217, %v5218
      %v5220 = vrot.slane %v5218, 4
      %v5221 = vrot.slane %v4360, 5
      %v5222 = vsel %vm1868, %v5220, %v5221
      %v5223 = vrot.slane %v5093, 5
      %v5224 = vrot.slane %v5223, 4
      %v5225 = vrot.slane %v4362, 5
      %v5226 = vsel %vm1868, %v5224, %v5225
      %v5227 = vrot.slane %v5225, 4
      %v5228 = vrot.slane %v4363, 5
      %v5229 = vsel %vm1868, %v5227, %v5228
      %v5230 = vrot.slane %v5094, 5
      %v5231 = vrot.slane %v5230, 4
      %v5232 = vrot.slane %v4365, 5
      %v5233 = vsel %vm1868, %v5231, %v5232
      %v5234 = vrot.slane %v5232, 4
      %v5235 = vrot.slane %v4366, 5
      %v5236 = vsel %vm1868, %v5234, %v5235
      %v5237 = vrot.slane %v5095, 5
      %v5238 = vrot.slane %v5237, 4
      %v5239 = vrot.slane %v4368, 5
      %v5240 = vsel %vm1868, %v5238, %v5239
      %v5241 = vrot.slane %v5239, 4
      %v5242 = vrot.slane %v4369, 5
      %v5243 = vsel %vm1868, %v5241, %v5242
      %v5244 = vrot.slane %v5096, 5
      %v5245 = vrot.slane %v5244, 4
      %v5246 = vrot.slane %v4371, 5
      %v5247 = vsel %vm1868, %v5245, %v5246
      %v5248 = vrot.slane %v5246, 4
      %v5249 = vrot.slane %v4372, 5
      %v5250 = vsel %vm1868, %v5248, %v5249
      %v5251 = vrot.slane %v5097, 5
      %v5252 = vrot.slane %v5251, 4
      %v5253 = vrot.slane %v4374, 5
      %v5254 = vsel %vm1868, %v5252, %v5253
      %v5255 = vrot.slane %v5253, 4
      %v5256 = vrot.slane %v4375, 5
      %v5257 = vsel %vm1868, %v5255, %v5256
      %s5258 = scalar_lea.vmem %s1, 512
      %v5259 = vld [vmem:[%s5258] sm:$0xf]
      %v5260 = vld [vmem:[%s5258 + $0x4] sm:$0xf]
      %v5261 = vld [vmem:[%s5258 + $0x8] sm:$0xf]
      %v5262 = vld [vmem:[%s5258 + $0xc] sm:$0xf]
      %v5263 = vld [vmem:[%s5258 + $0x10] sm:$0xf]
      %v5264 = vld [vmem:[%s5258 + $0x14] sm:$0xf]
      %v5265 = vld [vmem:[%s5258 + $0x18] sm:$0xf]
      %v5266 = vld [vmem:[%s5258 + $0x1c] sm:$0xf]
      %v5267 = vld [vmem:[%s5258 + $0x20] sm:$0xf]
      %v5268 = vld [vmem:[%s5258 + $0x24] sm:$0xf]
      %v5269 = vld [vmem:[%s5258 + $0x28] sm:$0xf]
      %v5270 = vld [vmem:[%s5258 + $0x2c] sm:$0xf]
      %v5271 = vld [vmem:[%s5258 + $0x30] sm:$0xf]
      %v5272 = vld [vmem:[%s5258 + $0x34] sm:$0xf]
      %v5273 = vld [vmem:[%s5258 + $0x38] sm:$0xf]
      %v5274 = vld [vmem:[%s5258 + $0x3c] sm:$0xf]
      %v5275 = vunpack.c.l.b16 %v5149
      %v5276 = vunpack.c.l.b16 %v5152
      %v5277 = vunpack.c.l.b16 %v5156
      %v5278 = vunpack.c.l.b16 %v5159
      %v5279 = vunpack.c.l.b16 %v5163
      %v5280 = vunpack.c.l.b16 %v5166
      %v5281 = vunpack.c.l.b16 %v5170
      %v5282 = vunpack.c.l.b16 %v5173
      %v5283 = vunpack.c.l.b16 %v5177
      %v5284 = vunpack.c.l.b16 %v5180
      %v5285 = vunpack.c.l.b16 %v5184
      %v5286 = vunpack.c.l.b16 %v5187
      %v5287 = vunpack.c.l.b16 %v5191
      %v5288 = vunpack.c.l.b16 %v5194
      %v5289 = vunpack.c.l.b16 %v5198
      %v5290 = vunpack.c.l.b16 %v5201
      %v5291 = vunpack.c.l.b16 %v5205
      %v5292 = vunpack.c.l.b16 %v5208
      %v5293 = vunpack.c.l.b16 %v5212
      %v5294 = vunpack.c.l.b16 %v5215
      %v5295 = vunpack.c.l.b16 %v5219
      %v5296 = vunpack.c.l.b16 %v5222
      %v5297 = vunpack.c.l.b16 %v5226
      %v5298 = vunpack.c.l.b16 %v5229
      %v5299 = vunpack.c.l.b16 %v5233
      %v5300 = vunpack.c.l.b16 %v5236
      %v5301 = vunpack.c.l.b16 %v5240
      %v5302 = vunpack.c.l.b16 %v5243
      %v5303 = vunpack.c.l.b16 %v5247
      %v5304 = vunpack.c.l.b16 %v5250
      %v5305 = vunpack.c.l.b16 %v5254
      %v5306 = vunpack.c.l.b16 %v5257
      %v5307 = vpack.c.b16 %v5276, %v5275
      %v5308 = vpack.c.b16 %v5278, %v5277
      %v5309 = vpack.c.b16 %v5280, %v5279
      %v5310 = vpack.c.b16 %v5282, %v5281
      %v5311 = vpack.c.b16 %v5284, %v5283
      %v5312 = vpack.c.b16 %v5286, %v5285
      %v5313 = vpack.c.b16 %v5288, %v5287
      %v5314 = vpack.c.b16 %v5290, %v5289
      %v5315 = vpack.c.b16 %v5292, %v5291
      %v5316 = vpack.c.b16 %v5294, %v5293
      %v5317 = vpack.c.b16 %v5296, %v5295
      %v5318 = vpack.c.b16 %v5298, %v5297
      %v5319 = vpack.c.b16 %v5300, %v5299
      %v5320 = vpack.c.b16 %v5302, %v5301
      %v5321 = vpack.c.b16 %v5304, %v5303
      %v5322 = vpack.c.b16 %v5306, %v5305
      %v5355 = vunpack.c.l.b16 %v5259
      %v5356 = vunpack.c.l.b16 %v5260
      %v5357 = vunpack.c.l.b16 %v5261
      %v5358 = vunpack.c.l.b16 %v5262
      %v5359 = vunpack.c.l.b16 %v5263
      %v5360 = vunpack.c.l.b16 %v5264
      %v5361 = vunpack.c.l.b16 %v5265
      %v5362 = vunpack.c.l.b16 %v5266
      %v5363 = vunpack.c.l.b16 %v5267
      %v5364 = vunpack.c.l.b16 %v5268
      %v5365 = vunpack.c.l.b16 %v5269
      %v5366 = vunpack.c.l.b16 %v5270
      %v5367 = vunpack.c.l.b16 %v5271
      %v5368 = vunpack.c.l.b16 %v5272
      %v5369 = vunpack.c.l.b16 %v5273
      %v5370 = vunpack.c.l.b16 %v5274
      %v5371 = vpack.c.b16 %v5356, %v5355
      %v5372 = vpack.c.b16 %v5358, %v5357
      %v5373 = vpack.c.b16 %v5360, %v5359
      %v5374 = vpack.c.b16 %v5362, %v5361
      %v5375 = vpack.c.b16 %v5364, %v5363
      %v5376 = vpack.c.b16 %v5366, %v5365
      %v5377 = vpack.c.b16 %v5368, %v5367
      %v5378 = vpack.c.b16 %v5370, %v5369
      %5387 = vmatprep.subr.bf16.mxu0 0
      %5388 = vmatpush1.bf16.msra.mxu0 %v5378
      %5389 = vmatprep.subr.bf16.mxu0 0
      %5390 = vmatpush1.bf16.msra.mxu0 %v5377
      %5391 = vmatprep.subr.bf16.mxu0 0
      %5392 = vmatpush1.bf16.msra.mxu0 %v5376
      %5393 = vmatprep.subr.bf16.mxu0 0
      %5394 = vmatpush1.bf16.msra.mxu0 %v5375
      %5395 = vmatprep.subr.bf16.mxu0 0
      %5396 = vmatpush1.bf16.msra.mxu0 %v5374
      %5397 = vmatprep.subr.bf16.mxu0 0
      %5398 = vmatpush1.bf16.msra.mxu0 %v5373
      %5399 = vmatprep.subr.bf16.mxu0 0
      %5400 = vmatpush1.bf16.msra.mxu0 %v5372
      %5401 = vmatprep.subr.bf16.mxu0 0
      %5402 = vmatpush1.bf16.msra.mxu0 %v5371
      %5403 = vmatprep.subr.bf16.mxu0 0
      %5404 = vmatpush2.bf16.msra.mxu0 0
      %5405 = vmatprep.subr.bf16.mxu0 0
      %5406 = vmatpush2.bf16.msra.mxu0 0
      %5407 = vmatprep.subr.bf16.mxu0 0
      %5408 = vmatpush2.bf16.msra.mxu0 0
      %5409 = vmatprep.subr.bf16.mxu0 0
      %5410 = vmatpush2.bf16.msra.mxu0 0
      %5411 = vmatprep.subr.bf16.mxu0 0
      %5412 = vmatpush2.bf16.msra.mxu0 0
      %5413 = vmatprep.subr.bf16.mxu0 0
      %5414 = vmatpush2.bf16.msra.mxu0 0
      %5415 = vmatprep.subr.bf16.mxu0 0
      %5416 = vmatpush2.bf16.msra.mxu0 0
      %5417 = vmatprep.subr.bf16.mxu0 0
      %5418 = vmatpush2.bf16.msra.mxu0 0
      %5419 = vmatprep.mubr.bf16.mxu0 0
      %5420 = vmatmul.mubr.bf16.gmra.mxu0 %v5307
      %v5421 = vpop.f32.mrf.mxu0
      %v5422 = vadd.f32 0.0, %v5421
      %v5423 = vpop.f32.mrf.mxu0
      %v5424 = vpop.f32.mrf.mxu0
      %v5425 = vadd.f32 0.0, %v5424
      %v5426 = vpop.f32.mrf.mxu0
      %5427 = vmatprep.mubr.bf16.mxu0 0
      %5428 = vmatmul.mubr.bf16.gmra.mxu0 %v5308
      %v5429 = vpop.f32.mrf.mxu0
      %v5430 = vadd.f32 0.0, %v5429
      %v5431 = vpop.f32.mrf.mxu0
      %v5432 = vpop.f32.mrf.mxu0
      %v5433 = vadd.f32 0.0, %v5432
      %v5434 = vpop.f32.mrf.mxu0
      %5435 = vmatprep.mubr.bf16.mxu0 0
      %5436 = vmatmul.mubr.bf16.gmra.mxu0 %v5309
      %v5437 = vpop.f32.mrf.mxu0
      %v5438 = vadd.f32 0.0, %v5437
      %v5439 = vpop.f32.mrf.mxu0
      %v5440 = vpop.f32.mrf.mxu0
      %v5441 = vadd.f32 0.0, %v5440
      %v5442 = vpop.f32.mrf.mxu0
      %5443 = vmatprep.mubr.bf16.mxu0 0
      %5444 = vmatmul.mubr.bf16.gmra.mxu0 %v5310
      %v5445 = vpop.f32.mrf.mxu0
      %v5446 = vadd.f32 0.0, %v5445
      %v5447 = vpop.f32.mrf.mxu0
      %v5448 = vpop.f32.mrf.mxu0
      %v5449 = vadd.f32 0.0, %v5448
      %v5450 = vpop.f32.mrf.mxu0
      %5451 = vmatprep.mubr.bf16.mxu0 0
      %5452 = vmatmul.mubr.bf16.gmra.mxu0 %v5311
      %v5453 = vpop.f32.mrf.mxu0
      %v5454 = vadd.f32 0.0, %v5453
      %v5455 = vpop.f32.mrf.mxu0
      %v5456 = vpop.f32.mrf.mxu0
      %v5457 = vadd.f32 0.0, %v5456
      %v5458 = vpop.f32.mrf.mxu0
      %5459 = vmatprep.mubr.bf16.mxu0 0
      %5460 = vmatmul.mubr.bf16.gmra.mxu0 %v5312
      %v5461 = vpop.f32.mrf.mxu0
      %v5462 = vadd.f32 0.0, %v5461
      %v5463 = vpop.f32.mrf.mxu0
      %v5464 = vpop.f32.mrf.mxu0
      %v5465 = vadd.f32 0.0, %v5464
      %v5466 = vpop.f32.mrf.mxu0
      %5467 = vmatprep.mubr.bf16.mxu0 0
      %5468 = vmatmul.mubr.bf16.gmra.mxu0 %v5313
      %v5469 = vpop.f32.mrf.mxu0
      %v5470 = vadd.f32 0.0, %v5469
      %v5471 = vpop.f32.mrf.mxu0
      %v5472 = vpop.f32.mrf.mxu0
      %v5473 = vadd.f32 0.0, %v5472
      %v5474 = vpop.f32.mrf.mxu0
      %5475 = vmatprep.mubr.bf16.mxu0 0
      %5476 = vmatmul.mubr.bf16.gmra.mxu0 %v5314
      %v5477 = vpop.f32.mrf.mxu0
      %v5478 = vadd.f32 0.0, %v5477
      %v5479 = vpop.f32.mrf.mxu0
      %v5480 = vpop.f32.mrf.mxu0
      %v5481 = vadd.f32 0.0, %v5480
      %v5482 = vpop.f32.mrf.mxu0
      %5483 = vmatprep.mubr.bf16.mxu0 0
      %5484 = vmatmul.mubr.bf16.gmra.mxu0 %v5315
      %v5485 = vpop.f32.mrf.mxu0
      %v5486 = vadd.f32 0.0, %v5485
      %v5487 = vpop.f32.mrf.mxu0
      %v5488 = vpop.f32.mrf.mxu0
      %v5489 = vadd.f32 0.0, %v5488
      %v5490 = vpop.f32.mrf.mxu0
      %5491 = vmatprep.mubr.bf16.mxu0 0
      %5492 = vmatmul.mubr.bf16.gmra.mxu0 %v5316
      %v5493 = vpop.f32.mrf.mxu0
      %v5494 = vadd.f32 0.0, %v5493
      %v5495 = vpop.f32.mrf.mxu0
      %v5496 = vpop.f32.mrf.mxu0
      %v5497 = vadd.f32 0.0, %v5496
      %v5498 = vpop.f32.mrf.mxu0
      %5499 = vmatprep.mubr.bf16.mxu0 0
      %5500 = vmatmul.mubr.bf16.gmra.mxu0 %v5317
      %v5501 = vpop.f32.mrf.mxu0
      %v5502 = vadd.f32 0.0, %v5501
      %v5503 = vpop.f32.mrf.mxu0
      %v5504 = vpop.f32.mrf.mxu0
      %v5505 = vadd.f32 0.0, %v5504
      %v5506 = vpop.f32.mrf.mxu0
      %5507 = vmatprep.mubr.bf16.mxu0 0
      %5508 = vmatmul.mubr.bf16.gmra.mxu0 %v5318
      %v5509 = vpop.f32.mrf.mxu0
      %v5510 = vadd.f32 0.0, %v5509
      %v5511 = vpop.f32.mrf.mxu0
      %v5512 = vpop.f32.mrf.mxu0
      %v5513 = vadd.f32 0.0, %v5512
      %v5514 = vpop.f32.mrf.mxu0
      %5515 = vmatprep.mubr.bf16.mxu0 0
      %5516 = vmatmul.mubr.bf16.gmra.mxu0 %v5319
      %v5517 = vpop.f32.mrf.mxu0
      %v5518 = vadd.f32 0.0, %v5517
      %v5519 = vpop.f32.mrf.mxu0
      %v5520 = vpop.f32.mrf.mxu0
      %v5521 = vadd.f32 0.0, %v5520
      %v5522 = vpop.f32.mrf.mxu0
      %5523 = vmatprep.mubr.bf16.mxu0 0
      %5524 = vmatmul.mubr.bf16.gmra.mxu0 %v5320
      %v5525 = vpop.f32.mrf.mxu0
      %v5526 = vadd.f32 0.0, %v5525
      %v5527 = vpop.f32.mrf.mxu0
      %v5528 = vpop.f32.mrf.mxu0
      %v5529 = vadd.f32 0.0, %v5528
      %v5530 = vpop.f32.mrf.mxu0
      %5531 = vmatprep.mubr.bf16.mxu0 0
      %5532 = vmatmul.mubr.bf16.gmra.mxu0 %v5321
      %v5533 = vpop.f32.mrf.mxu0
      %v5534 = vadd.f32 0.0, %v5533
      %v5535 = vpop.f32.mrf.mxu0
      %v5536 = vpop.f32.mrf.mxu0
      %v5537 = vadd.f32 0.0, %v5536
      %v5538 = vpop.f32.mrf.mxu0
      %5539 = vmatprep.mubr.bf16.mxu0 0
      %5540 = vmatmul.mubr.bf16.gmra.mxu0 %v5322
      %v5541 = vpop.f32.mrf.mxu0
      %v5542 = vadd.f32 0.0, %v5541
      %v5543 = vpop.f32.mrf.mxu0
      %v5544 = vpop.f32.mrf.mxu0
      %v5545 = vadd.f32 0.0, %v5544
      %v5546 = vpop.f32.mrf.mxu0
      %5547 = vdwg.mxu0
      %v5548 = vadd.f32 %v5050, %v5422
      %v5549 = vadd.f32 %v5051, %v5425
      %v5550 = vadd.f32 %v5052, %v5430
      %v5551 = vadd.f32 %v5053, %v5433
      %v5552 = vadd.f32 %v5054, %v5438
      %v5553 = vadd.f32 %v5055, %v5441
      %v5554 = vadd.f32 %v5056, %v5446
      %v5555 = vadd.f32 %v5057, %v5449
      %v5556 = vadd.f32 %v5058, %v5454
      %v5557 = vadd.f32 %v5059, %v5457
      %v5558 = vadd.f32 %v5060, %v5462
      %v5559 = vadd.f32 %v5061, %v5465
      %v5560 = vadd.f32 %v5062, %v5470
      %v5561 = vadd.f32 %v5063, %v5473
      %v5562 = vadd.f32 %v5064, %v5478
      %v5563 = vadd.f32 %v5065, %v5481
      %v5564 = vadd.f32 %v5066, %v5486
      %v5565 = vadd.f32 %v5067, %v5489
      %v5566 = vadd.f32 %v5068, %v5494
      %v5567 = vadd.f32 %v5069, %v5497
      %v5568 = vadd.f32 %v5070, %v5502
      %v5569 = vadd.f32 %v5071, %v5505
      %v5570 = vadd.f32 %v5072, %v5510
      %v5571 = vadd.f32 %v5073, %v5513
      %v5572 = vadd.f32 %v5074, %v5518
      %v5573 = vadd.f32 %v5075, %v5521
      %v5574 = vadd.f32 %v5076, %v5526
      %v5575 = vadd.f32 %v5077, %v5529
      %v5576 = vadd.f32 %v5078, %v5534
      %v5577 = vadd.f32 %v5079, %v5537
      %v5578 = vadd.f32 %v5080, %v5542
      %v5579 = vadd.f32 %v5081, %v5545
      %v5580 = vpack.c.bf16 %v5549, %v5548
      %v5581 = vpack.c.bf16 %v5551, %v5550
      %v5582 = vpack.c.bf16 %v5553, %v5552
      %v5583 = vpack.c.bf16 %v5555, %v5554
      %v5584 = vpack.c.bf16 %v5557, %v5556
      %v5585 = vpack.c.bf16 %v5559, %v5558
      %v5586 = vpack.c.bf16 %v5561, %v5560
      %v5587 = vpack.c.bf16 %v5563, %v5562
      %v5588 = vpack.c.bf16 %v5565, %v5564
      %v5589 = vpack.c.bf16 %v5567, %v5566
      %v5590 = vpack.c.bf16 %v5569, %v5568
      %v5591 = vpack.c.bf16 %v5571, %v5570
      %v5592 = vpack.c.bf16 %v5573, %v5572
      %v5593 = vpack.c.bf16 %v5575, %v5574
      %v5594 = vpack.c.bf16 %v5577, %v5576
      %v5595 = vpack.c.bf16 %v5579, %v5578
      %v5612 = vunpack.c.l.b16 %v5580
      %v5613 = vunpack.c.h.b16 %v5580
      %v5614 = vunpack.c.l.b16 %v5581
      %v5615 = vunpack.c.h.b16 %v5581
      %v5616 = vunpack.c.l.b16 %v5582
      %v5617 = vunpack.c.h.b16 %v5582
      %v5618 = vunpack.c.l.b16 %v5583
      %v5619 = vunpack.c.h.b16 %v5583
      %v5620 = vunpack.c.l.b16 %v5584
      %v5621 = vunpack.c.h.b16 %v5584
      %v5622 = vunpack.c.l.b16 %v5585
      %v5623 = vunpack.c.h.b16 %v5585
      %v5624 = vunpack.c.l.b16 %v5586
      %v5625 = vunpack.c.h.b16 %v5586
      %v5626 = vunpack.c.l.b16 %v5587
      %v5627 = vunpack.c.h.b16 %v5587
      %v5628 = vunpack.c.l.b16 %v5588
      %v5629 = vunpack.c.h.b16 %v5588
      %v5630 = vunpack.c.l.b16 %v5589
      %v5631 = vunpack.c.h.b16 %v5589
      %v5632 = vunpack.c.l.b16 %v5590
      %v5633 = vunpack.c.h.b16 %v5590
      %v5634 = vunpack.c.l.b16 %v5591
      %v5635 = vunpack.c.h.b16 %v5591
      %v5636 = vunpack.c.l.b16 %v5592
      %v5637 = vunpack.c.h.b16 %v5592
      %v5638 = vunpack.c.l.b16 %v5593
      %v5639 = vunpack.c.h.b16 %v5593
      %v5640 = vunpack.c.l.b16 %v5594
      %v5641 = vunpack.c.h.b16 %v5594
      %v5642 = vunpack.c.l.b16 %v5595
      %v5643 = vunpack.c.h.b16 %v5595
      %v5644 = vpack.c.b16 %v5612, %v5612
      %v5645 = vpack.c.b16 %v5613, %v5613
      %v5646 = vpack.c.b16 %v5614, %v5614
      %v5647 = vpack.c.b16 %v5615, %v5615
      %v5648 = vpack.c.b16 %v5616, %v5616
      %v5649 = vpack.c.b16 %v5617, %v5617
      %v5650 = vpack.c.b16 %v5618, %v5618
      %v5651 = vpack.c.b16 %v5619, %v5619
      %v5652 = vpack.c.b16 %v5620, %v5620
      %v5653 = vpack.c.b16 %v5621, %v5621
      %v5654 = vpack.c.b16 %v5622, %v5622
      %v5655 = vpack.c.b16 %v5623, %v5623
      %v5656 = vpack.c.b16 %v5624, %v5624
      %v5657 = vpack.c.b16 %v5625, %v5625
      %v5658 = vpack.c.b16 %v5626, %v5626
      %v5659 = vpack.c.b16 %v5627, %v5627
      %v5660 = vpack.c.b16 %v5628, %v5628
      %v5661 = vpack.c.b16 %v5629, %v5629
      %v5662 = vpack.c.b16 %v5630, %v5630
      %v5663 = vpack.c.b16 %v5631, %v5631
      %v5664 = vpack.c.b16 %v5632, %v5632
      %v5665 = vpack.c.b16 %v5633, %v5633
      %v5666 = vpack.c.b16 %v5634, %v5634
      %v5667 = vpack.c.b16 %v5635, %v5635
      %v5668 = vpack.c.b16 %v5636, %v5636
      %v5669 = vpack.c.b16 %v5637, %v5637
      %v5670 = vpack.c.b16 %v5638, %v5638
      %v5671 = vpack.c.b16 %v5639, %v5639
      %v5672 = vpack.c.b16 %v5640, %v5640
      %v5673 = vpack.c.b16 %v5641, %v5641
      %v5674 = vpack.c.b16 %v5642, %v5642
      %v5675 = vpack.c.b16 %v5643, %v5643
      %5708 = vst [vmem:[%s177] sm:$0xf] %v5644
      %5709 = vst [vmem:[%s177 + $0x4] sm:$0xf] %v5645
      %5710 = vst [vmem:[%s177 + $0x8] sm:$0xf] %v5646
      %5711 = vst [vmem:[%s177 + $0xc] sm:$0xf] %v5647
      %5712 = vst [vmem:[%s177 + $0x10] sm:$0xf] %v5648
      %5713 = vst [vmem:[%s177 + $0x14] sm:$0xf] %v5649
      %5714 = vst [vmem:[%s177 + $0x18] sm:$0xf] %v5650
      %5715 = vst [vmem:[%s177 + $0x1c] sm:$0xf] %v5651
      %5716 = vst [vmem:[%s177 + $0x20] sm:$0xf] %v5652
      %5717 = vst [vmem:[%s177 + $0x24] sm:$0xf] %v5653
      %5718 = vst [vmem:[%s177 + $0x28] sm:$0xf] %v5654
      %5719 = vst [vmem:[%s177 + $0x2c] sm:$0xf] %v5655
      %5720 = vst [vmem:[%s177 + $0x30] sm:$0xf] %v5656
      %5721 = vst [vmem:[%s177 + $0x34] sm:$0xf] %v5657
      %5722 = vst [vmem:[%s177 + $0x38] sm:$0xf] %v5658
      %5723 = vst [vmem:[%s177 + $0x3c] sm:$0xf] %v5659
      %5724 = vst [vmem:[%s177 + $0x40] sm:$0xf] %v5660
      %5725 = vst [vmem:[%s177 + $0x44] sm:$0xf] %v5661
      %5726 = vst [vmem:[%s177 + $0x48] sm:$0xf] %v5662
      %5727 = vst [vmem:[%s177 + $0x4c] sm:$0xf] %v5663
      %5728 = vst [vmem:[%s177 + $0x50] sm:$0xf] %v5664
      %5729 = vst [vmem:[%s177 + $0x54] sm:$0xf] %v5665
      %5730 = vst [vmem:[%s177 + $0x58] sm:$0xf] %v5666
      %5731 = vst [vmem:[%s177 + $0x5c] sm:$0xf] %v5667
      %5732 = vst [vmem:[%s177 + $0x60] sm:$0xf] %v5668
      %5733 = vst [vmem:[%s177 + $0x64] sm:$0xf] %v5669
      %5734 = vst [vmem:[%s177 + $0x68] sm:$0xf] %v5670
      %5735 = vst [vmem:[%s177 + $0x6c] sm:$0xf] %v5671
      %5736 = vst [vmem:[%s177 + $0x70] sm:$0xf] %v5672
      %5737 = vst [vmem:[%s177 + $0x74] sm:$0xf] %v5673
      %5738 = vst [vmem:[%s177 + $0x78] sm:$0xf] %v5674
      %5739 = vst [vmem:[%s177 + $0x7c] sm:$0xf] %v5675
      %v5740 = vadd.f32 %v5548, %v5549
      %v5741 = vadd.f32 %v5740, %v5550
      %v5742 = vadd.f32 %v5741, %v5551
      %v5743 = vadd.f32 %v5742, %v5552
      %v5744 = vadd.f32 %v5743, %v5553
      %v5745 = vadd.f32 %v5744, %v5554
      %v5746 = vadd.f32 %v5745, %v5555
      %v5747 = vadd.f32 %v5746, %v5556
      %v5748 = vadd.f32 %v5747, %v5557
      %v5749 = vadd.f32 %v5748, %v5558
      %v5750 = vadd.f32 %v5749, %v5559
      %v5751 = vadd.f32 %v5750, %v5560
      %v5752 = vadd.f32 %v5751, %v5561
      %v5753 = vadd.f32 %v5752, %v5562
      %v5754 = vadd.f32 %v5753, %v5563
      %v5755 = vadd.f32 %v5754, %v5564
      %v5756 = vadd.f32 %v5755, %v5565
      %v5757 = vadd.f32 %v5756, %v5566
      %v5758 = vadd.f32 %v5757, %v5567
      %v5759 = vadd.f32 %v5758, %v5568
      %v5760 = vadd.f32 %v5759, %v5569
      %v5761 = vadd.f32 %v5760, %v5570
      %v5762 = vadd.f32 %v5761, %v5571
      %v5763 = vadd.f32 %v5762, %v5572
      %v5764 = vadd.f32 %v5763, %v5573
      %v5765 = vadd.f32 %v5764, %v5574
      %v5766 = vadd.f32 %v5765, %v5575
      %v5767 = vadd.f32 %v5766, %v5576
      %v5768 = vadd.f32 %v5767, %v5577
      %v5769 = vadd.f32 %v5768, %v5578
      %v5770 = vadd.f32 %v5769, %v5579
      %v5771 = vrot.slane %v5770, 4
      %v5772 = vadd.f32 %v5770, %v5771
      %v5773 = vrot.slane %v5772, 2
      %v5774 = vadd.f32 %v5772, %v5773
      %v5775 = vrot.slane %v5774, 1
      %v5776 = vadd.f32 %v5774, %v5775
      %v5777 = vadd.f32 %v5776, 0.0
      %v5778 = vmul.f32 %v5548, %v5548
      %v5779 = vmul.f32 %v5549, %v5549
      %v5780 = vmul.f32 %v5550, %v5550
      %v5781 = vmul.f32 %v5551, %v5551
      %v5782 = vmul.f32 %v5552, %v5552
      %v5783 = vmul.f32 %v5553, %v5553
      %v5784 = vmul.f32 %v5554, %v5554
      %v5785 = vmul.f32 %v5555, %v5555
      %v5786 = vmul.f32 %v5556, %v5556
      %v5787 = vmul.f32 %v5557, %v5557
      %v5788 = vmul.f32 %v5558, %v5558
      %v5789 = vmul.f32 %v5559, %v5559
      %v5790 = vmul.f32 %v5560, %v5560
      %v5791 = vmul.f32 %v5561, %v5561
      %v5792 = vmul.f32 %v5562, %v5562
      %v5793 = vmul.f32 %v5563, %v5563
      %v5794 = vmul.f32 %v5564, %v5564
      %v5795 = vmul.f32 %v5565, %v5565
      %v5796 = vmul.f32 %v5566, %v5566
      %v5797 = vmul.f32 %v5567, %v5567
      %v5798 = vmul.f32 %v5568, %v5568
      %v5799 = vmul.f32 %v5569, %v5569
      %v5800 = vmul.f32 %v5570, %v5570
      %v5801 = vmul.f32 %v5571, %v5571
      %v5802 = vmul.f32 %v5572, %v5572
      %v5803 = vmul.f32 %v5573, %v5573
      %v5804 = vmul.f32 %v5574, %v5574
      %v5805 = vmul.f32 %v5575, %v5575
      %v5806 = vmul.f32 %v5576, %v5576
      %v5807 = vmul.f32 %v5577, %v5577
      %v5808 = vmul.f32 %v5578, %v5578
      %v5809 = vmul.f32 %v5579, %v5579
      %v5810 = vadd.f32 %v5778, %v5779
      %v5811 = vadd.f32 %v5810, %v5780
      %v5812 = vadd.f32 %v5811, %v5781
      %v5813 = vadd.f32 %v5812, %v5782
      %v5814 = vadd.f32 %v5813, %v5783
      %v5815 = vadd.f32 %v5814, %v5784
      %v5816 = vadd.f32 %v5815, %v5785
      %v5817 = vadd.f32 %v5816, %v5786
      %v5818 = vadd.f32 %v5817, %v5787
      %v5819 = vadd.f32 %v5818, %v5788
      %v5820 = vadd.f32 %v5819, %v5789
      %v5821 = vadd.f32 %v5820, %v5790
      %v5822 = vadd.f32 %v5821, %v5791
      %v5823 = vadd.f32 %v5822, %v5792
      %v5824 = vadd.f32 %v5823, %v5793
      %v5825 = vadd.f32 %v5824, %v5794
      %v5826 = vadd.f32 %v5825, %v5795
      %v5827 = vadd.f32 %v5826, %v5796
      %v5828 = vadd.f32 %v5827, %v5797
      %v5829 = vadd.f32 %v5828, %v5798
      %v5830 = vadd.f32 %v5829, %v5799
      %v5831 = vadd.f32 %v5830, %v5800
      %v5832 = vadd.f32 %v5831, %v5801
      %v5833 = vadd.f32 %v5832, %v5802
      %v5834 = vadd.f32 %v5833, %v5803
      %v5835 = vadd.f32 %v5834, %v5804
      %v5836 = vadd.f32 %v5835, %v5805
      %v5837 = vadd.f32 %v5836, %v5806
      %v5838 = vadd.f32 %v5837, %v5807
      %v5839 = vadd.f32 %v5838, %v5808
      %v5840 = vadd.f32 %v5839, %v5809
      %v5841 = vrot.slane %v5840, 4
      %v5842 = vadd.f32 %v5840, %v5841
      %v5843 = vrot.slane %v5842, 2
      %v5844 = vadd.f32 %v5842, %v5843
      %v5845 = vrot.slane %v5844, 1
      %v5846 = vadd.f32 %v5844, %v5845
      %v5847 = vadd.f32 %v5846, 0.0
      %vm5848 = vcmask 1040384
      %v5849 = vsel %vm5848, %v5777, %v5847
      %5850 = vst [vmem:[%s181] sm:$0x3] %v5849
      %p5851 = scmp.lt.s32.totalorder %s15, 1
      %s5852 = scalar_select %p5851, %s15, 1
      %s5853 = smul.addr %s5852, 32
      %s5854 = smul.addr %s5853, 4
      %s5855 = scalar_lea.vmem %s2, %s5854
      %p5856 = scmp.lt.s32.totalorder %s15, 1
      %s5857 = scalar_select %p5856, %s15, 1
      %s5858 = smul.addr %s5857, 2
      %s5859 = scalar_lea.vmem %s3, %s5858
      // Predicated region
      $region29: #{unet_decoding_block.2} parent=27 // pred_check
        %p5860 = pneg %p80
      $region30: #{unet_decoding_block.2} parent=27 // pred_check_branch
        %5862 = sbr.rel (%p5860) target = $region32
      $region31: #{unet_decoding_block.2} parent=27 // pred_region
        _
      $region32: #{unet_decoding_block.2} parent=27 // pred_fallthru
        _
      // Predicated region
      $region33: #{unet_decoding_block.2} parent=27 // pred_check
        %p5863 = pneg %p106
      $region34: #{unet_decoding_block.2} parent=27 // pred_check_branch
        %5865 = sbr.rel (%p5863) target = $region36
      $region35: #{unet_decoding_block.2} parent=27 // pred_region
        _
      $region36: #{unet_decoding_block.2} parent=27 // pred_fallthru
        _
    $region28: #{unet_decoding_block.2} parent=5 // pred_fallthru
      _
    %p5866 = scmp.le.s32.totalorder 2, %s10
    // Predicated region
    $region37: #{unet_decoding_block.2} parent=5 // pred_check
      %p5867 = pneg %p5866
    $region38: #{unet_decoding_block.2} parent=5 // pred_check_branch
      %5869 = sbr.rel (%p5867) target = $region40
    $region39: #{unet_decoding_block.2} parent=5 // pred_region
      %s5870 = ssub.s32 %s10, 2
      // Predicated region
      $region41: #{unet_decoding_block.2} parent=39 // pred_check
        %p5871 = pneg %p86
      $region42: #{unet_decoding_block.2} parent=39 // pred_check_branch
        %5873 = sbr.rel (%p5871) target = $region44
      $region43: #{unet_decoding_block.2} parent=39 // pred_region
        %p5874 = scmp.lt.s32.totalorder %s16, 1
        %s5875 = scalar_select %p5874, %s16, 1
        %s5876 = smul.addr %s5875, 32
        %s5877 = smul.addr %s5876, 4
        %s5878 = scalar_lea.vmem %s2, %s5877
      $region44: #{unet_decoding_block.2} parent=39 // pred_fallthru
        _
      // Predicated region
      $region45: #{unet_decoding_block.2} parent=39 // pred_check
        %p5879 = pneg %p112
      $region46: #{unet_decoding_block.2} parent=39 // pred_check_branch
        %5881 = sbr.rel (%p5879) target = $region48
      $region47: #{unet_decoding_block.2} parent=39 // pred_region
        %p5882 = scmp.lt.s32.totalorder %s16, 1
        %s5883 = scalar_select %p5882, %s16, 1
        %s5884 = smul.addr %s5883, 2
        %s5885 = scalar_lea.vmem %s3, %s5884
      $region48: #{unet_decoding_block.2} parent=39 // pred_fallthru
        _
    $region40: #{unet_decoding_block.2} parent=5 // pred_fallthru
      _
  $region6: #{unet_decoding_block.2} parent=0 // loop_footer
    %s14 = sadd.s32 1, %s10
  $region7: #{unet_decoding_block.2} parent=0 // loop_footer_branch
    %9 = sbr.rel target = $region3
  $region8: #{unet_decoding_block.2} parent=0 // loop_exit
    _

// kernel: unet_decoding_block.3
$region0: #{unet_decoding_block.3}
  #allocation0 [shape = 'u32[]', space=smem, size = 0x4, offset = 0x4, fixed_abs, tag = 'smem constant byte address 0x4 - core index']
  #allocation1 [shape = 'u32[144,128]{1,0:T(1,128)}', space=vmem, size = 0x12000, scoped, tag = 'internal scratch']
  #allocation2 [shape = 'bf16[18,18,128]{2,1,0:T(8,128)(2,1)}', space=vmem, size = 0x1b000, scoped, tag = 'scratch operand']
  %s0 = inlined_call_operand.vmem [shape: bf16[2,16,16,128], index: 0, kind: input, shape index: {}]
  %s1 = inlined_call_operand.vmem [shape: f32[1,128], index: 1, kind: input, shape index: {}]
  %s2 = inlined_call_operand.vmem [shape: f32[1,128], index: 2, kind: input, shape index: {}]
  %s3 = inlined_call_operand.vmem [shape: bf16[9,128,128], index: 3, kind: input, shape index: {}]
  %s4 = inlined_call_operand.vmem [shape: bf16[2,16,16,128], index: 4, kind: output, shape index: {0}]
  %s5 = inlined_call_operand.vmem [shape: f32[2,2,128], index: 5, kind: output, shape index: {1}]
  %6 = xla_tuple %s4, %s5
  %s7 = sld [smem:[#allocation0]]
  $region57: #{unet_decoding_block.3} parent=0
    _
  %s9 = ssub.s32 1, %s7
  %s10 = scalar_select 0, %s9, %s7
  loop: start=0, step=1, limit=4
  $region2: #{unet_decoding_block.3} parent=0 // loop_pre_header
    _
  $region3: #{unet_decoding_block.3} parent=0 // loop_header
    %s12 = sphi 0, %s16
    %p13 = scmp.ge.s32.totalorder %s12, 4
    %s22 = sphi 0, %s24
    %s25 = sphi 0, %s22
    %s26 = sphi 0, %s25
    %s42 = sphi 0, %s26
    %s46 = sphi 0, %s46
    %s48 = sphi 0, %s46
    %s49 = sphi 0, %s48
    %s63 = sphi 0, %s49
    %s67 = sphi 0, %s67
    %s69 = sphi 0, %s67
    %s70 = sphi 0, %s69
    %s84 = sphi 0, %s70
    %s88 = sphi 0, %s88
    %s90 = sphi 0, %s88
    %s91 = sphi 0, %s90
    %s105 = sphi 0, %s91
    %s111 = sphi 0, %s113
    %s114 = sphi 0, %s111
    %s115 = sphi 0, %s114
    %s131 = sphi 0, %s115
    %s137 = sphi 0, %s139
    %s140 = sphi 0, %s137
    %s141 = sphi 0, %s140
    %s157 = sphi 0, %s141
  $region4: #{unet_decoding_block.3} parent=0 // loop_header_branch
    %15 = sbr.rel (%p13) target = $region8
  $region5: #{unet_decoding_block.3} parent=0 // loop_body
    %s17 = ssub.s32 %s12, 1
    %s18 = ssub.s32 %s12, 2
    %s19 = sadd.s32 %s12, 1
    %s20 = ssub.s32 %s12, %s19
    %p21 = scmp.eq.s32.totalorder %s20, 0
    %s23 = sadd.s32 %s22, 1
    %s24 = scalar_select %p21, %s22, %s23
    %p27 = pneg %p21
    %p28 = scmp.eq.s32.totalorder %s12, 1
    %p29 = por %p27, %p28
    %p30 = scmp.ne.s32.totalorder %s22, %s25
    %p31 = scmp.eq.s32.totalorder %s12, 0
    %p32 = por %p30, %p31
    %p33 = scmp.ne.s32.totalorder %s22, %s25
    %p34 = scmp.eq.s32.totalorder %s17, 1
    %p35 = por %p33, %p34
    %p36 = scmp.ne.s32.totalorder %s25, %s26
    %p37 = scmp.eq.s32.totalorder %s17, 0
    %p38 = por %p36, %p37
    %p39 = scmp.ne.s32.totalorder %s25, %s26
    %p40 = scmp.eq.s32.totalorder %s18, 1
    %p41 = por %p39, %p40
    %p43 = scmp.ne.s32.totalorder %s26, %s42
    %p44 = scmp.eq.s32.totalorder %s18, 0
    %p45 = por %p43, %p44
    %s47 = sadd.s32 %s46, 1
    %p50 = scmp.eq.s32.totalorder %s12, 1
    %p51 = scmp.ne.s32.totalorder %s46, %s48
    %p52 = scmp.eq.s32.totalorder %s12, 0
    %p53 = por %p51, %p52
    %p54 = scmp.ne.s32.totalorder %s46, %s48
    %p55 = scmp.eq.s32.totalorder %s17, 1
    %p56 = por %p54, %p55
    %p57 = scmp.ne.s32.totalorder %s48, %s49
    %p58 = scmp.eq.s32.totalorder %s17, 0
    %p59 = por %p57, %p58
    %p60 = scmp.ne.s32.totalorder %s48, %s49
    %p61 = scmp.eq.s32.totalorder %s18, 1
    %p62 = por %p60, %p61
    %p64 = scmp.ne.s32.totalorder %s49, %s63
    %p65 = scmp.eq.s32.totalorder %s18, 0
    %p66 = por %p64, %p65
    %s68 = sadd.s32 %s67, 1
    %p71 = scmp.eq.s32.totalorder %s12, 1
    %p72 = scmp.ne.s32.totalorder %s67, %s69
    %p73 = scmp.eq.s32.totalorder %s12, 0
    %p74 = por %p72, %p73
    %p75 = scmp.ne.s32.totalorder %s67, %s69
    %p76 = scmp.eq.s32.totalorder %s17, 1
    %p77 = por %p75, %p76
    %p78 = scmp.ne.s32.totalorder %s69, %s70
    %p79 = scmp.eq.s32.totalorder %s17, 0
    %p80 = por %p78, %p79
    %p81 = scmp.ne.s32.totalorder %s69, %s70
    %p82 = scmp.eq.s32.totalorder %s18, 1
    %p83 = por %p81, %p82
    %p85 = scmp.ne.s32.totalorder %s70, %s84
    %p86 = scmp.eq.s32.totalorder %s18, 0
    %p87 = por %p85, %p86
    %s89 = sadd.s32 %s88, 1
    %p92 = scmp.eq.s32.totalorder %s12, 1
    %p93 = scmp.ne.s32.totalorder %s88, %s90
    %p94 = scmp.eq.s32.totalorder %s12, 0
    %p95 = por %p93, %p94
    %p96 = scmp.ne.s32.totalorder %s88, %s90
    %p97 = scmp.eq.s32.totalorder %s17, 1
    %p98 = por %p96, %p97
    %p99 = scmp.ne.s32.totalorder %s90, %s91
    %p100 = scmp.eq.s32.totalorder %s17, 0
    %p101 = por %p99, %p100
    %p102 = scmp.ne.s32.totalorder %s90, %s91
    %p103 = scmp.eq.s32.totalorder %s18, 1
    %p104 = por %p102, %p103
    %p106 = scmp.ne.s32.totalorder %s91, %s105
    %p107 = scmp.eq.s32.totalorder %s18, 0
    %p108 = por %p106, %p107
    %s109 = ssub.s32 %s12, %s19
    %p110 = scmp.eq.s32.totalorder %s109, 0
    %s112 = sadd.s32 %s111, 1
    %s113 = scalar_select %p110, %s111, %s112
    %p116 = pneg %p110
    %p117 = scmp.eq.s32.totalorder %s12, 1
    %p118 = por %p116, %p117
    %p119 = scmp.ne.s32.totalorder %s111, %s114
    %p120 = scmp.eq.s32.totalorder %s12, 0
    %p121 = por %p119, %p120
    %p122 = scmp.ne.s32.totalorder %s111, %s114
    %p123 = scmp.eq.s32.totalorder %s17, 1
    %p124 = por %p122, %p123
    %p125 = scmp.ne.s32.totalorder %s114, %s115
    %p126 = scmp.eq.s32.totalorder %s17, 0
    %p127 = por %p125, %p126
    %p128 = scmp.ne.s32.totalorder %s114, %s115
    %p129 = scmp.eq.s32.totalorder %s18, 1
    %p130 = por %p128, %p129
    %p132 = scmp.ne.s32.totalorder %s115, %s131
    %p133 = scmp.eq.s32.totalorder %s18, 0
    %p134 = por %p132, %p133
    %s135 = ssub.s32 %s12, %s19
    %p136 = scmp.eq.s32.totalorder %s135, 0
    %s138 = sadd.s32 %s137, 1
    %s139 = scalar_select %p136, %s137, %s138
    %p142 = pneg %p136
    %p143 = scmp.eq.s32.totalorder %s12, 1
    %p144 = por %p142, %p143
    %p145 = scmp.ne.s32.totalorder %s137, %s140
    %p146 = scmp.eq.s32.totalorder %s12, 0
    %p147 = por %p145, %p146
    %p148 = scmp.ne.s32.totalorder %s137, %s140
    %p149 = scmp.eq.s32.totalorder %s17, 1
    %p150 = por %p148, %p149
    %p151 = scmp.ne.s32.totalorder %s140, %s141
    %p152 = scmp.eq.s32.totalorder %s17, 0
    %p153 = por %p151, %p152
    %p154 = scmp.ne.s32.totalorder %s140, %s141
    %p155 = scmp.eq.s32.totalorder %s18, 1
    %p156 = por %p154, %p155
    %p158 = scmp.ne.s32.totalorder %s141, %s157
    %p159 = scmp.eq.s32.totalorder %s18, 0
    %p160 = por %p158, %p159
    %p161 = scmp.le.s32.totalorder 1, %s12
    %p162 = scmp.lt.s32.totalorder %s12, 3
    %p163 = pnand %p161, %p162
    %p164 = pneg %p163
    // Predicated region
    $region9: #{unet_decoding_block.3} parent=5 // pred_check
      _
    $region10: #{unet_decoding_block.3} parent=5 // pred_check_branch
      %166 = sbr.rel (%p163) target = $region12
    $region11: #{unet_decoding_block.3} parent=5 // pred_region
      %s167 = ssub.s32 %s12, 1
      // Predicated region
      $region13: #{unet_decoding_block.3} parent=11 // pred_check
        %p168 = pneg %p59
      $region14: #{unet_decoding_block.3} parent=11 // pred_check_branch
        %170 = sbr.rel (%p168) target = $region16
      $region15: #{unet_decoding_block.3} parent=11 // pred_region
        _
      $region16: #{unet_decoding_block.3} parent=11 // pred_fallthru
        _
      // Predicated region
      $region17: #{unet_decoding_block.3} parent=11 // pred_check
        %p171 = pneg %p80
      $region18: #{unet_decoding_block.3} parent=11 // pred_check_branch
        %173 = sbr.rel (%p171) target = $region20
      $region19: #{unet_decoding_block.3} parent=11 // pred_region
        _
      $region20: #{unet_decoding_block.3} parent=11 // pred_fallthru
        _
      // Predicated region
      $region21: #{unet_decoding_block.3} parent=11 // pred_check
        %p174 = pneg %p101
      $region22: #{unet_decoding_block.3} parent=11 // pred_check_branch
        %176 = sbr.rel (%p174) target = $region24
      $region23: #{unet_decoding_block.3} parent=11 // pred_region
        _
      $region24: #{unet_decoding_block.3} parent=11 // pred_fallthru
        _
    $region12: #{unet_decoding_block.3} parent=5 // pred_fallthru
      _
    %p177 = scmp.lt.s32.totalorder %s12, 2
    // Predicated region
    $region25: #{unet_decoding_block.3} parent=5 // pred_check
      %p178 = pneg %p177
    $region26: #{unet_decoding_block.3} parent=5 // pred_check_branch
      %180 = sbr.rel (%p178) target = $region28
    $region27: #{unet_decoding_block.3} parent=5 // pred_region
      // Predicated region
      $region29: #{unet_decoding_block.3} parent=27 // pred_check
        %p181 = pneg %p32
      $region30: #{unet_decoding_block.3} parent=27 // pred_check_branch
        %183 = sbr.rel (%p181) target = $region32
      $region31: #{unet_decoding_block.3} parent=27 // pred_region
        %p184 = scmp.lt.s32.totalorder %s12, 1
        %s185 = scalar_select %p184, %s12, 1
        %s186 = smul.addr %s185, 32
        %s187 = smul.addr %s186, 4
        %s188 = scalar_lea.vmem %s0, %s187
      $region32: #{unet_decoding_block.3} parent=27 // pred_fallthru
        _
    $region28: #{unet_decoding_block.3} parent=5 // pred_fallthru
      _
    %p189 = scmp.le.s32.totalorder 1, %s12
    %p190 = scmp.lt.s32.totalorder %s12, 3
    %p191 = pnand %p189, %p190
    %p192 = pneg %p191
    // Predicated region
    $region33: #{unet_decoding_block.3} parent=5 // pred_check
      _
    $region34: #{unet_decoding_block.3} parent=5 // pred_check_branch
      %194 = sbr.rel (%p191) target = $region36
    $region35: #{unet_decoding_block.3} parent=5 // pred_region
      %s195 = ssub.s32 %s12, 1
      %p196 = scmp.lt.s32.totalorder %s17, 1
      %s197 = scalar_select %p196, %s17, 1
      %s198 = smul.addr %s197, 32
      %s199 = smul.addr %s198, 4
      %s200 = scalar_lea.vmem %s0, %s199
      %p201 = pneg %p38
      %p202 = pneg %p35
      %p203 = pneg %p59
      %p204 = pneg %p56
      %p205 = pneg %p80
      %p206 = pneg %p77
      %p207 = pneg %p101
      %p208 = pneg %p98
      %p209 = pneg %p127
      %p210 = pneg %p124
      %p211 = scmp.lt.s32.totalorder %s17, 1
      %s212 = scalar_select %p211, %s17, 1
      %s213 = smul.addr %s212, 32
      %s214 = smul.addr %s213, 4
      %s215 = scalar_lea.vmem %s4, %s214
      %p216 = pneg %p153
      %p217 = pneg %p150
      %p218 = scmp.lt.s32.totalorder %s17, 1
      %s219 = scalar_select %p218, %s17, 1
      %s220 = smul.addr %s219, 2
      %s221 = scalar_lea.vmem %s5, %s220
      %p222 = scmp.lt.s32.totalorder %s17, 1
      %s223 = scalar_select %p222, %s17, 1
      %s224 = smul.addr %s223, 32
      %s225 = smul.addr %s224, 4
      %s226 = scalar_lea.vmem %s0, %s225
      %p227 = scmp.lt.s32.totalorder %s17, 1
      %s228 = scalar_select %p227, %s17, 1
      %s229 = smul.addr %s228, 32
      %s230 = smul.addr %s229, 4
      %s231 = scalar_lea.vmem %s4, %s230
      %p232 = scmp.lt.s32.totalorder %s17, 1
      %s233 = scalar_select %p232, %s17, 1
      %s234 = smul.addr %s233, 2
      %s235 = scalar_lea.vmem %s5, %s234
      %v237 = vld [vmem:[%s226] sm:$0xf]
      %v238 = vld [vmem:[%s226 + $0x4] sm:$0xf]
      %v239 = vld [vmem:[%s226 + $0x8] sm:$0xf]
      %v240 = vld [vmem:[%s226 + $0xc] sm:$0xf]
      %v241 = vld [vmem:[%s226 + $0x10] sm:$0xf]
      %v242 = vld [vmem:[%s226 + $0x14] sm:$0xf]
      %v243 = vld [vmem:[%s226 + $0x18] sm:$0xf]
      %v244 = vld [vmem:[%s226 + $0x1c] sm:$0xf]
      %v245 = vld [vmem:[%s226 + $0x20] sm:$0xf]
      %v246 = vld [vmem:[%s226 + $0x24] sm:$0xf]
      %v247 = vld [vmem:[%s226 + $0x28] sm:$0xf]
      %v248 = vld [vmem:[%s226 + $0x2c] sm:$0xf]
      %v249 = vld [vmem:[%s226 + $0x30] sm:$0xf]
      %v250 = vld [vmem:[%s226 + $0x34] sm:$0xf]
      %v251 = vld [vmem:[%s226 + $0x38] sm:$0xf]
      %v252 = vld [vmem:[%s226 + $0x3c] sm:$0xf]
      %v253 = vld [vmem:[%s226 + $0x40] sm:$0xf]
      %v254 = vld [vmem:[%s226 + $0x44] sm:$0xf]
      %v255 = vld [vmem:[%s226 + $0x48] sm:$0xf]
      %v256 = vld [vmem:[%s226 + $0x4c] sm:$0xf]
      %v257 = vld [vmem:[%s226 + $0x50] sm:$0xf]
      %v258 = vld [vmem:[%s226 + $0x54] sm:$0xf]
      %v259 = vld [vmem:[%s226 + $0x58] sm:$0xf]
      %v260 = vld [vmem:[%s226 + $0x5c] sm:$0xf]
      %v261 = vld [vmem:[%s226 + $0x60] sm:$0xf]
      %v262 = vld [vmem:[%s226 + $0x64] sm:$0xf]
      %v263 = vld [vmem:[%s226 + $0x68] sm:$0xf]
      %v264 = vld [vmem:[%s226 + $0x6c] sm:$0xf]
      %v265 = vld [vmem:[%s226 + $0x70] sm:$0xf]
      %v266 = vld [vmem:[%s226 + $0x74] sm:$0xf]
      %v267 = vld [vmem:[%s226 + $0x78] sm:$0xf]
      %v268 = vld [vmem:[%s226 + $0x7c] sm:$0xf]
      %v269 = vunpack.c.l.bf16 %v237
      %v270 = vunpack.c.l.bf16 %v238
      %v271 = vunpack.c.l.bf16 %v239
      %v272 = vunpack.c.l.bf16 %v240
      %v273 = vunpack.c.l.bf16 %v241
      %v274 = vunpack.c.l.bf16 %v242
      %v275 = vunpack.c.l.bf16 %v243
      %v276 = vunpack.c.l.bf16 %v244
      %v277 = vunpack.c.l.bf16 %v245
      %v278 = vunpack.c.l.bf16 %v246
      %v279 = vunpack.c.l.bf16 %v247
      %v280 = vunpack.c.l.bf16 %v248
      %v281 = vunpack.c.l.bf16 %v249
      %v282 = vunpack.c.l.bf16 %v250
      %v283 = vunpack.c.l.bf16 %v251
      %v284 = vunpack.c.l.bf16 %v252
      %v285 = vunpack.c.l.bf16 %v253
      %v286 = vunpack.c.l.bf16 %v254
      %v287 = vunpack.c.l.bf16 %v255
      %v288 = vunpack.c.l.bf16 %v256
      %v289 = vunpack.c.l.bf16 %v257
      %v290 = vunpack.c.l.bf16 %v258
      %v291 = vunpack.c.l.bf16 %v259
      %v292 = vunpack.c.l.bf16 %v260
      %v293 = vunpack.c.l.bf16 %v261
      %v294 = vunpack.c.l.bf16 %v262
      %v295 = vunpack.c.l.bf16 %v263
      %v296 = vunpack.c.l.bf16 %v264
      %v297 = vunpack.c.l.bf16 %v265
      %v298 = vunpack.c.l.bf16 %v266
      %v299 = vunpack.c.l.bf16 %v267
      %v300 = vunpack.c.l.bf16 %v268
      %v301 = vld [vmem:[%s1] sm:$0x1]
      %v303 = vlaneseq
      %v304 = vshrl.u32 %v303, 7
      %v305 = vsub.s32 0, %v304
      %v306 = vrot.slane %v301, %v305
      %v308 = vmul.f32 %v269, %v306
      %v309 = vmul.f32 %v270, %v306
      %v310 = vmul.f32 %v271, %v306
      %v311 = vmul.f32 %v272, %v306
      %v312 = vmul.f32 %v273, %v306
      %v313 = vmul.f32 %v274, %v306
      %v314 = vmul.f32 %v275, %v306
      %v315 = vmul.f32 %v276, %v306
      %v316 = vmul.f32 %v277, %v306
      %v317 = vmul.f32 %v278, %v306
      %v318 = vmul.f32 %v279, %v306
      %v319 = vmul.f32 %v280, %v306
      %v320 = vmul.f32 %v281, %v306
      %v321 = vmul.f32 %v282, %v306
      %v322 = vmul.f32 %v283, %v306
      %v323 = vmul.f32 %v284, %v306
      %v324 = vmul.f32 %v285, %v306
      %v325 = vmul.f32 %v286, %v306
      %v326 = vmul.f32 %v287, %v306
      %v327 = vmul.f32 %v288, %v306
      %v328 = vmul.f32 %v289, %v306
      %v329 = vmul.f32 %v290, %v306
      %v330 = vmul.f32 %v291, %v306
      %v331 = vmul.f32 %v292, %v306
      %v332 = vmul.f32 %v293, %v306
      %v333 = vmul.f32 %v294, %v306
      %v334 = vmul.f32 %v295, %v306
      %v335 = vmul.f32 %v296, %v306
      %v336 = vmul.f32 %v297, %v306
      %v337 = vmul.f32 %v298, %v306
      %v338 = vmul.f32 %v299, %v306
      %v339 = vmul.f32 %v300, %v306
      %v340 = vld [vmem:[%s2] sm:$0x1]
      %v342 = vlaneseq
      %v343 = vshrl.u32 %v342, 7
      %v344 = vsub.s32 0, %v343
      %v345 = vrot.slane %v340, %v344
      %v347 = vadd.f32 %v308, %v345
      %v348 = vadd.f32 %v309, %v345
      %v349 = vadd.f32 %v310, %v345
      %v350 = vadd.f32 %v311, %v345
      %v351 = vadd.f32 %v312, %v345
      %v352 = vadd.f32 %v313, %v345
      %v353 = vadd.f32 %v314, %v345
      %v354 = vadd.f32 %v315, %v345
      %v355 = vadd.f32 %v316, %v345
      %v356 = vadd.f32 %v317, %v345
      %v357 = vadd.f32 %v318, %v345
      %v358 = vadd.f32 %v319, %v345
      %v359 = vadd.f32 %v320, %v345
      %v360 = vadd.f32 %v321, %v345
      %v361 = vadd.f32 %v322, %v345
      %v362 = vadd.f32 %v323, %v345
      %v363 = vadd.f32 %v324, %v345
      %v364 = vadd.f32 %v325, %v345
      %v365 = vadd.f32 %v326, %v345
      %v366 = vadd.f32 %v327, %v345
      %v367 = vadd.f32 %v328, %v345
      %v368 = vadd.f32 %v329, %v345
      %v369 = vadd.f32 %v330, %v345
      %v370 = vadd.f32 %v331, %v345
      %v371 = vadd.f32 %v332, %v345
      %v372 = vadd.f32 %v333, %v345
      %v373 = vadd.f32 %v334, %v345
      %v374 = vadd.f32 %v335, %v345
      %v375 = vadd.f32 %v336, %v345
      %v376 = vadd.f32 %v337, %v345
      %v377 = vadd.f32 %v338, %v345
      %v378 = vadd.f32 %v339, %v345
      %v379 = vmax.f32 %v347, 0.0
      %v380 = vmax.f32 %v348, 0.0
      %v381 = vmax.f32 %v349, 0.0
      %v382 = vmax.f32 %v350, 0.0
      %v383 = vmax.f32 %v351, 0.0
      %v384 = vmax.f32 %v352, 0.0
      %v385 = vmax.f32 %v353, 0.0
      %v386 = vmax.f32 %v354, 0.0
      %v387 = vmax.f32 %v355, 0.0
      %v388 = vmax.f32 %v356, 0.0
      %v389 = vmax.f32 %v357, 0.0
      %v390 = vmax.f32 %v358, 0.0
      %v391 = vmax.f32 %v359, 0.0
      %v392 = vmax.f32 %v360, 0.0
      %v393 = vmax.f32 %v361, 0.0
      %v394 = vmax.f32 %v362, 0.0
      %v395 = vmax.f32 %v363, 0.0
      %v396 = vmax.f32 %v364, 0.0
      %v397 = vmax.f32 %v365, 0.0
      %v398 = vmax.f32 %v366, 0.0
      %v399 = vmax.f32 %v367, 0.0
      %v400 = vmax.f32 %v368, 0.0
      %v401 = vmax.f32 %v369, 0.0
      %v402 = vmax.f32 %v370, 0.0
      %v403 = vmax.f32 %v371, 0.0
      %v404 = vmax.f32 %v372, 0.0
      %v405 = vmax.f32 %v373, 0.0
      %v406 = vmax.f32 %v374, 0.0
      %v407 = vmax.f32 %v375, 0.0
      %v408 = vmax.f32 %v376, 0.0
      %v409 = vmax.f32 %v377, 0.0
      %v410 = vmax.f32 %v378, 0.0
      %v411 = vpack.c.bf16 %v380, %v379
      %v412 = vpack.c.bf16 %v382, %v381
      %v413 = vpack.c.bf16 %v384, %v383
      %v414 = vpack.c.bf16 %v386, %v385
      %v415 = vpack.c.bf16 %v388, %v387
      %v416 = vpack.c.bf16 %v390, %v389
      %v417 = vpack.c.bf16 %v392, %v391
      %v418 = vpack.c.bf16 %v394, %v393
      %v419 = vpack.c.bf16 %v396, %v395
      %v420 = vpack.c.bf16 %v398, %v397
      %v421 = vpack.c.bf16 %v400, %v399
      %v422 = vpack.c.bf16 %v402, %v401
      %v423 = vpack.c.bf16 %v404, %v403
      %v424 = vpack.c.bf16 %v406, %v405
      %v425 = vpack.c.bf16 %v408, %v407
      %v426 = vpack.c.bf16 %v410, %v409
      %427 = vst [vmem:[#allocation2] sm:$0xf] 0
      %428 = vst [vmem:[#allocation2 + $0x4] sm:$0xf] 0
      %429 = vst [vmem:[#allocation2 + $0x8] sm:$0x1] 0
      %s430 = scalar_lea.vmem [#allocation2], 204
      %431 = vst [vmem:[%s430] sm:$0xf] 0
      %432 = vst [vmem:[%s430 + $0x4] sm:$0xf] 0
      %433 = vst [vmem:[%s430 + $0x8] sm:$0x1] 0
      %vm434 = vcmask 1040384
      %vm435 = vsmask.f32 256
      %vm436 = vmand %vm434, %vm435
      %v437 = vld [vmem:[#allocation2] sm:$0x1]
      %v438 = vsel %vm436, 0, %v437
      %439 = vst [vmem:[#allocation2] sm:$0x1] %v438
      %v440 = vld [vmem:[#allocation2 + $0xc] sm:$0x1]
      %v441 = vsel %vm436, 0, %v440
      %442 = vst [vmem:[#allocation2 + $0xc] sm:$0x1] %v441
      %v443 = vld [vmem:[#allocation2 + $0x18] sm:$0x1]
      %v444 = vsel %vm436, 0, %v443
      %445 = vst [vmem:[#allocation2 + $0x18] sm:$0x1] %v444
      %v446 = vld [vmem:[#allocation2 + $0x24] sm:$0x1]
      %v447 = vsel %vm436, 0, %v446
      %448 = vst [vmem:[#allocation2 + $0x24] sm:$0x1] %v447
      %v449 = vld [vmem:[#allocation2 + $0x30] sm:$0x1]
      %v450 = vsel %vm436, 0, %v449
      %451 = vst [vmem:[#allocation2 + $0x30] sm:$0x1] %v450
      %v452 = vld [vmem:[#allocation2 + $0x3c] sm:$0x1]
      %v453 = vsel %vm436, 0, %v452
      %454 = vst [vmem:[#allocation2 + $0x3c] sm:$0x1] %v453
      %v455 = vld [vmem:[#allocation2 + $0x48] sm:$0x1]
      %v456 = vsel %vm436, 0, %v455
      %457 = vst [vmem:[#allocation2 + $0x48] sm:$0x1] %v456
      %v458 = vld [vmem:[#allocation2 + $0x54] sm:$0x1]
      %v459 = vsel %vm436, 0, %v458
      %460 = vst [vmem:[#allocation2 + $0x54] sm:$0x1] %v459
      %v461 = vld [vmem:[#allocation2 + $0x60] sm:$0x1]
      %v462 = vsel %vm436, 0, %v461
      %463 = vst [vmem:[#allocation2 + $0x60] sm:$0x1] %v462
      %v464 = vld [vmem:[#allocation2 + $0x6c] sm:$0x1]
      %v465 = vsel %vm436, 0, %v464
      %466 = vst [vmem:[#allocation2 + $0x6c] sm:$0x1] %v465
      %v467 = vld [vmem:[#allocation2 + $0x78] sm:$0x1]
      %v468 = vsel %vm436, 0, %v467
      %469 = vst [vmem:[#allocation2 + $0x78] sm:$0x1] %v468
      %v470 = vld [vmem:[#allocation2 + $0x84] sm:$0x1]
      %v471 = vsel %vm436, 0, %v470
      %472 = vst [vmem:[#allocation2 + $0x84] sm:$0x1] %v471
      %v473 = vld [vmem:[#allocation2 + $0x90] sm:$0x1]
      %v474 = vsel %vm436, 0, %v473
      %475 = vst [vmem:[#allocation2 + $0x90] sm:$0x1] %v474
      %v476 = vld [vmem:[#allocation2 + $0x9c] sm:$0x1]
      %v477 = vsel %vm436, 0, %v476
      %478 = vst [vmem:[#allocation2 + $0x9c] sm:$0x1] %v477
      %v479 = vld [vmem:[#allocation2 + $0xa8] sm:$0x1]
      %v480 = vsel %vm436, 0, %v479
      %481 = vst [vmem:[#allocation2 + $0xa8] sm:$0x1] %v480
      %v482 = vld [vmem:[#allocation2 + $0xb4] sm:$0x1]
      %v483 = vsel %vm436, 0, %v482
      %484 = vst [vmem:[#allocation2 + $0xb4] sm:$0x1] %v483
      %v485 = vld [vmem:[#allocation2 + $0xc0] sm:$0x1]
      %v486 = vsel %vm436, 0, %v485
      %487 = vst [vmem:[#allocation2 + $0xc0] sm:$0x1] %v486
      %v488 = vld [vmem:[#allocation2 + $0xcc] sm:$0x1]
      %v489 = vsel %vm436, 0, %v488
      %490 = vst [vmem:[#allocation2 + $0xcc] sm:$0x1] %v489
      %vm491 = vsmask.f32 7938
      %vm492 = vmand %vm434, %vm491
      %v493 = vld [vmem:[#allocation2 + $0x8] sm:$0x1]
      %v494 = vsel %vm492, 0, %v493
      %495 = vst [vmem:[#allocation2 + $0x8] sm:$0x1] %v494
      %v496 = vld [vmem:[#allocation2 + $0x14] sm:$0x1]
      %v497 = vsel %vm492, 0, %v496
      %498 = vst [vmem:[#allocation2 + $0x14] sm:$0x1] %v497
      %v499 = vld [vmem:[#allocation2 + $0x20] sm:$0x1]
      %v500 = vsel %vm492, 0, %v499
      %501 = vst [vmem:[#allocation2 + $0x20] sm:$0x1] %v500
      %v502 = vld [vmem:[#allocation2 + $0x2c] sm:$0x1]
      %v503 = vsel %vm492, 0, %v502
      %504 = vst [vmem:[#allocation2 + $0x2c] sm:$0x1] %v503
      %v505 = vld [vmem:[#allocation2 + $0x38] sm:$0x1]
      %v506 = vsel %vm492, 0, %v505
      %507 = vst [vmem:[#allocation2 + $0x38] sm:$0x1] %v506
      %v508 = vld [vmem:[#allocation2 + $0x44] sm:$0x1]
      %v509 = vsel %vm492, 0, %v508
      %510 = vst [vmem:[#allocation2 + $0x44] sm:$0x1] %v509
      %v511 = vld [vmem:[#allocation2 + $0x50] sm:$0x1]
      %v512 = vsel %vm492, 0, %v511
      %513 = vst [vmem:[#allocation2 + $0x50] sm:$0x1] %v512
      %v514 = vld [vmem:[#allocation2 + $0x5c] sm:$0x1]
      %v515 = vsel %vm492, 0, %v514
      %516 = vst [vmem:[#allocation2 + $0x5c] sm:$0x1] %v515
      %v517 = vld [vmem:[#allocation2 + $0x68] sm:$0x1]
      %v518 = vsel %vm492, 0, %v517
      %519 = vst [vmem:[#allocation2 + $0x68] sm:$0x1] %v518
      %v520 = vld [vmem:[#allocation2 + $0x74] sm:$0x1]
      %v521 = vsel %vm492, 0, %v520
      %522 = vst [vmem:[#allocation2 + $0x74] sm:$0x1] %v521
      %v523 = vld [vmem:[#allocation2 + $0x80] sm:$0x1]
      %v524 = vsel %vm492, 0, %v523
      %525 = vst [vmem:[#allocation2 + $0x80] sm:$0x1] %v524
      %v526 = vld [vmem:[#allocation2 + $0x8c] sm:$0x1]
      %v527 = vsel %vm492, 0, %v526
      %528 = vst [vmem:[#allocation2 + $0x8c] sm:$0x1] %v527
      %v529 = vld [vmem:[#allocation2 + $0x98] sm:$0x1]
      %v530 = vsel %vm492, 0, %v529
      %531 = vst [vmem:[#allocation2 + $0x98] sm:$0x1] %v530
      %v532 = vld [vmem:[#allocation2 + $0xa4] sm:$0x1]
      %v533 = vsel %vm492, 0, %v532
      %534 = vst [vmem:[#allocation2 + $0xa4] sm:$0x1] %v533
      %v535 = vld [vmem:[#allocation2 + $0xb0] sm:$0x1]
      %v536 = vsel %vm492, 0, %v535
      %537 = vst [vmem:[#allocation2 + $0xb0] sm:$0x1] %v536
      %v538 = vld [vmem:[#allocation2 + $0xbc] sm:$0x1]
      %v539 = vsel %vm492, 0, %v538
      %540 = vst [vmem:[#allocation2 + $0xbc] sm:$0x1] %v539
      %v541 = vld [vmem:[#allocation2 + $0xc8] sm:$0x1]
      %v542 = vsel %vm492, 0, %v541
      %543 = vst [vmem:[#allocation2 + $0xc8] sm:$0x1] %v542
      %v544 = vld [vmem:[#allocation2 + $0xd4] sm:$0x1]
      %v545 = vsel %vm492, 0, %v544
      %546 = vst [vmem:[#allocation2 + $0xd4] sm:$0x1] %v545
      %v563 = vunpack.c.l.b16 %v411
      %v564 = vunpack.c.h.b16 %v411
      %v565 = vunpack.c.l.b16 %v412
      %v566 = vunpack.c.h.b16 %v412
      %v567 = vunpack.c.l.b16 %v413
      %v568 = vunpack.c.h.b16 %v413
      %v569 = vunpack.c.l.b16 %v414
      %v570 = vunpack.c.h.b16 %v414
      %v571 = vunpack.c.l.b16 %v415
      %v572 = vunpack.c.h.b16 %v415
      %v573 = vunpack.c.l.b16 %v416
      %v574 = vunpack.c.h.b16 %v416
      %v575 = vunpack.c.l.b16 %v417
      %v576 = vunpack.c.h.b16 %v417
      %v577 = vunpack.c.l.b16 %v418
      %v578 = vunpack.c.h.b16 %v418
      %v579 = vunpack.c.l.b16 %v419
      %v580 = vunpack.c.h.b16 %v419
      %v581 = vunpack.c.l.b16 %v420
      %v582 = vunpack.c.h.b16 %v420
      %v583 = vunpack.c.l.b16 %v421
      %v584 = vunpack.c.h.b16 %v421
      %v585 = vunpack.c.l.b16 %v422
      %v586 = vunpack.c.h.b16 %v422
      %v587 = vunpack.c.l.b16 %v423
      %v588 = vunpack.c.h.b16 %v423
      %v589 = vunpack.c.l.b16 %v424
      %v590 = vunpack.c.h.b16 %v424
      %v591 = vunpack.c.l.b16 %v425
      %v592 = vunpack.c.h.b16 %v425
      %v593 = vunpack.c.l.b16 %v426
      %v594 = vunpack.c.h.b16 %v426
      %v595 = vpack.c.b16 %v563, %v563
      %v596 = vpack.c.b16 %v564, %v564
      %v597 = vpack.c.b16 %v565, %v565
      %v598 = vpack.c.b16 %v566, %v566
      %v599 = vpack.c.b16 %v567, %v567
      %v600 = vpack.c.b16 %v568, %v568
      %v601 = vpack.c.b16 %v569, %v569
      %v602 = vpack.c.b16 %v570, %v570
      %v603 = vpack.c.b16 %v571, %v571
      %v604 = vpack.c.b16 %v572, %v572
      %v605 = vpack.c.b16 %v573, %v573
      %v606 = vpack.c.b16 %v574, %v574
      %v607 = vpack.c.b16 %v575, %v575
      %v608 = vpack.c.b16 %v576, %v576
      %v609 = vpack.c.b16 %v577, %v577
      %v610 = vpack.c.b16 %v578, %v578
      %v611 = vpack.c.b16 %v579, %v579
      %v612 = vpack.c.b16 %v580, %v580
      %v613 = vpack.c.b16 %v581, %v581
      %v614 = vpack.c.b16 %v582, %v582
      %v615 = vpack.c.b16 %v583, %v583
      %v616 = vpack.c.b16 %v584, %v584
      %v617 = vpack.c.b16 %v585, %v585
      %v618 = vpack.c.b16 %v586, %v586
      %v619 = vpack.c.b16 %v587, %v587
      %v620 = vpack.c.b16 %v588, %v588
      %v621 = vpack.c.b16 %v589, %v589
      %v622 = vpack.c.b16 %v590, %v590
      %v623 = vpack.c.b16 %v591, %v591
      %v624 = vpack.c.b16 %v592, %v592
      %v625 = vpack.c.b16 %v593, %v593
      %v626 = vpack.c.b16 %v594, %v594
      %vm627 = vsmask.f32 4368
      %vm628 = vmor %vm435, %vm627
      %v630 = vshrl.u32 %v595, 16
      %v632 = vrot.slane %v630, 7
      %v633 = vshll.u32 %v595, 16
      %v635 = vor.u32 %v632, %v633
      %v636 = vrot.slane %v632, 4
      %v638 = vshrl.u32 %v596, 16
      %v640 = vrot.slane %v638, 7
      %v641 = vshll.u32 %v596, 16
      %v643 = vor.u32 %v640, %v641
      %v644 = vsel %vm628, %v636, %v643
      %v645 = vrot.slane %v640, 4
      %v647 = vshrl.u32 %v597, 16
      %v649 = vrot.slane %v647, 7
      %v650 = vshll.u32 %v597, 16
      %v652 = vor.u32 %v649, %v650
      %v653 = vrot.slane %v649, 4
      %v655 = vshrl.u32 %v598, 16
      %v657 = vrot.slane %v655, 7
      %v658 = vshll.u32 %v598, 16
      %v660 = vor.u32 %v657, %v658
      %v661 = vsel %vm628, %v653, %v660
      %v662 = vrot.slane %v657, 4
      %v664 = vshrl.u32 %v599, 16
      %v666 = vrot.slane %v664, 7
      %v667 = vshll.u32 %v599, 16
      %v669 = vor.u32 %v666, %v667
      %v670 = vrot.slane %v666, 4
      %v672 = vshrl.u32 %v600, 16
      %v674 = vrot.slane %v672, 7
      %v675 = vshll.u32 %v600, 16
      %v677 = vor.u32 %v674, %v675
      %v678 = vsel %vm628, %v670, %v677
      %v679 = vrot.slane %v674, 4
      %v681 = vshrl.u32 %v601, 16
      %v683 = vrot.slane %v681, 7
      %v684 = vshll.u32 %v601, 16
      %v686 = vor.u32 %v683, %v684
      %v687 = vrot.slane %v683, 4
      %v689 = vshrl.u32 %v602, 16
      %v691 = vrot.slane %v689, 7
      %v692 = vshll.u32 %v602, 16
      %v694 = vor.u32 %v691, %v692
      %v695 = vsel %vm628, %v687, %v694
      %v696 = vrot.slane %v691, 4
      %v698 = vshrl.u32 %v603, 16
      %v700 = vrot.slane %v698, 7
      %v701 = vshll.u32 %v603, 16
      %v703 = vor.u32 %v700, %v701
      %v704 = vrot.slane %v700, 4
      %v706 = vshrl.u32 %v604, 16
      %v708 = vrot.slane %v706, 7
      %v709 = vshll.u32 %v604, 16
      %v711 = vor.u32 %v708, %v709
      %v712 = vsel %vm628, %v704, %v711
      %v713 = vrot.slane %v708, 4
      %v715 = vshrl.u32 %v605, 16
      %v717 = vrot.slane %v715, 7
      %v718 = vshll.u32 %v605, 16
      %v720 = vor.u32 %v717, %v718
      %v721 = vrot.slane %v717, 4
      %v723 = vshrl.u32 %v606, 16
      %v725 = vrot.slane %v723, 7
      %v726 = vshll.u32 %v606, 16
      %v728 = vor.u32 %v725, %v726
      %v729 = vsel %vm628, %v721, %v728
      %v730 = vrot.slane %v725, 4
      %v732 = vshrl.u32 %v607, 16
      %v734 = vrot.slane %v732, 7
      %v735 = vshll.u32 %v607, 16
      %v737 = vor.u32 %v734, %v735
      %v738 = vrot.slane %v734, 4
      %v740 = vshrl.u32 %v608, 16
      %v742 = vrot.slane %v740, 7
      %v743 = vshll.u32 %v608, 16
      %v745 = vor.u32 %v742, %v743
      %v746 = vsel %vm628, %v738, %v745
      %v747 = vrot.slane %v742, 4
      %v749 = vshrl.u32 %v609, 16
      %v751 = vrot.slane %v749, 7
      %v752 = vshll.u32 %v609, 16
      %v754 = vor.u32 %v751, %v752
      %v755 = vrot.slane %v751, 4
      %v757 = vshrl.u32 %v610, 16
      %v759 = vrot.slane %v757, 7
      %v760 = vshll.u32 %v610, 16
      %v762 = vor.u32 %v759, %v760
      %v763 = vsel %vm628, %v755, %v762
      %v764 = vrot.slane %v759, 4
      %v766 = vshrl.u32 %v611, 16
      %v768 = vrot.slane %v766, 7
      %v769 = vshll.u32 %v611, 16
      %v771 = vor.u32 %v768, %v769
      %v772 = vrot.slane %v768, 4
      %v774 = vshrl.u32 %v612, 16
      %v776 = vrot.slane %v774, 7
      %v777 = vshll.u32 %v612, 16
      %v779 = vor.u32 %v776, %v777
      %v780 = vsel %vm628, %v772, %v779
      %v781 = vrot.slane %v776, 4
      %v783 = vshrl.u32 %v613, 16
      %v785 = vrot.slane %v783, 7
      %v786 = vshll.u32 %v613, 16
      %v788 = vor.u32 %v785, %v786
      %v789 = vrot.slane %v785, 4
      %v791 = vshrl.u32 %v614, 16
      %v793 = vrot.slane %v791, 7
      %v794 = vshll.u32 %v614, 16
      %v796 = vor.u32 %v793, %v794
      %v797 = vsel %vm628, %v789, %v796
      %v798 = vrot.slane %v793, 4
      %v800 = vshrl.u32 %v615, 16
      %v802 = vrot.slane %v800, 7
      %v803 = vshll.u32 %v615, 16
      %v805 = vor.u32 %v802, %v803
      %v806 = vrot.slane %v802, 4
      %v808 = vshrl.u32 %v616, 16
      %v810 = vrot.slane %v808, 7
      %v811 = vshll.u32 %v616, 16
      %v813 = vor.u32 %v810, %v811
      %v814 = vsel %vm628, %v806, %v813
      %v815 = vrot.slane %v810, 4
      %v817 = vshrl.u32 %v617, 16
      %v819 = vrot.slane %v817, 7
      %v820 = vshll.u32 %v617, 16
      %v822 = vor.u32 %v819, %v820
      %v823 = vrot.slane %v819, 4
      %v825 = vshrl.u32 %v618, 16
      %v827 = vrot.slane %v825, 7
      %v828 = vshll.u32 %v618, 16
      %v830 = vor.u32 %v827, %v828
      %v831 = vsel %vm628, %v823, %v830
      %v832 = vrot.slane %v827, 4
      %v834 = vshrl.u32 %v619, 16
      %v836 = vrot.slane %v834, 7
      %v837 = vshll.u32 %v619, 16
      %v839 = vor.u32 %v836, %v837
      %v840 = vrot.slane %v836, 4
      %v842 = vshrl.u32 %v620, 16
      %v844 = vrot.slane %v842, 7
      %v845 = vshll.u32 %v620, 16
      %v847 = vor.u32 %v844, %v845
      %v848 = vsel %vm628, %v840, %v847
      %v849 = vrot.slane %v844, 4
      %v851 = vshrl.u32 %v621, 16
      %v853 = vrot.slane %v851, 7
      %v854 = vshll.u32 %v621, 16
      %v856 = vor.u32 %v853, %v854
      %v857 = vrot.slane %v853, 4
      %v859 = vshrl.u32 %v622, 16
      %v861 = vrot.slane %v859, 7
      %v862 = vshll.u32 %v622, 16
      %v864 = vor.u32 %v861, %v862
      %v865 = vsel %vm628, %v857, %v864
      %v866 = vrot.slane %v861, 4
      %v868 = vshrl.u32 %v623, 16
      %v870 = vrot.slane %v868, 7
      %v871 = vshll.u32 %v623, 16
      %v873 = vor.u32 %v870, %v871
      %v874 = vrot.slane %v870, 4
      %v876 = vshrl.u32 %v624, 16
      %v878 = vrot.slane %v876, 7
      %v879 = vshll.u32 %v624, 16
      %v881 = vor.u32 %v878, %v879
      %v882 = vsel %vm628, %v874, %v881
      %v883 = vrot.slane %v878, 4
      %v885 = vshrl.u32 %v625, 16
      %v887 = vrot.slane %v885, 7
      %v888 = vshll.u32 %v625, 16
      %v890 = vor.u32 %v887, %v888
      %v891 = vrot.slane %v887, 4
      %v893 = vshrl.u32 %v626, 16
      %v895 = vrot.slane %v893, 7
      %v896 = vshll.u32 %v626, 16
      %v898 = vor.u32 %v895, %v896
      %v899 = vsel %vm628, %v891, %v898
      %v900 = vrot.slane %v895, 4
      %s949 = scalar_lea.vmem [#allocation2], 12
      %vm950 = vcmask 1043456
      %vm951 = vmand %vm950, %vm491
      %v952 = vld [vmem:[%s949] sm:$0xf]
      %v953 = vsel %vm951, %v635, %v952
      %954 = vst [vmem:[%s949] sm:$0xf] %v953
      %955 = vst [vmem:[%s949 + $0x4] sm:$0xf] %v644
      %v956 = vld [vmem:[%s949 + $0x8] sm:$0x1]
      %v957 = vsel %vm436, %v645, %v956
      %958 = vst [vmem:[%s949 + $0x8] sm:$0x1] %v957
      %v959 = vld [vmem:[%s949 + $0xc] sm:$0xf]
      %v960 = vsel %vm951, %v652, %v959
      %961 = vst [vmem:[%s949 + $0xc] sm:$0xf] %v960
      %962 = vst [vmem:[%s949 + $0x10] sm:$0xf] %v661
      %v963 = vld [vmem:[%s949 + $0x14] sm:$0x1]
      %v964 = vsel %vm436, %v662, %v963
      %965 = vst [vmem:[%s949 + $0x14] sm:$0x1] %v964
      %v966 = vld [vmem:[%s949 + $0x18] sm:$0xf]
      %v967 = vsel %vm951, %v669, %v966
      %968 = vst [vmem:[%s949 + $0x18] sm:$0xf] %v967
      %969 = vst [vmem:[%s949 + $0x1c] sm:$0xf] %v678
      %v970 = vld [vmem:[%s949 + $0x20] sm:$0x1]
      %v971 = vsel %vm436, %v679, %v970
      %972 = vst [vmem:[%s949 + $0x20] sm:$0x1] %v971
      %v973 = vld [vmem:[%s949 + $0x24] sm:$0xf]
      %v974 = vsel %vm951, %v686, %v973
      %975 = vst [vmem:[%s949 + $0x24] sm:$0xf] %v974
      %976 = vst [vmem:[%s949 + $0x28] sm:$0xf] %v695
      %v977 = vld [vmem:[%s949 + $0x2c] sm:$0x1]
      %v978 = vsel %vm436, %v696, %v977
      %979 = vst [vmem:[%s949 + $0x2c] sm:$0x1] %v978
      %v980 = vld [vmem:[%s949 + $0x30] sm:$0xf]
      %v981 = vsel %vm951, %v703, %v980
      %982 = vst [vmem:[%s949 + $0x30] sm:$0xf] %v981
      %983 = vst [vmem:[%s949 + $0x34] sm:$0xf] %v712
      %v984 = vld [vmem:[%s949 + $0x38] sm:$0x1]
      %v985 = vsel %vm436, %v713, %v984
      %986 = vst [vmem:[%s949 + $0x38] sm:$0x1] %v985
      %v987 = vld [vmem:[%s949 + $0x3c] sm:$0xf]
      %v988 = vsel %vm951, %v720, %v987
      %989 = vst [vmem:[%s949 + $0x3c] sm:$0xf] %v988
      %990 = vst [vmem:[%s949 + $0x40] sm:$0xf] %v729
      %v991 = vld [vmem:[%s949 + $0x44] sm:$0x1]
      %v992 = vsel %vm436, %v730, %v991
      %993 = vst [vmem:[%s949 + $0x44] sm:$0x1] %v992
      %v994 = vld [vmem:[%s949 + $0x48] sm:$0xf]
      %v995 = vsel %vm951, %v737, %v994
      %996 = vst [vmem:[%s949 + $0x48] sm:$0xf] %v995
      %997 = vst [vmem:[%s949 + $0x4c] sm:$0xf] %v746
      %v998 = vld [vmem:[%s949 + $0x50] sm:$0x1]
      %v999 = vsel %vm436, %v747, %v998
      %1000 = vst [vmem:[%s949 + $0x50] sm:$0x1] %v999
      %v1001 = vld [vmem:[%s949 + $0x54] sm:$0xf]
      %v1002 = vsel %vm951, %v754, %v1001
      %1003 = vst [vmem:[%s949 + $0x54] sm:$0xf] %v1002
      %1004 = vst [vmem:[%s949 + $0x58] sm:$0xf] %v763
      %v1005 = vld [vmem:[%s949 + $0x5c] sm:$0x1]
      %v1006 = vsel %vm436, %v764, %v1005
      %1007 = vst [vmem:[%s949 + $0x5c] sm:$0x1] %v1006
      %v1008 = vld [vmem:[%s949 + $0x60] sm:$0xf]
      %v1009 = vsel %vm951, %v771, %v1008
      %1010 = vst [vmem:[%s949 + $0x60] sm:$0xf] %v1009
      %1011 = vst [vmem:[%s949 + $0x64] sm:$0xf] %v780
      %v1012 = vld [vmem:[%s949 + $0x68] sm:$0x1]
      %v1013 = vsel %vm436, %v781, %v1012
      %1014 = vst [vmem:[%s949 + $0x68] sm:$0x1] %v1013
      %v1015 = vld [vmem:[%s949 + $0x6c] sm:$0xf]
      %v1016 = vsel %vm951, %v788, %v1015
      %1017 = vst [vmem:[%s949 + $0x6c] sm:$0xf] %v1016
      %1018 = vst [vmem:[%s949 + $0x70] sm:$0xf] %v797
      %v1019 = vld [vmem:[%s949 + $0x74] sm:$0x1]
      %v1020 = vsel %vm436, %v798, %v1019
      %1021 = vst [vmem:[%s949 + $0x74] sm:$0x1] %v1020
      %v1022 = vld [vmem:[%s949 + $0x78] sm:$0xf]
      %v1023 = vsel %vm951, %v805, %v1022
      %1024 = vst [vmem:[%s949 + $0x78] sm:$0xf] %v1023
      %1025 = vst [vmem:[%s949 + $0x7c] sm:$0xf] %v814
      %v1026 = vld [vmem:[%s949 + $0x80] sm:$0x1]
      %v1027 = vsel %vm436, %v815, %v1026
      %1028 = vst [vmem:[%s949 + $0x80] sm:$0x1] %v1027
      %v1029 = vld [vmem:[%s949 + $0x84] sm:$0xf]
      %v1030 = vsel %vm951, %v822, %v1029
      %1031 = vst [vmem:[%s949 + $0x84] sm:$0xf] %v1030
      %1032 = vst [vmem:[%s949 + $0x88] sm:$0xf] %v831
      %v1033 = vld [vmem:[%s949 + $0x8c] sm:$0x1]
      %v1034 = vsel %vm436, %v832, %v1033
      %1035 = vst [vmem:[%s949 + $0x8c] sm:$0x1] %v1034
      %v1036 = vld [vmem:[%s949 + $0x90] sm:$0xf]
      %v1037 = vsel %vm951, %v839, %v1036
      %1038 = vst [vmem:[%s949 + $0x90] sm:$0xf] %v1037
      %1039 = vst [vmem:[%s949 + $0x94] sm:$0xf] %v848
      %v1040 = vld [vmem:[%s949 + $0x98] sm:$0x1]
      %v1041 = vsel %vm436, %v849, %v1040
      %1042 = vst [vmem:[%s949 + $0x98] sm:$0x1] %v1041
      %v1043 = vld [vmem:[%s949 + $0x9c] sm:$0xf]
      %v1044 = vsel %vm951, %v856, %v1043
      %1045 = vst [vmem:[%s949 + $0x9c] sm:$0xf] %v1044
      %1046 = vst [vmem:[%s949 + $0xa0] sm:$0xf] %v865
      %v1047 = vld [vmem:[%s949 + $0xa4] sm:$0x1]
      %v1048 = vsel %vm436, %v866, %v1047
      %1049 = vst [vmem:[%s949 + $0xa4] sm:$0x1] %v1048
      %v1050 = vld [vmem:[%s949 + $0xa8] sm:$0xf]
      %v1051 = vsel %vm951, %v873, %v1050
      %1052 = vst [vmem:[%s949 + $0xa8] sm:$0xf] %v1051
      %1053 = vst [vmem:[%s949 + $0xac] sm:$0xf] %v882
      %v1054 = vld [vmem:[%s949 + $0xb0] sm:$0x1]
      %v1055 = vsel %vm436, %v883, %v1054
      %1056 = vst [vmem:[%s949 + $0xb0] sm:$0x1] %v1055
      %v1057 = vld [vmem:[%s949 + $0xb4] sm:$0xf]
      %v1058 = vsel %vm951, %v890, %v1057
      %1059 = vst [vmem:[%s949 + $0xb4] sm:$0xf] %v1058
      %1060 = vst [vmem:[%s949 + $0xb8] sm:$0xf] %v899
      %v1061 = vld [vmem:[%s949 + $0xbc] sm:$0x1]
      %v1062 = vsel %vm436, %v900, %v1061
      %1063 = vst [vmem:[%s949 + $0xbc] sm:$0x1] %v1062
      %v1064 = vld [vmem:[#allocation2] sm:$0xf]
      %v1065 = vld [vmem:[#allocation2 + $0x4] sm:$0xf]
      %v1066 = vld [vmem:[#allocation2 + $0xc] sm:$0xf]
      %v1067 = vld [vmem:[#allocation2 + $0x10] sm:$0xf]
      %v1068 = vld [vmem:[#allocation2 + $0x18] sm:$0xf]
      %v1069 = vld [vmem:[#allocation2 + $0x1c] sm:$0xf]
      %v1070 = vld [vmem:[#allocation2 + $0x24] sm:$0xf]
      %v1071 = vld [vmem:[#allocation2 + $0x28] sm:$0xf]
      %v1072 = vld [vmem:[#allocation2 + $0x30] sm:$0xf]
      %v1073 = vld [vmem:[#allocation2 + $0x34] sm:$0xf]
      %v1074 = vld [vmem:[#allocation2 + $0x3c] sm:$0xf]
      %v1075 = vld [vmem:[#allocation2 + $0x40] sm:$0xf]
      %v1076 = vld [vmem:[#allocation2 + $0x48] sm:$0xf]
      %v1077 = vld [vmem:[#allocation2 + $0x4c] sm:$0xf]
      %v1078 = vld [vmem:[#allocation2 + $0x54] sm:$0xf]
      %v1079 = vld [vmem:[#allocation2 + $0x58] sm:$0xf]
      %v1080 = vld [vmem:[#allocation2 + $0x60] sm:$0xf]
      %v1081 = vld [vmem:[#allocation2 + $0x64] sm:$0xf]
      %v1082 = vld [vmem:[#allocation2 + $0x6c] sm:$0xf]
      %v1083 = vld [vmem:[#allocation2 + $0x70] sm:$0xf]
      %v1084 = vld [vmem:[#allocation2 + $0x78] sm:$0xf]
      %v1085 = vld [vmem:[#allocation2 + $0x7c] sm:$0xf]
      %v1086 = vld [vmem:[#allocation2 + $0x84] sm:$0xf]
      %v1087 = vld [vmem:[#allocation2 + $0x88] sm:$0xf]
      %v1088 = vld [vmem:[#allocation2 + $0x90] sm:$0xf]
      %v1089 = vld [vmem:[#allocation2 + $0x94] sm:$0xf]
      %v1090 = vld [vmem:[#allocation2 + $0x9c] sm:$0xf]
      %v1091 = vld [vmem:[#allocation2 + $0xa0] sm:$0xf]
      %v1092 = vld [vmem:[#allocation2 + $0xa8] sm:$0xf]
      %v1093 = vld [vmem:[#allocation2 + $0xac] sm:$0xf]
      %v1094 = vld [vmem:[#allocation2 + $0xb4] sm:$0xf]
      %v1095 = vld [vmem:[#allocation2 + $0xb8] sm:$0xf]
      %v1096 = vld [vmem:[%s3] sm:$0xf]
      %v1097 = vld [vmem:[%s3 + $0x4] sm:$0xf]
      %v1098 = vld [vmem:[%s3 + $0x8] sm:$0xf]
      %v1099 = vld [vmem:[%s3 + $0xc] sm:$0xf]
      %v1100 = vld [vmem:[%s3 + $0x10] sm:$0xf]
      %v1101 = vld [vmem:[%s3 + $0x14] sm:$0xf]
      %v1102 = vld [vmem:[%s3 + $0x18] sm:$0xf]
      %v1103 = vld [vmem:[%s3 + $0x1c] sm:$0xf]
      %v1104 = vld [vmem:[%s3 + $0x20] sm:$0xf]
      %v1105 = vld [vmem:[%s3 + $0x24] sm:$0xf]
      %v1106 = vld [vmem:[%s3 + $0x28] sm:$0xf]
      %v1107 = vld [vmem:[%s3 + $0x2c] sm:$0xf]
      %v1108 = vld [vmem:[%s3 + $0x30] sm:$0xf]
      %v1109 = vld [vmem:[%s3 + $0x34] sm:$0xf]
      %v1110 = vld [vmem:[%s3 + $0x38] sm:$0xf]
      %v1111 = vld [vmem:[%s3 + $0x3c] sm:$0xf]
      %v1112 = vld [vmem:[#allocation2 + $0x8] sm:$0x1]
      %v1113 = vld [vmem:[#allocation2 + $0x14] sm:$0x1]
      %v1114 = vld [vmem:[#allocation2 + $0x20] sm:$0x1]
      %v1115 = vld [vmem:[#allocation2 + $0x2c] sm:$0x1]
      %v1116 = vld [vmem:[#allocation2 + $0x38] sm:$0x1]
      %v1117 = vld [vmem:[#allocation2 + $0x44] sm:$0x1]
      %v1118 = vld [vmem:[#allocation2 + $0x50] sm:$0x1]
      %v1119 = vld [vmem:[#allocation2 + $0x5c] sm:$0x1]
      %v1120 = vld [vmem:[#allocation2 + $0x68] sm:$0x1]
      %v1121 = vld [vmem:[#allocation2 + $0x74] sm:$0x1]
      %v1122 = vld [vmem:[#allocation2 + $0x80] sm:$0x1]
      %v1123 = vld [vmem:[#allocation2 + $0x8c] sm:$0x1]
      %v1124 = vld [vmem:[#allocation2 + $0x98] sm:$0x1]
      %v1125 = vld [vmem:[#allocation2 + $0xa4] sm:$0x1]
      %v1126 = vld [vmem:[#allocation2 + $0xb0] sm:$0x1]
      %v1127 = vld [vmem:[#allocation2 + $0xbc] sm:$0x1]
      %vm1128 = vsmask.f32 3328
      %vm1129 = vsmask.f32 7440
      %vm1130 = vmor %vm1128, %vm1129
      %v1132 = vshrl.u32 %v1064, 16
      %v1134 = vrot.slane %v1132, 4
      %v1135 = vshll.u32 %v1064, 16
      %v1137 = vrot.slane %v1135, 5
      %v1138 = vor.u32 %v1134, %v1137
      %v1139 = vrot.slane %v1138, 4
      %v1141 = vshll.u32 %v1065, 16
      %v1143 = vrot.slane %v1141, 5
      %v1144 = vsel %vm1130, %v1139, %v1143
      %v1145 = vshrl.u32 %v1065, 16
      %v1147 = vrot.slane %v1145, 4
      %v1148 = vor.u32 %v1147, %v1143
      %v1149 = vrot.slane %v1148, 4
      %v1151 = vshll.u32 %v1112, 16
      %v1153 = vrot.slane %v1151, 5
      %v1154 = vsel %vm1130, %v1149, %v1153
      %v1156 = vshrl.u32 %v1066, 16
      %v1158 = vrot.slane %v1156, 4
      %v1159 = vshll.u32 %v1066, 16
      %v1161 = vrot.slane %v1159, 5
      %v1162 = vor.u32 %v1158, %v1161
      %v1163 = vrot.slane %v1162, 4
      %v1165 = vshll.u32 %v1067, 16
      %v1167 = vrot.slane %v1165, 5
      %v1168 = vsel %vm1130, %v1163, %v1167
      %v1169 = vshrl.u32 %v1067, 16
      %v1171 = vrot.slane %v1169, 4
      %v1172 = vor.u32 %v1171, %v1167
      %v1173 = vrot.slane %v1172, 4
      %v1175 = vshll.u32 %v1113, 16
      %v1177 = vrot.slane %v1175, 5
      %v1178 = vsel %vm1130, %v1173, %v1177
      %v1180 = vshrl.u32 %v1068, 16
      %v1182 = vrot.slane %v1180, 4
      %v1183 = vshll.u32 %v1068, 16
      %v1185 = vrot.slane %v1183, 5
      %v1186 = vor.u32 %v1182, %v1185
      %v1187 = vrot.slane %v1186, 4
      %v1189 = vshll.u32 %v1069, 16
      %v1191 = vrot.slane %v1189, 5
      %v1192 = vsel %vm1130, %v1187, %v1191
      %v1193 = vshrl.u32 %v1069, 16
      %v1195 = vrot.slane %v1193, 4
      %v1196 = vor.u32 %v1195, %v1191
      %v1197 = vrot.slane %v1196, 4
      %v1199 = vshll.u32 %v1114, 16
      %v1201 = vrot.slane %v1199, 5
      %v1202 = vsel %vm1130, %v1197, %v1201
      %v1204 = vshrl.u32 %v1070, 16
      %v1206 = vrot.slane %v1204, 4
      %v1207 = vshll.u32 %v1070, 16
      %v1209 = vrot.slane %v1207, 5
      %v1210 = vor.u32 %v1206, %v1209
      %v1211 = vrot.slane %v1210, 4
      %v1213 = vshll.u32 %v1071, 16
      %v1215 = vrot.slane %v1213, 5
      %v1216 = vsel %vm1130, %v1211, %v1215
      %v1217 = vshrl.u32 %v1071, 16
      %v1219 = vrot.slane %v1217, 4
      %v1220 = vor.u32 %v1219, %v1215
      %v1221 = vrot.slane %v1220, 4
      %v1223 = vshll.u32 %v1115, 16
      %v1225 = vrot.slane %v1223, 5
      %v1226 = vsel %vm1130, %v1221, %v1225
      %v1228 = vshrl.u32 %v1072, 16
      %v1230 = vrot.slane %v1228, 4
      %v1231 = vshll.u32 %v1072, 16
      %v1233 = vrot.slane %v1231, 5
      %v1234 = vor.u32 %v1230, %v1233
      %v1235 = vrot.slane %v1234, 4
      %v1237 = vshll.u32 %v1073, 16
      %v1239 = vrot.slane %v1237, 5
      %v1240 = vsel %vm1130, %v1235, %v1239
      %v1241 = vshrl.u32 %v1073, 16
      %v1243 = vrot.slane %v1241, 4
      %v1244 = vor.u32 %v1243, %v1239
      %v1245 = vrot.slane %v1244, 4
      %v1247 = vshll.u32 %v1116, 16
      %v1249 = vrot.slane %v1247, 5
      %v1250 = vsel %vm1130, %v1245, %v1249
      %v1252 = vshrl.u32 %v1074, 16
      %v1254 = vrot.slane %v1252, 4
      %v1255 = vshll.u32 %v1074, 16
      %v1257 = vrot.slane %v1255, 5
      %v1258 = vor.u32 %v1254, %v1257
      %v1259 = vrot.slane %v1258, 4
      %v1261 = vshll.u32 %v1075, 16
      %v1263 = vrot.slane %v1261, 5
      %v1264 = vsel %vm1130, %v1259, %v1263
      %v1265 = vshrl.u32 %v1075, 16
      %v1267 = vrot.slane %v1265, 4
      %v1268 = vor.u32 %v1267, %v1263
      %v1269 = vrot.slane %v1268, 4
      %v1271 = vshll.u32 %v1117, 16
      %v1273 = vrot.slane %v1271, 5
      %v1274 = vsel %vm1130, %v1269, %v1273
      %v1276 = vshrl.u32 %v1076, 16
      %v1278 = vrot.slane %v1276, 4
      %v1279 = vshll.u32 %v1076, 16
      %v1281 = vrot.slane %v1279, 5
      %v1282 = vor.u32 %v1278, %v1281
      %v1283 = vrot.slane %v1282, 4
      %v1285 = vshll.u32 %v1077, 16
      %v1287 = vrot.slane %v1285, 5
      %v1288 = vsel %vm1130, %v1283, %v1287
      %v1289 = vshrl.u32 %v1077, 16
      %v1291 = vrot.slane %v1289, 4
      %v1292 = vor.u32 %v1291, %v1287
      %v1293 = vrot.slane %v1292, 4
      %v1295 = vshll.u32 %v1118, 16
      %v1297 = vrot.slane %v1295, 5
      %v1298 = vsel %vm1130, %v1293, %v1297
      %v1300 = vshrl.u32 %v1078, 16
      %v1302 = vrot.slane %v1300, 4
      %v1303 = vshll.u32 %v1078, 16
      %v1305 = vrot.slane %v1303, 5
      %v1306 = vor.u32 %v1302, %v1305
      %v1307 = vrot.slane %v1306, 4
      %v1309 = vshll.u32 %v1079, 16
      %v1311 = vrot.slane %v1309, 5
      %v1312 = vsel %vm1130, %v1307, %v1311
      %v1313 = vshrl.u32 %v1079, 16
      %v1315 = vrot.slane %v1313, 4
      %v1316 = vor.u32 %v1315, %v1311
      %v1317 = vrot.slane %v1316, 4
      %v1319 = vshll.u32 %v1119, 16
      %v1321 = vrot.slane %v1319, 5
      %v1322 = vsel %vm1130, %v1317, %v1321
      %v1324 = vshrl.u32 %v1080, 16
      %v1326 = vrot.slane %v1324, 4
      %v1327 = vshll.u32 %v1080, 16
      %v1329 = vrot.slane %v1327, 5
      %v1330 = vor.u32 %v1326, %v1329
      %v1331 = vrot.slane %v1330, 4
      %v1333 = vshll.u32 %v1081, 16
      %v1335 = vrot.slane %v1333, 5
      %v1336 = vsel %vm1130, %v1331, %v1335
      %v1337 = vshrl.u32 %v1081, 16
      %v1339 = vrot.slane %v1337, 4
      %v1340 = vor.u32 %v1339, %v1335
      %v1341 = vrot.slane %v1340, 4
      %v1343 = vshll.u32 %v1120, 16
      %v1345 = vrot.slane %v1343, 5
      %v1346 = vsel %vm1130, %v1341, %v1345
      %v1348 = vshrl.u32 %v1082, 16
      %v1350 = vrot.slane %v1348, 4
      %v1351 = vshll.u32 %v1082, 16
      %v1353 = vrot.slane %v1351, 5
      %v1354 = vor.u32 %v1350, %v1353
      %v1355 = vrot.slane %v1354, 4
      %v1357 = vshll.u32 %v1083, 16
      %v1359 = vrot.slane %v1357, 5
      %v1360 = vsel %vm1130, %v1355, %v1359
      %v1361 = vshrl.u32 %v1083, 16
      %v1363 = vrot.slane %v1361, 4
      %v1364 = vor.u32 %v1363, %v1359
      %v1365 = vrot.slane %v1364, 4
      %v1367 = vshll.u32 %v1121, 16
      %v1369 = vrot.slane %v1367, 5
      %v1370 = vsel %vm1130, %v1365, %v1369
      %v1372 = vshrl.u32 %v1084, 16
      %v1374 = vrot.slane %v1372, 4
      %v1375 = vshll.u32 %v1084, 16
      %v1377 = vrot.slane %v1375, 5
      %v1378 = vor.u32 %v1374, %v1377
      %v1379 = vrot.slane %v1378, 4
      %v1381 = vshll.u32 %v1085, 16
      %v1383 = vrot.slane %v1381, 5
      %v1384 = vsel %vm1130, %v1379, %v1383
      %v1385 = vshrl.u32 %v1085, 16
      %v1387 = vrot.slane %v1385, 4
      %v1388 = vor.u32 %v1387, %v1383
      %v1389 = vrot.slane %v1388, 4
      %v1391 = vshll.u32 %v1122, 16
      %v1393 = vrot.slane %v1391, 5
      %v1394 = vsel %vm1130, %v1389, %v1393
      %v1396 = vshrl.u32 %v1086, 16
      %v1398 = vrot.slane %v1396, 4
      %v1399 = vshll.u32 %v1086, 16
      %v1401 = vrot.slane %v1399, 5
      %v1402 = vor.u32 %v1398, %v1401
      %v1403 = vrot.slane %v1402, 4
      %v1405 = vshll.u32 %v1087, 16
      %v1407 = vrot.slane %v1405, 5
      %v1408 = vsel %vm1130, %v1403, %v1407
      %v1409 = vshrl.u32 %v1087, 16
      %v1411 = vrot.slane %v1409, 4
      %v1412 = vor.u32 %v1411, %v1407
      %v1413 = vrot.slane %v1412, 4
      %v1415 = vshll.u32 %v1123, 16
      %v1417 = vrot.slane %v1415, 5
      %v1418 = vsel %vm1130, %v1413, %v1417
      %v1420 = vshrl.u32 %v1088, 16
      %v1422 = vrot.slane %v1420, 4
      %v1423 = vshll.u32 %v1088, 16
      %v1425 = vrot.slane %v1423, 5
      %v1426 = vor.u32 %v1422, %v1425
      %v1427 = vrot.slane %v1426, 4
      %v1429 = vshll.u32 %v1089, 16
      %v1431 = vrot.slane %v1429, 5
      %v1432 = vsel %vm1130, %v1427, %v1431
      %v1433 = vshrl.u32 %v1089, 16
      %v1435 = vrot.slane %v1433, 4
      %v1436 = vor.u32 %v1435, %v1431
      %v1437 = vrot.slane %v1436, 4
      %v1439 = vshll.u32 %v1124, 16
      %v1441 = vrot.slane %v1439, 5
      %v1442 = vsel %vm1130, %v1437, %v1441
      %v1444 = vshrl.u32 %v1090, 16
      %v1446 = vrot.slane %v1444, 4
      %v1447 = vshll.u32 %v1090, 16
      %v1449 = vrot.slane %v1447, 5
      %v1450 = vor.u32 %v1446, %v1449
      %v1451 = vrot.slane %v1450, 4
      %v1453 = vshll.u32 %v1091, 16
      %v1455 = vrot.slane %v1453, 5
      %v1456 = vsel %vm1130, %v1451, %v1455
      %v1457 = vshrl.u32 %v1091, 16
      %v1459 = vrot.slane %v1457, 4
      %v1460 = vor.u32 %v1459, %v1455
      %v1461 = vrot.slane %v1460, 4
      %v1463 = vshll.u32 %v1125, 16
      %v1465 = vrot.slane %v1463, 5
      %v1466 = vsel %vm1130, %v1461, %v1465
      %v1468 = vshrl.u32 %v1092, 16
      %v1470 = vrot.slane %v1468, 4
      %v1471 = vshll.u32 %v1092, 16
      %v1473 = vrot.slane %v1471, 5
      %v1474 = vor.u32 %v1470, %v1473
      %v1475 = vrot.slane %v1474, 4
      %v1477 = vshll.u32 %v1093, 16
      %v1479 = vrot.slane %v1477, 5
      %v1480 = vsel %vm1130, %v1475, %v1479
      %v1481 = vshrl.u32 %v1093, 16
      %v1483 = vrot.slane %v1481, 4
      %v1484 = vor.u32 %v1483, %v1479
      %v1485 = vrot.slane %v1484, 4
      %v1487 = vshll.u32 %v1126, 16
      %v1489 = vrot.slane %v1487, 5
      %v1490 = vsel %vm1130, %v1485, %v1489
      %v1492 = vshrl.u32 %v1094, 16
      %v1494 = vrot.slane %v1492, 4
      %v1495 = vshll.u32 %v1094, 16
      %v1497 = vrot.slane %v1495, 5
      %v1498 = vor.u32 %v1494, %v1497
      %v1499 = vrot.slane %v1498, 4
      %v1501 = vshll.u32 %v1095, 16
      %v1503 = vrot.slane %v1501, 5
      %v1504 = vsel %vm1130, %v1499, %v1503
      %v1505 = vshrl.u32 %v1095, 16
      %v1507 = vrot.slane %v1505, 4
      %v1508 = vor.u32 %v1507, %v1503
      %v1509 = vrot.slane %v1508, 4
      %v1511 = vshll.u32 %v1127, 16
      %v1513 = vrot.slane %v1511, 5
      %v1514 = vsel %vm1130, %v1509, %v1513
      %s1515 = scalar_lea.vmem %s3, 64
      %v1516 = vld [vmem:[%s1515] sm:$0xf]
      %v1517 = vld [vmem:[%s1515 + $0x4] sm:$0xf]
      %v1518 = vld [vmem:[%s1515 + $0x8] sm:$0xf]
      %v1519 = vld [vmem:[%s1515 + $0xc] sm:$0xf]
      %v1520 = vld [vmem:[%s1515 + $0x10] sm:$0xf]
      %v1521 = vld [vmem:[%s1515 + $0x14] sm:$0xf]
      %v1522 = vld [vmem:[%s1515 + $0x18] sm:$0xf]
      %v1523 = vld [vmem:[%s1515 + $0x1c] sm:$0xf]
      %v1524 = vld [vmem:[%s1515 + $0x20] sm:$0xf]
      %v1525 = vld [vmem:[%s1515 + $0x24] sm:$0xf]
      %v1526 = vld [vmem:[%s1515 + $0x28] sm:$0xf]
      %v1527 = vld [vmem:[%s1515 + $0x2c] sm:$0xf]
      %v1528 = vld [vmem:[%s1515 + $0x30] sm:$0xf]
      %v1529 = vld [vmem:[%s1515 + $0x34] sm:$0xf]
      %v1530 = vld [vmem:[%s1515 + $0x38] sm:$0xf]
      %v1531 = vld [vmem:[%s1515 + $0x3c] sm:$0xf]
      %v1532 = vunpack.c.l.b16 %v1144
      %v1533 = vunpack.c.l.b16 %v1154
      %v1534 = vunpack.c.l.b16 %v1168
      %v1535 = vunpack.c.l.b16 %v1178
      %v1536 = vunpack.c.l.b16 %v1192
      %v1537 = vunpack.c.l.b16 %v1202
      %v1538 = vunpack.c.l.b16 %v1216
      %v1539 = vunpack.c.l.b16 %v1226
      %v1540 = vunpack.c.l.b16 %v1240
      %v1541 = vunpack.c.l.b16 %v1250
      %v1542 = vunpack.c.l.b16 %v1264
      %v1543 = vunpack.c.l.b16 %v1274
      %v1544 = vunpack.c.l.b16 %v1288
      %v1545 = vunpack.c.l.b16 %v1298
      %v1546 = vunpack.c.l.b16 %v1312
      %v1547 = vunpack.c.l.b16 %v1322
      %v1548 = vunpack.c.l.b16 %v1336
      %v1549 = vunpack.c.l.b16 %v1346
      %v1550 = vunpack.c.l.b16 %v1360
      %v1551 = vunpack.c.l.b16 %v1370
      %v1552 = vunpack.c.l.b16 %v1384
      %v1553 = vunpack.c.l.b16 %v1394
      %v1554 = vunpack.c.l.b16 %v1408
      %v1555 = vunpack.c.l.b16 %v1418
      %v1556 = vunpack.c.l.b16 %v1432
      %v1557 = vunpack.c.l.b16 %v1442
      %v1558 = vunpack.c.l.b16 %v1456
      %v1559 = vunpack.c.l.b16 %v1466
      %v1560 = vunpack.c.l.b16 %v1480
      %v1561 = vunpack.c.l.b16 %v1490
      %v1562 = vunpack.c.l.b16 %v1504
      %v1563 = vunpack.c.l.b16 %v1514
      %v1564 = vpack.c.b16 %v1533, %v1532
      %v1565 = vpack.c.b16 %v1535, %v1534
      %v1566 = vpack.c.b16 %v1537, %v1536
      %v1567 = vpack.c.b16 %v1539, %v1538
      %v1568 = vpack.c.b16 %v1541, %v1540
      %v1569 = vpack.c.b16 %v1543, %v1542
      %v1570 = vpack.c.b16 %v1545, %v1544
      %v1571 = vpack.c.b16 %v1547, %v1546
      %v1572 = vpack.c.b16 %v1549, %v1548
      %v1573 = vpack.c.b16 %v1551, %v1550
      %v1574 = vpack.c.b16 %v1553, %v1552
      %v1575 = vpack.c.b16 %v1555, %v1554
      %v1576 = vpack.c.b16 %v1557, %v1556
      %v1577 = vpack.c.b16 %v1559, %v1558
      %v1578 = vpack.c.b16 %v1561, %v1560
      %v1579 = vpack.c.b16 %v1563, %v1562
      %v1612 = vunpack.c.l.b16 %v1516
      %v1613 = vunpack.c.l.b16 %v1517
      %v1614 = vunpack.c.l.b16 %v1518
      %v1615 = vunpack.c.l.b16 %v1519
      %v1616 = vunpack.c.l.b16 %v1520
      %v1617 = vunpack.c.l.b16 %v1521
      %v1618 = vunpack.c.l.b16 %v1522
      %v1619 = vunpack.c.l.b16 %v1523
      %v1620 = vunpack.c.l.b16 %v1524
      %v1621 = vunpack.c.l.b16 %v1525
      %v1622 = vunpack.c.l.b16 %v1526
      %v1623 = vunpack.c.l.b16 %v1527
      %v1624 = vunpack.c.l.b16 %v1528
      %v1625 = vunpack.c.l.b16 %v1529
      %v1626 = vunpack.c.l.b16 %v1530
      %v1627 = vunpack.c.l.b16 %v1531
      %v1628 = vpack.c.b16 %v1613, %v1612
      %v1629 = vpack.c.b16 %v1615, %v1614
      %v1630 = vpack.c.b16 %v1617, %v1616
      %v1631 = vpack.c.b16 %v1619, %v1618
      %v1632 = vpack.c.b16 %v1621, %v1620
      %v1633 = vpack.c.b16 %v1623, %v1622
      %v1634 = vpack.c.b16 %v1625, %v1624
      %v1635 = vpack.c.b16 %v1627, %v1626
      %1644 = vmatprep.subr.bf16.mxu0 0
      %1645 = vmatpush1.bf16.msra.mxu0 %v1635
      %1646 = vmatprep.subr.bf16.mxu0 0
      %1647 = vmatpush1.bf16.msra.mxu0 %v1634
      %1648 = vmatprep.subr.bf16.mxu0 0
      %1649 = vmatpush1.bf16.msra.mxu0 %v1633
      %1650 = vmatprep.subr.bf16.mxu0 0
      %1651 = vmatpush1.bf16.msra.mxu0 %v1632
      %1652 = vmatprep.subr.bf16.mxu0 0
      %1653 = vmatpush1.bf16.msra.mxu0 %v1631
      %1654 = vmatprep.subr.bf16.mxu0 0
      %1655 = vmatpush1.bf16.msra.mxu0 %v1630
      %1656 = vmatprep.subr.bf16.mxu0 0
      %1657 = vmatpush1.bf16.msra.mxu0 %v1629
      %1658 = vmatprep.subr.bf16.mxu0 0
      %1659 = vmatpush1.bf16.msra.mxu0 %v1628
      %1660 = vmatprep.subr.bf16.mxu0 0
      %1661 = vmatpush2.bf16.msra.mxu0 0
      %1662 = vmatprep.subr.bf16.mxu0 0
      %1663 = vmatpush2.bf16.msra.mxu0 0
      %1664 = vmatprep.subr.bf16.mxu0 0
      %1665 = vmatpush2.bf16.msra.mxu0 0
      %1666 = vmatprep.subr.bf16.mxu0 0
      %1667 = vmatpush2.bf16.msra.mxu0 0
      %1668 = vmatprep.subr.bf16.mxu0 0
      %1669 = vmatpush2.bf16.msra.mxu0 0
      %1670 = vmatprep.subr.bf16.mxu0 0
      %1671 = vmatpush2.bf16.msra.mxu0 0
      %1672 = vmatprep.subr.bf16.mxu0 0
      %1673 = vmatpush2.bf16.msra.mxu0 0
      %1674 = vmatprep.subr.bf16.mxu0 0
      %1675 = vmatpush2.bf16.msra.mxu0 0
      %1676 = vmatprep.mubr.bf16.mxu0 0
      %1677 = vmatmul.mubr.bf16.gmra.mxu0 %v1564
      %v1678 = vpop.f32.mrf.mxu0
      %v1679 = vadd.f32 0.0, %v1678
      %v1680 = vpop.f32.mrf.mxu0
      %v1681 = vpop.f32.mrf.mxu0
      %v1682 = vadd.f32 0.0, %v1681
      %v1683 = vpop.f32.mrf.mxu0
      %1684 = vmatprep.mubr.bf16.mxu0 0
      %1685 = vmatmul.mubr.bf16.gmra.mxu0 %v1565
      %v1686 = vpop.f32.mrf.mxu0
      %v1687 = vadd.f32 0.0, %v1686
      %v1688 = vpop.f32.mrf.mxu0
      %v1689 = vpop.f32.mrf.mxu0
      %v1690 = vadd.f32 0.0, %v1689
      %v1691 = vpop.f32.mrf.mxu0
      %1692 = vmatprep.mubr.bf16.mxu0 0
      %1693 = vmatmul.mubr.bf16.gmra.mxu0 %v1566
      %v1694 = vpop.f32.mrf.mxu0
      %v1695 = vadd.f32 0.0, %v1694
      %v1696 = vpop.f32.mrf.mxu0
      %v1697 = vpop.f32.mrf.mxu0
      %v1698 = vadd.f32 0.0, %v1697
      %v1699 = vpop.f32.mrf.mxu0
      %1700 = vmatprep.mubr.bf16.mxu0 0
      %1701 = vmatmul.mubr.bf16.gmra.mxu0 %v1567
      %v1702 = vpop.f32.mrf.mxu0
      %v1703 = vadd.f32 0.0, %v1702
      %v1704 = vpop.f32.mrf.mxu0
      %v1705 = vpop.f32.mrf.mxu0
      %v1706 = vadd.f32 0.0, %v1705
      %v1707 = vpop.f32.mrf.mxu0
      %1708 = vmatprep.mubr.bf16.mxu0 0
      %1709 = vmatmul.mubr.bf16.gmra.mxu0 %v1568
      %v1710 = vpop.f32.mrf.mxu0
      %v1711 = vadd.f32 0.0, %v1710
      %v1712 = vpop.f32.mrf.mxu0
      %v1713 = vpop.f32.mrf.mxu0
      %v1714 = vadd.f32 0.0, %v1713
      %v1715 = vpop.f32.mrf.mxu0
      %1716 = vmatprep.mubr.bf16.mxu0 0
      %1717 = vmatmul.mubr.bf16.gmra.mxu0 %v1569
      %v1718 = vpop.f32.mrf.mxu0
      %v1719 = vadd.f32 0.0, %v1718
      %v1720 = vpop.f32.mrf.mxu0
      %v1721 = vpop.f32.mrf.mxu0
      %v1722 = vadd.f32 0.0, %v1721
      %v1723 = vpop.f32.mrf.mxu0
      %1724 = vmatprep.mubr.bf16.mxu0 0
      %1725 = vmatmul.mubr.bf16.gmra.mxu0 %v1570
      %v1726 = vpop.f32.mrf.mxu0
      %v1727 = vadd.f32 0.0, %v1726
      %v1728 = vpop.f32.mrf.mxu0
      %v1729 = vpop.f32.mrf.mxu0
      %v1730 = vadd.f32 0.0, %v1729
      %v1731 = vpop.f32.mrf.mxu0
      %1732 = vmatprep.mubr.bf16.mxu0 0
      %1733 = vmatmul.mubr.bf16.gmra.mxu0 %v1571
      %v1734 = vpop.f32.mrf.mxu0
      %v1735 = vadd.f32 0.0, %v1734
      %v1736 = vpop.f32.mrf.mxu0
      %v1737 = vpop.f32.mrf.mxu0
      %v1738 = vadd.f32 0.0, %v1737
      %v1739 = vpop.f32.mrf.mxu0
      %1740 = vmatprep.mubr.bf16.mxu0 0
      %1741 = vmatmul.mubr.bf16.gmra.mxu0 %v1572
      %v1742 = vpop.f32.mrf.mxu0
      %v1743 = vadd.f32 0.0, %v1742
      %v1744 = vpop.f32.mrf.mxu0
      %v1745 = vpop.f32.mrf.mxu0
      %v1746 = vadd.f32 0.0, %v1745
      %v1747 = vpop.f32.mrf.mxu0
      %1748 = vmatprep.mubr.bf16.mxu0 0
      %1749 = vmatmul.mubr.bf16.gmra.mxu0 %v1573
      %v1750 = vpop.f32.mrf.mxu0
      %v1751 = vadd.f32 0.0, %v1750
      %v1752 = vpop.f32.mrf.mxu0
      %v1753 = vpop.f32.mrf.mxu0
      %v1754 = vadd.f32 0.0, %v1753
      %v1755 = vpop.f32.mrf.mxu0
      %1756 = vmatprep.mubr.bf16.mxu0 0
      %1757 = vmatmul.mubr.bf16.gmra.mxu0 %v1574
      %v1758 = vpop.f32.mrf.mxu0
      %v1759 = vadd.f32 0.0, %v1758
      %v1760 = vpop.f32.mrf.mxu0
      %v1761 = vpop.f32.mrf.mxu0
      %v1762 = vadd.f32 0.0, %v1761
      %v1763 = vpop.f32.mrf.mxu0
      %1764 = vmatprep.mubr.bf16.mxu0 0
      %1765 = vmatmul.mubr.bf16.gmra.mxu0 %v1575
      %v1766 = vpop.f32.mrf.mxu0
      %v1767 = vadd.f32 0.0, %v1766
      %v1768 = vpop.f32.mrf.mxu0
      %v1769 = vpop.f32.mrf.mxu0
      %v1770 = vadd.f32 0.0, %v1769
      %v1771 = vpop.f32.mrf.mxu0
      %1772 = vmatprep.mubr.bf16.mxu0 0
      %1773 = vmatmul.mubr.bf16.gmra.mxu0 %v1576
      %v1774 = vpop.f32.mrf.mxu0
      %v1775 = vadd.f32 0.0, %v1774
      %v1776 = vpop.f32.mrf.mxu0
      %v1777 = vpop.f32.mrf.mxu0
      %v1778 = vadd.f32 0.0, %v1777
      %v1779 = vpop.f32.mrf.mxu0
      %1780 = vmatprep.mubr.bf16.mxu0 0
      %1781 = vmatmul.mubr.bf16.gmra.mxu0 %v1577
      %v1782 = vpop.f32.mrf.mxu0
      %v1783 = vadd.f32 0.0, %v1782
      %v1784 = vpop.f32.mrf.mxu0
      %v1785 = vpop.f32.mrf.mxu0
      %v1786 = vadd.f32 0.0, %v1785
      %v1787 = vpop.f32.mrf.mxu0
      %1788 = vmatprep.mubr.bf16.mxu0 0
      %1789 = vmatmul.mubr.bf16.gmra.mxu0 %v1578
      %v1790 = vpop.f32.mrf.mxu0
      %v1791 = vadd.f32 0.0, %v1790
      %v1792 = vpop.f32.mrf.mxu0
      %v1793 = vpop.f32.mrf.mxu0
      %v1794 = vadd.f32 0.0, %v1793
      %v1795 = vpop.f32.mrf.mxu0
      %1796 = vmatprep.mubr.bf16.mxu0 0
      %1797 = vmatmul.mubr.bf16.gmra.mxu0 %v1579
      %v1798 = vpop.f32.mrf.mxu0
      %v1799 = vadd.f32 0.0, %v1798
      %v1800 = vpop.f32.mrf.mxu0
      %v1801 = vpop.f32.mrf.mxu0
      %v1802 = vadd.f32 0.0, %v1801
      %v1803 = vpop.f32.mrf.mxu0
      %1804 = vdwg.mxu0
      %v1837 = vunpack.c.l.b16 %v1064
      %v1838 = vunpack.c.l.b16 %v1065
      %v1839 = vunpack.c.l.b16 %v1066
      %v1840 = vunpack.c.l.b16 %v1067
      %v1841 = vunpack.c.l.b16 %v1068
      %v1842 = vunpack.c.l.b16 %v1069
      %v1843 = vunpack.c.l.b16 %v1070
      %v1844 = vunpack.c.l.b16 %v1071
      %v1845 = vunpack.c.l.b16 %v1072
      %v1846 = vunpack.c.l.b16 %v1073
      %v1847 = vunpack.c.l.b16 %v1074
      %v1848 = vunpack.c.l.b16 %v1075
      %v1849 = vunpack.c.l.b16 %v1076
      %v1850 = vunpack.c.l.b16 %v1077
      %v1851 = vunpack.c.l.b16 %v1078
      %v1852 = vunpack.c.l.b16 %v1079
      %v1853 = vunpack.c.l.b16 %v1080
      %v1854 = vunpack.c.l.b16 %v1081
      %v1855 = vunpack.c.l.b16 %v1082
      %v1856 = vunpack.c.l.b16 %v1083
      %v1857 = vunpack.c.l.b16 %v1084
      %v1858 = vunpack.c.l.b16 %v1085
      %v1859 = vunpack.c.l.b16 %v1086
      %v1860 = vunpack.c.l.b16 %v1087
      %v1861 = vunpack.c.l.b16 %v1088
      %v1862 = vunpack.c.l.b16 %v1089
      %v1863 = vunpack.c.l.b16 %v1090
      %v1864 = vunpack.c.l.b16 %v1091
      %v1865 = vunpack.c.l.b16 %v1092
      %v1866 = vunpack.c.l.b16 %v1093
      %v1867 = vunpack.c.l.b16 %v1094
      %v1868 = vunpack.c.l.b16 %v1095
      %v1869 = vpack.c.b16 %v1838, %v1837
      %v1870 = vpack.c.b16 %v1840, %v1839
      %v1871 = vpack.c.b16 %v1842, %v1841
      %v1872 = vpack.c.b16 %v1844, %v1843
      %v1873 = vpack.c.b16 %v1846, %v1845
      %v1874 = vpack.c.b16 %v1848, %v1847
      %v1875 = vpack.c.b16 %v1850, %v1849
      %v1876 = vpack.c.b16 %v1852, %v1851
      %v1877 = vpack.c.b16 %v1854, %v1853
      %v1878 = vpack.c.b16 %v1856, %v1855
      %v1879 = vpack.c.b16 %v1858, %v1857
      %v1880 = vpack.c.b16 %v1860, %v1859
      %v1881 = vpack.c.b16 %v1862, %v1861
      %v1882 = vpack.c.b16 %v1864, %v1863
      %v1883 = vpack.c.b16 %v1866, %v1865
      %v1884 = vpack.c.b16 %v1868, %v1867
      %v1917 = vunpack.c.l.b16 %v1096
      %v1918 = vunpack.c.l.b16 %v1097
      %v1919 = vunpack.c.l.b16 %v1098
      %v1920 = vunpack.c.l.b16 %v1099
      %v1921 = vunpack.c.l.b16 %v1100
      %v1922 = vunpack.c.l.b16 %v1101
      %v1923 = vunpack.c.l.b16 %v1102
      %v1924 = vunpack.c.l.b16 %v1103
      %v1925 = vunpack.c.l.b16 %v1104
      %v1926 = vunpack.c.l.b16 %v1105
      %v1927 = vunpack.c.l.b16 %v1106
      %v1928 = vunpack.c.l.b16 %v1107
      %v1929 = vunpack.c.l.b16 %v1108
      %v1930 = vunpack.c.l.b16 %v1109
      %v1931 = vunpack.c.l.b16 %v1110
      %v1932 = vunpack.c.l.b16 %v1111
      %v1933 = vpack.c.b16 %v1918, %v1917
      %v1934 = vpack.c.b16 %v1920, %v1919
      %v1935 = vpack.c.b16 %v1922, %v1921
      %v1936 = vpack.c.b16 %v1924, %v1923
      %v1937 = vpack.c.b16 %v1926, %v1925
      %v1938 = vpack.c.b16 %v1928, %v1927
      %v1939 = vpack.c.b16 %v1930, %v1929
      %v1940 = vpack.c.b16 %v1932, %v1931
      %1949 = vmatprep.subr.bf16.mxu0 0
      %1950 = vmatpush1.bf16.msra.mxu0 %v1940
      %1951 = vmatprep.subr.bf16.mxu0 0
      %1952 = vmatpush1.bf16.msra.mxu0 %v1939
      %1953 = vmatprep.subr.bf16.mxu0 0
      %1954 = vmatpush1.bf16.msra.mxu0 %v1938
      %1955 = vmatprep.subr.bf16.mxu0 0
      %1956 = vmatpush1.bf16.msra.mxu0 %v1937
      %1957 = vmatprep.subr.bf16.mxu0 0
      %1958 = vmatpush1.bf16.msra.mxu0 %v1936
      %1959 = vmatprep.subr.bf16.mxu0 0
      %1960 = vmatpush1.bf16.msra.mxu0 %v1935
      %1961 = vmatprep.subr.bf16.mxu0 0
      %1962 = vmatpush1.bf16.msra.mxu0 %v1934
      %1963 = vmatprep.subr.bf16.mxu0 0
      %1964 = vmatpush1.bf16.msra.mxu0 %v1933
      %1965 = vmatprep.subr.bf16.mxu0 0
      %1966 = vmatpush2.bf16.msra.mxu0 0
      %1967 = vmatprep.subr.bf16.mxu0 0
      %1968 = vmatpush2.bf16.msra.mxu0 0
      %1969 = vmatprep.subr.bf16.mxu0 0
      %1970 = vmatpush2.bf16.msra.mxu0 0
      %1971 = vmatprep.subr.bf16.mxu0 0
      %1972 = vmatpush2.bf16.msra.mxu0 0
      %1973 = vmatprep.subr.bf16.mxu0 0
      %1974 = vmatpush2.bf16.msra.mxu0 0
      %1975 = vmatprep.subr.bf16.mxu0 0
      %1976 = vmatpush2.bf16.msra.mxu0 0
      %1977 = vmatprep.subr.bf16.mxu0 0
      %1978 = vmatpush2.bf16.msra.mxu0 0
      %1979 = vmatprep.subr.bf16.mxu0 0
      %1980 = vmatpush2.bf16.msra.mxu0 0
      %1981 = vmatprep.mubr.bf16.mxu0 0
      %1982 = vmatmul.mubr.bf16.gmra.mxu0 %v1869
      %v1983 = vpop.f32.mrf.mxu0
      %v1984 = vadd.f32 %v1679, %v1983
      %v1985 = vpop.f32.mrf.mxu0
      %v1986 = vpop.f32.mrf.mxu0
      %v1987 = vadd.f32 %v1682, %v1986
      %v1988 = vpop.f32.mrf.mxu0
      %1989 = vmatprep.mubr.bf16.mxu0 0
      %1990 = vmatmul.mubr.bf16.gmra.mxu0 %v1870
      %v1991 = vpop.f32.mrf.mxu0
      %v1992 = vadd.f32 %v1687, %v1991
      %v1993 = vpop.f32.mrf.mxu0
      %v1994 = vpop.f32.mrf.mxu0
      %v1995 = vadd.f32 %v1690, %v1994
      %v1996 = vpop.f32.mrf.mxu0
      %1997 = vmatprep.mubr.bf16.mxu0 0
      %1998 = vmatmul.mubr.bf16.gmra.mxu0 %v1871
      %v1999 = vpop.f32.mrf.mxu0
      %v2000 = vadd.f32 %v1695, %v1999
      %v2001 = vpop.f32.mrf.mxu0
      %v2002 = vpop.f32.mrf.mxu0
      %v2003 = vadd.f32 %v1698, %v2002
      %v2004 = vpop.f32.mrf.mxu0
      %2005 = vmatprep.mubr.bf16.mxu0 0
      %2006 = vmatmul.mubr.bf16.gmra.mxu0 %v1872
      %v2007 = vpop.f32.mrf.mxu0
      %v2008 = vadd.f32 %v1703, %v2007
      %v2009 = vpop.f32.mrf.mxu0
      %v2010 = vpop.f32.mrf.mxu0
      %v2011 = vadd.f32 %v1706, %v2010
      %v2012 = vpop.f32.mrf.mxu0
      %2013 = vmatprep.mubr.bf16.mxu0 0
      %2014 = vmatmul.mubr.bf16.gmra.mxu0 %v1873
      %v2015 = vpop.f32.mrf.mxu0
      %v2016 = vadd.f32 %v1711, %v2015
      %v2017 = vpop.f32.mrf.mxu0
      %v2018 = vpop.f32.mrf.mxu0
      %v2019 = vadd.f32 %v1714, %v2018
      %v2020 = vpop.f32.mrf.mxu0
      %2021 = vmatprep.mubr.bf16.mxu0 0
      %2022 = vmatmul.mubr.bf16.gmra.mxu0 %v1874
      %v2023 = vpop.f32.mrf.mxu0
      %v2024 = vadd.f32 %v1719, %v2023
      %v2025 = vpop.f32.mrf.mxu0
      %v2026 = vpop.f32.mrf.mxu0
      %v2027 = vadd.f32 %v1722, %v2026
      %v2028 = vpop.f32.mrf.mxu0
      %2029 = vmatprep.mubr.bf16.mxu0 0
      %2030 = vmatmul.mubr.bf16.gmra.mxu0 %v1875
      %v2031 = vpop.f32.mrf.mxu0
      %v2032 = vadd.f32 %v1727, %v2031
      %v2033 = vpop.f32.mrf.mxu0
      %v2034 = vpop.f32.mrf.mxu0
      %v2035 = vadd.f32 %v1730, %v2034
      %v2036 = vpop.f32.mrf.mxu0
      %2037 = vmatprep.mubr.bf16.mxu0 0
      %2038 = vmatmul.mubr.bf16.gmra.mxu0 %v1876
      %v2039 = vpop.f32.mrf.mxu0
      %v2040 = vadd.f32 %v1735, %v2039
      %v2041 = vpop.f32.mrf.mxu0
      %v2042 = vpop.f32.mrf.mxu0
      %v2043 = vadd.f32 %v1738, %v2042
      %v2044 = vpop.f32.mrf.mxu0
      %2045 = vmatprep.mubr.bf16.mxu0 0
      %2046 = vmatmul.mubr.bf16.gmra.mxu0 %v1877
      %v2047 = vpop.f32.mrf.mxu0
      %v2048 = vadd.f32 %v1743, %v2047
      %v2049 = vpop.f32.mrf.mxu0
      %v2050 = vpop.f32.mrf.mxu0
      %v2051 = vadd.f32 %v1746, %v2050
      %v2052 = vpop.f32.mrf.mxu0
      %2053 = vmatprep.mubr.bf16.mxu0 0
      %2054 = vmatmul.mubr.bf16.gmra.mxu0 %v1878
      %v2055 = vpop.f32.mrf.mxu0
      %v2056 = vadd.f32 %v1751, %v2055
      %v2057 = vpop.f32.mrf.mxu0
      %v2058 = vpop.f32.mrf.mxu0
      %v2059 = vadd.f32 %v1754, %v2058
      %v2060 = vpop.f32.mrf.mxu0
      %2061 = vmatprep.mubr.bf16.mxu0 0
      %2062 = vmatmul.mubr.bf16.gmra.mxu0 %v1879
      %v2063 = vpop.f32.mrf.mxu0
      %v2064 = vadd.f32 %v1759, %v2063
      %v2065 = vpop.f32.mrf.mxu0
      %v2066 = vpop.f32.mrf.mxu0
      %v2067 = vadd.f32 %v1762, %v2066
      %v2068 = vpop.f32.mrf.mxu0
      %2069 = vmatprep.mubr.bf16.mxu0 0
      %2070 = vmatmul.mubr.bf16.gmra.mxu0 %v1880
      %v2071 = vpop.f32.mrf.mxu0
      %v2072 = vadd.f32 %v1767, %v2071
      %v2073 = vpop.f32.mrf.mxu0
      %v2074 = vpop.f32.mrf.mxu0
      %v2075 = vadd.f32 %v1770, %v2074
      %v2076 = vpop.f32.mrf.mxu0
      %2077 = vmatprep.mubr.bf16.mxu0 0
      %2078 = vmatmul.mubr.bf16.gmra.mxu0 %v1881
      %v2079 = vpop.f32.mrf.mxu0
      %v2080 = vadd.f32 %v1775, %v2079
      %v2081 = vpop.f32.mrf.mxu0
      %v2082 = vpop.f32.mrf.mxu0
      %v2083 = vadd.f32 %v1778, %v2082
      %v2084 = vpop.f32.mrf.mxu0
      %2085 = vmatprep.mubr.bf16.mxu0 0
      %2086 = vmatmul.mubr.bf16.gmra.mxu0 %v1882
      %v2087 = vpop.f32.mrf.mxu0
      %v2088 = vadd.f32 %v1783, %v2087
      %v2089 = vpop.f32.mrf.mxu0
      %v2090 = vpop.f32.mrf.mxu0
      %v2091 = vadd.f32 %v1786, %v2090
      %v2092 = vpop.f32.mrf.mxu0
      %2093 = vmatprep.mubr.bf16.mxu0 0
      %2094 = vmatmul.mubr.bf16.gmra.mxu0 %v1883
      %v2095 = vpop.f32.mrf.mxu0
      %v2096 = vadd.f32 %v1791, %v2095
      %v2097 = vpop.f32.mrf.mxu0
      %v2098 = vpop.f32.mrf.mxu0
      %v2099 = vadd.f32 %v1794, %v2098
      %v2100 = vpop.f32.mrf.mxu0
      %2101 = vmatprep.mubr.bf16.mxu0 0
      %2102 = vmatmul.mubr.bf16.gmra.mxu0 %v1884
      %v2103 = vpop.f32.mrf.mxu0
      %v2104 = vadd.f32 %v1799, %v2103
      %v2105 = vpop.f32.mrf.mxu0
      %v2106 = vpop.f32.mrf.mxu0
      %v2107 = vadd.f32 %v1802, %v2106
      %v2108 = vpop.f32.mrf.mxu0
      %2109 = vdwg.mxu0
      %v2110 = vld [vmem:[#allocation2] sm:$0xe]
      %v2111 = vld [vmem:[#allocation2 + $0xc] sm:$0xe]
      %v2112 = vld [vmem:[#allocation2 + $0x18] sm:$0xe]
      %v2113 = vld [vmem:[#allocation2 + $0x24] sm:$0xe]
      %v2114 = vld [vmem:[#allocation2 + $0x30] sm:$0xe]
      %v2115 = vld [vmem:[#allocation2 + $0x3c] sm:$0xe]
      %v2116 = vld [vmem:[#allocation2 + $0x48] sm:$0xe]
      %v2117 = vld [vmem:[#allocation2 + $0x54] sm:$0xe]
      %v2118 = vld [vmem:[#allocation2 + $0x60] sm:$0xe]
      %v2119 = vld [vmem:[#allocation2 + $0x6c] sm:$0xe]
      %v2120 = vld [vmem:[#allocation2 + $0x78] sm:$0xe]
      %v2121 = vld [vmem:[#allocation2 + $0x84] sm:$0xe]
      %v2122 = vld [vmem:[#allocation2 + $0x90] sm:$0xe]
      %v2123 = vld [vmem:[#allocation2 + $0x9c] sm:$0xe]
      %v2124 = vld [vmem:[#allocation2 + $0xa8] sm:$0xe]
      %v2125 = vld [vmem:[#allocation2 + $0xb4] sm:$0xe]
      %vm2158 = vcmask 1042432
      %vm2159 = vcmask 1046532
      %vm2160 = vmor %vm2158, %vm2159
      %v2161 = vrot.slane %v2110, 5
      %v2162 = vrot.slane %v2161, 4
      %v2163 = vrot.slane %v1065, 5
      %v2164 = vsel %vm2160, %v2162, %v2163
      %v2165 = vrot.slane %v2163, 4
      %v2166 = vrot.slane %v1112, 5
      %v2167 = vsel %vm2160, %v2165, %v2166
      %v2168 = vrot.slane %v2111, 5
      %v2169 = vrot.slane %v2168, 4
      %v2170 = vrot.slane %v1067, 5
      %v2171 = vsel %vm2160, %v2169, %v2170
      %v2172 = vrot.slane %v2170, 4
      %v2173 = vrot.slane %v1113, 5
      %v2174 = vsel %vm2160, %v2172, %v2173
      %v2175 = vrot.slane %v2112, 5
      %v2176 = vrot.slane %v2175, 4
      %v2177 = vrot.slane %v1069, 5
      %v2178 = vsel %vm2160, %v2176, %v2177
      %v2179 = vrot.slane %v2177, 4
      %v2180 = vrot.slane %v1114, 5
      %v2181 = vsel %vm2160, %v2179, %v2180
      %v2182 = vrot.slane %v2113, 5
      %v2183 = vrot.slane %v2182, 4
      %v2184 = vrot.slane %v1071, 5
      %v2185 = vsel %vm2160, %v2183, %v2184
      %v2186 = vrot.slane %v2184, 4
      %v2187 = vrot.slane %v1115, 5
      %v2188 = vsel %vm2160, %v2186, %v2187
      %v2189 = vrot.slane %v2114, 5
      %v2190 = vrot.slane %v2189, 4
      %v2191 = vrot.slane %v1073, 5
      %v2192 = vsel %vm2160, %v2190, %v2191
      %v2193 = vrot.slane %v2191, 4
      %v2194 = vrot.slane %v1116, 5
      %v2195 = vsel %vm2160, %v2193, %v2194
      %v2196 = vrot.slane %v2115, 5
      %v2197 = vrot.slane %v2196, 4
      %v2198 = vrot.slane %v1075, 5
      %v2199 = vsel %vm2160, %v2197, %v2198
      %v2200 = vrot.slane %v2198, 4
      %v2201 = vrot.slane %v1117, 5
      %v2202 = vsel %vm2160, %v2200, %v2201
      %v2203 = vrot.slane %v2116, 5
      %v2204 = vrot.slane %v2203, 4
      %v2205 = vrot.slane %v1077, 5
      %v2206 = vsel %vm2160, %v2204, %v2205
      %v2207 = vrot.slane %v2205, 4
      %v2208 = vrot.slane %v1118, 5
      %v2209 = vsel %vm2160, %v2207, %v2208
      %v2210 = vrot.slane %v2117, 5
      %v2211 = vrot.slane %v2210, 4
      %v2212 = vrot.slane %v1079, 5
      %v2213 = vsel %vm2160, %v2211, %v2212
      %v2214 = vrot.slane %v2212, 4
      %v2215 = vrot.slane %v1119, 5
      %v2216 = vsel %vm2160, %v2214, %v2215
      %v2217 = vrot.slane %v2118, 5
      %v2218 = vrot.slane %v2217, 4
      %v2219 = vrot.slane %v1081, 5
      %v2220 = vsel %vm2160, %v2218, %v2219
      %v2221 = vrot.slane %v2219, 4
      %v2222 = vrot.slane %v1120, 5
      %v2223 = vsel %vm2160, %v2221, %v2222
      %v2224 = vrot.slane %v2119, 5
      %v2225 = vrot.slane %v2224, 4
      %v2226 = vrot.slane %v1083, 5
      %v2227 = vsel %vm2160, %v2225, %v2226
      %v2228 = vrot.slane %v2226, 4
      %v2229 = vrot.slane %v1121, 5
      %v2230 = vsel %vm2160, %v2228, %v2229
      %v2231 = vrot.slane %v2120, 5
      %v2232 = vrot.slane %v2231, 4
      %v2233 = vrot.slane %v1085, 5
      %v2234 = vsel %vm2160, %v2232, %v2233
      %v2235 = vrot.slane %v2233, 4
      %v2236 = vrot.slane %v1122, 5
      %v2237 = vsel %vm2160, %v2235, %v2236
      %v2238 = vrot.slane %v2121, 5
      %v2239 = vrot.slane %v2238, 4
      %v2240 = vrot.slane %v1087, 5
      %v2241 = vsel %vm2160, %v2239, %v2240
      %v2242 = vrot.slane %v2240, 4
      %v2243 = vrot.slane %v1123, 5
      %v2244 = vsel %vm2160, %v2242, %v2243
      %v2245 = vrot.slane %v2122, 5
      %v2246 = vrot.slane %v2245, 4
      %v2247 = vrot.slane %v1089, 5
      %v2248 = vsel %vm2160, %v2246, %v2247
      %v2249 = vrot.slane %v2247, 4
      %v2250 = vrot.slane %v1124, 5
      %v2251 = vsel %vm2160, %v2249, %v2250
      %v2252 = vrot.slane %v2123, 5
      %v2253 = vrot.slane %v2252, 4
      %v2254 = vrot.slane %v1091, 5
      %v2255 = vsel %vm2160, %v2253, %v2254
      %v2256 = vrot.slane %v2254, 4
      %v2257 = vrot.slane %v1125, 5
      %v2258 = vsel %vm2160, %v2256, %v2257
      %v2259 = vrot.slane %v2124, 5
      %v2260 = vrot.slane %v2259, 4
      %v2261 = vrot.slane %v1093, 5
      %v2262 = vsel %vm2160, %v2260, %v2261
      %v2263 = vrot.slane %v2261, 4
      %v2264 = vrot.slane %v1126, 5
      %v2265 = vsel %vm2160, %v2263, %v2264
      %v2266 = vrot.slane %v2125, 5
      %v2267 = vrot.slane %v2266, 4
      %v2268 = vrot.slane %v1095, 5
      %v2269 = vsel %vm2160, %v2267, %v2268
      %v2270 = vrot.slane %v2268, 4
      %v2271 = vrot.slane %v1127, 5
      %v2272 = vsel %vm2160, %v2270, %v2271
      %s2273 = scalar_lea.vmem %s3, 128
      %v2274 = vld [vmem:[%s2273] sm:$0xf]
      %v2275 = vld [vmem:[%s2273 + $0x4] sm:$0xf]
      %v2276 = vld [vmem:[%s2273 + $0x8] sm:$0xf]
      %v2277 = vld [vmem:[%s2273 + $0xc] sm:$0xf]
      %v2278 = vld [vmem:[%s2273 + $0x10] sm:$0xf]
      %v2279 = vld [vmem:[%s2273 + $0x14] sm:$0xf]
      %v2280 = vld [vmem:[%s2273 + $0x18] sm:$0xf]
      %v2281 = vld [vmem:[%s2273 + $0x1c] sm:$0xf]
      %v2282 = vld [vmem:[%s2273 + $0x20] sm:$0xf]
      %v2283 = vld [vmem:[%s2273 + $0x24] sm:$0xf]
      %v2284 = vld [vmem:[%s2273 + $0x28] sm:$0xf]
      %v2285 = vld [vmem:[%s2273 + $0x2c] sm:$0xf]
      %v2286 = vld [vmem:[%s2273 + $0x30] sm:$0xf]
      %v2287 = vld [vmem:[%s2273 + $0x34] sm:$0xf]
      %v2288 = vld [vmem:[%s2273 + $0x38] sm:$0xf]
      %v2289 = vld [vmem:[%s2273 + $0x3c] sm:$0xf]
      %v2290 = vunpack.c.l.b16 %v2164
      %v2291 = vunpack.c.l.b16 %v2167
      %v2292 = vunpack.c.l.b16 %v2171
      %v2293 = vunpack.c.l.b16 %v2174
      %v2294 = vunpack.c.l.b16 %v2178
      %v2295 = vunpack.c.l.b16 %v2181
      %v2296 = vunpack.c.l.b16 %v2185
      %v2297 = vunpack.c.l.b16 %v2188
      %v2298 = vunpack.c.l.b16 %v2192
      %v2299 = vunpack.c.l.b16 %v2195
      %v2300 = vunpack.c.l.b16 %v2199
      %v2301 = vunpack.c.l.b16 %v2202
      %v2302 = vunpack.c.l.b16 %v2206
      %v2303 = vunpack.c.l.b16 %v2209
      %v2304 = vunpack.c.l.b16 %v2213
      %v2305 = vunpack.c.l.b16 %v2216
      %v2306 = vunpack.c.l.b16 %v2220
      %v2307 = vunpack.c.l.b16 %v2223
      %v2308 = vunpack.c.l.b16 %v2227
      %v2309 = vunpack.c.l.b16 %v2230
      %v2310 = vunpack.c.l.b16 %v2234
      %v2311 = vunpack.c.l.b16 %v2237
      %v2312 = vunpack.c.l.b16 %v2241
      %v2313 = vunpack.c.l.b16 %v2244
      %v2314 = vunpack.c.l.b16 %v2248
      %v2315 = vunpack.c.l.b16 %v2251
      %v2316 = vunpack.c.l.b16 %v2255
      %v2317 = vunpack.c.l.b16 %v2258
      %v2318 = vunpack.c.l.b16 %v2262
      %v2319 = vunpack.c.l.b16 %v2265
      %v2320 = vunpack.c.l.b16 %v2269
      %v2321 = vunpack.c.l.b16 %v2272
      %v2322 = vpack.c.b16 %v2291, %v2290
      %v2323 = vpack.c.b16 %v2293, %v2292
      %v2324 = vpack.c.b16 %v2295, %v2294
      %v2325 = vpack.c.b16 %v2297, %v2296
      %v2326 = vpack.c.b16 %v2299, %v2298
      %v2327 = vpack.c.b16 %v2301, %v2300
      %v2328 = vpack.c.b16 %v2303, %v2302
      %v2329 = vpack.c.b16 %v2305, %v2304
      %v2330 = vpack.c.b16 %v2307, %v2306
      %v2331 = vpack.c.b16 %v2309, %v2308
      %v2332 = vpack.c.b16 %v2311, %v2310
      %v2333 = vpack.c.b16 %v2313, %v2312
      %v2334 = vpack.c.b16 %v2315, %v2314
      %v2335 = vpack.c.b16 %v2317, %v2316
      %v2336 = vpack.c.b16 %v2319, %v2318
      %v2337 = vpack.c.b16 %v2321, %v2320
      %v2370 = vunpack.c.l.b16 %v2274
      %v2371 = vunpack.c.l.b16 %v2275
      %v2372 = vunpack.c.l.b16 %v2276
      %v2373 = vunpack.c.l.b16 %v2277
      %v2374 = vunpack.c.l.b16 %v2278
      %v2375 = vunpack.c.l.b16 %v2279
      %v2376 = vunpack.c.l.b16 %v2280
      %v2377 = vunpack.c.l.b16 %v2281
      %v2378 = vunpack.c.l.b16 %v2282
      %v2379 = vunpack.c.l.b16 %v2283
      %v2380 = vunpack.c.l.b16 %v2284
      %v2381 = vunpack.c.l.b16 %v2285
      %v2382 = vunpack.c.l.b16 %v2286
      %v2383 = vunpack.c.l.b16 %v2287
      %v2384 = vunpack.c.l.b16 %v2288
      %v2385 = vunpack.c.l.b16 %v2289
      %v2386 = vpack.c.b16 %v2371, %v2370
      %v2387 = vpack.c.b16 %v2373, %v2372
      %v2388 = vpack.c.b16 %v2375, %v2374
      %v2389 = vpack.c.b16 %v2377, %v2376
      %v2390 = vpack.c.b16 %v2379, %v2378
      %v2391 = vpack.c.b16 %v2381, %v2380
      %v2392 = vpack.c.b16 %v2383, %v2382
      %v2393 = vpack.c.b16 %v2385, %v2384
      %2402 = vmatprep.subr.bf16.mxu0 0
      %2403 = vmatpush1.bf16.msra.mxu0 %v2393
      %2404 = vmatprep.subr.bf16.mxu0 0
      %2405 = vmatpush1.bf16.msra.mxu0 %v2392
      %2406 = vmatprep.subr.bf16.mxu0 0
      %2407 = vmatpush1.bf16.msra.mxu0 %v2391
      %2408 = vmatprep.subr.bf16.mxu0 0
      %2409 = vmatpush1.bf16.msra.mxu0 %v2390
      %2410 = vmatprep.subr.bf16.mxu0 0
      %2411 = vmatpush1.bf16.msra.mxu0 %v2389
      %2412 = vmatprep.subr.bf16.mxu0 0
      %2413 = vmatpush1.bf16.msra.mxu0 %v2388
      %2414 = vmatprep.subr.bf16.mxu0 0
      %2415 = vmatpush1.bf16.msra.mxu0 %v2387
      %2416 = vmatprep.subr.bf16.mxu0 0
      %2417 = vmatpush1.bf16.msra.mxu0 %v2386
      %2418 = vmatprep.subr.bf16.mxu0 0
      %2419 = vmatpush2.bf16.msra.mxu0 0
      %2420 = vmatprep.subr.bf16.mxu0 0
      %2421 = vmatpush2.bf16.msra.mxu0 0
      %2422 = vmatprep.subr.bf16.mxu0 0
      %2423 = vmatpush2.bf16.msra.mxu0 0
      %2424 = vmatprep.subr.bf16.mxu0 0
      %2425 = vmatpush2.bf16.msra.mxu0 0
      %2426 = vmatprep.subr.bf16.mxu0 0
      %2427 = vmatpush2.bf16.msra.mxu0 0
      %2428 = vmatprep.subr.bf16.mxu0 0
      %2429 = vmatpush2.bf16.msra.mxu0 0
      %2430 = vmatprep.subr.bf16.mxu0 0
      %2431 = vmatpush2.bf16.msra.mxu0 0
      %2432 = vmatprep.subr.bf16.mxu0 0
      %2433 = vmatpush2.bf16.msra.mxu0 0
      %2434 = vmatprep.mubr.bf16.mxu0 0
      %2435 = vmatmul.mubr.bf16.gmra.mxu0 %v2322
      %v2436 = vpop.f32.mrf.mxu0
      %v2437 = vadd.f32 0.0, %v2436
      %v2438 = vpop.f32.mrf.mxu0
      %v2439 = vpop.f32.mrf.mxu0
      %v2440 = vadd.f32 0.0, %v2439
      %v2441 = vpop.f32.mrf.mxu0
      %2442 = vmatprep.mubr.bf16.mxu0 0
      %2443 = vmatmul.mubr.bf16.gmra.mxu0 %v2323
      %v2444 = vpop.f32.mrf.mxu0
      %v2445 = vadd.f32 0.0, %v2444
      %v2446 = vpop.f32.mrf.mxu0
      %v2447 = vpop.f32.mrf.mxu0
      %v2448 = vadd.f32 0.0, %v2447
      %v2449 = vpop.f32.mrf.mxu0
      %2450 = vmatprep.mubr.bf16.mxu0 0
      %2451 = vmatmul.mubr.bf16.gmra.mxu0 %v2324
      %v2452 = vpop.f32.mrf.mxu0
      %v2453 = vadd.f32 0.0, %v2452
      %v2454 = vpop.f32.mrf.mxu0
      %v2455 = vpop.f32.mrf.mxu0
      %v2456 = vadd.f32 0.0, %v2455
      %v2457 = vpop.f32.mrf.mxu0
      %2458 = vmatprep.mubr.bf16.mxu0 0
      %2459 = vmatmul.mubr.bf16.gmra.mxu0 %v2325
      %v2460 = vpop.f32.mrf.mxu0
      %v2461 = vadd.f32 0.0, %v2460
      %v2462 = vpop.f32.mrf.mxu0
      %v2463 = vpop.f32.mrf.mxu0
      %v2464 = vadd.f32 0.0, %v2463
      %v2465 = vpop.f32.mrf.mxu0
      %2466 = vmatprep.mubr.bf16.mxu0 0
      %2467 = vmatmul.mubr.bf16.gmra.mxu0 %v2326
      %v2468 = vpop.f32.mrf.mxu0
      %v2469 = vadd.f32 0.0, %v2468
      %v2470 = vpop.f32.mrf.mxu0
      %v2471 = vpop.f32.mrf.mxu0
      %v2472 = vadd.f32 0.0, %v2471
      %v2473 = vpop.f32.mrf.mxu0
      %2474 = vmatprep.mubr.bf16.mxu0 0
      %2475 = vmatmul.mubr.bf16.gmra.mxu0 %v2327
      %v2476 = vpop.f32.mrf.mxu0
      %v2477 = vadd.f32 0.0, %v2476
      %v2478 = vpop.f32.mrf.mxu0
      %v2479 = vpop.f32.mrf.mxu0
      %v2480 = vadd.f32 0.0, %v2479
      %v2481 = vpop.f32.mrf.mxu0
      %2482 = vmatprep.mubr.bf16.mxu0 0
      %2483 = vmatmul.mubr.bf16.gmra.mxu0 %v2328
      %v2484 = vpop.f32.mrf.mxu0
      %v2485 = vadd.f32 0.0, %v2484
      %v2486 = vpop.f32.mrf.mxu0
      %v2487 = vpop.f32.mrf.mxu0
      %v2488 = vadd.f32 0.0, %v2487
      %v2489 = vpop.f32.mrf.mxu0
      %2490 = vmatprep.mubr.bf16.mxu0 0
      %2491 = vmatmul.mubr.bf16.gmra.mxu0 %v2329
      %v2492 = vpop.f32.mrf.mxu0
      %v2493 = vadd.f32 0.0, %v2492
      %v2494 = vpop.f32.mrf.mxu0
      %v2495 = vpop.f32.mrf.mxu0
      %v2496 = vadd.f32 0.0, %v2495
      %v2497 = vpop.f32.mrf.mxu0
      %2498 = vmatprep.mubr.bf16.mxu0 0
      %2499 = vmatmul.mubr.bf16.gmra.mxu0 %v2330
      %v2500 = vpop.f32.mrf.mxu0
      %v2501 = vadd.f32 0.0, %v2500
      %v2502 = vpop.f32.mrf.mxu0
      %v2503 = vpop.f32.mrf.mxu0
      %v2504 = vadd.f32 0.0, %v2503
      %v2505 = vpop.f32.mrf.mxu0
      %2506 = vmatprep.mubr.bf16.mxu0 0
      %2507 = vmatmul.mubr.bf16.gmra.mxu0 %v2331
      %v2508 = vpop.f32.mrf.mxu0
      %v2509 = vadd.f32 0.0, %v2508
      %v2510 = vpop.f32.mrf.mxu0
      %v2511 = vpop.f32.mrf.mxu0
      %v2512 = vadd.f32 0.0, %v2511
      %v2513 = vpop.f32.mrf.mxu0
      %2514 = vmatprep.mubr.bf16.mxu0 0
      %2515 = vmatmul.mubr.bf16.gmra.mxu0 %v2332
      %v2516 = vpop.f32.mrf.mxu0
      %v2517 = vadd.f32 0.0, %v2516
      %v2518 = vpop.f32.mrf.mxu0
      %v2519 = vpop.f32.mrf.mxu0
      %v2520 = vadd.f32 0.0, %v2519
      %v2521 = vpop.f32.mrf.mxu0
      %2522 = vmatprep.mubr.bf16.mxu0 0
      %2523 = vmatmul.mubr.bf16.gmra.mxu0 %v2333
      %v2524 = vpop.f32.mrf.mxu0
      %v2525 = vadd.f32 0.0, %v2524
      %v2526 = vpop.f32.mrf.mxu0
      %v2527 = vpop.f32.mrf.mxu0
      %v2528 = vadd.f32 0.0, %v2527
      %v2529 = vpop.f32.mrf.mxu0
      %2530 = vmatprep.mubr.bf16.mxu0 0
      %2531 = vmatmul.mubr.bf16.gmra.mxu0 %v2334
      %v2532 = vpop.f32.mrf.mxu0
      %v2533 = vadd.f32 0.0, %v2532
      %v2534 = vpop.f32.mrf.mxu0
      %v2535 = vpop.f32.mrf.mxu0
      %v2536 = vadd.f32 0.0, %v2535
      %v2537 = vpop.f32.mrf.mxu0
      %2538 = vmatprep.mubr.bf16.mxu0 0
      %2539 = vmatmul.mubr.bf16.gmra.mxu0 %v2335
      %v2540 = vpop.f32.mrf.mxu0
      %v2541 = vadd.f32 0.0, %v2540
      %v2542 = vpop.f32.mrf.mxu0
      %v2543 = vpop.f32.mrf.mxu0
      %v2544 = vadd.f32 0.0, %v2543
      %v2545 = vpop.f32.mrf.mxu0
      %2546 = vmatprep.mubr.bf16.mxu0 0
      %2547 = vmatmul.mubr.bf16.gmra.mxu0 %v2336
      %v2548 = vpop.f32.mrf.mxu0
      %v2549 = vadd.f32 0.0, %v2548
      %v2550 = vpop.f32.mrf.mxu0
      %v2551 = vpop.f32.mrf.mxu0
      %v2552 = vadd.f32 0.0, %v2551
      %v2553 = vpop.f32.mrf.mxu0
      %2554 = vmatprep.mubr.bf16.mxu0 0
      %2555 = vmatmul.mubr.bf16.gmra.mxu0 %v2337
      %v2556 = vpop.f32.mrf.mxu0
      %v2557 = vadd.f32 0.0, %v2556
      %v2558 = vpop.f32.mrf.mxu0
      %v2559 = vpop.f32.mrf.mxu0
      %v2560 = vadd.f32 0.0, %v2559
      %v2561 = vpop.f32.mrf.mxu0
      %2562 = vdwg.mxu0
      %v2563 = vadd.f32 %v1984, %v2437
      %v2564 = vadd.f32 %v1987, %v2440
      %v2565 = vadd.f32 %v1992, %v2445
      %v2566 = vadd.f32 %v1995, %v2448
      %v2567 = vadd.f32 %v2000, %v2453
      %v2568 = vadd.f32 %v2003, %v2456
      %v2569 = vadd.f32 %v2008, %v2461
      %v2570 = vadd.f32 %v2011, %v2464
      %v2571 = vadd.f32 %v2016, %v2469
      %v2572 = vadd.f32 %v2019, %v2472
      %v2573 = vadd.f32 %v2024, %v2477
      %v2574 = vadd.f32 %v2027, %v2480
      %v2575 = vadd.f32 %v2032, %v2485
      %v2576 = vadd.f32 %v2035, %v2488
      %v2577 = vadd.f32 %v2040, %v2493
      %v2578 = vadd.f32 %v2043, %v2496
      %v2579 = vadd.f32 %v2048, %v2501
      %v2580 = vadd.f32 %v2051, %v2504
      %v2581 = vadd.f32 %v2056, %v2509
      %v2582 = vadd.f32 %v2059, %v2512
      %v2583 = vadd.f32 %v2064, %v2517
      %v2584 = vadd.f32 %v2067, %v2520
      %v2585 = vadd.f32 %v2072, %v2525
      %v2586 = vadd.f32 %v2075, %v2528
      %v2587 = vadd.f32 %v2080, %v2533
      %v2588 = vadd.f32 %v2083, %v2536
      %v2589 = vadd.f32 %v2088, %v2541
      %v2590 = vadd.f32 %v2091, %v2544
      %v2591 = vadd.f32 %v2096, %v2549
      %v2592 = vadd.f32 %v2099, %v2552
      %v2593 = vadd.f32 %v2104, %v2557
      %v2594 = vadd.f32 %v2107, %v2560
      %v2595 = vld [vmem:[%s949] sm:$0xf]
      %v2596 = vld [vmem:[%s949 + $0x4] sm:$0xf]
      %v2597 = vld [vmem:[%s949 + $0xc] sm:$0xf]
      %v2598 = vld [vmem:[%s949 + $0x10] sm:$0xf]
      %v2599 = vld [vmem:[%s949 + $0x18] sm:$0xf]
      %v2600 = vld [vmem:[%s949 + $0x1c] sm:$0xf]
      %v2601 = vld [vmem:[%s949 + $0x24] sm:$0xf]
      %v2602 = vld [vmem:[%s949 + $0x28] sm:$0xf]
      %v2603 = vld [vmem:[%s949 + $0x30] sm:$0xf]
      %v2604 = vld [vmem:[%s949 + $0x34] sm:$0xf]
      %v2605 = vld [vmem:[%s949 + $0x3c] sm:$0xf]
      %v2606 = vld [vmem:[%s949 + $0x40] sm:$0xf]
      %v2607 = vld [vmem:[%s949 + $0x48] sm:$0xf]
      %v2608 = vld [vmem:[%s949 + $0x4c] sm:$0xf]
      %v2609 = vld [vmem:[%s949 + $0x54] sm:$0xf]
      %v2610 = vld [vmem:[%s949 + $0x58] sm:$0xf]
      %v2611 = vld [vmem:[%s949 + $0x60] sm:$0xf]
      %v2612 = vld [vmem:[%s949 + $0x64] sm:$0xf]
      %v2613 = vld [vmem:[%s949 + $0x6c] sm:$0xf]
      %v2614 = vld [vmem:[%s949 + $0x70] sm:$0xf]
      %v2615 = vld [vmem:[%s949 + $0x78] sm:$0xf]
      %v2616 = vld [vmem:[%s949 + $0x7c] sm:$0xf]
      %v2617 = vld [vmem:[%s949 + $0x84] sm:$0xf]
      %v2618 = vld [vmem:[%s949 + $0x88] sm:$0xf]
      %v2619 = vld [vmem:[%s949 + $0x90] sm:$0xf]
      %v2620 = vld [vmem:[%s949 + $0x94] sm:$0xf]
      %v2621 = vld [vmem:[%s949 + $0x9c] sm:$0xf]
      %v2622 = vld [vmem:[%s949 + $0xa0] sm:$0xf]
      %v2623 = vld [vmem:[%s949 + $0xa8] sm:$0xf]
      %v2624 = vld [vmem:[%s949 + $0xac] sm:$0xf]
      %v2625 = vld [vmem:[%s949 + $0xb4] sm:$0xf]
      %v2626 = vld [vmem:[%s949 + $0xb8] sm:$0xf]
      %s2627 = scalar_lea.vmem %s3, 192
      %v2628 = vld [vmem:[%s2627] sm:$0xf]
      %v2629 = vld [vmem:[%s2627 + $0x4] sm:$0xf]
      %v2630 = vld [vmem:[%s2627 + $0x8] sm:$0xf]
      %v2631 = vld [vmem:[%s2627 + $0xc] sm:$0xf]
      %v2632 = vld [vmem:[%s2627 + $0x10] sm:$0xf]
      %v2633 = vld [vmem:[%s2627 + $0x14] sm:$0xf]
      %v2634 = vld [vmem:[%s2627 + $0x18] sm:$0xf]
      %v2635 = vld [vmem:[%s2627 + $0x1c] sm:$0xf]
      %v2636 = vld [vmem:[%s2627 + $0x20] sm:$0xf]
      %v2637 = vld [vmem:[%s2627 + $0x24] sm:$0xf]
      %v2638 = vld [vmem:[%s2627 + $0x28] sm:$0xf]
      %v2639 = vld [vmem:[%s2627 + $0x2c] sm:$0xf]
      %v2640 = vld [vmem:[%s2627 + $0x30] sm:$0xf]
      %v2641 = vld [vmem:[%s2627 + $0x34] sm:$0xf]
      %v2642 = vld [vmem:[%s2627 + $0x38] sm:$0xf]
      %v2643 = vld [vmem:[%s2627 + $0x3c] sm:$0xf]
      %v2676 = vunpack.c.l.b16 %v2595
      %v2677 = vunpack.c.l.b16 %v2596
      %v2678 = vunpack.c.l.b16 %v2597
      %v2679 = vunpack.c.l.b16 %v2598
      %v2680 = vunpack.c.l.b16 %v2599
      %v2681 = vunpack.c.l.b16 %v2600
      %v2682 = vunpack.c.l.b16 %v2601
      %v2683 = vunpack.c.l.b16 %v2602
      %v2684 = vunpack.c.l.b16 %v2603
      %v2685 = vunpack.c.l.b16 %v2604
      %v2686 = vunpack.c.l.b16 %v2605
      %v2687 = vunpack.c.l.b16 %v2606
      %v2688 = vunpack.c.l.b16 %v2607
      %v2689 = vunpack.c.l.b16 %v2608
      %v2690 = vunpack.c.l.b16 %v2609
      %v2691 = vunpack.c.l.b16 %v2610
      %v2692 = vunpack.c.l.b16 %v2611
      %v2693 = vunpack.c.l.b16 %v2612
      %v2694 = vunpack.c.l.b16 %v2613
      %v2695 = vunpack.c.l.b16 %v2614
      %v2696 = vunpack.c.l.b16 %v2615
      %v2697 = vunpack.c.l.b16 %v2616
      %v2698 = vunpack.c.l.b16 %v2617
      %v2699 = vunpack.c.l.b16 %v2618
      %v2700 = vunpack.c.l.b16 %v2619
      %v2701 = vunpack.c.l.b16 %v2620
      %v2702 = vunpack.c.l.b16 %v2621
      %v2703 = vunpack.c.l.b16 %v2622
      %v2704 = vunpack.c.l.b16 %v2623
      %v2705 = vunpack.c.l.b16 %v2624
      %v2706 = vunpack.c.l.b16 %v2625
      %v2707 = vunpack.c.l.b16 %v2626
      %v2708 = vpack.c.b16 %v2677, %v2676
      %v2709 = vpack.c.b16 %v2679, %v2678
      %v2710 = vpack.c.b16 %v2681, %v2680
      %v2711 = vpack.c.b16 %v2683, %v2682
      %v2712 = vpack.c.b16 %v2685, %v2684
      %v2713 = vpack.c.b16 %v2687, %v2686
      %v2714 = vpack.c.b16 %v2689, %v2688
      %v2715 = vpack.c.b16 %v2691, %v2690
      %v2716 = vpack.c.b16 %v2693, %v2692
      %v2717 = vpack.c.b16 %v2695, %v2694
      %v2718 = vpack.c.b16 %v2697, %v2696
      %v2719 = vpack.c.b16 %v2699, %v2698
      %v2720 = vpack.c.b16 %v2701, %v2700
      %v2721 = vpack.c.b16 %v2703, %v2702
      %v2722 = vpack.c.b16 %v2705, %v2704
      %v2723 = vpack.c.b16 %v2707, %v2706
      %v2756 = vunpack.c.l.b16 %v2628
      %v2757 = vunpack.c.l.b16 %v2629
      %v2758 = vunpack.c.l.b16 %v2630
      %v2759 = vunpack.c.l.b16 %v2631
      %v2760 = vunpack.c.l.b16 %v2632
      %v2761 = vunpack.c.l.b16 %v2633
      %v2762 = vunpack.c.l.b16 %v2634
      %v2763 = vunpack.c.l.b16 %v2635
      %v2764 = vunpack.c.l.b16 %v2636
      %v2765 = vunpack.c.l.b16 %v2637
      %v2766 = vunpack.c.l.b16 %v2638
      %v2767 = vunpack.c.l.b16 %v2639
      %v2768 = vunpack.c.l.b16 %v2640
      %v2769 = vunpack.c.l.b16 %v2641
      %v2770 = vunpack.c.l.b16 %v2642
      %v2771 = vunpack.c.l.b16 %v2643
      %v2772 = vpack.c.b16 %v2757, %v2756
      %v2773 = vpack.c.b16 %v2759, %v2758
      %v2774 = vpack.c.b16 %v2761, %v2760
      %v2775 = vpack.c.b16 %v2763, %v2762
      %v2776 = vpack.c.b16 %v2765, %v2764
      %v2777 = vpack.c.b16 %v2767, %v2766
      %v2778 = vpack.c.b16 %v2769, %v2768
      %v2779 = vpack.c.b16 %v2771, %v2770
      %2788 = vmatprep.subr.bf16.mxu0 0
      %2789 = vmatpush1.bf16.msra.mxu0 %v2779
      %2790 = vmatprep.subr.bf16.mxu0 0
      %2791 = vmatpush1.bf16.msra.mxu0 %v2778
      %2792 = vmatprep.subr.bf16.mxu0 0
      %2793 = vmatpush1.bf16.msra.mxu0 %v2777
      %2794 = vmatprep.subr.bf16.mxu0 0
      %2795 = vmatpush1.bf16.msra.mxu0 %v2776
      %2796 = vmatprep.subr.bf16.mxu0 0
      %2797 = vmatpush1.bf16.msra.mxu0 %v2775
      %2798 = vmatprep.subr.bf16.mxu0 0
      %2799 = vmatpush1.bf16.msra.mxu0 %v2774
      %2800 = vmatprep.subr.bf16.mxu0 0
      %2801 = vmatpush1.bf16.msra.mxu0 %v2773
      %2802 = vmatprep.subr.bf16.mxu0 0
      %2803 = vmatpush1.bf16.msra.mxu0 %v2772
      %2804 = vmatprep.subr.bf16.mxu0 0
      %2805 = vmatpush2.bf16.msra.mxu0 0
      %2806 = vmatprep.subr.bf16.mxu0 0
      %2807 = vmatpush2.bf16.msra.mxu0 0
      %2808 = vmatprep.subr.bf16.mxu0 0
      %2809 = vmatpush2.bf16.msra.mxu0 0
      %2810 = vmatprep.subr.bf16.mxu0 0
      %2811 = vmatpush2.bf16.msra.mxu0 0
      %2812 = vmatprep.subr.bf16.mxu0 0
      %2813 = vmatpush2.bf16.msra.mxu0 0
      %2814 = vmatprep.subr.bf16.mxu0 0
      %2815 = vmatpush2.bf16.msra.mxu0 0
      %2816 = vmatprep.subr.bf16.mxu0 0
      %2817 = vmatpush2.bf16.msra.mxu0 0
      %2818 = vmatprep.subr.bf16.mxu0 0
      %2819 = vmatpush2.bf16.msra.mxu0 0
      %2820 = vmatprep.mubr.bf16.mxu0 0
      %2821 = vmatmul.mubr.bf16.gmra.mxu0 %v2708
      %v2822 = vpop.f32.mrf.mxu0
      %v2823 = vadd.f32 0.0, %v2822
      %v2824 = vpop.f32.mrf.mxu0
      %v2825 = vpop.f32.mrf.mxu0
      %v2826 = vadd.f32 0.0, %v2825
      %v2827 = vpop.f32.mrf.mxu0
      %2828 = vmatprep.mubr.bf16.mxu0 0
      %2829 = vmatmul.mubr.bf16.gmra.mxu0 %v2709
      %v2830 = vpop.f32.mrf.mxu0
      %v2831 = vadd.f32 0.0, %v2830
      %v2832 = vpop.f32.mrf.mxu0
      %v2833 = vpop.f32.mrf.mxu0
      %v2834 = vadd.f32 0.0, %v2833
      %v2835 = vpop.f32.mrf.mxu0
      %2836 = vmatprep.mubr.bf16.mxu0 0
      %2837 = vmatmul.mubr.bf16.gmra.mxu0 %v2710
      %v2838 = vpop.f32.mrf.mxu0
      %v2839 = vadd.f32 0.0, %v2838
      %v2840 = vpop.f32.mrf.mxu0
      %v2841 = vpop.f32.mrf.mxu0
      %v2842 = vadd.f32 0.0, %v2841
      %v2843 = vpop.f32.mrf.mxu0
      %2844 = vmatprep.mubr.bf16.mxu0 0
      %2845 = vmatmul.mubr.bf16.gmra.mxu0 %v2711
      %v2846 = vpop.f32.mrf.mxu0
      %v2847 = vadd.f32 0.0, %v2846
      %v2848 = vpop.f32.mrf.mxu0
      %v2849 = vpop.f32.mrf.mxu0
      %v2850 = vadd.f32 0.0, %v2849
      %v2851 = vpop.f32.mrf.mxu0
      %2852 = vmatprep.mubr.bf16.mxu0 0
      %2853 = vmatmul.mubr.bf16.gmra.mxu0 %v2712
      %v2854 = vpop.f32.mrf.mxu0
      %v2855 = vadd.f32 0.0, %v2854
      %v2856 = vpop.f32.mrf.mxu0
      %v2857 = vpop.f32.mrf.mxu0
      %v2858 = vadd.f32 0.0, %v2857
      %v2859 = vpop.f32.mrf.mxu0
      %2860 = vmatprep.mubr.bf16.mxu0 0
      %2861 = vmatmul.mubr.bf16.gmra.mxu0 %v2713
      %v2862 = vpop.f32.mrf.mxu0
      %v2863 = vadd.f32 0.0, %v2862
      %v2864 = vpop.f32.mrf.mxu0
      %v2865 = vpop.f32.mrf.mxu0
      %v2866 = vadd.f32 0.0, %v2865
      %v2867 = vpop.f32.mrf.mxu0
      %2868 = vmatprep.mubr.bf16.mxu0 0
      %2869 = vmatmul.mubr.bf16.gmra.mxu0 %v2714
      %v2870 = vpop.f32.mrf.mxu0
      %v2871 = vadd.f32 0.0, %v2870
      %v2872 = vpop.f32.mrf.mxu0
      %v2873 = vpop.f32.mrf.mxu0
      %v2874 = vadd.f32 0.0, %v2873
      %v2875 = vpop.f32.mrf.mxu0
      %2876 = vmatprep.mubr.bf16.mxu0 0
      %2877 = vmatmul.mubr.bf16.gmra.mxu0 %v2715
      %v2878 = vpop.f32.mrf.mxu0
      %v2879 = vadd.f32 0.0, %v2878
      %v2880 = vpop.f32.mrf.mxu0
      %v2881 = vpop.f32.mrf.mxu0
      %v2882 = vadd.f32 0.0, %v2881
      %v2883 = vpop.f32.mrf.mxu0
      %2884 = vmatprep.mubr.bf16.mxu0 0
      %2885 = vmatmul.mubr.bf16.gmra.mxu0 %v2716
      %v2886 = vpop.f32.mrf.mxu0
      %v2887 = vadd.f32 0.0, %v2886
      %v2888 = vpop.f32.mrf.mxu0
      %v2889 = vpop.f32.mrf.mxu0
      %v2890 = vadd.f32 0.0, %v2889
      %v2891 = vpop.f32.mrf.mxu0
      %2892 = vmatprep.mubr.bf16.mxu0 0
      %2893 = vmatmul.mubr.bf16.gmra.mxu0 %v2717
      %v2894 = vpop.f32.mrf.mxu0
      %v2895 = vadd.f32 0.0, %v2894
      %v2896 = vpop.f32.mrf.mxu0
      %v2897 = vpop.f32.mrf.mxu0
      %v2898 = vadd.f32 0.0, %v2897
      %v2899 = vpop.f32.mrf.mxu0
      %2900 = vmatprep.mubr.bf16.mxu0 0
      %2901 = vmatmul.mubr.bf16.gmra.mxu0 %v2718
      %v2902 = vpop.f32.mrf.mxu0
      %v2903 = vadd.f32 0.0, %v2902
      %v2904 = vpop.f32.mrf.mxu0
      %v2905 = vpop.f32.mrf.mxu0
      %v2906 = vadd.f32 0.0, %v2905
      %v2907 = vpop.f32.mrf.mxu0
      %2908 = vmatprep.mubr.bf16.mxu0 0
      %2909 = vmatmul.mubr.bf16.gmra.mxu0 %v2719
      %v2910 = vpop.f32.mrf.mxu0
      %v2911 = vadd.f32 0.0, %v2910
      %v2912 = vpop.f32.mrf.mxu0
      %v2913 = vpop.f32.mrf.mxu0
      %v2914 = vadd.f32 0.0, %v2913
      %v2915 = vpop.f32.mrf.mxu0
      %2916 = vmatprep.mubr.bf16.mxu0 0
      %2917 = vmatmul.mubr.bf16.gmra.mxu0 %v2720
      %v2918 = vpop.f32.mrf.mxu0
      %v2919 = vadd.f32 0.0, %v2918
      %v2920 = vpop.f32.mrf.mxu0
      %v2921 = vpop.f32.mrf.mxu0
      %v2922 = vadd.f32 0.0, %v2921
      %v2923 = vpop.f32.mrf.mxu0
      %2924 = vmatprep.mubr.bf16.mxu0 0
      %2925 = vmatmul.mubr.bf16.gmra.mxu0 %v2721
      %v2926 = vpop.f32.mrf.mxu0
      %v2927 = vadd.f32 0.0, %v2926
      %v2928 = vpop.f32.mrf.mxu0
      %v2929 = vpop.f32.mrf.mxu0
      %v2930 = vadd.f32 0.0, %v2929
      %v2931 = vpop.f32.mrf.mxu0
      %2932 = vmatprep.mubr.bf16.mxu0 0
      %2933 = vmatmul.mubr.bf16.gmra.mxu0 %v2722
      %v2934 = vpop.f32.mrf.mxu0
      %v2935 = vadd.f32 0.0, %v2934
      %v2936 = vpop.f32.mrf.mxu0
      %v2937 = vpop.f32.mrf.mxu0
      %v2938 = vadd.f32 0.0, %v2937
      %v2939 = vpop.f32.mrf.mxu0
      %2940 = vmatprep.mubr.bf16.mxu0 0
      %2941 = vmatmul.mubr.bf16.gmra.mxu0 %v2723
      %v2942 = vpop.f32.mrf.mxu0
      %v2943 = vadd.f32 0.0, %v2942
      %v2944 = vpop.f32.mrf.mxu0
      %v2945 = vpop.f32.mrf.mxu0
      %v2946 = vadd.f32 0.0, %v2945
      %v2947 = vpop.f32.mrf.mxu0
      %2948 = vdwg.mxu0
      %v2949 = vadd.f32 %v2563, %v2823
      %v2950 = vadd.f32 %v2564, %v2826
      %v2951 = vadd.f32 %v2565, %v2831
      %v2952 = vadd.f32 %v2566, %v2834
      %v2953 = vadd.f32 %v2567, %v2839
      %v2954 = vadd.f32 %v2568, %v2842
      %v2955 = vadd.f32 %v2569, %v2847
      %v2956 = vadd.f32 %v2570, %v2850
      %v2957 = vadd.f32 %v2571, %v2855
      %v2958 = vadd.f32 %v2572, %v2858
      %v2959 = vadd.f32 %v2573, %v2863
      %v2960 = vadd.f32 %v2574, %v2866
      %v2961 = vadd.f32 %v2575, %v2871
      %v2962 = vadd.f32 %v2576, %v2874
      %v2963 = vadd.f32 %v2577, %v2879
      %v2964 = vadd.f32 %v2578, %v2882
      %v2965 = vadd.f32 %v2579, %v2887
      %v2966 = vadd.f32 %v2580, %v2890
      %v2967 = vadd.f32 %v2581, %v2895
      %v2968 = vadd.f32 %v2582, %v2898
      %v2969 = vadd.f32 %v2583, %v2903
      %v2970 = vadd.f32 %v2584, %v2906
      %v2971 = vadd.f32 %v2585, %v2911
      %v2972 = vadd.f32 %v2586, %v2914
      %v2973 = vadd.f32 %v2587, %v2919
      %v2974 = vadd.f32 %v2588, %v2922
      %v2975 = vadd.f32 %v2589, %v2927
      %v2976 = vadd.f32 %v2590, %v2930
      %v2977 = vadd.f32 %v2591, %v2935
      %v2978 = vadd.f32 %v2592, %v2938
      %v2979 = vadd.f32 %v2593, %v2943
      %v2980 = vadd.f32 %v2594, %v2946
      %v2981 = vld [vmem:[%s949] sm:$0xf]
      %v2982 = vld [vmem:[%s949 + $0x4] sm:$0xf]
      %v2983 = vld [vmem:[%s949 + $0x8] sm:$0x1]
      %v2984 = vld [vmem:[%s949 + $0xc] sm:$0xf]
      %v2985 = vld [vmem:[%s949 + $0x10] sm:$0xf]
      %v2986 = vld [vmem:[%s949 + $0x14] sm:$0x1]
      %v2987 = vld [vmem:[%s949 + $0x18] sm:$0xf]
      %v2988 = vld [vmem:[%s949 + $0x1c] sm:$0xf]
      %v2989 = vld [vmem:[%s949 + $0x20] sm:$0x1]
      %v2990 = vld [vmem:[%s949 + $0x24] sm:$0xf]
      %v2991 = vld [vmem:[%s949 + $0x28] sm:$0xf]
      %v2992 = vld [vmem:[%s949 + $0x2c] sm:$0x1]
      %v2993 = vld [vmem:[%s949 + $0x30] sm:$0xf]
      %v2994 = vld [vmem:[%s949 + $0x34] sm:$0xf]
      %v2995 = vld [vmem:[%s949 + $0x38] sm:$0x1]
      %v2996 = vld [vmem:[%s949 + $0x3c] sm:$0xf]
      %v2997 = vld [vmem:[%s949 + $0x40] sm:$0xf]
      %v2998 = vld [vmem:[%s949 + $0x44] sm:$0x1]
      %v2999 = vld [vmem:[%s949 + $0x48] sm:$0xf]
      %v3000 = vld [vmem:[%s949 + $0x4c] sm:$0xf]
      %v3001 = vld [vmem:[%s949 + $0x50] sm:$0x1]
      %v3002 = vld [vmem:[%s949 + $0x54] sm:$0xf]
      %v3003 = vld [vmem:[%s949 + $0x58] sm:$0xf]
      %v3004 = vld [vmem:[%s949 + $0x5c] sm:$0x1]
      %v3005 = vld [vmem:[%s949 + $0x60] sm:$0xf]
      %v3006 = vld [vmem:[%s949 + $0x64] sm:$0xf]
      %v3007 = vld [vmem:[%s949 + $0x68] sm:$0x1]
      %v3008 = vld [vmem:[%s949 + $0x6c] sm:$0xf]
      %v3009 = vld [vmem:[%s949 + $0x70] sm:$0xf]
      %v3010 = vld [vmem:[%s949 + $0x74] sm:$0x1]
      %v3011 = vld [vmem:[%s949 + $0x78] sm:$0xf]
      %v3012 = vld [vmem:[%s949 + $0x7c] sm:$0xf]
      %v3013 = vld [vmem:[%s949 + $0x80] sm:$0x1]
      %v3014 = vld [vmem:[%s949 + $0x84] sm:$0xf]
      %v3015 = vld [vmem:[%s949 + $0x88] sm:$0xf]
      %v3016 = vld [vmem:[%s949 + $0x8c] sm:$0x1]
      %v3017 = vld [vmem:[%s949 + $0x90] sm:$0xf]
      %v3018 = vld [vmem:[%s949 + $0x94] sm:$0xf]
      %v3019 = vld [vmem:[%s949 + $0x98] sm:$0x1]
      %v3020 = vld [vmem:[%s949 + $0x9c] sm:$0xf]
      %v3021 = vld [vmem:[%s949 + $0xa0] sm:$0xf]
      %v3022 = vld [vmem:[%s949 + $0xa4] sm:$0x1]
      %v3023 = vld [vmem:[%s949 + $0xa8] sm:$0xf]
      %v3024 = vld [vmem:[%s949 + $0xac] sm:$0xf]
      %v3025 = vld [vmem:[%s949 + $0xb0] sm:$0x1]
      %v3026 = vld [vmem:[%s949 + $0xb4] sm:$0xf]
      %v3027 = vld [vmem:[%s949 + $0xb8] sm:$0xf]
      %v3028 = vld [vmem:[%s949 + $0xbc] sm:$0x1]
      %v3030 = vshrl.u32 %v2981, 16
      %v3032 = vrot.slane %v3030, 4
      %v3033 = vshll.u32 %v2981, 16
      %v3035 = vrot.slane %v3033, 5
      %v3036 = vor.u32 %v3032, %v3035
      %v3037 = vrot.slane %v3036, 4
      %v3039 = vshll.u32 %v2982, 16
      %v3041 = vrot.slane %v3039, 5
      %v3042 = vsel %vm1130, %v3037, %v3041
      %v3043 = vshrl.u32 %v2982, 16
      %v3045 = vrot.slane %v3043, 4
      %v3046 = vor.u32 %v3045, %v3041
      %v3047 = vrot.slane %v3046, 4
      %v3049 = vshll.u32 %v2983, 16
      %v3051 = vrot.slane %v3049, 5
      %v3052 = vsel %vm1130, %v3047, %v3051
      %v3054 = vshrl.u32 %v2984, 16
      %v3056 = vrot.slane %v3054, 4
      %v3057 = vshll.u32 %v2984, 16
      %v3059 = vrot.slane %v3057, 5
      %v3060 = vor.u32 %v3056, %v3059
      %v3061 = vrot.slane %v3060, 4
      %v3063 = vshll.u32 %v2985, 16
      %v3065 = vrot.slane %v3063, 5
      %v3066 = vsel %vm1130, %v3061, %v3065
      %v3067 = vshrl.u32 %v2985, 16
      %v3069 = vrot.slane %v3067, 4
      %v3070 = vor.u32 %v3069, %v3065
      %v3071 = vrot.slane %v3070, 4
      %v3073 = vshll.u32 %v2986, 16
      %v3075 = vrot.slane %v3073, 5
      %v3076 = vsel %vm1130, %v3071, %v3075
      %v3078 = vshrl.u32 %v2987, 16
      %v3080 = vrot.slane %v3078, 4
      %v3081 = vshll.u32 %v2987, 16
      %v3083 = vrot.slane %v3081, 5
      %v3084 = vor.u32 %v3080, %v3083
      %v3085 = vrot.slane %v3084, 4
      %v3087 = vshll.u32 %v2988, 16
      %v3089 = vrot.slane %v3087, 5
      %v3090 = vsel %vm1130, %v3085, %v3089
      %v3091 = vshrl.u32 %v2988, 16
      %v3093 = vrot.slane %v3091, 4
      %v3094 = vor.u32 %v3093, %v3089
      %v3095 = vrot.slane %v3094, 4
      %v3097 = vshll.u32 %v2989, 16
      %v3099 = vrot.slane %v3097, 5
      %v3100 = vsel %vm1130, %v3095, %v3099
      %v3102 = vshrl.u32 %v2990, 16
      %v3104 = vrot.slane %v3102, 4
      %v3105 = vshll.u32 %v2990, 16
      %v3107 = vrot.slane %v3105, 5
      %v3108 = vor.u32 %v3104, %v3107
      %v3109 = vrot.slane %v3108, 4
      %v3111 = vshll.u32 %v2991, 16
      %v3113 = vrot.slane %v3111, 5
      %v3114 = vsel %vm1130, %v3109, %v3113
      %v3115 = vshrl.u32 %v2991, 16
      %v3117 = vrot.slane %v3115, 4
      %v3118 = vor.u32 %v3117, %v3113
      %v3119 = vrot.slane %v3118, 4
      %v3121 = vshll.u32 %v2992, 16
      %v3123 = vrot.slane %v3121, 5
      %v3124 = vsel %vm1130, %v3119, %v3123
      %v3126 = vshrl.u32 %v2993, 16
      %v3128 = vrot.slane %v3126, 4
      %v3129 = vshll.u32 %v2993, 16
      %v3131 = vrot.slane %v3129, 5
      %v3132 = vor.u32 %v3128, %v3131
      %v3133 = vrot.slane %v3132, 4
      %v3135 = vshll.u32 %v2994, 16
      %v3137 = vrot.slane %v3135, 5
      %v3138 = vsel %vm1130, %v3133, %v3137
      %v3139 = vshrl.u32 %v2994, 16
      %v3141 = vrot.slane %v3139, 4
      %v3142 = vor.u32 %v3141, %v3137
      %v3143 = vrot.slane %v3142, 4
      %v3145 = vshll.u32 %v2995, 16
      %v3147 = vrot.slane %v3145, 5
      %v3148 = vsel %vm1130, %v3143, %v3147
      %v3150 = vshrl.u32 %v2996, 16
      %v3152 = vrot.slane %v3150, 4
      %v3153 = vshll.u32 %v2996, 16
      %v3155 = vrot.slane %v3153, 5
      %v3156 = vor.u32 %v3152, %v3155
      %v3157 = vrot.slane %v3156, 4
      %v3159 = vshll.u32 %v2997, 16
      %v3161 = vrot.slane %v3159, 5
      %v3162 = vsel %vm1130, %v3157, %v3161
      %v3163 = vshrl.u32 %v2997, 16
      %v3165 = vrot.slane %v3163, 4
      %v3166 = vor.u32 %v3165, %v3161
      %v3167 = vrot.slane %v3166, 4
      %v3169 = vshll.u32 %v2998, 16
      %v3171 = vrot.slane %v3169, 5
      %v3172 = vsel %vm1130, %v3167, %v3171
      %v3174 = vshrl.u32 %v2999, 16
      %v3176 = vrot.slane %v3174, 4
      %v3177 = vshll.u32 %v2999, 16
      %v3179 = vrot.slane %v3177, 5
      %v3180 = vor.u32 %v3176, %v3179
      %v3181 = vrot.slane %v3180, 4
      %v3183 = vshll.u32 %v3000, 16
      %v3185 = vrot.slane %v3183, 5
      %v3186 = vsel %vm1130, %v3181, %v3185
      %v3187 = vshrl.u32 %v3000, 16
      %v3189 = vrot.slane %v3187, 4
      %v3190 = vor.u32 %v3189, %v3185
      %v3191 = vrot.slane %v3190, 4
      %v3193 = vshll.u32 %v3001, 16
      %v3195 = vrot.slane %v3193, 5
      %v3196 = vsel %vm1130, %v3191, %v3195
      %v3198 = vshrl.u32 %v3002, 16
      %v3200 = vrot.slane %v3198, 4
      %v3201 = vshll.u32 %v3002, 16
      %v3203 = vrot.slane %v3201, 5
      %v3204 = vor.u32 %v3200, %v3203
      %v3205 = vrot.slane %v3204, 4
      %v3207 = vshll.u32 %v3003, 16
      %v3209 = vrot.slane %v3207, 5
      %v3210 = vsel %vm1130, %v3205, %v3209
      %v3211 = vshrl.u32 %v3003, 16
      %v3213 = vrot.slane %v3211, 4
      %v3214 = vor.u32 %v3213, %v3209
      %v3215 = vrot.slane %v3214, 4
      %v3217 = vshll.u32 %v3004, 16
      %v3219 = vrot.slane %v3217, 5
      %v3220 = vsel %vm1130, %v3215, %v3219
      %v3222 = vshrl.u32 %v3005, 16
      %v3224 = vrot.slane %v3222, 4
      %v3225 = vshll.u32 %v3005, 16
      %v3227 = vrot.slane %v3225, 5
      %v3228 = vor.u32 %v3224, %v3227
      %v3229 = vrot.slane %v3228, 4
      %v3231 = vshll.u32 %v3006, 16
      %v3233 = vrot.slane %v3231, 5
      %v3234 = vsel %vm1130, %v3229, %v3233
      %v3235 = vshrl.u32 %v3006, 16
      %v3237 = vrot.slane %v3235, 4
      %v3238 = vor.u32 %v3237, %v3233
      %v3239 = vrot.slane %v3238, 4
      %v3241 = vshll.u32 %v3007, 16
      %v3243 = vrot.slane %v3241, 5
      %v3244 = vsel %vm1130, %v3239, %v3243
      %v3246 = vshrl.u32 %v3008, 16
      %v3248 = vrot.slane %v3246, 4
      %v3249 = vshll.u32 %v3008, 16
      %v3251 = vrot.slane %v3249, 5
      %v3252 = vor.u32 %v3248, %v3251
      %v3253 = vrot.slane %v3252, 4
      %v3255 = vshll.u32 %v3009, 16
      %v3257 = vrot.slane %v3255, 5
      %v3258 = vsel %vm1130, %v3253, %v3257
      %v3259 = vshrl.u32 %v3009, 16
      %v3261 = vrot.slane %v3259, 4
      %v3262 = vor.u32 %v3261, %v3257
      %v3263 = vrot.slane %v3262, 4
      %v3265 = vshll.u32 %v3010, 16
      %v3267 = vrot.slane %v3265, 5
      %v3268 = vsel %vm1130, %v3263, %v3267
      %v3270 = vshrl.u32 %v3011, 16
      %v3272 = vrot.slane %v3270, 4
      %v3273 = vshll.u32 %v3011, 16
      %v3275 = vrot.slane %v3273, 5
      %v3276 = vor.u32 %v3272, %v3275
      %v3277 = vrot.slane %v3276, 4
      %v3279 = vshll.u32 %v3012, 16
      %v3281 = vrot.slane %v3279, 5
      %v3282 = vsel %vm1130, %v3277, %v3281
      %v3283 = vshrl.u32 %v3012, 16
      %v3285 = vrot.slane %v3283, 4
      %v3286 = vor.u32 %v3285, %v3281
      %v3287 = vrot.slane %v3286, 4
      %v3289 = vshll.u32 %v3013, 16
      %v3291 = vrot.slane %v3289, 5
      %v3292 = vsel %vm1130, %v3287, %v3291
      %v3294 = vshrl.u32 %v3014, 16
      %v3296 = vrot.slane %v3294, 4
      %v3297 = vshll.u32 %v3014, 16
      %v3299 = vrot.slane %v3297, 5
      %v3300 = vor.u32 %v3296, %v3299
      %v3301 = vrot.slane %v3300, 4
      %v3303 = vshll.u32 %v3015, 16
      %v3305 = vrot.slane %v3303, 5
      %v3306 = vsel %vm1130, %v3301, %v3305
      %v3307 = vshrl.u32 %v3015, 16
      %v3309 = vrot.slane %v3307, 4
      %v3310 = vor.u32 %v3309, %v3305
      %v3311 = vrot.slane %v3310, 4
      %v3313 = vshll.u32 %v3016, 16
      %v3315 = vrot.slane %v3313, 5
      %v3316 = vsel %vm1130, %v3311, %v3315
      %v3318 = vshrl.u32 %v3017, 16
      %v3320 = vrot.slane %v3318, 4
      %v3321 = vshll.u32 %v3017, 16
      %v3323 = vrot.slane %v3321, 5
      %v3324 = vor.u32 %v3320, %v3323
      %v3325 = vrot.slane %v3324, 4
      %v3327 = vshll.u32 %v3018, 16
      %v3329 = vrot.slane %v3327, 5
      %v3330 = vsel %vm1130, %v3325, %v3329
      %v3331 = vshrl.u32 %v3018, 16
      %v3333 = vrot.slane %v3331, 4
      %v3334 = vor.u32 %v3333, %v3329
      %v3335 = vrot.slane %v3334, 4
      %v3337 = vshll.u32 %v3019, 16
      %v3339 = vrot.slane %v3337, 5
      %v3340 = vsel %vm1130, %v3335, %v3339
      %v3342 = vshrl.u32 %v3020, 16
      %v3344 = vrot.slane %v3342, 4
      %v3345 = vshll.u32 %v3020, 16
      %v3347 = vrot.slane %v3345, 5
      %v3348 = vor.u32 %v3344, %v3347
      %v3349 = vrot.slane %v3348, 4
      %v3351 = vshll.u32 %v3021, 16
      %v3353 = vrot.slane %v3351, 5
      %v3354 = vsel %vm1130, %v3349, %v3353
      %v3355 = vshrl.u32 %v3021, 16
      %v3357 = vrot.slane %v3355, 4
      %v3358 = vor.u32 %v3357, %v3353
      %v3359 = vrot.slane %v3358, 4
      %v3361 = vshll.u32 %v3022, 16
      %v3363 = vrot.slane %v3361, 5
      %v3364 = vsel %vm1130, %v3359, %v3363
      %v3366 = vshrl.u32 %v3023, 16
      %v3368 = vrot.slane %v3366, 4
      %v3369 = vshll.u32 %v3023, 16
      %v3371 = vrot.slane %v3369, 5
      %v3372 = vor.u32 %v3368, %v3371
      %v3373 = vrot.slane %v3372, 4
      %v3375 = vshll.u32 %v3024, 16
      %v3377 = vrot.slane %v3375, 5
      %v3378 = vsel %vm1130, %v3373, %v3377
      %v3379 = vshrl.u32 %v3024, 16
      %v3381 = vrot.slane %v3379, 4
      %v3382 = vor.u32 %v3381, %v3377
      %v3383 = vrot.slane %v3382, 4
      %v3385 = vshll.u32 %v3025, 16
      %v3387 = vrot.slane %v3385, 5
      %v3388 = vsel %vm1130, %v3383, %v3387
      %v3390 = vshrl.u32 %v3026, 16
      %v3392 = vrot.slane %v3390, 4
      %v3393 = vshll.u32 %v3026, 16
      %v3395 = vrot.slane %v3393, 5
      %v3396 = vor.u32 %v3392, %v3395
      %v3397 = vrot.slane %v3396, 4
      %v3399 = vshll.u32 %v3027, 16
      %v3401 = vrot.slane %v3399, 5
      %v3402 = vsel %vm1130, %v3397, %v3401
      %v3403 = vshrl.u32 %v3027, 16
      %v3405 = vrot.slane %v3403, 4
      %v3406 = vor.u32 %v3405, %v3401
      %v3407 = vrot.slane %v3406, 4
      %v3409 = vshll.u32 %v3028, 16
      %v3411 = vrot.slane %v3409, 5
      %v3412 = vsel %vm1130, %v3407, %v3411
      %s3413 = scalar_lea.vmem %s3, 256
      %v3414 = vld [vmem:[%s3413] sm:$0xf]
      %v3415 = vld [vmem:[%s3413 + $0x4] sm:$0xf]
      %v3416 = vld [vmem:[%s3413 + $0x8] sm:$0xf]
      %v3417 = vld [vmem:[%s3413 + $0xc] sm:$0xf]
      %v3418 = vld [vmem:[%s3413 + $0x10] sm:$0xf]
      %v3419 = vld [vmem:[%s3413 + $0x14] sm:$0xf]
      %v3420 = vld [vmem:[%s3413 + $0x18] sm:$0xf]
      %v3421 = vld [vmem:[%s3413 + $0x1c] sm:$0xf]
      %v3422 = vld [vmem:[%s3413 + $0x20] sm:$0xf]
      %v3423 = vld [vmem:[%s3413 + $0x24] sm:$0xf]
      %v3424 = vld [vmem:[%s3413 + $0x28] sm:$0xf]
      %v3425 = vld [vmem:[%s3413 + $0x2c] sm:$0xf]
      %v3426 = vld [vmem:[%s3413 + $0x30] sm:$0xf]
      %v3427 = vld [vmem:[%s3413 + $0x34] sm:$0xf]
      %v3428 = vld [vmem:[%s3413 + $0x38] sm:$0xf]
      %v3429 = vld [vmem:[%s3413 + $0x3c] sm:$0xf]
      %v3430 = vunpack.c.l.b16 %v3042
      %v3431 = vunpack.c.l.b16 %v3052
      %v3432 = vunpack.c.l.b16 %v3066
      %v3433 = vunpack.c.l.b16 %v3076
      %v3434 = vunpack.c.l.b16 %v3090
      %v3435 = vunpack.c.l.b16 %v3100
      %v3436 = vunpack.c.l.b16 %v3114
      %v3437 = vunpack.c.l.b16 %v3124
      %v3438 = vunpack.c.l.b16 %v3138
      %v3439 = vunpack.c.l.b16 %v3148
      %v3440 = vunpack.c.l.b16 %v3162
      %v3441 = vunpack.c.l.b16 %v3172
      %v3442 = vunpack.c.l.b16 %v3186
      %v3443 = vunpack.c.l.b16 %v3196
      %v3444 = vunpack.c.l.b16 %v3210
      %v3445 = vunpack.c.l.b16 %v3220
      %v3446 = vunpack.c.l.b16 %v3234
      %v3447 = vunpack.c.l.b16 %v3244
      %v3448 = vunpack.c.l.b16 %v3258
      %v3449 = vunpack.c.l.b16 %v3268
      %v3450 = vunpack.c.l.b16 %v3282
      %v3451 = vunpack.c.l.b16 %v3292
      %v3452 = vunpack.c.l.b16 %v3306
      %v3453 = vunpack.c.l.b16 %v3316
      %v3454 = vunpack.c.l.b16 %v3330
      %v3455 = vunpack.c.l.b16 %v3340
      %v3456 = vunpack.c.l.b16 %v3354
      %v3457 = vunpack.c.l.b16 %v3364
      %v3458 = vunpack.c.l.b16 %v3378
      %v3459 = vunpack.c.l.b16 %v3388
      %v3460 = vunpack.c.l.b16 %v3402
      %v3461 = vunpack.c.l.b16 %v3412
      %v3462 = vpack.c.b16 %v3431, %v3430
      %v3463 = vpack.c.b16 %v3433, %v3432
      %v3464 = vpack.c.b16 %v3435, %v3434
      %v3465 = vpack.c.b16 %v3437, %v3436
      %v3466 = vpack.c.b16 %v3439, %v3438
      %v3467 = vpack.c.b16 %v3441, %v3440
      %v3468 = vpack.c.b16 %v3443, %v3442
      %v3469 = vpack.c.b16 %v3445, %v3444
      %v3470 = vpack.c.b16 %v3447, %v3446
      %v3471 = vpack.c.b16 %v3449, %v3448
      %v3472 = vpack.c.b16 %v3451, %v3450
      %v3473 = vpack.c.b16 %v3453, %v3452
      %v3474 = vpack.c.b16 %v3455, %v3454
      %v3475 = vpack.c.b16 %v3457, %v3456
      %v3476 = vpack.c.b16 %v3459, %v3458
      %v3477 = vpack.c.b16 %v3461, %v3460
      %v3510 = vunpack.c.l.b16 %v3414
      %v3511 = vunpack.c.l.b16 %v3415
      %v3512 = vunpack.c.l.b16 %v3416
      %v3513 = vunpack.c.l.b16 %v3417
      %v3514 = vunpack.c.l.b16 %v3418
      %v3515 = vunpack.c.l.b16 %v3419
      %v3516 = vunpack.c.l.b16 %v3420
      %v3517 = vunpack.c.l.b16 %v3421
      %v3518 = vunpack.c.l.b16 %v3422
      %v3519 = vunpack.c.l.b16 %v3423
      %v3520 = vunpack.c.l.b16 %v3424
      %v3521 = vunpack.c.l.b16 %v3425
      %v3522 = vunpack.c.l.b16 %v3426
      %v3523 = vunpack.c.l.b16 %v3427
      %v3524 = vunpack.c.l.b16 %v3428
      %v3525 = vunpack.c.l.b16 %v3429
      %v3526 = vpack.c.b16 %v3511, %v3510
      %v3527 = vpack.c.b16 %v3513, %v3512
      %v3528 = vpack.c.b16 %v3515, %v3514
      %v3529 = vpack.c.b16 %v3517, %v3516
      %v3530 = vpack.c.b16 %v3519, %v3518
      %v3531 = vpack.c.b16 %v3521, %v3520
      %v3532 = vpack.c.b16 %v3523, %v3522
      %v3533 = vpack.c.b16 %v3525, %v3524
      %3542 = vmatprep.subr.bf16.mxu0 0
      %3543 = vmatpush1.bf16.msra.mxu0 %v3533
      %3544 = vmatprep.subr.bf16.mxu0 0
      %3545 = vmatpush1.bf16.msra.mxu0 %v3532
      %3546 = vmatprep.subr.bf16.mxu0 0
      %3547 = vmatpush1.bf16.msra.mxu0 %v3531
      %3548 = vmatprep.subr.bf16.mxu0 0
      %3549 = vmatpush1.bf16.msra.mxu0 %v3530
      %3550 = vmatprep.subr.bf16.mxu0 0
      %3551 = vmatpush1.bf16.msra.mxu0 %v3529
      %3552 = vmatprep.subr.bf16.mxu0 0
      %3553 = vmatpush1.bf16.msra.mxu0 %v3528
      %3554 = vmatprep.subr.bf16.mxu0 0
      %3555 = vmatpush1.bf16.msra.mxu0 %v3527
      %3556 = vmatprep.subr.bf16.mxu0 0
      %3557 = vmatpush1.bf16.msra.mxu0 %v3526
      %3558 = vmatprep.subr.bf16.mxu0 0
      %3559 = vmatpush2.bf16.msra.mxu0 0
      %3560 = vmatprep.subr.bf16.mxu0 0
      %3561 = vmatpush2.bf16.msra.mxu0 0
      %3562 = vmatprep.subr.bf16.mxu0 0
      %3563 = vmatpush2.bf16.msra.mxu0 0
      %3564 = vmatprep.subr.bf16.mxu0 0
      %3565 = vmatpush2.bf16.msra.mxu0 0
      %3566 = vmatprep.subr.bf16.mxu0 0
      %3567 = vmatpush2.bf16.msra.mxu0 0
      %3568 = vmatprep.subr.bf16.mxu0 0
      %3569 = vmatpush2.bf16.msra.mxu0 0
      %3570 = vmatprep.subr.bf16.mxu0 0
      %3571 = vmatpush2.bf16.msra.mxu0 0
      %3572 = vmatprep.subr.bf16.mxu0 0
      %3573 = vmatpush2.bf16.msra.mxu0 0
      %3574 = vmatprep.mubr.bf16.mxu0 0
      %3575 = vmatmul.mubr.bf16.gmra.mxu0 %v3462
      %v3576 = vpop.f32.mrf.mxu0
      %v3577 = vadd.f32 0.0, %v3576
      %v3578 = vpop.f32.mrf.mxu0
      %v3579 = vpop.f32.mrf.mxu0
      %v3580 = vadd.f32 0.0, %v3579
      %v3581 = vpop.f32.mrf.mxu0
      %3582 = vmatprep.mubr.bf16.mxu0 0
      %3583 = vmatmul.mubr.bf16.gmra.mxu0 %v3463
      %v3584 = vpop.f32.mrf.mxu0
      %v3585 = vadd.f32 0.0, %v3584
      %v3586 = vpop.f32.mrf.mxu0
      %v3587 = vpop.f32.mrf.mxu0
      %v3588 = vadd.f32 0.0, %v3587
      %v3589 = vpop.f32.mrf.mxu0
      %3590 = vmatprep.mubr.bf16.mxu0 0
      %3591 = vmatmul.mubr.bf16.gmra.mxu0 %v3464
      %v3592 = vpop.f32.mrf.mxu0
      %v3593 = vadd.f32 0.0, %v3592
      %v3594 = vpop.f32.mrf.mxu0
      %v3595 = vpop.f32.mrf.mxu0
      %v3596 = vadd.f32 0.0, %v3595
      %v3597 = vpop.f32.mrf.mxu0
      %3598 = vmatprep.mubr.bf16.mxu0 0
      %3599 = vmatmul.mubr.bf16.gmra.mxu0 %v3465
      %v3600 = vpop.f32.mrf.mxu0
      %v3601 = vadd.f32 0.0, %v3600
      %v3602 = vpop.f32.mrf.mxu0
      %v3603 = vpop.f32.mrf.mxu0
      %v3604 = vadd.f32 0.0, %v3603
      %v3605 = vpop.f32.mrf.mxu0
      %3606 = vmatprep.mubr.bf16.mxu0 0
      %3607 = vmatmul.mubr.bf16.gmra.mxu0 %v3466
      %v3608 = vpop.f32.mrf.mxu0
      %v3609 = vadd.f32 0.0, %v3608
      %v3610 = vpop.f32.mrf.mxu0
      %v3611 = vpop.f32.mrf.mxu0
      %v3612 = vadd.f32 0.0, %v3611
      %v3613 = vpop.f32.mrf.mxu0
      %3614 = vmatprep.mubr.bf16.mxu0 0
      %3615 = vmatmul.mubr.bf16.gmra.mxu0 %v3467
      %v3616 = vpop.f32.mrf.mxu0
      %v3617 = vadd.f32 0.0, %v3616
      %v3618 = vpop.f32.mrf.mxu0
      %v3619 = vpop.f32.mrf.mxu0
      %v3620 = vadd.f32 0.0, %v3619
      %v3621 = vpop.f32.mrf.mxu0
      %3622 = vmatprep.mubr.bf16.mxu0 0
      %3623 = vmatmul.mubr.bf16.gmra.mxu0 %v3468
      %v3624 = vpop.f32.mrf.mxu0
      %v3625 = vadd.f32 0.0, %v3624
      %v3626 = vpop.f32.mrf.mxu0
      %v3627 = vpop.f32.mrf.mxu0
      %v3628 = vadd.f32 0.0, %v3627
      %v3629 = vpop.f32.mrf.mxu0
      %3630 = vmatprep.mubr.bf16.mxu0 0
      %3631 = vmatmul.mubr.bf16.gmra.mxu0 %v3469
      %v3632 = vpop.f32.mrf.mxu0
      %v3633 = vadd.f32 0.0, %v3632
      %v3634 = vpop.f32.mrf.mxu0
      %v3635 = vpop.f32.mrf.mxu0
      %v3636 = vadd.f32 0.0, %v3635
      %v3637 = vpop.f32.mrf.mxu0
      %3638 = vmatprep.mubr.bf16.mxu0 0
      %3639 = vmatmul.mubr.bf16.gmra.mxu0 %v3470
      %v3640 = vpop.f32.mrf.mxu0
      %v3641 = vadd.f32 0.0, %v3640
      %v3642 = vpop.f32.mrf.mxu0
      %v3643 = vpop.f32.mrf.mxu0
      %v3644 = vadd.f32 0.0, %v3643
      %v3645 = vpop.f32.mrf.mxu0
      %3646 = vmatprep.mubr.bf16.mxu0 0
      %3647 = vmatmul.mubr.bf16.gmra.mxu0 %v3471
      %v3648 = vpop.f32.mrf.mxu0
      %v3649 = vadd.f32 0.0, %v3648
      %v3650 = vpop.f32.mrf.mxu0
      %v3651 = vpop.f32.mrf.mxu0
      %v3652 = vadd.f32 0.0, %v3651
      %v3653 = vpop.f32.mrf.mxu0
      %3654 = vmatprep.mubr.bf16.mxu0 0
      %3655 = vmatmul.mubr.bf16.gmra.mxu0 %v3472
      %v3656 = vpop.f32.mrf.mxu0
      %v3657 = vadd.f32 0.0, %v3656
      %v3658 = vpop.f32.mrf.mxu0
      %v3659 = vpop.f32.mrf.mxu0
      %v3660 = vadd.f32 0.0, %v3659
      %v3661 = vpop.f32.mrf.mxu0
      %3662 = vmatprep.mubr.bf16.mxu0 0
      %3663 = vmatmul.mubr.bf16.gmra.mxu0 %v3473
      %v3664 = vpop.f32.mrf.mxu0
      %v3665 = vadd.f32 0.0, %v3664
      %v3666 = vpop.f32.mrf.mxu0
      %v3667 = vpop.f32.mrf.mxu0
      %v3668 = vadd.f32 0.0, %v3667
      %v3669 = vpop.f32.mrf.mxu0
      %3670 = vmatprep.mubr.bf16.mxu0 0
      %3671 = vmatmul.mubr.bf16.gmra.mxu0 %v3474
      %v3672 = vpop.f32.mrf.mxu0
      %v3673 = vadd.f32 0.0, %v3672
      %v3674 = vpop.f32.mrf.mxu0
      %v3675 = vpop.f32.mrf.mxu0
      %v3676 = vadd.f32 0.0, %v3675
      %v3677 = vpop.f32.mrf.mxu0
      %3678 = vmatprep.mubr.bf16.mxu0 0
      %3679 = vmatmul.mubr.bf16.gmra.mxu0 %v3475
      %v3680 = vpop.f32.mrf.mxu0
      %v3681 = vadd.f32 0.0, %v3680
      %v3682 = vpop.f32.mrf.mxu0
      %v3683 = vpop.f32.mrf.mxu0
      %v3684 = vadd.f32 0.0, %v3683
      %v3685 = vpop.f32.mrf.mxu0
      %3686 = vmatprep.mubr.bf16.mxu0 0
      %3687 = vmatmul.mubr.bf16.gmra.mxu0 %v3476
      %v3688 = vpop.f32.mrf.mxu0
      %v3689 = vadd.f32 0.0, %v3688
      %v3690 = vpop.f32.mrf.mxu0
      %v3691 = vpop.f32.mrf.mxu0
      %v3692 = vadd.f32 0.0, %v3691
      %v3693 = vpop.f32.mrf.mxu0
      %3694 = vmatprep.mubr.bf16.mxu0 0
      %3695 = vmatmul.mubr.bf16.gmra.mxu0 %v3477
      %v3696 = vpop.f32.mrf.mxu0
      %v3697 = vadd.f32 0.0, %v3696
      %v3698 = vpop.f32.mrf.mxu0
      %v3699 = vpop.f32.mrf.mxu0
      %v3700 = vadd.f32 0.0, %v3699
      %v3701 = vpop.f32.mrf.mxu0
      %3702 = vdwg.mxu0
      %v3703 = vadd.f32 %v2949, %v3577
      %v3704 = vadd.f32 %v2950, %v3580
      %v3705 = vadd.f32 %v2951, %v3585
      %v3706 = vadd.f32 %v2952, %v3588
      %v3707 = vadd.f32 %v2953, %v3593
      %v3708 = vadd.f32 %v2954, %v3596
      %v3709 = vadd.f32 %v2955, %v3601
      %v3710 = vadd.f32 %v2956, %v3604
      %v3711 = vadd.f32 %v2957, %v3609
      %v3712 = vadd.f32 %v2958, %v3612
      %v3713 = vadd.f32 %v2959, %v3617
      %v3714 = vadd.f32 %v2960, %v3620
      %v3715 = vadd.f32 %v2961, %v3625
      %v3716 = vadd.f32 %v2962, %v3628
      %v3717 = vadd.f32 %v2963, %v3633
      %v3718 = vadd.f32 %v2964, %v3636
      %v3719 = vadd.f32 %v2965, %v3641
      %v3720 = vadd.f32 %v2966, %v3644
      %v3721 = vadd.f32 %v2967, %v3649
      %v3722 = vadd.f32 %v2968, %v3652
      %v3723 = vadd.f32 %v2969, %v3657
      %v3724 = vadd.f32 %v2970, %v3660
      %v3725 = vadd.f32 %v2971, %v3665
      %v3726 = vadd.f32 %v2972, %v3668
      %v3727 = vadd.f32 %v2973, %v3673
      %v3728 = vadd.f32 %v2974, %v3676
      %v3729 = vadd.f32 %v2975, %v3681
      %v3730 = vadd.f32 %v2976, %v3684
      %v3731 = vadd.f32 %v2977, %v3689
      %v3732 = vadd.f32 %v2978, %v3692
      %v3733 = vadd.f32 %v2979, %v3697
      %v3734 = vadd.f32 %v2980, %v3700
      %v3735 = vld [vmem:[%s949] sm:$0xe]
      %v3736 = vld [vmem:[%s949 + $0xc] sm:$0xe]
      %v3737 = vld [vmem:[%s949 + $0x18] sm:$0xe]
      %v3738 = vld [vmem:[%s949 + $0x24] sm:$0xe]
      %v3739 = vld [vmem:[%s949 + $0x30] sm:$0xe]
      %v3740 = vld [vmem:[%s949 + $0x3c] sm:$0xe]
      %v3741 = vld [vmem:[%s949 + $0x48] sm:$0xe]
      %v3742 = vld [vmem:[%s949 + $0x54] sm:$0xe]
      %v3743 = vld [vmem:[%s949 + $0x60] sm:$0xe]
      %v3744 = vld [vmem:[%s949 + $0x6c] sm:$0xe]
      %v3745 = vld [vmem:[%s949 + $0x78] sm:$0xe]
      %v3746 = vld [vmem:[%s949 + $0x84] sm:$0xe]
      %v3747 = vld [vmem:[%s949 + $0x90] sm:$0xe]
      %v3748 = vld [vmem:[%s949 + $0x9c] sm:$0xe]
      %v3749 = vld [vmem:[%s949 + $0xa8] sm:$0xe]
      %v3750 = vld [vmem:[%s949 + $0xb4] sm:$0xe]
      %v3799 = vrot.slane %v3735, 5
      %v3800 = vrot.slane %v3799, 4
      %v3801 = vrot.slane %v2982, 5
      %v3802 = vsel %vm2160, %v3800, %v3801
      %v3803 = vrot.slane %v3801, 4
      %v3804 = vrot.slane %v2983, 5
      %v3805 = vsel %vm2160, %v3803, %v3804
      %v3806 = vrot.slane %v3736, 5
      %v3807 = vrot.slane %v3806, 4
      %v3808 = vrot.slane %v2985, 5
      %v3809 = vsel %vm2160, %v3807, %v3808
      %v3810 = vrot.slane %v3808, 4
      %v3811 = vrot.slane %v2986, 5
      %v3812 = vsel %vm2160, %v3810, %v3811
      %v3813 = vrot.slane %v3737, 5
      %v3814 = vrot.slane %v3813, 4
      %v3815 = vrot.slane %v2988, 5
      %v3816 = vsel %vm2160, %v3814, %v3815
      %v3817 = vrot.slane %v3815, 4
      %v3818 = vrot.slane %v2989, 5
      %v3819 = vsel %vm2160, %v3817, %v3818
      %v3820 = vrot.slane %v3738, 5
      %v3821 = vrot.slane %v3820, 4
      %v3822 = vrot.slane %v2991, 5
      %v3823 = vsel %vm2160, %v3821, %v3822
      %v3824 = vrot.slane %v3822, 4
      %v3825 = vrot.slane %v2992, 5
      %v3826 = vsel %vm2160, %v3824, %v3825
      %v3827 = vrot.slane %v3739, 5
      %v3828 = vrot.slane %v3827, 4
      %v3829 = vrot.slane %v2994, 5
      %v3830 = vsel %vm2160, %v3828, %v3829
      %v3831 = vrot.slane %v3829, 4
      %v3832 = vrot.slane %v2995, 5
      %v3833 = vsel %vm2160, %v3831, %v3832
      %v3834 = vrot.slane %v3740, 5
      %v3835 = vrot.slane %v3834, 4
      %v3836 = vrot.slane %v2997, 5
      %v3837 = vsel %vm2160, %v3835, %v3836
      %v3838 = vrot.slane %v3836, 4
      %v3839 = vrot.slane %v2998, 5
      %v3840 = vsel %vm2160, %v3838, %v3839
      %v3841 = vrot.slane %v3741, 5
      %v3842 = vrot.slane %v3841, 4
      %v3843 = vrot.slane %v3000, 5
      %v3844 = vsel %vm2160, %v3842, %v3843
      %v3845 = vrot.slane %v3843, 4
      %v3846 = vrot.slane %v3001, 5
      %v3847 = vsel %vm2160, %v3845, %v3846
      %v3848 = vrot.slane %v3742, 5
      %v3849 = vrot.slane %v3848, 4
      %v3850 = vrot.slane %v3003, 5
      %v3851 = vsel %vm2160, %v3849, %v3850
      %v3852 = vrot.slane %v3850, 4
      %v3853 = vrot.slane %v3004, 5
      %v3854 = vsel %vm2160, %v3852, %v3853
      %v3855 = vrot.slane %v3743, 5
      %v3856 = vrot.slane %v3855, 4
      %v3857 = vrot.slane %v3006, 5
      %v3858 = vsel %vm2160, %v3856, %v3857
      %v3859 = vrot.slane %v3857, 4
      %v3860 = vrot.slane %v3007, 5
      %v3861 = vsel %vm2160, %v3859, %v3860
      %v3862 = vrot.slane %v3744, 5
      %v3863 = vrot.slane %v3862, 4
      %v3864 = vrot.slane %v3009, 5
      %v3865 = vsel %vm2160, %v3863, %v3864
      %v3866 = vrot.slane %v3864, 4
      %v3867 = vrot.slane %v3010, 5
      %v3868 = vsel %vm2160, %v3866, %v3867
      %v3869 = vrot.slane %v3745, 5
      %v3870 = vrot.slane %v3869, 4
      %v3871 = vrot.slane %v3012, 5
      %v3872 = vsel %vm2160, %v3870, %v3871
      %v3873 = vrot.slane %v3871, 4
      %v3874 = vrot.slane %v3013, 5
      %v3875 = vsel %vm2160, %v3873, %v3874
      %v3876 = vrot.slane %v3746, 5
      %v3877 = vrot.slane %v3876, 4
      %v3878 = vrot.slane %v3015, 5
      %v3879 = vsel %vm2160, %v3877, %v3878
      %v3880 = vrot.slane %v3878, 4
      %v3881 = vrot.slane %v3016, 5
      %v3882 = vsel %vm2160, %v3880, %v3881
      %v3883 = vrot.slane %v3747, 5
      %v3884 = vrot.slane %v3883, 4
      %v3885 = vrot.slane %v3018, 5
      %v3886 = vsel %vm2160, %v3884, %v3885
      %v3887 = vrot.slane %v3885, 4
      %v3888 = vrot.slane %v3019, 5
      %v3889 = vsel %vm2160, %v3887, %v3888
      %v3890 = vrot.slane %v3748, 5
      %v3891 = vrot.slane %v3890, 4
      %v3892 = vrot.slane %v3021, 5
      %v3893 = vsel %vm2160, %v3891, %v3892
      %v3894 = vrot.slane %v3892, 4
      %v3895 = vrot.slane %v3022, 5
      %v3896 = vsel %vm2160, %v3894, %v3895
      %v3897 = vrot.slane %v3749, 5
      %v3898 = vrot.slane %v3897, 4
      %v3899 = vrot.slane %v3024, 5
      %v3900 = vsel %vm2160, %v3898, %v3899
      %v3901 = vrot.slane %v3899, 4
      %v3902 = vrot.slane %v3025, 5
      %v3903 = vsel %vm2160, %v3901, %v3902
      %v3904 = vrot.slane %v3750, 5
      %v3905 = vrot.slane %v3904, 4
      %v3906 = vrot.slane %v3027, 5
      %v3907 = vsel %vm2160, %v3905, %v3906
      %v3908 = vrot.slane %v3906, 4
      %v3909 = vrot.slane %v3028, 5
      %v3910 = vsel %vm2160, %v3908, %v3909
      %s3911 = scalar_lea.vmem %s3, 320
      %v3912 = vld [vmem:[%s3911] sm:$0xf]
      %v3913 = vld [vmem:[%s3911 + $0x4] sm:$0xf]
      %v3914 = vld [vmem:[%s3911 + $0x8] sm:$0xf]
      %v3915 = vld [vmem:[%s3911 + $0xc] sm:$0xf]
      %v3916 = vld [vmem:[%s3911 + $0x10] sm:$0xf]
      %v3917 = vld [vmem:[%s3911 + $0x14] sm:$0xf]
      %v3918 = vld [vmem:[%s3911 + $0x18] sm:$0xf]
      %v3919 = vld [vmem:[%s3911 + $0x1c] sm:$0xf]
      %v3920 = vld [vmem:[%s3911 + $0x20] sm:$0xf]
      %v3921 = vld [vmem:[%s3911 + $0x24] sm:$0xf]
      %v3922 = vld [vmem:[%s3911 + $0x28] sm:$0xf]
      %v3923 = vld [vmem:[%s3911 + $0x2c] sm:$0xf]
      %v3924 = vld [vmem:[%s3911 + $0x30] sm:$0xf]
      %v3925 = vld [vmem:[%s3911 + $0x34] sm:$0xf]
      %v3926 = vld [vmem:[%s3911 + $0x38] sm:$0xf]
      %v3927 = vld [vmem:[%s3911 + $0x3c] sm:$0xf]
      %v3928 = vunpack.c.l.b16 %v3802
      %v3929 = vunpack.c.l.b16 %v3805
      %v3930 = vunpack.c.l.b16 %v3809
      %v3931 = vunpack.c.l.b16 %v3812
      %v3932 = vunpack.c.l.b16 %v3816
      %v3933 = vunpack.c.l.b16 %v3819
      %v3934 = vunpack.c.l.b16 %v3823
      %v3935 = vunpack.c.l.b16 %v3826
      %v3936 = vunpack.c.l.b16 %v3830
      %v3937 = vunpack.c.l.b16 %v3833
      %v3938 = vunpack.c.l.b16 %v3837
      %v3939 = vunpack.c.l.b16 %v3840
      %v3940 = vunpack.c.l.b16 %v3844
      %v3941 = vunpack.c.l.b16 %v3847
      %v3942 = vunpack.c.l.b16 %v3851
      %v3943 = vunpack.c.l.b16 %v3854
      %v3944 = vunpack.c.l.b16 %v3858
      %v3945 = vunpack.c.l.b16 %v3861
      %v3946 = vunpack.c.l.b16 %v3865
      %v3947 = vunpack.c.l.b16 %v3868
      %v3948 = vunpack.c.l.b16 %v3872
      %v3949 = vunpack.c.l.b16 %v3875
      %v3950 = vunpack.c.l.b16 %v3879
      %v3951 = vunpack.c.l.b16 %v3882
      %v3952 = vunpack.c.l.b16 %v3886
      %v3953 = vunpack.c.l.b16 %v3889
      %v3954 = vunpack.c.l.b16 %v3893
      %v3955 = vunpack.c.l.b16 %v3896
      %v3956 = vunpack.c.l.b16 %v3900
      %v3957 = vunpack.c.l.b16 %v3903
      %v3958 = vunpack.c.l.b16 %v3907
      %v3959 = vunpack.c.l.b16 %v3910
      %v3960 = vpack.c.b16 %v3929, %v3928
      %v3961 = vpack.c.b16 %v3931, %v3930
      %v3962 = vpack.c.b16 %v3933, %v3932
      %v3963 = vpack.c.b16 %v3935, %v3934
      %v3964 = vpack.c.b16 %v3937, %v3936
      %v3965 = vpack.c.b16 %v3939, %v3938
      %v3966 = vpack.c.b16 %v3941, %v3940
      %v3967 = vpack.c.b16 %v3943, %v3942
      %v3968 = vpack.c.b16 %v3945, %v3944
      %v3969 = vpack.c.b16 %v3947, %v3946
      %v3970 = vpack.c.b16 %v3949, %v3948
      %v3971 = vpack.c.b16 %v3951, %v3950
      %v3972 = vpack.c.b16 %v3953, %v3952
      %v3973 = vpack.c.b16 %v3955, %v3954
      %v3974 = vpack.c.b16 %v3957, %v3956
      %v3975 = vpack.c.b16 %v3959, %v3958
      %v4008 = vunpack.c.l.b16 %v3912
      %v4009 = vunpack.c.l.b16 %v3913
      %v4010 = vunpack.c.l.b16 %v3914
      %v4011 = vunpack.c.l.b16 %v3915
      %v4012 = vunpack.c.l.b16 %v3916
      %v4013 = vunpack.c.l.b16 %v3917
      %v4014 = vunpack.c.l.b16 %v3918
      %v4015 = vunpack.c.l.b16 %v3919
      %v4016 = vunpack.c.l.b16 %v3920
      %v4017 = vunpack.c.l.b16 %v3921
      %v4018 = vunpack.c.l.b16 %v3922
      %v4019 = vunpack.c.l.b16 %v3923
      %v4020 = vunpack.c.l.b16 %v3924
      %v4021 = vunpack.c.l.b16 %v3925
      %v4022 = vunpack.c.l.b16 %v3926
      %v4023 = vunpack.c.l.b16 %v3927
      %v4024 = vpack.c.b16 %v4009, %v4008
      %v4025 = vpack.c.b16 %v4011, %v4010
      %v4026 = vpack.c.b16 %v4013, %v4012
      %v4027 = vpack.c.b16 %v4015, %v4014
      %v4028 = vpack.c.b16 %v4017, %v4016
      %v4029 = vpack.c.b16 %v4019, %v4018
      %v4030 = vpack.c.b16 %v4021, %v4020
      %v4031 = vpack.c.b16 %v4023, %v4022
      %4040 = vmatprep.subr.bf16.mxu0 0
      %4041 = vmatpush1.bf16.msra.mxu0 %v4031
      %4042 = vmatprep.subr.bf16.mxu0 0
      %4043 = vmatpush1.bf16.msra.mxu0 %v4030
      %4044 = vmatprep.subr.bf16.mxu0 0
      %4045 = vmatpush1.bf16.msra.mxu0 %v4029
      %4046 = vmatprep.subr.bf16.mxu0 0
      %4047 = vmatpush1.bf16.msra.mxu0 %v4028
      %4048 = vmatprep.subr.bf16.mxu0 0
      %4049 = vmatpush1.bf16.msra.mxu0 %v4027
      %4050 = vmatprep.subr.bf16.mxu0 0
      %4051 = vmatpush1.bf16.msra.mxu0 %v4026
      %4052 = vmatprep.subr.bf16.mxu0 0
      %4053 = vmatpush1.bf16.msra.mxu0 %v4025
      %4054 = vmatprep.subr.bf16.mxu0 0
      %4055 = vmatpush1.bf16.msra.mxu0 %v4024
      %4056 = vmatprep.subr.bf16.mxu0 0
      %4057 = vmatpush2.bf16.msra.mxu0 0
      %4058 = vmatprep.subr.bf16.mxu0 0
      %4059 = vmatpush2.bf16.msra.mxu0 0
      %4060 = vmatprep.subr.bf16.mxu0 0
      %4061 = vmatpush2.bf16.msra.mxu0 0
      %4062 = vmatprep.subr.bf16.mxu0 0
      %4063 = vmatpush2.bf16.msra.mxu0 0
      %4064 = vmatprep.subr.bf16.mxu0 0
      %4065 = vmatpush2.bf16.msra.mxu0 0
      %4066 = vmatprep.subr.bf16.mxu0 0
      %4067 = vmatpush2.bf16.msra.mxu0 0
      %4068 = vmatprep.subr.bf16.mxu0 0
      %4069 = vmatpush2.bf16.msra.mxu0 0
      %4070 = vmatprep.subr.bf16.mxu0 0
      %4071 = vmatpush2.bf16.msra.mxu0 0
      %4072 = vmatprep.mubr.bf16.mxu0 0
      %4073 = vmatmul.mubr.bf16.gmra.mxu0 %v3960
      %v4074 = vpop.f32.mrf.mxu0
      %v4075 = vadd.f32 0.0, %v4074
      %v4076 = vpop.f32.mrf.mxu0
      %v4077 = vpop.f32.mrf.mxu0
      %v4078 = vadd.f32 0.0, %v4077
      %v4079 = vpop.f32.mrf.mxu0
      %4080 = vmatprep.mubr.bf16.mxu0 0
      %4081 = vmatmul.mubr.bf16.gmra.mxu0 %v3961
      %v4082 = vpop.f32.mrf.mxu0
      %v4083 = vadd.f32 0.0, %v4082
      %v4084 = vpop.f32.mrf.mxu0
      %v4085 = vpop.f32.mrf.mxu0
      %v4086 = vadd.f32 0.0, %v4085
      %v4087 = vpop.f32.mrf.mxu0
      %4088 = vmatprep.mubr.bf16.mxu0 0
      %4089 = vmatmul.mubr.bf16.gmra.mxu0 %v3962
      %v4090 = vpop.f32.mrf.mxu0
      %v4091 = vadd.f32 0.0, %v4090
      %v4092 = vpop.f32.mrf.mxu0
      %v4093 = vpop.f32.mrf.mxu0
      %v4094 = vadd.f32 0.0, %v4093
      %v4095 = vpop.f32.mrf.mxu0
      %4096 = vmatprep.mubr.bf16.mxu0 0
      %4097 = vmatmul.mubr.bf16.gmra.mxu0 %v3963
      %v4098 = vpop.f32.mrf.mxu0
      %v4099 = vadd.f32 0.0, %v4098
      %v4100 = vpop.f32.mrf.mxu0
      %v4101 = vpop.f32.mrf.mxu0
      %v4102 = vadd.f32 0.0, %v4101
      %v4103 = vpop.f32.mrf.mxu0
      %4104 = vmatprep.mubr.bf16.mxu0 0
      %4105 = vmatmul.mubr.bf16.gmra.mxu0 %v3964
      %v4106 = vpop.f32.mrf.mxu0
      %v4107 = vadd.f32 0.0, %v4106
      %v4108 = vpop.f32.mrf.mxu0
      %v4109 = vpop.f32.mrf.mxu0
      %v4110 = vadd.f32 0.0, %v4109
      %v4111 = vpop.f32.mrf.mxu0
      %4112 = vmatprep.mubr.bf16.mxu0 0
      %4113 = vmatmul.mubr.bf16.gmra.mxu0 %v3965
      %v4114 = vpop.f32.mrf.mxu0
      %v4115 = vadd.f32 0.0, %v4114
      %v4116 = vpop.f32.mrf.mxu0
      %v4117 = vpop.f32.mrf.mxu0
      %v4118 = vadd.f32 0.0, %v4117
      %v4119 = vpop.f32.mrf.mxu0
      %4120 = vmatprep.mubr.bf16.mxu0 0
      %4121 = vmatmul.mubr.bf16.gmra.mxu0 %v3966
      %v4122 = vpop.f32.mrf.mxu0
      %v4123 = vadd.f32 0.0, %v4122
      %v4124 = vpop.f32.mrf.mxu0
      %v4125 = vpop.f32.mrf.mxu0
      %v4126 = vadd.f32 0.0, %v4125
      %v4127 = vpop.f32.mrf.mxu0
      %4128 = vmatprep.mubr.bf16.mxu0 0
      %4129 = vmatmul.mubr.bf16.gmra.mxu0 %v3967
      %v4130 = vpop.f32.mrf.mxu0
      %v4131 = vadd.f32 0.0, %v4130
      %v4132 = vpop.f32.mrf.mxu0
      %v4133 = vpop.f32.mrf.mxu0
      %v4134 = vadd.f32 0.0, %v4133
      %v4135 = vpop.f32.mrf.mxu0
      %4136 = vmatprep.mubr.bf16.mxu0 0
      %4137 = vmatmul.mubr.bf16.gmra.mxu0 %v3968
      %v4138 = vpop.f32.mrf.mxu0
      %v4139 = vadd.f32 0.0, %v4138
      %v4140 = vpop.f32.mrf.mxu0
      %v4141 = vpop.f32.mrf.mxu0
      %v4142 = vadd.f32 0.0, %v4141
      %v4143 = vpop.f32.mrf.mxu0
      %4144 = vmatprep.mubr.bf16.mxu0 0
      %4145 = vmatmul.mubr.bf16.gmra.mxu0 %v3969
      %v4146 = vpop.f32.mrf.mxu0
      %v4147 = vadd.f32 0.0, %v4146
      %v4148 = vpop.f32.mrf.mxu0
      %v4149 = vpop.f32.mrf.mxu0
      %v4150 = vadd.f32 0.0, %v4149
      %v4151 = vpop.f32.mrf.mxu0
      %4152 = vmatprep.mubr.bf16.mxu0 0
      %4153 = vmatmul.mubr.bf16.gmra.mxu0 %v3970
      %v4154 = vpop.f32.mrf.mxu0
      %v4155 = vadd.f32 0.0, %v4154
      %v4156 = vpop.f32.mrf.mxu0
      %v4157 = vpop.f32.mrf.mxu0
      %v4158 = vadd.f32 0.0, %v4157
      %v4159 = vpop.f32.mrf.mxu0
      %4160 = vmatprep.mubr.bf16.mxu0 0
      %4161 = vmatmul.mubr.bf16.gmra.mxu0 %v3971
      %v4162 = vpop.f32.mrf.mxu0
      %v4163 = vadd.f32 0.0, %v4162
      %v4164 = vpop.f32.mrf.mxu0
      %v4165 = vpop.f32.mrf.mxu0
      %v4166 = vadd.f32 0.0, %v4165
      %v4167 = vpop.f32.mrf.mxu0
      %4168 = vmatprep.mubr.bf16.mxu0 0
      %4169 = vmatmul.mubr.bf16.gmra.mxu0 %v3972
      %v4170 = vpop.f32.mrf.mxu0
      %v4171 = vadd.f32 0.0, %v4170
      %v4172 = vpop.f32.mrf.mxu0
      %v4173 = vpop.f32.mrf.mxu0
      %v4174 = vadd.f32 0.0, %v4173
      %v4175 = vpop.f32.mrf.mxu0
      %4176 = vmatprep.mubr.bf16.mxu0 0
      %4177 = vmatmul.mubr.bf16.gmra.mxu0 %v3973
      %v4178 = vpop.f32.mrf.mxu0
      %v4179 = vadd.f32 0.0, %v4178
      %v4180 = vpop.f32.mrf.mxu0
      %v4181 = vpop.f32.mrf.mxu0
      %v4182 = vadd.f32 0.0, %v4181
      %v4183 = vpop.f32.mrf.mxu0
      %4184 = vmatprep.mubr.bf16.mxu0 0
      %4185 = vmatmul.mubr.bf16.gmra.mxu0 %v3974
      %v4186 = vpop.f32.mrf.mxu0
      %v4187 = vadd.f32 0.0, %v4186
      %v4188 = vpop.f32.mrf.mxu0
      %v4189 = vpop.f32.mrf.mxu0
      %v4190 = vadd.f32 0.0, %v4189
      %v4191 = vpop.f32.mrf.mxu0
      %4192 = vmatprep.mubr.bf16.mxu0 0
      %4193 = vmatmul.mubr.bf16.gmra.mxu0 %v3975
      %v4194 = vpop.f32.mrf.mxu0
      %v4195 = vadd.f32 0.0, %v4194
      %v4196 = vpop.f32.mrf.mxu0
      %v4197 = vpop.f32.mrf.mxu0
      %v4198 = vadd.f32 0.0, %v4197
      %v4199 = vpop.f32.mrf.mxu0
      %4200 = vdwg.mxu0
      %v4201 = vadd.f32 %v3703, %v4075
      %v4202 = vadd.f32 %v3704, %v4078
      %v4203 = vadd.f32 %v3705, %v4083
      %v4204 = vadd.f32 %v3706, %v4086
      %v4205 = vadd.f32 %v3707, %v4091
      %v4206 = vadd.f32 %v3708, %v4094
      %v4207 = vadd.f32 %v3709, %v4099
      %v4208 = vadd.f32 %v3710, %v4102
      %v4209 = vadd.f32 %v3711, %v4107
      %v4210 = vadd.f32 %v3712, %v4110
      %v4211 = vadd.f32 %v3713, %v4115
      %v4212 = vadd.f32 %v3714, %v4118
      %v4213 = vadd.f32 %v3715, %v4123
      %v4214 = vadd.f32 %v3716, %v4126
      %v4215 = vadd.f32 %v3717, %v4131
      %v4216 = vadd.f32 %v3718, %v4134
      %v4217 = vadd.f32 %v3719, %v4139
      %v4218 = vadd.f32 %v3720, %v4142
      %v4219 = vadd.f32 %v3721, %v4147
      %v4220 = vadd.f32 %v3722, %v4150
      %v4221 = vadd.f32 %v3723, %v4155
      %v4222 = vadd.f32 %v3724, %v4158
      %v4223 = vadd.f32 %v3725, %v4163
      %v4224 = vadd.f32 %v3726, %v4166
      %v4225 = vadd.f32 %v3727, %v4171
      %v4226 = vadd.f32 %v3728, %v4174
      %v4227 = vadd.f32 %v3729, %v4179
      %v4228 = vadd.f32 %v3730, %v4182
      %v4229 = vadd.f32 %v3731, %v4187
      %v4230 = vadd.f32 %v3732, %v4190
      %v4231 = vadd.f32 %v3733, %v4195
      %v4232 = vadd.f32 %v3734, %v4198
      %s4233 = scalar_lea.vmem [#allocation2], 24
      %v4234 = vld [vmem:[%s4233] sm:$0xf]
      %v4235 = vld [vmem:[%s4233 + $0x4] sm:$0xf]
      %v4236 = vld [vmem:[%s4233 + $0xc] sm:$0xf]
      %v4237 = vld [vmem:[%s4233 + $0x10] sm:$0xf]
      %v4238 = vld [vmem:[%s4233 + $0x18] sm:$0xf]
      %v4239 = vld [vmem:[%s4233 + $0x1c] sm:$0xf]
      %v4240 = vld [vmem:[%s4233 + $0x24] sm:$0xf]
      %v4241 = vld [vmem:[%s4233 + $0x28] sm:$0xf]
      %v4242 = vld [vmem:[%s4233 + $0x30] sm:$0xf]
      %v4243 = vld [vmem:[%s4233 + $0x34] sm:$0xf]
      %v4244 = vld [vmem:[%s4233 + $0x3c] sm:$0xf]
      %v4245 = vld [vmem:[%s4233 + $0x40] sm:$0xf]
      %v4246 = vld [vmem:[%s4233 + $0x48] sm:$0xf]
      %v4247 = vld [vmem:[%s4233 + $0x4c] sm:$0xf]
      %v4248 = vld [vmem:[%s4233 + $0x54] sm:$0xf]
      %v4249 = vld [vmem:[%s4233 + $0x58] sm:$0xf]
      %v4250 = vld [vmem:[%s4233 + $0x60] sm:$0xf]
      %v4251 = vld [vmem:[%s4233 + $0x64] sm:$0xf]
      %v4252 = vld [vmem:[%s4233 + $0x6c] sm:$0xf]
      %v4253 = vld [vmem:[%s4233 + $0x70] sm:$0xf]
      %v4254 = vld [vmem:[%s4233 + $0x78] sm:$0xf]
      %v4255 = vld [vmem:[%s4233 + $0x7c] sm:$0xf]
      %v4256 = vld [vmem:[%s4233 + $0x84] sm:$0xf]
      %v4257 = vld [vmem:[%s4233 + $0x88] sm:$0xf]
      %v4258 = vld [vmem:[%s4233 + $0x90] sm:$0xf]
      %v4259 = vld [vmem:[%s4233 + $0x94] sm:$0xf]
      %v4260 = vld [vmem:[%s4233 + $0x9c] sm:$0xf]
      %v4261 = vld [vmem:[%s4233 + $0xa0] sm:$0xf]
      %v4262 = vld [vmem:[%s4233 + $0xa8] sm:$0xf]
      %v4263 = vld [vmem:[%s4233 + $0xac] sm:$0xf]
      %v4264 = vld [vmem:[%s4233 + $0xb4] sm:$0xf]
      %v4265 = vld [vmem:[%s4233 + $0xb8] sm:$0xf]
      %s4266 = scalar_lea.vmem %s3, 384
      %v4267 = vld [vmem:[%s4266] sm:$0xf]
      %v4268 = vld [vmem:[%s4266 + $0x4] sm:$0xf]
      %v4269 = vld [vmem:[%s4266 + $0x8] sm:$0xf]
      %v4270 = vld [vmem:[%s4266 + $0xc] sm:$0xf]
      %v4271 = vld [vmem:[%s4266 + $0x10] sm:$0xf]
      %v4272 = vld [vmem:[%s4266 + $0x14] sm:$0xf]
      %v4273 = vld [vmem:[%s4266 + $0x18] sm:$0xf]
      %v4274 = vld [vmem:[%s4266 + $0x1c] sm:$0xf]
      %v4275 = vld [vmem:[%s4266 + $0x20] sm:$0xf]
      %v4276 = vld [vmem:[%s4266 + $0x24] sm:$0xf]
      %v4277 = vld [vmem:[%s4266 + $0x28] sm:$0xf]
      %v4278 = vld [vmem:[%s4266 + $0x2c] sm:$0xf]
      %v4279 = vld [vmem:[%s4266 + $0x30] sm:$0xf]
      %v4280 = vld [vmem:[%s4266 + $0x34] sm:$0xf]
      %v4281 = vld [vmem:[%s4266 + $0x38] sm:$0xf]
      %v4282 = vld [vmem:[%s4266 + $0x3c] sm:$0xf]
      %v4315 = vunpack.c.l.b16 %v4234
      %v4316 = vunpack.c.l.b16 %v4235
      %v4317 = vunpack.c.l.b16 %v4236
      %v4318 = vunpack.c.l.b16 %v4237
      %v4319 = vunpack.c.l.b16 %v4238
      %v4320 = vunpack.c.l.b16 %v4239
      %v4321 = vunpack.c.l.b16 %v4240
      %v4322 = vunpack.c.l.b16 %v4241
      %v4323 = vunpack.c.l.b16 %v4242
      %v4324 = vunpack.c.l.b16 %v4243
      %v4325 = vunpack.c.l.b16 %v4244
      %v4326 = vunpack.c.l.b16 %v4245
      %v4327 = vunpack.c.l.b16 %v4246
      %v4328 = vunpack.c.l.b16 %v4247
      %v4329 = vunpack.c.l.b16 %v4248
      %v4330 = vunpack.c.l.b16 %v4249
      %v4331 = vunpack.c.l.b16 %v4250
      %v4332 = vunpack.c.l.b16 %v4251
      %v4333 = vunpack.c.l.b16 %v4252
      %v4334 = vunpack.c.l.b16 %v4253
      %v4335 = vunpack.c.l.b16 %v4254
      %v4336 = vunpack.c.l.b16 %v4255
      %v4337 = vunpack.c.l.b16 %v4256
      %v4338 = vunpack.c.l.b16 %v4257
      %v4339 = vunpack.c.l.b16 %v4258
      %v4340 = vunpack.c.l.b16 %v4259
      %v4341 = vunpack.c.l.b16 %v4260
      %v4342 = vunpack.c.l.b16 %v4261
      %v4343 = vunpack.c.l.b16 %v4262
      %v4344 = vunpack.c.l.b16 %v4263
      %v4345 = vunpack.c.l.b16 %v4264
      %v4346 = vunpack.c.l.b16 %v4265
      %v4347 = vpack.c.b16 %v4316, %v4315
      %v4348 = vpack.c.b16 %v4318, %v4317
      %v4349 = vpack.c.b16 %v4320, %v4319
      %v4350 = vpack.c.b16 %v4322, %v4321
      %v4351 = vpack.c.b16 %v4324, %v4323
      %v4352 = vpack.c.b16 %v4326, %v4325
      %v4353 = vpack.c.b16 %v4328, %v4327
      %v4354 = vpack.c.b16 %v4330, %v4329
      %v4355 = vpack.c.b16 %v4332, %v4331
      %v4356 = vpack.c.b16 %v4334, %v4333
      %v4357 = vpack.c.b16 %v4336, %v4335
      %v4358 = vpack.c.b16 %v4338, %v4337
      %v4359 = vpack.c.b16 %v4340, %v4339
      %v4360 = vpack.c.b16 %v4342, %v4341
      %v4361 = vpack.c.b16 %v4344, %v4343
      %v4362 = vpack.c.b16 %v4346, %v4345
      %v4395 = vunpack.c.l.b16 %v4267
      %v4396 = vunpack.c.l.b16 %v4268
      %v4397 = vunpack.c.l.b16 %v4269
      %v4398 = vunpack.c.l.b16 %v4270
      %v4399 = vunpack.c.l.b16 %v4271
      %v4400 = vunpack.c.l.b16 %v4272
      %v4401 = vunpack.c.l.b16 %v4273
      %v4402 = vunpack.c.l.b16 %v4274
      %v4403 = vunpack.c.l.b16 %v4275
      %v4404 = vunpack.c.l.b16 %v4276
      %v4405 = vunpack.c.l.b16 %v4277
      %v4406 = vunpack.c.l.b16 %v4278
      %v4407 = vunpack.c.l.b16 %v4279
      %v4408 = vunpack.c.l.b16 %v4280
      %v4409 = vunpack.c.l.b16 %v4281
      %v4410 = vunpack.c.l.b16 %v4282
      %v4411 = vpack.c.b16 %v4396, %v4395
      %v4412 = vpack.c.b16 %v4398, %v4397
      %v4413 = vpack.c.b16 %v4400, %v4399
      %v4414 = vpack.c.b16 %v4402, %v4401
      %v4415 = vpack.c.b16 %v4404, %v4403
      %v4416 = vpack.c.b16 %v4406, %v4405
      %v4417 = vpack.c.b16 %v4408, %v4407
      %v4418 = vpack.c.b16 %v4410, %v4409
      %4427 = vmatprep.subr.bf16.mxu0 0
      %4428 = vmatpush1.bf16.msra.mxu0 %v4418
      %4429 = vmatprep.subr.bf16.mxu0 0
      %4430 = vmatpush1.bf16.msra.mxu0 %v4417
      %4431 = vmatprep.subr.bf16.mxu0 0
      %4432 = vmatpush1.bf16.msra.mxu0 %v4416
      %4433 = vmatprep.subr.bf16.mxu0 0
      %4434 = vmatpush1.bf16.msra.mxu0 %v4415
      %4435 = vmatprep.subr.bf16.mxu0 0
      %4436 = vmatpush1.bf16.msra.mxu0 %v4414
      %4437 = vmatprep.subr.bf16.mxu0 0
      %4438 = vmatpush1.bf16.msra.mxu0 %v4413
      %4439 = vmatprep.subr.bf16.mxu0 0
      %4440 = vmatpush1.bf16.msra.mxu0 %v4412
      %4441 = vmatprep.subr.bf16.mxu0 0
      %4442 = vmatpush1.bf16.msra.mxu0 %v4411
      %4443 = vmatprep.subr.bf16.mxu0 0
      %4444 = vmatpush2.bf16.msra.mxu0 0
      %4445 = vmatprep.subr.bf16.mxu0 0
      %4446 = vmatpush2.bf16.msra.mxu0 0
      %4447 = vmatprep.subr.bf16.mxu0 0
      %4448 = vmatpush2.bf16.msra.mxu0 0
      %4449 = vmatprep.subr.bf16.mxu0 0
      %4450 = vmatpush2.bf16.msra.mxu0 0
      %4451 = vmatprep.subr.bf16.mxu0 0
      %4452 = vmatpush2.bf16.msra.mxu0 0
      %4453 = vmatprep.subr.bf16.mxu0 0
      %4454 = vmatpush2.bf16.msra.mxu0 0
      %4455 = vmatprep.subr.bf16.mxu0 0
      %4456 = vmatpush2.bf16.msra.mxu0 0
      %4457 = vmatprep.subr.bf16.mxu0 0
      %4458 = vmatpush2.bf16.msra.mxu0 0
      %4459 = vmatprep.mubr.bf16.mxu0 0
      %4460 = vmatmul.mubr.bf16.gmra.mxu0 %v4347
      %v4461 = vpop.f32.mrf.mxu0
      %v4462 = vadd.f32 0.0, %v4461
      %v4463 = vpop.f32.mrf.mxu0
      %v4464 = vpop.f32.mrf.mxu0
      %v4465 = vadd.f32 0.0, %v4464
      %v4466 = vpop.f32.mrf.mxu0
      %4467 = vmatprep.mubr.bf16.mxu0 0
      %4468 = vmatmul.mubr.bf16.gmra.mxu0 %v4348
      %v4469 = vpop.f32.mrf.mxu0
      %v4470 = vadd.f32 0.0, %v4469
      %v4471 = vpop.f32.mrf.mxu0
      %v4472 = vpop.f32.mrf.mxu0
      %v4473 = vadd.f32 0.0, %v4472
      %v4474 = vpop.f32.mrf.mxu0
      %4475 = vmatprep.mubr.bf16.mxu0 0
      %4476 = vmatmul.mubr.bf16.gmra.mxu0 %v4349
      %v4477 = vpop.f32.mrf.mxu0
      %v4478 = vadd.f32 0.0, %v4477
      %v4479 = vpop.f32.mrf.mxu0
      %v4480 = vpop.f32.mrf.mxu0
      %v4481 = vadd.f32 0.0, %v4480
      %v4482 = vpop.f32.mrf.mxu0
      %4483 = vmatprep.mubr.bf16.mxu0 0
      %4484 = vmatmul.mubr.bf16.gmra.mxu0 %v4350
      %v4485 = vpop.f32.mrf.mxu0
      %v4486 = vadd.f32 0.0, %v4485
      %v4487 = vpop.f32.mrf.mxu0
      %v4488 = vpop.f32.mrf.mxu0
      %v4489 = vadd.f32 0.0, %v4488
      %v4490 = vpop.f32.mrf.mxu0
      %4491 = vmatprep.mubr.bf16.mxu0 0
      %4492 = vmatmul.mubr.bf16.gmra.mxu0 %v4351
      %v4493 = vpop.f32.mrf.mxu0
      %v4494 = vadd.f32 0.0, %v4493
      %v4495 = vpop.f32.mrf.mxu0
      %v4496 = vpop.f32.mrf.mxu0
      %v4497 = vadd.f32 0.0, %v4496
      %v4498 = vpop.f32.mrf.mxu0
      %4499 = vmatprep.mubr.bf16.mxu0 0
      %4500 = vmatmul.mubr.bf16.gmra.mxu0 %v4352
      %v4501 = vpop.f32.mrf.mxu0
      %v4502 = vadd.f32 0.0, %v4501
      %v4503 = vpop.f32.mrf.mxu0
      %v4504 = vpop.f32.mrf.mxu0
      %v4505 = vadd.f32 0.0, %v4504
      %v4506 = vpop.f32.mrf.mxu0
      %4507 = vmatprep.mubr.bf16.mxu0 0
      %4508 = vmatmul.mubr.bf16.gmra.mxu0 %v4353
      %v4509 = vpop.f32.mrf.mxu0
      %v4510 = vadd.f32 0.0, %v4509
      %v4511 = vpop.f32.mrf.mxu0
      %v4512 = vpop.f32.mrf.mxu0
      %v4513 = vadd.f32 0.0, %v4512
      %v4514 = vpop.f32.mrf.mxu0
      %4515 = vmatprep.mubr.bf16.mxu0 0
      %4516 = vmatmul.mubr.bf16.gmra.mxu0 %v4354
      %v4517 = vpop.f32.mrf.mxu0
      %v4518 = vadd.f32 0.0, %v4517
      %v4519 = vpop.f32.mrf.mxu0
      %v4520 = vpop.f32.mrf.mxu0
      %v4521 = vadd.f32 0.0, %v4520
      %v4522 = vpop.f32.mrf.mxu0
      %4523 = vmatprep.mubr.bf16.mxu0 0
      %4524 = vmatmul.mubr.bf16.gmra.mxu0 %v4355
      %v4525 = vpop.f32.mrf.mxu0
      %v4526 = vadd.f32 0.0, %v4525
      %v4527 = vpop.f32.mrf.mxu0
      %v4528 = vpop.f32.mrf.mxu0
      %v4529 = vadd.f32 0.0, %v4528
      %v4530 = vpop.f32.mrf.mxu0
      %4531 = vmatprep.mubr.bf16.mxu0 0
      %4532 = vmatmul.mubr.bf16.gmra.mxu0 %v4356
      %v4533 = vpop.f32.mrf.mxu0
      %v4534 = vadd.f32 0.0, %v4533
      %v4535 = vpop.f32.mrf.mxu0
      %v4536 = vpop.f32.mrf.mxu0
      %v4537 = vadd.f32 0.0, %v4536
      %v4538 = vpop.f32.mrf.mxu0
      %4539 = vmatprep.mubr.bf16.mxu0 0
      %4540 = vmatmul.mubr.bf16.gmra.mxu0 %v4357
      %v4541 = vpop.f32.mrf.mxu0
      %v4542 = vadd.f32 0.0, %v4541
      %v4543 = vpop.f32.mrf.mxu0
      %v4544 = vpop.f32.mrf.mxu0
      %v4545 = vadd.f32 0.0, %v4544
      %v4546 = vpop.f32.mrf.mxu0
      %4547 = vmatprep.mubr.bf16.mxu0 0
      %4548 = vmatmul.mubr.bf16.gmra.mxu0 %v4358
      %v4549 = vpop.f32.mrf.mxu0
      %v4550 = vadd.f32 0.0, %v4549
      %v4551 = vpop.f32.mrf.mxu0
      %v4552 = vpop.f32.mrf.mxu0
      %v4553 = vadd.f32 0.0, %v4552
      %v4554 = vpop.f32.mrf.mxu0
      %4555 = vmatprep.mubr.bf16.mxu0 0
      %4556 = vmatmul.mubr.bf16.gmra.mxu0 %v4359
      %v4557 = vpop.f32.mrf.mxu0
      %v4558 = vadd.f32 0.0, %v4557
      %v4559 = vpop.f32.mrf.mxu0
      %v4560 = vpop.f32.mrf.mxu0
      %v4561 = vadd.f32 0.0, %v4560
      %v4562 = vpop.f32.mrf.mxu0
      %4563 = vmatprep.mubr.bf16.mxu0 0
      %4564 = vmatmul.mubr.bf16.gmra.mxu0 %v4360
      %v4565 = vpop.f32.mrf.mxu0
      %v4566 = vadd.f32 0.0, %v4565
      %v4567 = vpop.f32.mrf.mxu0
      %v4568 = vpop.f32.mrf.mxu0
      %v4569 = vadd.f32 0.0, %v4568
      %v4570 = vpop.f32.mrf.mxu0
      %4571 = vmatprep.mubr.bf16.mxu0 0
      %4572 = vmatmul.mubr.bf16.gmra.mxu0 %v4361
      %v4573 = vpop.f32.mrf.mxu0
      %v4574 = vadd.f32 0.0, %v4573
      %v4575 = vpop.f32.mrf.mxu0
      %v4576 = vpop.f32.mrf.mxu0
      %v4577 = vadd.f32 0.0, %v4576
      %v4578 = vpop.f32.mrf.mxu0
      %4579 = vmatprep.mubr.bf16.mxu0 0
      %4580 = vmatmul.mubr.bf16.gmra.mxu0 %v4362
      %v4581 = vpop.f32.mrf.mxu0
      %v4582 = vadd.f32 0.0, %v4581
      %v4583 = vpop.f32.mrf.mxu0
      %v4584 = vpop.f32.mrf.mxu0
      %v4585 = vadd.f32 0.0, %v4584
      %v4586 = vpop.f32.mrf.mxu0
      %4587 = vdwg.mxu0
      %v4588 = vadd.f32 %v4201, %v4462
      %v4589 = vadd.f32 %v4202, %v4465
      %v4590 = vadd.f32 %v4203, %v4470
      %v4591 = vadd.f32 %v4204, %v4473
      %v4592 = vadd.f32 %v4205, %v4478
      %v4593 = vadd.f32 %v4206, %v4481
      %v4594 = vadd.f32 %v4207, %v4486
      %v4595 = vadd.f32 %v4208, %v4489
      %v4596 = vadd.f32 %v4209, %v4494
      %v4597 = vadd.f32 %v4210, %v4497
      %v4598 = vadd.f32 %v4211, %v4502
      %v4599 = vadd.f32 %v4212, %v4505
      %v4600 = vadd.f32 %v4213, %v4510
      %v4601 = vadd.f32 %v4214, %v4513
      %v4602 = vadd.f32 %v4215, %v4518
      %v4603 = vadd.f32 %v4216, %v4521
      %v4604 = vadd.f32 %v4217, %v4526
      %v4605 = vadd.f32 %v4218, %v4529
      %v4606 = vadd.f32 %v4219, %v4534
      %v4607 = vadd.f32 %v4220, %v4537
      %v4608 = vadd.f32 %v4221, %v4542
      %v4609 = vadd.f32 %v4222, %v4545
      %v4610 = vadd.f32 %v4223, %v4550
      %v4611 = vadd.f32 %v4224, %v4553
      %v4612 = vadd.f32 %v4225, %v4558
      %v4613 = vadd.f32 %v4226, %v4561
      %v4614 = vadd.f32 %v4227, %v4566
      %v4615 = vadd.f32 %v4228, %v4569
      %v4616 = vadd.f32 %v4229, %v4574
      %v4617 = vadd.f32 %v4230, %v4577
      %v4618 = vadd.f32 %v4231, %v4582
      %v4619 = vadd.f32 %v4232, %v4585
      %v4620 = vld [vmem:[%s4233] sm:$0xf]
      %v4621 = vld [vmem:[%s4233 + $0x4] sm:$0xf]
      %v4622 = vld [vmem:[%s4233 + $0x8] sm:$0x1]
      %v4623 = vld [vmem:[%s4233 + $0xc] sm:$0xf]
      %v4624 = vld [vmem:[%s4233 + $0x10] sm:$0xf]
      %v4625 = vld [vmem:[%s4233 + $0x14] sm:$0x1]
      %v4626 = vld [vmem:[%s4233 + $0x18] sm:$0xf]
      %v4627 = vld [vmem:[%s4233 + $0x1c] sm:$0xf]
      %v4628 = vld [vmem:[%s4233 + $0x20] sm:$0x1]
      %v4629 = vld [vmem:[%s4233 + $0x24] sm:$0xf]
      %v4630 = vld [vmem:[%s4233 + $0x28] sm:$0xf]
      %v4631 = vld [vmem:[%s4233 + $0x2c] sm:$0x1]
      %v4632 = vld [vmem:[%s4233 + $0x30] sm:$0xf]
      %v4633 = vld [vmem:[%s4233 + $0x34] sm:$0xf]
      %v4634 = vld [vmem:[%s4233 + $0x38] sm:$0x1]
      %v4635 = vld [vmem:[%s4233 + $0x3c] sm:$0xf]
      %v4636 = vld [vmem:[%s4233 + $0x40] sm:$0xf]
      %v4637 = vld [vmem:[%s4233 + $0x44] sm:$0x1]
      %v4638 = vld [vmem:[%s4233 + $0x48] sm:$0xf]
      %v4639 = vld [vmem:[%s4233 + $0x4c] sm:$0xf]
      %v4640 = vld [vmem:[%s4233 + $0x50] sm:$0x1]
      %v4641 = vld [vmem:[%s4233 + $0x54] sm:$0xf]
      %v4642 = vld [vmem:[%s4233 + $0x58] sm:$0xf]
      %v4643 = vld [vmem:[%s4233 + $0x5c] sm:$0x1]
      %v4644 = vld [vmem:[%s4233 + $0x60] sm:$0xf]
      %v4645 = vld [vmem:[%s4233 + $0x64] sm:$0xf]
      %v4646 = vld [vmem:[%s4233 + $0x68] sm:$0x1]
      %v4647 = vld [vmem:[%s4233 + $0x6c] sm:$0xf]
      %v4648 = vld [vmem:[%s4233 + $0x70] sm:$0xf]
      %v4649 = vld [vmem:[%s4233 + $0x74] sm:$0x1]
      %v4650 = vld [vmem:[%s4233 + $0x78] sm:$0xf]
      %v4651 = vld [vmem:[%s4233 + $0x7c] sm:$0xf]
      %v4652 = vld [vmem:[%s4233 + $0x80] sm:$0x1]
      %v4653 = vld [vmem:[%s4233 + $0x84] sm:$0xf]
      %v4654 = vld [vmem:[%s4233 + $0x88] sm:$0xf]
      %v4655 = vld [vmem:[%s4233 + $0x8c] sm:$0x1]
      %v4656 = vld [vmem:[%s4233 + $0x90] sm:$0xf]
      %v4657 = vld [vmem:[%s4233 + $0x94] sm:$0xf]
      %v4658 = vld [vmem:[%s4233 + $0x98] sm:$0x1]
      %v4659 = vld [vmem:[%s4233 + $0x9c] sm:$0xf]
      %v4660 = vld [vmem:[%s4233 + $0xa0] sm:$0xf]
      %v4661 = vld [vmem:[%s4233 + $0xa4] sm:$0x1]
      %v4662 = vld [vmem:[%s4233 + $0xa8] sm:$0xf]
      %v4663 = vld [vmem:[%s4233 + $0xac] sm:$0xf]
      %v4664 = vld [vmem:[%s4233 + $0xb0] sm:$0x1]
      %v4665 = vld [vmem:[%s4233 + $0xb4] sm:$0xf]
      %v4666 = vld [vmem:[%s4233 + $0xb8] sm:$0xf]
      %v4667 = vld [vmem:[%s4233 + $0xbc] sm:$0x1]
      %v4669 = vshrl.u32 %v4620, 16
      %v4671 = vrot.slane %v4669, 4
      %v4672 = vshll.u32 %v4620, 16
      %v4674 = vrot.slane %v4672, 5
      %v4675 = vor.u32 %v4671, %v4674
      %v4676 = vrot.slane %v4675, 4
      %v4678 = vshll.u32 %v4621, 16
      %v4680 = vrot.slane %v4678, 5
      %v4681 = vsel %vm1130, %v4676, %v4680
      %v4682 = vshrl.u32 %v4621, 16
      %v4684 = vrot.slane %v4682, 4
      %v4685 = vor.u32 %v4684, %v4680
      %v4686 = vrot.slane %v4685, 4
      %v4688 = vshll.u32 %v4622, 16
      %v4690 = vrot.slane %v4688, 5
      %v4691 = vsel %vm1130, %v4686, %v4690
      %v4693 = vshrl.u32 %v4623, 16
      %v4695 = vrot.slane %v4693, 4
      %v4696 = vshll.u32 %v4623, 16
      %v4698 = vrot.slane %v4696, 5
      %v4699 = vor.u32 %v4695, %v4698
      %v4700 = vrot.slane %v4699, 4
      %v4702 = vshll.u32 %v4624, 16
      %v4704 = vrot.slane %v4702, 5
      %v4705 = vsel %vm1130, %v4700, %v4704
      %v4706 = vshrl.u32 %v4624, 16
      %v4708 = vrot.slane %v4706, 4
      %v4709 = vor.u32 %v4708, %v4704
      %v4710 = vrot.slane %v4709, 4
      %v4712 = vshll.u32 %v4625, 16
      %v4714 = vrot.slane %v4712, 5
      %v4715 = vsel %vm1130, %v4710, %v4714
      %v4717 = vshrl.u32 %v4626, 16
      %v4719 = vrot.slane %v4717, 4
      %v4720 = vshll.u32 %v4626, 16
      %v4722 = vrot.slane %v4720, 5
      %v4723 = vor.u32 %v4719, %v4722
      %v4724 = vrot.slane %v4723, 4
      %v4726 = vshll.u32 %v4627, 16
      %v4728 = vrot.slane %v4726, 5
      %v4729 = vsel %vm1130, %v4724, %v4728
      %v4730 = vshrl.u32 %v4627, 16
      %v4732 = vrot.slane %v4730, 4
      %v4733 = vor.u32 %v4732, %v4728
      %v4734 = vrot.slane %v4733, 4
      %v4736 = vshll.u32 %v4628, 16
      %v4738 = vrot.slane %v4736, 5
      %v4739 = vsel %vm1130, %v4734, %v4738
      %v4741 = vshrl.u32 %v4629, 16
      %v4743 = vrot.slane %v4741, 4
      %v4744 = vshll.u32 %v4629, 16
      %v4746 = vrot.slane %v4744, 5
      %v4747 = vor.u32 %v4743, %v4746
      %v4748 = vrot.slane %v4747, 4
      %v4750 = vshll.u32 %v4630, 16
      %v4752 = vrot.slane %v4750, 5
      %v4753 = vsel %vm1130, %v4748, %v4752
      %v4754 = vshrl.u32 %v4630, 16
      %v4756 = vrot.slane %v4754, 4
      %v4757 = vor.u32 %v4756, %v4752
      %v4758 = vrot.slane %v4757, 4
      %v4760 = vshll.u32 %v4631, 16
      %v4762 = vrot.slane %v4760, 5
      %v4763 = vsel %vm1130, %v4758, %v4762
      %v4765 = vshrl.u32 %v4632, 16
      %v4767 = vrot.slane %v4765, 4
      %v4768 = vshll.u32 %v4632, 16
      %v4770 = vrot.slane %v4768, 5
      %v4771 = vor.u32 %v4767, %v4770
      %v4772 = vrot.slane %v4771, 4
      %v4774 = vshll.u32 %v4633, 16
      %v4776 = vrot.slane %v4774, 5
      %v4777 = vsel %vm1130, %v4772, %v4776
      %v4778 = vshrl.u32 %v4633, 16
      %v4780 = vrot.slane %v4778, 4
      %v4781 = vor.u32 %v4780, %v4776
      %v4782 = vrot.slane %v4781, 4
      %v4784 = vshll.u32 %v4634, 16
      %v4786 = vrot.slane %v4784, 5
      %v4787 = vsel %vm1130, %v4782, %v4786
      %v4789 = vshrl.u32 %v4635, 16
      %v4791 = vrot.slane %v4789, 4
      %v4792 = vshll.u32 %v4635, 16
      %v4794 = vrot.slane %v4792, 5
      %v4795 = vor.u32 %v4791, %v4794
      %v4796 = vrot.slane %v4795, 4
      %v4798 = vshll.u32 %v4636, 16
      %v4800 = vrot.slane %v4798, 5
      %v4801 = vsel %vm1130, %v4796, %v4800
      %v4802 = vshrl.u32 %v4636, 16
      %v4804 = vrot.slane %v4802, 4
      %v4805 = vor.u32 %v4804, %v4800
      %v4806 = vrot.slane %v4805, 4
      %v4808 = vshll.u32 %v4637, 16
      %v4810 = vrot.slane %v4808, 5
      %v4811 = vsel %vm1130, %v4806, %v4810
      %v4813 = vshrl.u32 %v4638, 16
      %v4815 = vrot.slane %v4813, 4
      %v4816 = vshll.u32 %v4638, 16
      %v4818 = vrot.slane %v4816, 5
      %v4819 = vor.u32 %v4815, %v4818
      %v4820 = vrot.slane %v4819, 4
      %v4822 = vshll.u32 %v4639, 16
      %v4824 = vrot.slane %v4822, 5
      %v4825 = vsel %vm1130, %v4820, %v4824
      %v4826 = vshrl.u32 %v4639, 16
      %v4828 = vrot.slane %v4826, 4
      %v4829 = vor.u32 %v4828, %v4824
      %v4830 = vrot.slane %v4829, 4
      %v4832 = vshll.u32 %v4640, 16
      %v4834 = vrot.slane %v4832, 5
      %v4835 = vsel %vm1130, %v4830, %v4834
      %v4837 = vshrl.u32 %v4641, 16
      %v4839 = vrot.slane %v4837, 4
      %v4840 = vshll.u32 %v4641, 16
      %v4842 = vrot.slane %v4840, 5
      %v4843 = vor.u32 %v4839, %v4842
      %v4844 = vrot.slane %v4843, 4
      %v4846 = vshll.u32 %v4642, 16
      %v4848 = vrot.slane %v4846, 5
      %v4849 = vsel %vm1130, %v4844, %v4848
      %v4850 = vshrl.u32 %v4642, 16
      %v4852 = vrot.slane %v4850, 4
      %v4853 = vor.u32 %v4852, %v4848
      %v4854 = vrot.slane %v4853, 4
      %v4856 = vshll.u32 %v4643, 16
      %v4858 = vrot.slane %v4856, 5
      %v4859 = vsel %vm1130, %v4854, %v4858
      %v4861 = vshrl.u32 %v4644, 16
      %v4863 = vrot.slane %v4861, 4
      %v4864 = vshll.u32 %v4644, 16
      %v4866 = vrot.slane %v4864, 5
      %v4867 = vor.u32 %v4863, %v4866
      %v4868 = vrot.slane %v4867, 4
      %v4870 = vshll.u32 %v4645, 16
      %v4872 = vrot.slane %v4870, 5
      %v4873 = vsel %vm1130, %v4868, %v4872
      %v4874 = vshrl.u32 %v4645, 16
      %v4876 = vrot.slane %v4874, 4
      %v4877 = vor.u32 %v4876, %v4872
      %v4878 = vrot.slane %v4877, 4
      %v4880 = vshll.u32 %v4646, 16
      %v4882 = vrot.slane %v4880, 5
      %v4883 = vsel %vm1130, %v4878, %v4882
      %v4885 = vshrl.u32 %v4647, 16
      %v4887 = vrot.slane %v4885, 4
      %v4888 = vshll.u32 %v4647, 16
      %v4890 = vrot.slane %v4888, 5
      %v4891 = vor.u32 %v4887, %v4890
      %v4892 = vrot.slane %v4891, 4
      %v4894 = vshll.u32 %v4648, 16
      %v4896 = vrot.slane %v4894, 5
      %v4897 = vsel %vm1130, %v4892, %v4896
      %v4898 = vshrl.u32 %v4648, 16
      %v4900 = vrot.slane %v4898, 4
      %v4901 = vor.u32 %v4900, %v4896
      %v4902 = vrot.slane %v4901, 4
      %v4904 = vshll.u32 %v4649, 16
      %v4906 = vrot.slane %v4904, 5
      %v4907 = vsel %vm1130, %v4902, %v4906
      %v4909 = vshrl.u32 %v4650, 16
      %v4911 = vrot.slane %v4909, 4
      %v4912 = vshll.u32 %v4650, 16
      %v4914 = vrot.slane %v4912, 5
      %v4915 = vor.u32 %v4911, %v4914
      %v4916 = vrot.slane %v4915, 4
      %v4918 = vshll.u32 %v4651, 16
      %v4920 = vrot.slane %v4918, 5
      %v4921 = vsel %vm1130, %v4916, %v4920
      %v4922 = vshrl.u32 %v4651, 16
      %v4924 = vrot.slane %v4922, 4
      %v4925 = vor.u32 %v4924, %v4920
      %v4926 = vrot.slane %v4925, 4
      %v4928 = vshll.u32 %v4652, 16
      %v4930 = vrot.slane %v4928, 5
      %v4931 = vsel %vm1130, %v4926, %v4930
      %v4933 = vshrl.u32 %v4653, 16
      %v4935 = vrot.slane %v4933, 4
      %v4936 = vshll.u32 %v4653, 16
      %v4938 = vrot.slane %v4936, 5
      %v4939 = vor.u32 %v4935, %v4938
      %v4940 = vrot.slane %v4939, 4
      %v4942 = vshll.u32 %v4654, 16
      %v4944 = vrot.slane %v4942, 5
      %v4945 = vsel %vm1130, %v4940, %v4944
      %v4946 = vshrl.u32 %v4654, 16
      %v4948 = vrot.slane %v4946, 4
      %v4949 = vor.u32 %v4948, %v4944
      %v4950 = vrot.slane %v4949, 4
      %v4952 = vshll.u32 %v4655, 16
      %v4954 = vrot.slane %v4952, 5
      %v4955 = vsel %vm1130, %v4950, %v4954
      %v4957 = vshrl.u32 %v4656, 16
      %v4959 = vrot.slane %v4957, 4
      %v4960 = vshll.u32 %v4656, 16
      %v4962 = vrot.slane %v4960, 5
      %v4963 = vor.u32 %v4959, %v4962
      %v4964 = vrot.slane %v4963, 4
      %v4966 = vshll.u32 %v4657, 16
      %v4968 = vrot.slane %v4966, 5
      %v4969 = vsel %vm1130, %v4964, %v4968
      %v4970 = vshrl.u32 %v4657, 16
      %v4972 = vrot.slane %v4970, 4
      %v4973 = vor.u32 %v4972, %v4968
      %v4974 = vrot.slane %v4973, 4
      %v4976 = vshll.u32 %v4658, 16
      %v4978 = vrot.slane %v4976, 5
      %v4979 = vsel %vm1130, %v4974, %v4978
      %v4981 = vshrl.u32 %v4659, 16
      %v4983 = vrot.slane %v4981, 4
      %v4984 = vshll.u32 %v4659, 16
      %v4986 = vrot.slane %v4984, 5
      %v4987 = vor.u32 %v4983, %v4986
      %v4988 = vrot.slane %v4987, 4
      %v4990 = vshll.u32 %v4660, 16
      %v4992 = vrot.slane %v4990, 5
      %v4993 = vsel %vm1130, %v4988, %v4992
      %v4994 = vshrl.u32 %v4660, 16
      %v4996 = vrot.slane %v4994, 4
      %v4997 = vor.u32 %v4996, %v4992
      %v4998 = vrot.slane %v4997, 4
      %v5000 = vshll.u32 %v4661, 16
      %v5002 = vrot.slane %v5000, 5
      %v5003 = vsel %vm1130, %v4998, %v5002
      %v5005 = vshrl.u32 %v4662, 16
      %v5007 = vrot.slane %v5005, 4
      %v5008 = vshll.u32 %v4662, 16
      %v5010 = vrot.slane %v5008, 5
      %v5011 = vor.u32 %v5007, %v5010
      %v5012 = vrot.slane %v5011, 4
      %v5014 = vshll.u32 %v4663, 16
      %v5016 = vrot.slane %v5014, 5
      %v5017 = vsel %vm1130, %v5012, %v5016
      %v5018 = vshrl.u32 %v4663, 16
      %v5020 = vrot.slane %v5018, 4
      %v5021 = vor.u32 %v5020, %v5016
      %v5022 = vrot.slane %v5021, 4
      %v5024 = vshll.u32 %v4664, 16
      %v5026 = vrot.slane %v5024, 5
      %v5027 = vsel %vm1130, %v5022, %v5026
      %v5029 = vshrl.u32 %v4665, 16
      %v5031 = vrot.slane %v5029, 4
      %v5032 = vshll.u32 %v4665, 16
      %v5034 = vrot.slane %v5032, 5
      %v5035 = vor.u32 %v5031, %v5034
      %v5036 = vrot.slane %v5035, 4
      %v5038 = vshll.u32 %v4666, 16
      %v5040 = vrot.slane %v5038, 5
      %v5041 = vsel %vm1130, %v5036, %v5040
      %v5042 = vshrl.u32 %v4666, 16
      %v5044 = vrot.slane %v5042, 4
      %v5045 = vor.u32 %v5044, %v5040
      %v5046 = vrot.slane %v5045, 4
      %v5048 = vshll.u32 %v4667, 16
      %v5050 = vrot.slane %v5048, 5
      %v5051 = vsel %vm1130, %v5046, %v5050
      %s5052 = scalar_lea.vmem %s3, 448
      %v5053 = vld [vmem:[%s5052] sm:$0xf]
      %v5054 = vld [vmem:[%s5052 + $0x4] sm:$0xf]
      %v5055 = vld [vmem:[%s5052 + $0x8] sm:$0xf]
      %v5056 = vld [vmem:[%s5052 + $0xc] sm:$0xf]
      %v5057 = vld [vmem:[%s5052 + $0x10] sm:$0xf]
      %v5058 = vld [vmem:[%s5052 + $0x14] sm:$0xf]
      %v5059 = vld [vmem:[%s5052 + $0x18] sm:$0xf]
      %v5060 = vld [vmem:[%s5052 + $0x1c] sm:$0xf]
      %v5061 = vld [vmem:[%s5052 + $0x20] sm:$0xf]
      %v5062 = vld [vmem:[%s5052 + $0x24] sm:$0xf]
      %v5063 = vld [vmem:[%s5052 + $0x28] sm:$0xf]
      %v5064 = vld [vmem:[%s5052 + $0x2c] sm:$0xf]
      %v5065 = vld [vmem:[%s5052 + $0x30] sm:$0xf]
      %v5066 = vld [vmem:[%s5052 + $0x34] sm:$0xf]
      %v5067 = vld [vmem:[%s5052 + $0x38] sm:$0xf]
      %v5068 = vld [vmem:[%s5052 + $0x3c] sm:$0xf]
      %v5069 = vunpack.c.l.b16 %v4681
      %v5070 = vunpack.c.l.b16 %v4691
      %v5071 = vunpack.c.l.b16 %v4705
      %v5072 = vunpack.c.l.b16 %v4715
      %v5073 = vunpack.c.l.b16 %v4729
      %v5074 = vunpack.c.l.b16 %v4739
      %v5075 = vunpack.c.l.b16 %v4753
      %v5076 = vunpack.c.l.b16 %v4763
      %v5077 = vunpack.c.l.b16 %v4777
      %v5078 = vunpack.c.l.b16 %v4787
      %v5079 = vunpack.c.l.b16 %v4801
      %v5080 = vunpack.c.l.b16 %v4811
      %v5081 = vunpack.c.l.b16 %v4825
      %v5082 = vunpack.c.l.b16 %v4835
      %v5083 = vunpack.c.l.b16 %v4849
      %v5084 = vunpack.c.l.b16 %v4859
      %v5085 = vunpack.c.l.b16 %v4873
      %v5086 = vunpack.c.l.b16 %v4883
      %v5087 = vunpack.c.l.b16 %v4897
      %v5088 = vunpack.c.l.b16 %v4907
      %v5089 = vunpack.c.l.b16 %v4921
      %v5090 = vunpack.c.l.b16 %v4931
      %v5091 = vunpack.c.l.b16 %v4945
      %v5092 = vunpack.c.l.b16 %v4955
      %v5093 = vunpack.c.l.b16 %v4969
      %v5094 = vunpack.c.l.b16 %v4979
      %v5095 = vunpack.c.l.b16 %v4993
      %v5096 = vunpack.c.l.b16 %v5003
      %v5097 = vunpack.c.l.b16 %v5017
      %v5098 = vunpack.c.l.b16 %v5027
      %v5099 = vunpack.c.l.b16 %v5041
      %v5100 = vunpack.c.l.b16 %v5051
      %v5101 = vpack.c.b16 %v5070, %v5069
      %v5102 = vpack.c.b16 %v5072, %v5071
      %v5103 = vpack.c.b16 %v5074, %v5073
      %v5104 = vpack.c.b16 %v5076, %v5075
      %v5105 = vpack.c.b16 %v5078, %v5077
      %v5106 = vpack.c.b16 %v5080, %v5079
      %v5107 = vpack.c.b16 %v5082, %v5081
      %v5108 = vpack.c.b16 %v5084, %v5083
      %v5109 = vpack.c.b16 %v5086, %v5085
      %v5110 = vpack.c.b16 %v5088, %v5087
      %v5111 = vpack.c.b16 %v5090, %v5089
      %v5112 = vpack.c.b16 %v5092, %v5091
      %v5113 = vpack.c.b16 %v5094, %v5093
      %v5114 = vpack.c.b16 %v5096, %v5095
      %v5115 = vpack.c.b16 %v5098, %v5097
      %v5116 = vpack.c.b16 %v5100, %v5099
      %v5149 = vunpack.c.l.b16 %v5053
      %v5150 = vunpack.c.l.b16 %v5054
      %v5151 = vunpack.c.l.b16 %v5055
      %v5152 = vunpack.c.l.b16 %v5056
      %v5153 = vunpack.c.l.b16 %v5057
      %v5154 = vunpack.c.l.b16 %v5058
      %v5155 = vunpack.c.l.b16 %v5059
      %v5156 = vunpack.c.l.b16 %v5060
      %v5157 = vunpack.c.l.b16 %v5061
      %v5158 = vunpack.c.l.b16 %v5062
      %v5159 = vunpack.c.l.b16 %v5063
      %v5160 = vunpack.c.l.b16 %v5064
      %v5161 = vunpack.c.l.b16 %v5065
      %v5162 = vunpack.c.l.b16 %v5066
      %v5163 = vunpack.c.l.b16 %v5067
      %v5164 = vunpack.c.l.b16 %v5068
      %v5165 = vpack.c.b16 %v5150, %v5149
      %v5166 = vpack.c.b16 %v5152, %v5151
      %v5167 = vpack.c.b16 %v5154, %v5153
      %v5168 = vpack.c.b16 %v5156, %v5155
      %v5169 = vpack.c.b16 %v5158, %v5157
      %v5170 = vpack.c.b16 %v5160, %v5159
      %v5171 = vpack.c.b16 %v5162, %v5161
      %v5172 = vpack.c.b16 %v5164, %v5163
      %5181 = vmatprep.subr.bf16.mxu0 0
      %5182 = vmatpush1.bf16.msra.mxu0 %v5172
      %5183 = vmatprep.subr.bf16.mxu0 0
      %5184 = vmatpush1.bf16.msra.mxu0 %v5171
      %5185 = vmatprep.subr.bf16.mxu0 0
      %5186 = vmatpush1.bf16.msra.mxu0 %v5170
      %5187 = vmatprep.subr.bf16.mxu0 0
      %5188 = vmatpush1.bf16.msra.mxu0 %v5169
      %5189 = vmatprep.subr.bf16.mxu0 0
      %5190 = vmatpush1.bf16.msra.mxu0 %v5168
      %5191 = vmatprep.subr.bf16.mxu0 0
      %5192 = vmatpush1.bf16.msra.mxu0 %v5167
      %5193 = vmatprep.subr.bf16.mxu0 0
      %5194 = vmatpush1.bf16.msra.mxu0 %v5166
      %5195 = vmatprep.subr.bf16.mxu0 0
      %5196 = vmatpush1.bf16.msra.mxu0 %v5165
      %5197 = vmatprep.subr.bf16.mxu0 0
      %5198 = vmatpush2.bf16.msra.mxu0 0
      %5199 = vmatprep.subr.bf16.mxu0 0
      %5200 = vmatpush2.bf16.msra.mxu0 0
      %5201 = vmatprep.subr.bf16.mxu0 0
      %5202 = vmatpush2.bf16.msra.mxu0 0
      %5203 = vmatprep.subr.bf16.mxu0 0
      %5204 = vmatpush2.bf16.msra.mxu0 0
      %5205 = vmatprep.subr.bf16.mxu0 0
      %5206 = vmatpush2.bf16.msra.mxu0 0
      %5207 = vmatprep.subr.bf16.mxu0 0
      %5208 = vmatpush2.bf16.msra.mxu0 0
      %5209 = vmatprep.subr.bf16.mxu0 0
      %5210 = vmatpush2.bf16.msra.mxu0 0
      %5211 = vmatprep.subr.bf16.mxu0 0
      %5212 = vmatpush2.bf16.msra.mxu0 0
      %5213 = vmatprep.mubr.bf16.mxu0 0
      %5214 = vmatmul.mubr.bf16.gmra.mxu0 %v5101
      %v5215 = vpop.f32.mrf.mxu0
      %v5216 = vadd.f32 0.0, %v5215
      %v5217 = vpop.f32.mrf.mxu0
      %v5218 = vpop.f32.mrf.mxu0
      %v5219 = vadd.f32 0.0, %v5218
      %v5220 = vpop.f32.mrf.mxu0
      %5221 = vmatprep.mubr.bf16.mxu0 0
      %5222 = vmatmul.mubr.bf16.gmra.mxu0 %v5102
      %v5223 = vpop.f32.mrf.mxu0
      %v5224 = vadd.f32 0.0, %v5223
      %v5225 = vpop.f32.mrf.mxu0
      %v5226 = vpop.f32.mrf.mxu0
      %v5227 = vadd.f32 0.0, %v5226
      %v5228 = vpop.f32.mrf.mxu0
      %5229 = vmatprep.mubr.bf16.mxu0 0
      %5230 = vmatmul.mubr.bf16.gmra.mxu0 %v5103
      %v5231 = vpop.f32.mrf.mxu0
      %v5232 = vadd.f32 0.0, %v5231
      %v5233 = vpop.f32.mrf.mxu0
      %v5234 = vpop.f32.mrf.mxu0
      %v5235 = vadd.f32 0.0, %v5234
      %v5236 = vpop.f32.mrf.mxu0
      %5237 = vmatprep.mubr.bf16.mxu0 0
      %5238 = vmatmul.mubr.bf16.gmra.mxu0 %v5104
      %v5239 = vpop.f32.mrf.mxu0
      %v5240 = vadd.f32 0.0, %v5239
      %v5241 = vpop.f32.mrf.mxu0
      %v5242 = vpop.f32.mrf.mxu0
      %v5243 = vadd.f32 0.0, %v5242
      %v5244 = vpop.f32.mrf.mxu0
      %5245 = vmatprep.mubr.bf16.mxu0 0
      %5246 = vmatmul.mubr.bf16.gmra.mxu0 %v5105
      %v5247 = vpop.f32.mrf.mxu0
      %v5248 = vadd.f32 0.0, %v5247
      %v5249 = vpop.f32.mrf.mxu0
      %v5250 = vpop.f32.mrf.mxu0
      %v5251 = vadd.f32 0.0, %v5250
      %v5252 = vpop.f32.mrf.mxu0
      %5253 = vmatprep.mubr.bf16.mxu0 0
      %5254 = vmatmul.mubr.bf16.gmra.mxu0 %v5106
      %v5255 = vpop.f32.mrf.mxu0
      %v5256 = vadd.f32 0.0, %v5255
      %v5257 = vpop.f32.mrf.mxu0
      %v5258 = vpop.f32.mrf.mxu0
      %v5259 = vadd.f32 0.0, %v5258
      %v5260 = vpop.f32.mrf.mxu0
      %5261 = vmatprep.mubr.bf16.mxu0 0
      %5262 = vmatmul.mubr.bf16.gmra.mxu0 %v5107
      %v5263 = vpop.f32.mrf.mxu0
      %v5264 = vadd.f32 0.0, %v5263
      %v5265 = vpop.f32.mrf.mxu0
      %v5266 = vpop.f32.mrf.mxu0
      %v5267 = vadd.f32 0.0, %v5266
      %v5268 = vpop.f32.mrf.mxu0
      %5269 = vmatprep.mubr.bf16.mxu0 0
      %5270 = vmatmul.mubr.bf16.gmra.mxu0 %v5108
      %v5271 = vpop.f32.mrf.mxu0
      %v5272 = vadd.f32 0.0, %v5271
      %v5273 = vpop.f32.mrf.mxu0
      %v5274 = vpop.f32.mrf.mxu0
      %v5275 = vadd.f32 0.0, %v5274
      %v5276 = vpop.f32.mrf.mxu0
      %5277 = vmatprep.mubr.bf16.mxu0 0
      %5278 = vmatmul.mubr.bf16.gmra.mxu0 %v5109
      %v5279 = vpop.f32.mrf.mxu0
      %v5280 = vadd.f32 0.0, %v5279
      %v5281 = vpop.f32.mrf.mxu0
      %v5282 = vpop.f32.mrf.mxu0
      %v5283 = vadd.f32 0.0, %v5282
      %v5284 = vpop.f32.mrf.mxu0
      %5285 = vmatprep.mubr.bf16.mxu0 0
      %5286 = vmatmul.mubr.bf16.gmra.mxu0 %v5110
      %v5287 = vpop.f32.mrf.mxu0
      %v5288 = vadd.f32 0.0, %v5287
      %v5289 = vpop.f32.mrf.mxu0
      %v5290 = vpop.f32.mrf.mxu0
      %v5291 = vadd.f32 0.0, %v5290
      %v5292 = vpop.f32.mrf.mxu0
      %5293 = vmatprep.mubr.bf16.mxu0 0
      %5294 = vmatmul.mubr.bf16.gmra.mxu0 %v5111
      %v5295 = vpop.f32.mrf.mxu0
      %v5296 = vadd.f32 0.0, %v5295
      %v5297 = vpop.f32.mrf.mxu0
      %v5298 = vpop.f32.mrf.mxu0
      %v5299 = vadd.f32 0.0, %v5298
      %v5300 = vpop.f32.mrf.mxu0
      %5301 = vmatprep.mubr.bf16.mxu0 0
      %5302 = vmatmul.mubr.bf16.gmra.mxu0 %v5112
      %v5303 = vpop.f32.mrf.mxu0
      %v5304 = vadd.f32 0.0, %v5303
      %v5305 = vpop.f32.mrf.mxu0
      %v5306 = vpop.f32.mrf.mxu0
      %v5307 = vadd.f32 0.0, %v5306
      %v5308 = vpop.f32.mrf.mxu0
      %5309 = vmatprep.mubr.bf16.mxu0 0
      %5310 = vmatmul.mubr.bf16.gmra.mxu0 %v5113
      %v5311 = vpop.f32.mrf.mxu0
      %v5312 = vadd.f32 0.0, %v5311
      %v5313 = vpop.f32.mrf.mxu0
      %v5314 = vpop.f32.mrf.mxu0
      %v5315 = vadd.f32 0.0, %v5314
      %v5316 = vpop.f32.mrf.mxu0
      %5317 = vmatprep.mubr.bf16.mxu0 0
      %5318 = vmatmul.mubr.bf16.gmra.mxu0 %v5114
      %v5319 = vpop.f32.mrf.mxu0
      %v5320 = vadd.f32 0.0, %v5319
      %v5321 = vpop.f32.mrf.mxu0
      %v5322 = vpop.f32.mrf.mxu0
      %v5323 = vadd.f32 0.0, %v5322
      %v5324 = vpop.f32.mrf.mxu0
      %5325 = vmatprep.mubr.bf16.mxu0 0
      %5326 = vmatmul.mubr.bf16.gmra.mxu0 %v5115
      %v5327 = vpop.f32.mrf.mxu0
      %v5328 = vadd.f32 0.0, %v5327
      %v5329 = vpop.f32.mrf.mxu0
      %v5330 = vpop.f32.mrf.mxu0
      %v5331 = vadd.f32 0.0, %v5330
      %v5332 = vpop.f32.mrf.mxu0
      %5333 = vmatprep.mubr.bf16.mxu0 0
      %5334 = vmatmul.mubr.bf16.gmra.mxu0 %v5116
      %v5335 = vpop.f32.mrf.mxu0
      %v5336 = vadd.f32 0.0, %v5335
      %v5337 = vpop.f32.mrf.mxu0
      %v5338 = vpop.f32.mrf.mxu0
      %v5339 = vadd.f32 0.0, %v5338
      %v5340 = vpop.f32.mrf.mxu0
      %5341 = vdwg.mxu0
      %v5342 = vadd.f32 %v4588, %v5216
      %v5343 = vadd.f32 %v4589, %v5219
      %v5344 = vadd.f32 %v4590, %v5224
      %v5345 = vadd.f32 %v4591, %v5227
      %v5346 = vadd.f32 %v4592, %v5232
      %v5347 = vadd.f32 %v4593, %v5235
      %v5348 = vadd.f32 %v4594, %v5240
      %v5349 = vadd.f32 %v4595, %v5243
      %v5350 = vadd.f32 %v4596, %v5248
      %v5351 = vadd.f32 %v4597, %v5251
      %v5352 = vadd.f32 %v4598, %v5256
      %v5353 = vadd.f32 %v4599, %v5259
      %v5354 = vadd.f32 %v4600, %v5264
      %v5355 = vadd.f32 %v4601, %v5267
      %v5356 = vadd.f32 %v4602, %v5272
      %v5357 = vadd.f32 %v4603, %v5275
      %v5358 = vadd.f32 %v4604, %v5280
      %v5359 = vadd.f32 %v4605, %v5283
      %v5360 = vadd.f32 %v4606, %v5288
      %v5361 = vadd.f32 %v4607, %v5291
      %v5362 = vadd.f32 %v4608, %v5296
      %v5363 = vadd.f32 %v4609, %v5299
      %v5364 = vadd.f32 %v4610, %v5304
      %v5365 = vadd.f32 %v4611, %v5307
      %v5366 = vadd.f32 %v4612, %v5312
      %v5367 = vadd.f32 %v4613, %v5315
      %v5368 = vadd.f32 %v4614, %v5320
      %v5369 = vadd.f32 %v4615, %v5323
      %v5370 = vadd.f32 %v4616, %v5328
      %v5371 = vadd.f32 %v4617, %v5331
      %v5372 = vadd.f32 %v4618, %v5336
      %v5373 = vadd.f32 %v4619, %v5339
      %v5374 = vld [vmem:[%s4233] sm:$0xe]
      %v5375 = vld [vmem:[%s4233 + $0xc] sm:$0xe]
      %v5376 = vld [vmem:[%s4233 + $0x18] sm:$0xe]
      %v5377 = vld [vmem:[%s4233 + $0x24] sm:$0xe]
      %v5378 = vld [vmem:[%s4233 + $0x30] sm:$0xe]
      %v5379 = vld [vmem:[%s4233 + $0x3c] sm:$0xe]
      %v5380 = vld [vmem:[%s4233 + $0x48] sm:$0xe]
      %v5381 = vld [vmem:[%s4233 + $0x54] sm:$0xe]
      %v5382 = vld [vmem:[%s4233 + $0x60] sm:$0xe]
      %v5383 = vld [vmem:[%s4233 + $0x6c] sm:$0xe]
      %v5384 = vld [vmem:[%s4233 + $0x78] sm:$0xe]
      %v5385 = vld [vmem:[%s4233 + $0x84] sm:$0xe]
      %v5386 = vld [vmem:[%s4233 + $0x90] sm:$0xe]
      %v5387 = vld [vmem:[%s4233 + $0x9c] sm:$0xe]
      %v5388 = vld [vmem:[%s4233 + $0xa8] sm:$0xe]
      %v5389 = vld [vmem:[%s4233 + $0xb4] sm:$0xe]
      %v5438 = vrot.slane %v5374, 5
      %v5439 = vrot.slane %v5438, 4
      %v5440 = vrot.slane %v4621, 5
      %v5441 = vsel %vm2160, %v5439, %v5440
      %v5442 = vrot.slane %v5440, 4
      %v5443 = vrot.slane %v4622, 5
      %v5444 = vsel %vm2160, %v5442, %v5443
      %v5445 = vrot.slane %v5375, 5
      %v5446 = vrot.slane %v5445, 4
      %v5447 = vrot.slane %v4624, 5
      %v5448 = vsel %vm2160, %v5446, %v5447
      %v5449 = vrot.slane %v5447, 4
      %v5450 = vrot.slane %v4625, 5
      %v5451 = vsel %vm2160, %v5449, %v5450
      %v5452 = vrot.slane %v5376, 5
      %v5453 = vrot.slane %v5452, 4
      %v5454 = vrot.slane %v4627, 5
      %v5455 = vsel %vm2160, %v5453, %v5454
      %v5456 = vrot.slane %v5454, 4
      %v5457 = vrot.slane %v4628, 5
      %v5458 = vsel %vm2160, %v5456, %v5457
      %v5459 = vrot.slane %v5377, 5
      %v5460 = vrot.slane %v5459, 4
      %v5461 = vrot.slane %v4630, 5
      %v5462 = vsel %vm2160, %v5460, %v5461
      %v5463 = vrot.slane %v5461, 4
      %v5464 = vrot.slane %v4631, 5
      %v5465 = vsel %vm2160, %v5463, %v5464
      %v5466 = vrot.slane %v5378, 5
      %v5467 = vrot.slane %v5466, 4
      %v5468 = vrot.slane %v4633, 5
      %v5469 = vsel %vm2160, %v5467, %v5468
      %v5470 = vrot.slane %v5468, 4
      %v5471 = vrot.slane %v4634, 5
      %v5472 = vsel %vm2160, %v5470, %v5471
      %v5473 = vrot.slane %v5379, 5
      %v5474 = vrot.slane %v5473, 4
      %v5475 = vrot.slane %v4636, 5
      %v5476 = vsel %vm2160, %v5474, %v5475
      %v5477 = vrot.slane %v5475, 4
      %v5478 = vrot.slane %v4637, 5
      %v5479 = vsel %vm2160, %v5477, %v5478
      %v5480 = vrot.slane %v5380, 5
      %v5481 = vrot.slane %v5480, 4
      %v5482 = vrot.slane %v4639, 5
      %v5483 = vsel %vm2160, %v5481, %v5482
      %v5484 = vrot.slane %v5482, 4
      %v5485 = vrot.slane %v4640, 5
      %v5486 = vsel %vm2160, %v5484, %v5485
      %v5487 = vrot.slane %v5381, 5
      %v5488 = vrot.slane %v5487, 4
      %v5489 = vrot.slane %v4642, 5
      %v5490 = vsel %vm2160, %v5488, %v5489
      %v5491 = vrot.slane %v5489, 4
      %v5492 = vrot.slane %v4643, 5
      %v5493 = vsel %vm2160, %v5491, %v5492
      %v5494 = vrot.slane %v5382, 5
      %v5495 = vrot.slane %v5494, 4
      %v5496 = vrot.slane %v4645, 5
      %v5497 = vsel %vm2160, %v5495, %v5496
      %v5498 = vrot.slane %v5496, 4
      %v5499 = vrot.slane %v4646, 5
      %v5500 = vsel %vm2160, %v5498, %v5499
      %v5501 = vrot.slane %v5383, 5
      %v5502 = vrot.slane %v5501, 4
      %v5503 = vrot.slane %v4648, 5
      %v5504 = vsel %vm2160, %v5502, %v5503
      %v5505 = vrot.slane %v5503, 4
      %v5506 = vrot.slane %v4649, 5
      %v5507 = vsel %vm2160, %v5505, %v5506
      %v5508 = vrot.slane %v5384, 5
      %v5509 = vrot.slane %v5508, 4
      %v5510 = vrot.slane %v4651, 5
      %v5511 = vsel %vm2160, %v5509, %v5510
      %v5512 = vrot.slane %v5510, 4
      %v5513 = vrot.slane %v4652, 5
      %v5514 = vsel %vm2160, %v5512, %v5513
      %v5515 = vrot.slane %v5385, 5
      %v5516 = vrot.slane %v5515, 4
      %v5517 = vrot.slane %v4654, 5
      %v5518 = vsel %vm2160, %v5516, %v5517
      %v5519 = vrot.slane %v5517, 4
      %v5520 = vrot.slane %v4655, 5
      %v5521 = vsel %vm2160, %v5519, %v5520
      %v5522 = vrot.slane %v5386, 5
      %v5523 = vrot.slane %v5522, 4
      %v5524 = vrot.slane %v4657, 5
      %v5525 = vsel %vm2160, %v5523, %v5524
      %v5526 = vrot.slane %v5524, 4
      %v5527 = vrot.slane %v4658, 5
      %v5528 = vsel %vm2160, %v5526, %v5527
      %v5529 = vrot.slane %v5387, 5
      %v5530 = vrot.slane %v5529, 4
      %v5531 = vrot.slane %v4660, 5
      %v5532 = vsel %vm2160, %v5530, %v5531
      %v5533 = vrot.slane %v5531, 4
      %v5534 = vrot.slane %v4661, 5
      %v5535 = vsel %vm2160, %v5533, %v5534
      %v5536 = vrot.slane %v5388, 5
      %v5537 = vrot.slane %v5536, 4
      %v5538 = vrot.slane %v4663, 5
      %v5539 = vsel %vm2160, %v5537, %v5538
      %v5540 = vrot.slane %v5538, 4
      %v5541 = vrot.slane %v4664, 5
      %v5542 = vsel %vm2160, %v5540, %v5541
      %v5543 = vrot.slane %v5389, 5
      %v5544 = vrot.slane %v5543, 4
      %v5545 = vrot.slane %v4666, 5
      %v5546 = vsel %vm2160, %v5544, %v5545
      %v5547 = vrot.slane %v5545, 4
      %v5548 = vrot.slane %v4667, 5
      %v5549 = vsel %vm2160, %v5547, %v5548
      %s5550 = scalar_lea.vmem %s3, 512
      %v5551 = vld [vmem:[%s5550] sm:$0xf]
      %v5552 = vld [vmem:[%s5550 + $0x4] sm:$0xf]
      %v5553 = vld [vmem:[%s5550 + $0x8] sm:$0xf]
      %v5554 = vld [vmem:[%s5550 + $0xc] sm:$0xf]
      %v5555 = vld [vmem:[%s5550 + $0x10] sm:$0xf]
      %v5556 = vld [vmem:[%s5550 + $0x14] sm:$0xf]
      %v5557 = vld [vmem:[%s5550 + $0x18] sm:$0xf]
      %v5558 = vld [vmem:[%s5550 + $0x1c] sm:$0xf]
      %v5559 = vld [vmem:[%s5550 + $0x20] sm:$0xf]
      %v5560 = vld [vmem:[%s5550 + $0x24] sm:$0xf]
      %v5561 = vld [vmem:[%s5550 + $0x28] sm:$0xf]
      %v5562 = vld [vmem:[%s5550 + $0x2c] sm:$0xf]
      %v5563 = vld [vmem:[%s5550 + $0x30] sm:$0xf]
      %v5564 = vld [vmem:[%s5550 + $0x34] sm:$0xf]
      %v5565 = vld [vmem:[%s5550 + $0x38] sm:$0xf]
      %v5566 = vld [vmem:[%s5550 + $0x3c] sm:$0xf]
      %v5567 = vunpack.c.l.b16 %v5441
      %v5568 = vunpack.c.l.b16 %v5444
      %v5569 = vunpack.c.l.b16 %v5448
      %v5570 = vunpack.c.l.b16 %v5451
      %v5571 = vunpack.c.l.b16 %v5455
      %v5572 = vunpack.c.l.b16 %v5458
      %v5573 = vunpack.c.l.b16 %v5462
      %v5574 = vunpack.c.l.b16 %v5465
      %v5575 = vunpack.c.l.b16 %v5469
      %v5576 = vunpack.c.l.b16 %v5472
      %v5577 = vunpack.c.l.b16 %v5476
      %v5578 = vunpack.c.l.b16 %v5479
      %v5579 = vunpack.c.l.b16 %v5483
      %v5580 = vunpack.c.l.b16 %v5486
      %v5581 = vunpack.c.l.b16 %v5490
      %v5582 = vunpack.c.l.b16 %v5493
      %v5583 = vunpack.c.l.b16 %v5497
      %v5584 = vunpack.c.l.b16 %v5500
      %v5585 = vunpack.c.l.b16 %v5504
      %v5586 = vunpack.c.l.b16 %v5507
      %v5587 = vunpack.c.l.b16 %v5511
      %v5588 = vunpack.c.l.b16 %v5514
      %v5589 = vunpack.c.l.b16 %v5518
      %v5590 = vunpack.c.l.b16 %v5521
      %v5591 = vunpack.c.l.b16 %v5525
      %v5592 = vunpack.c.l.b16 %v5528
      %v5593 = vunpack.c.l.b16 %v5532
      %v5594 = vunpack.c.l.b16 %v5535
      %v5595 = vunpack.c.l.b16 %v5539
      %v5596 = vunpack.c.l.b16 %v5542
      %v5597 = vunpack.c.l.b16 %v5546
      %v5598 = vunpack.c.l.b16 %v5549
      %v5599 = vpack.c.b16 %v5568, %v5567
      %v5600 = vpack.c.b16 %v5570, %v5569
      %v5601 = vpack.c.b16 %v5572, %v5571
      %v5602 = vpack.c.b16 %v5574, %v5573
      %v5603 = vpack.c.b16 %v5576, %v5575
      %v5604 = vpack.c.b16 %v5578, %v5577
      %v5605 = vpack.c.b16 %v5580, %v5579
      %v5606 = vpack.c.b16 %v5582, %v5581
      %v5607 = vpack.c.b16 %v5584, %v5583
      %v5608 = vpack.c.b16 %v5586, %v5585
      %v5609 = vpack.c.b16 %v5588, %v5587
      %v5610 = vpack.c.b16 %v5590, %v5589
      %v5611 = vpack.c.b16 %v5592, %v5591
      %v5612 = vpack.c.b16 %v5594, %v5593
      %v5613 = vpack.c.b16 %v5596, %v5595
      %v5614 = vpack.c.b16 %v5598, %v5597
      %v5647 = vunpack.c.l.b16 %v5551
      %v5648 = vunpack.c.l.b16 %v5552
      %v5649 = vunpack.c.l.b16 %v5553
      %v5650 = vunpack.c.l.b16 %v5554
      %v5651 = vunpack.c.l.b16 %v5555
      %v5652 = vunpack.c.l.b16 %v5556
      %v5653 = vunpack.c.l.b16 %v5557
      %v5654 = vunpack.c.l.b16 %v5558
      %v5655 = vunpack.c.l.b16 %v5559
      %v5656 = vunpack.c.l.b16 %v5560
      %v5657 = vunpack.c.l.b16 %v5561
      %v5658 = vunpack.c.l.b16 %v5562
      %v5659 = vunpack.c.l.b16 %v5563
      %v5660 = vunpack.c.l.b16 %v5564
      %v5661 = vunpack.c.l.b16 %v5565
      %v5662 = vunpack.c.l.b16 %v5566
      %v5663 = vpack.c.b16 %v5648, %v5647
      %v5664 = vpack.c.b16 %v5650, %v5649
      %v5665 = vpack.c.b16 %v5652, %v5651
      %v5666 = vpack.c.b16 %v5654, %v5653
      %v5667 = vpack.c.b16 %v5656, %v5655
      %v5668 = vpack.c.b16 %v5658, %v5657
      %v5669 = vpack.c.b16 %v5660, %v5659
      %v5670 = vpack.c.b16 %v5662, %v5661
      %5679 = vmatprep.subr.bf16.mxu0 0
      %5680 = vmatpush1.bf16.msra.mxu0 %v5670
      %5681 = vmatprep.subr.bf16.mxu0 0
      %5682 = vmatpush1.bf16.msra.mxu0 %v5669
      %5683 = vmatprep.subr.bf16.mxu0 0
      %5684 = vmatpush1.bf16.msra.mxu0 %v5668
      %5685 = vmatprep.subr.bf16.mxu0 0
      %5686 = vmatpush1.bf16.msra.mxu0 %v5667
      %5687 = vmatprep.subr.bf16.mxu0 0
      %5688 = vmatpush1.bf16.msra.mxu0 %v5666
      %5689 = vmatprep.subr.bf16.mxu0 0
      %5690 = vmatpush1.bf16.msra.mxu0 %v5665
      %5691 = vmatprep.subr.bf16.mxu0 0
      %5692 = vmatpush1.bf16.msra.mxu0 %v5664
      %5693 = vmatprep.subr.bf16.mxu0 0
      %5694 = vmatpush1.bf16.msra.mxu0 %v5663
      %5695 = vmatprep.subr.bf16.mxu0 0
      %5696 = vmatpush2.bf16.msra.mxu0 0
      %5697 = vmatprep.subr.bf16.mxu0 0
      %5698 = vmatpush2.bf16.msra.mxu0 0
      %5699 = vmatprep.subr.bf16.mxu0 0
      %5700 = vmatpush2.bf16.msra.mxu0 0
      %5701 = vmatprep.subr.bf16.mxu0 0
      %5702 = vmatpush2.bf16.msra.mxu0 0
      %5703 = vmatprep.subr.bf16.mxu0 0
      %5704 = vmatpush2.bf16.msra.mxu0 0
      %5705 = vmatprep.subr.bf16.mxu0 0
      %5706 = vmatpush2.bf16.msra.mxu0 0
      %5707 = vmatprep.subr.bf16.mxu0 0
      %5708 = vmatpush2.bf16.msra.mxu0 0
      %5709 = vmatprep.subr.bf16.mxu0 0
      %5710 = vmatpush2.bf16.msra.mxu0 0
      %5711 = vmatprep.mubr.bf16.mxu0 0
      %5712 = vmatmul.mubr.bf16.gmra.mxu0 %v5599
      %v5713 = vpop.f32.mrf.mxu0
      %v5714 = vadd.f32 0.0, %v5713
      %v5715 = vpop.f32.mrf.mxu0
      %v5716 = vpop.f32.mrf.mxu0
      %v5717 = vadd.f32 0.0, %v5716
      %v5718 = vpop.f32.mrf.mxu0
      %5719 = vmatprep.mubr.bf16.mxu0 0
      %5720 = vmatmul.mubr.bf16.gmra.mxu0 %v5600
      %v5721 = vpop.f32.mrf.mxu0
      %v5722 = vadd.f32 0.0, %v5721
      %v5723 = vpop.f32.mrf.mxu0
      %v5724 = vpop.f32.mrf.mxu0
      %v5725 = vadd.f32 0.0, %v5724
      %v5726 = vpop.f32.mrf.mxu0
      %5727 = vmatprep.mubr.bf16.mxu0 0
      %5728 = vmatmul.mubr.bf16.gmra.mxu0 %v5601
      %v5729 = vpop.f32.mrf.mxu0
      %v5730 = vadd.f32 0.0, %v5729
      %v5731 = vpop.f32.mrf.mxu0
      %v5732 = vpop.f32.mrf.mxu0
      %v5733 = vadd.f32 0.0, %v5732
      %v5734 = vpop.f32.mrf.mxu0
      %5735 = vmatprep.mubr.bf16.mxu0 0
      %5736 = vmatmul.mubr.bf16.gmra.mxu0 %v5602
      %v5737 = vpop.f32.mrf.mxu0
      %v5738 = vadd.f32 0.0, %v5737
      %v5739 = vpop.f32.mrf.mxu0
      %v5740 = vpop.f32.mrf.mxu0
      %v5741 = vadd.f32 0.0, %v5740
      %v5742 = vpop.f32.mrf.mxu0
      %5743 = vmatprep.mubr.bf16.mxu0 0
      %5744 = vmatmul.mubr.bf16.gmra.mxu0 %v5603
      %v5745 = vpop.f32.mrf.mxu0
      %v5746 = vadd.f32 0.0, %v5745
      %v5747 = vpop.f32.mrf.mxu0
      %v5748 = vpop.f32.mrf.mxu0
      %v5749 = vadd.f32 0.0, %v5748
      %v5750 = vpop.f32.mrf.mxu0
      %5751 = vmatprep.mubr.bf16.mxu0 0
      %5752 = vmatmul.mubr.bf16.gmra.mxu0 %v5604
      %v5753 = vpop.f32.mrf.mxu0
      %v5754 = vadd.f32 0.0, %v5753
      %v5755 = vpop.f32.mrf.mxu0
      %v5756 = vpop.f32.mrf.mxu0
      %v5757 = vadd.f32 0.0, %v5756
      %v5758 = vpop.f32.mrf.mxu0
      %5759 = vmatprep.mubr.bf16.mxu0 0
      %5760 = vmatmul.mubr.bf16.gmra.mxu0 %v5605
      %v5761 = vpop.f32.mrf.mxu0
      %v5762 = vadd.f32 0.0, %v5761
      %v5763 = vpop.f32.mrf.mxu0
      %v5764 = vpop.f32.mrf.mxu0
      %v5765 = vadd.f32 0.0, %v5764
      %v5766 = vpop.f32.mrf.mxu0
      %5767 = vmatprep.mubr.bf16.mxu0 0
      %5768 = vmatmul.mubr.bf16.gmra.mxu0 %v5606
      %v5769 = vpop.f32.mrf.mxu0
      %v5770 = vadd.f32 0.0, %v5769
      %v5771 = vpop.f32.mrf.mxu0
      %v5772 = vpop.f32.mrf.mxu0
      %v5773 = vadd.f32 0.0, %v5772
      %v5774 = vpop.f32.mrf.mxu0
      %5775 = vmatprep.mubr.bf16.mxu0 0
      %5776 = vmatmul.mubr.bf16.gmra.mxu0 %v5607
      %v5777 = vpop.f32.mrf.mxu0
      %v5778 = vadd.f32 0.0, %v5777
      %v5779 = vpop.f32.mrf.mxu0
      %v5780 = vpop.f32.mrf.mxu0
      %v5781 = vadd.f32 0.0, %v5780
      %v5782 = vpop.f32.mrf.mxu0
      %5783 = vmatprep.mubr.bf16.mxu0 0
      %5784 = vmatmul.mubr.bf16.gmra.mxu0 %v5608
      %v5785 = vpop.f32.mrf.mxu0
      %v5786 = vadd.f32 0.0, %v5785
      %v5787 = vpop.f32.mrf.mxu0
      %v5788 = vpop.f32.mrf.mxu0
      %v5789 = vadd.f32 0.0, %v5788
      %v5790 = vpop.f32.mrf.mxu0
      %5791 = vmatprep.mubr.bf16.mxu0 0
      %5792 = vmatmul.mubr.bf16.gmra.mxu0 %v5609
      %v5793 = vpop.f32.mrf.mxu0
      %v5794 = vadd.f32 0.0, %v5793
      %v5795 = vpop.f32.mrf.mxu0
      %v5796 = vpop.f32.mrf.mxu0
      %v5797 = vadd.f32 0.0, %v5796
      %v5798 = vpop.f32.mrf.mxu0
      %5799 = vmatprep.mubr.bf16.mxu0 0
      %5800 = vmatmul.mubr.bf16.gmra.mxu0 %v5610
      %v5801 = vpop.f32.mrf.mxu0
      %v5802 = vadd.f32 0.0, %v5801
      %v5803 = vpop.f32.mrf.mxu0
      %v5804 = vpop.f32.mrf.mxu0
      %v5805 = vadd.f32 0.0, %v5804
      %v5806 = vpop.f32.mrf.mxu0
      %5807 = vmatprep.mubr.bf16.mxu0 0
      %5808 = vmatmul.mubr.bf16.gmra.mxu0 %v5611
      %v5809 = vpop.f32.mrf.mxu0
      %v5810 = vadd.f32 0.0, %v5809
      %v5811 = vpop.f32.mrf.mxu0
      %v5812 = vpop.f32.mrf.mxu0
      %v5813 = vadd.f32 0.0, %v5812
      %v5814 = vpop.f32.mrf.mxu0
      %5815 = vmatprep.mubr.bf16.mxu0 0
      %5816 = vmatmul.mubr.bf16.gmra.mxu0 %v5612
      %v5817 = vpop.f32.mrf.mxu0
      %v5818 = vadd.f32 0.0, %v5817
      %v5819 = vpop.f32.mrf.mxu0
      %v5820 = vpop.f32.mrf.mxu0
      %v5821 = vadd.f32 0.0, %v5820
      %v5822 = vpop.f32.mrf.mxu0
      %5823 = vmatprep.mubr.bf16.mxu0 0
      %5824 = vmatmul.mubr.bf16.gmra.mxu0 %v5613
      %v5825 = vpop.f32.mrf.mxu0
      %v5826 = vadd.f32 0.0, %v5825
      %v5827 = vpop.f32.mrf.mxu0
      %v5828 = vpop.f32.mrf.mxu0
      %v5829 = vadd.f32 0.0, %v5828
      %v5830 = vpop.f32.mrf.mxu0
      %5831 = vmatprep.mubr.bf16.mxu0 0
      %5832 = vmatmul.mubr.bf16.gmra.mxu0 %v5614
      %v5833 = vpop.f32.mrf.mxu0
      %v5834 = vadd.f32 0.0, %v5833
      %v5835 = vpop.f32.mrf.mxu0
      %v5836 = vpop.f32.mrf.mxu0
      %v5837 = vadd.f32 0.0, %v5836
      %v5838 = vpop.f32.mrf.mxu0
      %5839 = vdwg.mxu0
      %v5840 = vadd.f32 %v5342, %v5714
      %v5841 = vadd.f32 %v5343, %v5717
      %v5842 = vadd.f32 %v5344, %v5722
      %v5843 = vadd.f32 %v5345, %v5725
      %v5844 = vadd.f32 %v5346, %v5730
      %v5845 = vadd.f32 %v5347, %v5733
      %v5846 = vadd.f32 %v5348, %v5738
      %v5847 = vadd.f32 %v5349, %v5741
      %v5848 = vadd.f32 %v5350, %v5746
      %v5849 = vadd.f32 %v5351, %v5749
      %v5850 = vadd.f32 %v5352, %v5754
      %v5851 = vadd.f32 %v5353, %v5757
      %v5852 = vadd.f32 %v5354, %v5762
      %v5853 = vadd.f32 %v5355, %v5765
      %v5854 = vadd.f32 %v5356, %v5770
      %v5855 = vadd.f32 %v5357, %v5773
      %v5856 = vadd.f32 %v5358, %v5778
      %v5857 = vadd.f32 %v5359, %v5781
      %v5858 = vadd.f32 %v5360, %v5786
      %v5859 = vadd.f32 %v5361, %v5789
      %v5860 = vadd.f32 %v5362, %v5794
      %v5861 = vadd.f32 %v5363, %v5797
      %v5862 = vadd.f32 %v5364, %v5802
      %v5863 = vadd.f32 %v5365, %v5805
      %v5864 = vadd.f32 %v5366, %v5810
      %v5865 = vadd.f32 %v5367, %v5813
      %v5866 = vadd.f32 %v5368, %v5818
      %v5867 = vadd.f32 %v5369, %v5821
      %v5868 = vadd.f32 %v5370, %v5826
      %v5869 = vadd.f32 %v5371, %v5829
      %v5870 = vadd.f32 %v5372, %v5834
      %v5871 = vadd.f32 %v5373, %v5837
      %v5872 = vpack.c.bf16 %v5841, %v5840
      %v5873 = vpack.c.bf16 %v5843, %v5842
      %v5874 = vpack.c.bf16 %v5845, %v5844
      %v5875 = vpack.c.bf16 %v5847, %v5846
      %v5876 = vpack.c.bf16 %v5849, %v5848
      %v5877 = vpack.c.bf16 %v5851, %v5850
      %v5878 = vpack.c.bf16 %v5853, %v5852
      %v5879 = vpack.c.bf16 %v5855, %v5854
      %v5880 = vpack.c.bf16 %v5857, %v5856
      %v5881 = vpack.c.bf16 %v5859, %v5858
      %v5882 = vpack.c.bf16 %v5861, %v5860
      %v5883 = vpack.c.bf16 %v5863, %v5862
      %v5884 = vpack.c.bf16 %v5865, %v5864
      %v5885 = vpack.c.bf16 %v5867, %v5866
      %v5886 = vpack.c.bf16 %v5869, %v5868
      %v5887 = vpack.c.bf16 %v5871, %v5870
      %v5904 = vunpack.c.l.b16 %v5872
      %v5905 = vunpack.c.h.b16 %v5872
      %v5906 = vunpack.c.l.b16 %v5873
      %v5907 = vunpack.c.h.b16 %v5873
      %v5908 = vunpack.c.l.b16 %v5874
      %v5909 = vunpack.c.h.b16 %v5874
      %v5910 = vunpack.c.l.b16 %v5875
      %v5911 = vunpack.c.h.b16 %v5875
      %v5912 = vunpack.c.l.b16 %v5876
      %v5913 = vunpack.c.h.b16 %v5876
      %v5914 = vunpack.c.l.b16 %v5877
      %v5915 = vunpack.c.h.b16 %v5877
      %v5916 = vunpack.c.l.b16 %v5878
      %v5917 = vunpack.c.h.b16 %v5878
      %v5918 = vunpack.c.l.b16 %v5879
      %v5919 = vunpack.c.h.b16 %v5879
      %v5920 = vunpack.c.l.b16 %v5880
      %v5921 = vunpack.c.h.b16 %v5880
      %v5922 = vunpack.c.l.b16 %v5881
      %v5923 = vunpack.c.h.b16 %v5881
      %v5924 = vunpack.c.l.b16 %v5882
      %v5925 = vunpack.c.h.b16 %v5882
      %v5926 = vunpack.c.l.b16 %v5883
      %v5927 = vunpack.c.h.b16 %v5883
      %v5928 = vunpack.c.l.b16 %v5884
      %v5929 = vunpack.c.h.b16 %v5884
      %v5930 = vunpack.c.l.b16 %v5885
      %v5931 = vunpack.c.h.b16 %v5885
      %v5932 = vunpack.c.l.b16 %v5886
      %v5933 = vunpack.c.h.b16 %v5886
      %v5934 = vunpack.c.l.b16 %v5887
      %v5935 = vunpack.c.h.b16 %v5887
      %v5936 = vpack.c.b16 %v5904, %v5904
      %v5937 = vpack.c.b16 %v5905, %v5905
      %v5938 = vpack.c.b16 %v5906, %v5906
      %v5939 = vpack.c.b16 %v5907, %v5907
      %v5940 = vpack.c.b16 %v5908, %v5908
      %v5941 = vpack.c.b16 %v5909, %v5909
      %v5942 = vpack.c.b16 %v5910, %v5910
      %v5943 = vpack.c.b16 %v5911, %v5911
      %v5944 = vpack.c.b16 %v5912, %v5912
      %v5945 = vpack.c.b16 %v5913, %v5913
      %v5946 = vpack.c.b16 %v5914, %v5914
      %v5947 = vpack.c.b16 %v5915, %v5915
      %v5948 = vpack.c.b16 %v5916, %v5916
      %v5949 = vpack.c.b16 %v5917, %v5917
      %v5950 = vpack.c.b16 %v5918, %v5918
      %v5951 = vpack.c.b16 %v5919, %v5919
      %v5952 = vpack.c.b16 %v5920, %v5920
      %v5953 = vpack.c.b16 %v5921, %v5921
      %v5954 = vpack.c.b16 %v5922, %v5922
      %v5955 = vpack.c.b16 %v5923, %v5923
      %v5956 = vpack.c.b16 %v5924, %v5924
      %v5957 = vpack.c.b16 %v5925, %v5925
      %v5958 = vpack.c.b16 %v5926, %v5926
      %v5959 = vpack.c.b16 %v5927, %v5927
      %v5960 = vpack.c.b16 %v5928, %v5928
      %v5961 = vpack.c.b16 %v5929, %v5929
      %v5962 = vpack.c.b16 %v5930, %v5930
      %v5963 = vpack.c.b16 %v5931, %v5931
      %v5964 = vpack.c.b16 %v5932, %v5932
      %v5965 = vpack.c.b16 %v5933, %v5933
      %v5966 = vpack.c.b16 %v5934, %v5934
      %v5967 = vpack.c.b16 %v5935, %v5935
      %6000 = vst [vmem:[%s231] sm:$0xf] %v5936
      %6001 = vst [vmem:[%s231 + $0x4] sm:$0xf] %v5937
      %6002 = vst [vmem:[%s231 + $0x8] sm:$0xf] %v5938
      %6003 = vst [vmem:[%s231 + $0xc] sm:$0xf] %v5939
      %6004 = vst [vmem:[%s231 + $0x10] sm:$0xf] %v5940
      %6005 = vst [vmem:[%s231 + $0x14] sm:$0xf] %v5941
      %6006 = vst [vmem:[%s231 + $0x18] sm:$0xf] %v5942
      %6007 = vst [vmem:[%s231 + $0x1c] sm:$0xf] %v5943
      %6008 = vst [vmem:[%s231 + $0x20] sm:$0xf] %v5944
      %6009 = vst [vmem:[%s231 + $0x24] sm:$0xf] %v5945
      %6010 = vst [vmem:[%s231 + $0x28] sm:$0xf] %v5946
      %6011 = vst [vmem:[%s231 + $0x2c] sm:$0xf] %v5947
      %6012 = vst [vmem:[%s231 + $0x30] sm:$0xf] %v5948
      %6013 = vst [vmem:[%s231 + $0x34] sm:$0xf] %v5949
      %6014 = vst [vmem:[%s231 + $0x38] sm:$0xf] %v5950
      %6015 = vst [vmem:[%s231 + $0x3c] sm:$0xf] %v5951
      %6016 = vst [vmem:[%s231 + $0x40] sm:$0xf] %v5952
      %6017 = vst [vmem:[%s231 + $0x44] sm:$0xf] %v5953
      %6018 = vst [vmem:[%s231 + $0x48] sm:$0xf] %v5954
      %6019 = vst [vmem:[%s231 + $0x4c] sm:$0xf] %v5955
      %6020 = vst [vmem:[%s231 + $0x50] sm:$0xf] %v5956
      %6021 = vst [vmem:[%s231 + $0x54] sm:$0xf] %v5957
      %6022 = vst [vmem:[%s231 + $0x58] sm:$0xf] %v5958
      %6023 = vst [vmem:[%s231 + $0x5c] sm:$0xf] %v5959
      %6024 = vst [vmem:[%s231 + $0x60] sm:$0xf] %v5960
      %6025 = vst [vmem:[%s231 + $0x64] sm:$0xf] %v5961
      %6026 = vst [vmem:[%s231 + $0x68] sm:$0xf] %v5962
      %6027 = vst [vmem:[%s231 + $0x6c] sm:$0xf] %v5963
      %6028 = vst [vmem:[%s231 + $0x70] sm:$0xf] %v5964
      %6029 = vst [vmem:[%s231 + $0x74] sm:$0xf] %v5965
      %6030 = vst [vmem:[%s231 + $0x78] sm:$0xf] %v5966
      %6031 = vst [vmem:[%s231 + $0x7c] sm:$0xf] %v5967
      %v6032 = vadd.f32 %v5840, %v5841
      %v6033 = vadd.f32 %v6032, %v5842
      %v6034 = vadd.f32 %v6033, %v5843
      %v6035 = vadd.f32 %v6034, %v5844
      %v6036 = vadd.f32 %v6035, %v5845
      %v6037 = vadd.f32 %v6036, %v5846
      %v6038 = vadd.f32 %v6037, %v5847
      %v6039 = vadd.f32 %v6038, %v5848
      %v6040 = vadd.f32 %v6039, %v5849
      %v6041 = vadd.f32 %v6040, %v5850
      %v6042 = vadd.f32 %v6041, %v5851
      %v6043 = vadd.f32 %v6042, %v5852
      %v6044 = vadd.f32 %v6043, %v5853
      %v6045 = vadd.f32 %v6044, %v5854
      %v6046 = vadd.f32 %v6045, %v5855
      %v6047 = vadd.f32 %v6046, %v5856
      %v6048 = vadd.f32 %v6047, %v5857
      %v6049 = vadd.f32 %v6048, %v5858
      %v6050 = vadd.f32 %v6049, %v5859
      %v6051 = vadd.f32 %v6050, %v5860
      %v6052 = vadd.f32 %v6051, %v5861
      %v6053 = vadd.f32 %v6052, %v5862
      %v6054 = vadd.f32 %v6053, %v5863
      %v6055 = vadd.f32 %v6054, %v5864
      %v6056 = vadd.f32 %v6055, %v5865
      %v6057 = vadd.f32 %v6056, %v5866
      %v6058 = vadd.f32 %v6057, %v5867
      %v6059 = vadd.f32 %v6058, %v5868
      %v6060 = vadd.f32 %v6059, %v5869
      %v6061 = vadd.f32 %v6060, %v5870
      %v6062 = vadd.f32 %v6061, %v5871
      %v6063 = vrot.slane %v6062, 4
      %v6064 = vadd.f32 %v6062, %v6063
      %v6065 = vrot.slane %v6064, 2
      %v6066 = vadd.f32 %v6064, %v6065
      %v6067 = vrot.slane %v6066, 1
      %v6068 = vadd.f32 %v6066, %v6067
      %v6069 = vadd.f32 %v6068, 0.0
      %v6070 = vmul.f32 %v5840, %v5840
      %v6071 = vmul.f32 %v5841, %v5841
      %v6072 = vmul.f32 %v5842, %v5842
      %v6073 = vmul.f32 %v5843, %v5843
      %v6074 = vmul.f32 %v5844, %v5844
      %v6075 = vmul.f32 %v5845, %v5845
      %v6076 = vmul.f32 %v5846, %v5846
      %v6077 = vmul.f32 %v5847, %v5847
      %v6078 = vmul.f32 %v5848, %v5848
      %v6079 = vmul.f32 %v5849, %v5849
      %v6080 = vmul.f32 %v5850, %v5850
      %v6081 = vmul.f32 %v5851, %v5851
      %v6082 = vmul.f32 %v5852, %v5852
      %v6083 = vmul.f32 %v5853, %v5853
      %v6084 = vmul.f32 %v5854, %v5854
      %v6085 = vmul.f32 %v5855, %v5855
      %v6086 = vmul.f32 %v5856, %v5856
      %v6087 = vmul.f32 %v5857, %v5857
      %v6088 = vmul.f32 %v5858, %v5858
      %v6089 = vmul.f32 %v5859, %v5859
      %v6090 = vmul.f32 %v5860, %v5860
      %v6091 = vmul.f32 %v5861, %v5861
      %v6092 = vmul.f32 %v5862, %v5862
      %v6093 = vmul.f32 %v5863, %v5863
      %v6094 = vmul.f32 %v5864, %v5864
      %v6095 = vmul.f32 %v5865, %v5865
      %v6096 = vmul.f32 %v5866, %v5866
      %v6097 = vmul.f32 %v5867, %v5867
      %v6098 = vmul.f32 %v5868, %v5868
      %v6099 = vmul.f32 %v5869, %v5869
      %v6100 = vmul.f32 %v5870, %v5870
      %v6101 = vmul.f32 %v5871, %v5871
      %v6102 = vadd.f32 %v6070, %v6071
      %v6103 = vadd.f32 %v6102, %v6072
      %v6104 = vadd.f32 %v6103, %v6073
      %v6105 = vadd.f32 %v6104, %v6074
      %v6106 = vadd.f32 %v6105, %v6075
      %v6107 = vadd.f32 %v6106, %v6076
      %v6108 = vadd.f32 %v6107, %v6077
      %v6109 = vadd.f32 %v6108, %v6078
      %v6110 = vadd.f32 %v6109, %v6079
      %v6111 = vadd.f32 %v6110, %v6080
      %v6112 = vadd.f32 %v6111, %v6081
      %v6113 = vadd.f32 %v6112, %v6082
      %v6114 = vadd.f32 %v6113, %v6083
      %v6115 = vadd.f32 %v6114, %v6084
      %v6116 = vadd.f32 %v6115, %v6085
      %v6117 = vadd.f32 %v6116, %v6086
      %v6118 = vadd.f32 %v6117, %v6087
      %v6119 = vadd.f32 %v6118, %v6088
      %v6120 = vadd.f32 %v6119, %v6089
      %v6121 = vadd.f32 %v6120, %v6090
      %v6122 = vadd.f32 %v6121, %v6091
      %v6123 = vadd.f32 %v6122, %v6092
      %v6124 = vadd.f32 %v6123, %v6093
      %v6125 = vadd.f32 %v6124, %v6094
      %v6126 = vadd.f32 %v6125, %v6095
      %v6127 = vadd.f32 %v6126, %v6096
      %v6128 = vadd.f32 %v6127, %v6097
      %v6129 = vadd.f32 %v6128, %v6098
      %v6130 = vadd.f32 %v6129, %v6099
      %v6131 = vadd.f32 %v6130, %v6100
      %v6132 = vadd.f32 %v6131, %v6101
      %v6133 = vrot.slane %v6132, 4
      %v6134 = vadd.f32 %v6132, %v6133
      %v6135 = vrot.slane %v6134, 2
      %v6136 = vadd.f32 %v6134, %v6135
      %v6137 = vrot.slane %v6136, 1
      %v6138 = vadd.f32 %v6136, %v6137
      %v6139 = vadd.f32 %v6138, 0.0
      %vm6140 = vcmask 1040384
      %v6141 = vsel %vm6140, %v6069, %v6139
      %6142 = vst [vmem:[%s235] sm:$0x3] %v6141
      %p6143 = scmp.lt.s32.totalorder %s17, 1
      %s6144 = scalar_select %p6143, %s17, 1
      %s6145 = smul.addr %s6144, 32
      %s6146 = smul.addr %s6145, 4
      %s6147 = scalar_lea.vmem %s4, %s6146
      %p6148 = scmp.lt.s32.totalorder %s17, 1
      %s6149 = scalar_select %p6148, %s17, 1
      %s6150 = smul.addr %s6149, 2
      %s6151 = scalar_lea.vmem %s5, %s6150
      // Predicated region
      $region37: #{unet_decoding_block.3} parent=35 // pred_check
        %p6152 = pneg %p124
      $region38: #{unet_decoding_block.3} parent=35 // pred_check_branch
        %6154 = sbr.rel (%p6152) target = $region40
      $region39: #{unet_decoding_block.3} parent=35 // pred_region
        _
      $region40: #{unet_decoding_block.3} parent=35 // pred_fallthru
        _
      // Predicated region
      $region41: #{unet_decoding_block.3} parent=35 // pred_check
        %p6155 = pneg %p150
      $region42: #{unet_decoding_block.3} parent=35 // pred_check_branch
        %6157 = sbr.rel (%p6155) target = $region44
      $region43: #{unet_decoding_block.3} parent=35 // pred_region
        _
      $region44: #{unet_decoding_block.3} parent=35 // pred_fallthru
        _
    $region36: #{unet_decoding_block.3} parent=5 // pred_fallthru
      _
    %p6158 = scmp.le.s32.totalorder 2, %s12
    // Predicated region
    $region45: #{unet_decoding_block.3} parent=5 // pred_check
      %p6159 = pneg %p6158
    $region46: #{unet_decoding_block.3} parent=5 // pred_check_branch
      %6161 = sbr.rel (%p6159) target = $region48
    $region47: #{unet_decoding_block.3} parent=5 // pred_region
      %s6162 = ssub.s32 %s12, 2
      // Predicated region
      $region49: #{unet_decoding_block.3} parent=47 // pred_check
        %p6163 = pneg %p130
      $region50: #{unet_decoding_block.3} parent=47 // pred_check_branch
        %6165 = sbr.rel (%p6163) target = $region52
      $region51: #{unet_decoding_block.3} parent=47 // pred_region
        %p6166 = scmp.lt.s32.totalorder %s18, 1
        %s6167 = scalar_select %p6166, %s18, 1
        %s6168 = smul.addr %s6167, 32
        %s6169 = smul.addr %s6168, 4
        %s6170 = scalar_lea.vmem %s4, %s6169
      $region52: #{unet_decoding_block.3} parent=47 // pred_fallthru
        _
      // Predicated region
      $region53: #{unet_decoding_block.3} parent=47 // pred_check
        %p6171 = pneg %p156
      $region54: #{unet_decoding_block.3} parent=47 // pred_check_branch
        %6173 = sbr.rel (%p6171) target = $region56
      $region55: #{unet_decoding_block.3} parent=47 // pred_region
        %p6174 = scmp.lt.s32.totalorder %s18, 1
        %s6175 = scalar_select %p6174, %s18, 1
        %s6176 = smul.addr %s6175, 2
        %s6177 = scalar_lea.vmem %s5, %s6176
      $region56: #{unet_decoding_block.3} parent=47 // pred_fallthru
        _
    $region48: #{unet_decoding_block.3} parent=5 // pred_fallthru
      _
  $region6: #{unet_decoding_block.3} parent=0 // loop_footer
    %s16 = sadd.s32 1, %s12
  $region7: #{unet_decoding_block.3} parent=0 // loop_footer_branch
    %11 = sbr.rel target = $region3
  $region8: #{unet_decoding_block.3} parent=0 // loop_exit
    _

</llo_original>
